<compile_context>
chip_gen: v5e
topology: v5e:2x2
jax: 0.10.0
libtpu: 0.0.40
codegen_flags: <defaults>
</compile_context>

<pallas_src>
import functools

import jax
import jax.numpy as jnp
from jax.experimental import pallas as pl
from jax.experimental.pallas import tpu as pltpu


# --------------------------------------------------------------------------- #
# Kernel
# --------------------------------------------------------------------------- #
def _lstm_chunk_kernel(x_ref, w_ih_ref, w_hh_ref, b_ref, y_ref,
                       h_scr, c_scr, gx_scr, *, seq_valid, nc):
    """Process one time chunk of one direction of one LSTM layer.

    x_ref:    (Ts*B, D)   flattened input time chunk (original time order)
    w_ih_ref: (D, 4H)     input->gates weight, gate order (i, f, o, g)
    w_hh_ref: (H, 4H)     hidden->gates weight, gate order (i, f, o, g)
    b_ref:    (1, 4H)     combined bias (b_ih + b_hh), f32, gate order (i,f,o,g)
    y_ref:    (Ts*B, H)   output chunk for this direction
    h_scr:    (B, H)      persistent hidden state (matmul dtype)
    c_scr:    (B, H)      persistent cell state (f32)
    gx_scr:   (Ts*B, 4H)  precomputed input-projection gates (f32)
    """
    bsz, hsz = c_scr.shape
    ts = x_ref.shape[0] // bsz
    seq_padded = nc * ts
    needs_mask = seq_padded != seq_valid      # static Python bool

    d = pl.program_id(0)     # direction: 0 = forward, 1 = backward
    tc = pl.program_id(1)    # time-chunk index (reversal folded into maps)

    @pl.when(tc == 0)
    def _():
        h_scr[...] = jnp.zeros_like(h_scr)
        c_scr[...] = jnp.zeros_like(c_scr)

    # ---- hoisted input projection: one chunk-sized MXU GEMM ----------------
    gx = jnp.dot(x_ref[...].astype(w_ih_ref.dtype), w_ih_ref[...],
                 preferred_element_type=jnp.float32)
    gx_scr[...] = gx + b_ref[...]

    # Chunk's global time offset; within-chunk order: fwd 0..Ts-1, bwd Ts-1..0.
    chunk = d * (nc - 1) + (1 - 2 * d) * tc
    base_t = chunk * ts
    t_start = d * (ts - 1)
    t_step = 1 - 2 * d
    cdt = h_scr.dtype        # h carry dtype (bf16 on the fast path)

    def step(j, carry):
        h, c = carry
        t = t_start + t_step * j
        row = pl.multiple_of(t * bsz, bsz)
        gates = gx_scr[pl.ds(row, bsz), :] + jnp.dot(
            h, w_hh_ref[...], preferred_element_type=jnp.float32)
        # Gate order (i, f, o, g): one sigmoid slab + one tanh slab.
        sig = jax.nn.sigmoid(gates[:, :3 * hsz])
        i_g = sig[:, :hsz]
        f_g = sig[:, hsz:2 * hsz]
        o_g = sig[:, 2 * hsz:]
        g_g = jnp.tanh(gates[:, 3 * hsz:])
        c_new = f_g * c + i_g * g_g
        h_new = o_g * jnp.tanh(c_new)
        if needs_mask:
            valid = (base_t + t) < seq_valid
            c_new = jnp.where(valid, c_new, c)
            h_new = jnp.where(valid, h_new, h.astype(jnp.float32))
        y_ref[pl.ds(row, bsz), :] = h_new.astype(y_ref.dtype)
        return (h_new.astype(cdt), c_new)

    h_fin, c_fin = jax.lax.fori_loop(0, ts, step, (h_scr[...], c_scr[...]),
                                     unroll=True)
    h_scr[...] = h_fin
    c_scr[...] = c_fin


# --------------------------------------------------------------------------- #
# Wrapper helpers
# --------------------------------------------------------------------------- #
def _tpu_vmem_capacity_bytes():
    try:
        return int(pltpu.get_tpu_info().vmem_capacity_bytes)
    except Exception:
        return 64 << 20   # conservative default (v7x per-TensorCore VMEM)


def _direction_semantics(nd):
    if nd < 2:
        return pltpu.ARBITRARY
    try:
        kind = jax.devices()[0].device_kind.lower()
    except Exception:
        kind = ""
    if "v7" in kind or "7x" in kind:
        # v7x: the two directions of a bidirectional layer -> two TensorCores.
        return pltpu.CORE_PARALLEL
    return pltpu.PARALLEL


def _pick_time_chunk(seq_len, max_chunk):
    """Prefer an exact divisor >= 8; otherwise pad and mask the tail."""
    ts_div = 1
    for ts in range(min(seq_len, max_chunk), 0, -1):
        if seq_len % ts == 0:
            ts_div = ts
            break
    if ts_div >= min(8, seq_len):
        return ts_div
    return min(seq_len, max_chunk)


def _lstm_layer(x, w_ih, w_hh, b, *, out_dtype, max_chunk=None):
    """One (possibly bidirectional) LSTM layer.

    x:    (S, B, D)
    w_ih: (nd, D, 4H)  gate order (i, f, o, g), matmul dtype
    w_hh: (nd, H, 4H)  gate order (i, f, o, g), matmul dtype
    b:    (nd, 1, 4H)  f32, folded b_ih + b_hh, gate order (i, f, o, g)
    returns (S, B, nd*H) in out_dtype (PyTorch direction-interleaved layout).
    """
    S, B, D = x.shape
    nd = w_hh.shape[0]
    H = w_hh.shape[1]

    x_bytes = jnp.dtype(x.dtype).itemsize
    w_bytes = jnp.dtype(w_ih.dtype).itemsize
    o_bytes = jnp.dtype(out_dtype).itemsize

    # VMEM footprint model: chunk-proportional (double-buffered x/y + gx) and
    # fixed (single-buffered weights/bias + h/c state).
    per_ts = B * (2 * D * x_bytes + 2 * H * o_bytes + 4 * H * 4)
    fixed = (D + H) * 4 * H * w_bytes + 4 * H * 4 + 2 * B * H * 4

    cap = _tpu_vmem_capacity_bytes()
    if max_chunk is None:
        budget = int(0.6 * cap)
        max_chunk = int(max(1, min(32, (budget - fixed) // max(per_ts, 1))))
    ts = _pick_time_chunk(S, max_chunk)
    S_pad = pl.cdiv(S, ts) * ts
    nc = S_pad // ts

    vmem_limit = int(min(max((fixed + ts * per_ts) * 3 // 2 + (2 << 20),
                             16 << 20),
                         cap - (2 << 20)))

    if S_pad != S:
        x = jnp.pad(x, ((0, S_pad - S), (0, 0), (0, 0)))
    x2 = x.reshape(S_pad * B, D)          # free metadata reshape

    def chunk_block(di, tci):
        # forward walks chunks 0..nc-1, backward nc-1..0 (reversal folded here)
        return di * (nc - 1) + (1 - 2 * di) * tci

    # Lane-dense fused output (no wrapper concat) whenever the per-direction
    # column offset d*H is 128-lane aligned (always true for nd == 1).
    fuse_out = (nd == 1) or (H % 128 == 0)
    if fuse_out:
        out_shape = jax.ShapeDtypeStruct((S_pad * B, nd * H), out_dtype)
        out_spec = pl.BlockSpec((ts * B, H),
                                lambda di, tci: (chunk_block(di, tci), di))
    else:
        out_shape = jax.ShapeDtypeStruct((nd, S_pad * B, H), out_dtype)
        out_spec = pl.BlockSpec((None, ts * B, H),
                                lambda di, tci: (di, chunk_block(di, tci), 0))

    kernel = functools.partial(_lstm_chunk_kernel, seq_valid=S, nc=nc)

    y = pl.pallas_call(
        kernel,
        out_shape=out_shape,
        grid_spec=pltpu.PrefetchScalarGridSpec(
            num_scalar_prefetch=0,
            grid=(nd, nc),
            in_specs=[
                pl.BlockSpec((ts * B, D),
                             lambda di, tci: (chunk_block(di, tci), 0)),
                # Grid-invariant weights/bias: single-buffered.
                pl.BlockSpec((None, D, 4 * H), lambda di, tci: (di, 0, 0),
                             pipeline_mode=pl.Buffered(1)),
                pl.BlockSpec((None, H, 4 * H), lambda di, tci: (di, 0, 0),
                             pipeline_mode=pl.Buffered(1)),
                pl.BlockSpec((None, 1, 4 * H), lambda di, tci: (di, 0, 0),
                             pipeline_mode=pl.Buffered(1)),
            ],
            out_specs=out_spec,
            scratch_shapes=[
                pltpu.VMEM((B, H), w_hh.dtype),            # h carry
                pltpu.VMEM((B, H), jnp.float32),           # c carry
                pltpu.VMEM((ts * B, 4 * H), jnp.float32),  # chunk input gates
            ],
        ),
        compiler_params=pltpu.CompilerParams(
            dimension_semantics=(_direction_semantics(nd), pltpu.ARBITRARY),
            vmem_limit_bytes=vmem_limit,
        ),
    )(x2, w_ih, w_hh, b)

    if fuse_out:
        y = y.reshape(S_pad, B, nd * H)   # free metadata reshape
        return y[:S] if S_pad != S else y
    # TODO(synk): lane-unaligned bidirectional H falls back to one concat pass.
    y = y.reshape(nd, S_pad, B, H)
    if S_pad != S:
        y = y[:, :S]
    return jnp.concatenate([y[0], y[1]], axis=-1)


@functools.partial(jax.jit, static_argnames=("max_chunk",))
def lstm_block_forward(x, prepared_params, max_chunk=None):
    """Equivalent of Lstm_Block.forward(x) with zero initial hidden state."""
    n_layers = len(prepared_params)
    out = x
    for li, (w_ih, w_hh, b) in enumerate(prepared_params):
        last = li == n_layers - 1
        # Intermediate-layer activations stay in the matmul dtype (halves
        # inter-layer HBM traffic on the bf16 path); final layer emits f32.
        lay_dtype = jnp.float32 if (last or w_ih.dtype == jnp.float32) \
            else w_ih.dtype
        out = _lstm_layer(out, w_ih, w_hh, b, out_dtype=lay_dtype,
                          max_chunk=max_chunk)
    return out


# --------------------------------------------------------------------------- #
# Parameters
# --------------------------------------------------------------------------- #
def init_lstm_params(key, latent_dim, hidden_size, num_layers, bidirectional):
    """Deterministic init matching nn.LSTM parameter shapes (canonical form).

    PyTorch stores weight_ih_l{k} as (4H, in), weight_hh_l{k} as (4H, H),
    biases as (4H,), U(-1/sqrt(H), 1/sqrt(H)), gate order (i, f, g, o).  Here
    weights are kept transposed (in, 4H)/(H, 4H) for right-multiplication,
    the two biases are folded, and per-direction tensors are stacked.
    """
    nd = 2 if bidirectional else 1
    bound = 1.0 / float(hidden_size) ** 0.5
    params = []
    for layer in range(num_layers):
        in_dim = latent_dim if layer == 0 else hidden_size * nd
        w_ih_d, w_hh_d, b_d = [], [], []
        for _ in range(nd):
            key, k1, k2, k3, k4 = jax.random.split(key, 5)
            w_ih = jax.random.uniform(
                k1, (in_dim, 4 * hidden_size), jnp.float32, -bound, bound)
            w_hh = jax.random.uniform(
                k2, (hidden_size, 4 * hidden_size), jnp.float32, -bound, bound)
            b_ih = jax.random.uniform(
                k3, (4 * hidden_size,), jnp.float32, -bound, bound)
            b_hh = jax.random.uniform(
                k4, (4 * hidden_size,), jnp.float32, -bound, bound)
            w_ih_d.append(w_ih)
            w_hh_d.append(w_hh)
            b_d.append((b_ih + b_hh)[None, :])
        params.append((jnp.stack(w_ih_d), jnp.stack(w_hh_d), jnp.stack(b_d)))
    return params


def _permute_gate_columns(w):
    """Gate order (i, f, g, o) -> (i, f, o, g): sigmoid over one 3H slab."""
    i, f, g, o = jnp.split(w, 4, axis=-1)
    return jnp.concatenate([i, f, o, g], axis=-1)


def prepare_lstm_params(params, matmul_dtype=jnp.bfloat16):
    """One-time conversion for the kernel: gate-permuted, weights cast to the
    matmul dtype (done once, NOT per forward call); biases stay f32."""
    prepped = []
    for w_ih, w_hh, b in params:
        prepped.append((_permute_gate_columns(w_ih).astype(matmul_dtype),
                        _permute_gate_columns(w_hh).astype(matmul_dtype),
                        _permute_gate_columns(b)))
    return prepped


# --------------------------------------------------------------------------- #
# Pure-JAX reference (lax.scan) for correctness checking
# --------------------------------------------------------------------------- #
def _lstm_layer_ref(x, w_ih, w_hh, b):
    nd = w_ih.shape[0]
    S, B, _ = x.shape
    H = w_hh.shape[1]
    outs = []
    for d in range(nd):
        xin = x if d == 0 else x[::-1]
        wi, wh, bb = w_ih[d], w_hh[d], b[d, 0]

        def step(carry, x_t, wi=wi, wh=wh, bb=bb):
            h, c = carry
            gates = x_t @ wi + h @ wh + bb
            i_g = jax.nn.sigmoid(gates[:, :H])
            f_g = jax.nn.sigmoid(gates[:, H:2 * H])
            g_g = jnp.tanh(gates[:, 2 * H:3 * H])
            o_g = jax.nn.sigmoid(gates[:, 3 * H:])
            c = f_g * c + i_g * g_g
            h = o_g * jnp.tanh(c)
            return (h, c), h

        init = (jnp.zeros((B, H), jnp.float32), jnp.zeros((B, H), jnp.float32))
        _, ys = jax.lax.scan(step, init, xin)
        if d == 1:
            ys = ys[::-1]
        outs.append(ys)
    return outs[0] if nd == 1 else jnp.concatenate(outs, axis=-1)


def lstm_block_forward_ref(x, params):
    out = x
    for (w_ih, w_hh, b) in params:
        out = _lstm_layer_ref(out, w_ih, w_hh, b)
    return out


# --------------------------------------------------------------------------- #
# Self-test
# --------------------------------------------------------------------------- #
if __name__ == "__main__":
    def check(name, seq, batch, latent, hidden, layers, bidir, max_chunk=None):
        key = jax.random.PRNGKey(0)
        kx, kp = jax.random.split(key)
        x = jax.random.normal(kx, (seq, batch, latent), jnp.float32)
        params = init_lstm_params(kp, latent, hidden, layers, bidir)
        ref = jax.block_until_ready(lstm_block_forward_ref(x, params))

        nd = 2 if bidir else 1
        expected = (seq, batch, nd * hidden)

        # f32 matmul path: tight check against the lax.scan reference.
        p32 = prepare_lstm_params(params, jnp.float32)
        o32 = jax.block_until_ready(
            lstm_block_forward(x, p32, max_chunk=max_chunk))
        assert o32.shape == expected, (name, o32.shape)
        err32 = float(jnp.max(jnp.abs(o32 - ref)))
        assert err32 < 1e-4, (name, err32)

        # bf16 matmul operands, bf16 h-carry, bf16 inter-layer activations.
        pbf = prepare_lstm_params(params, jnp.bfloat16)
        obf = jax.block_until_ready(
            lstm_block_forward(x, pbf, max_chunk=max_chunk))
        assert obf.shape == expected, (name, obf.shape)
        errbf = float(jnp.max(jnp.abs(obf.astype(jnp.float32) - ref)))
        assert errbf < 6e-2, (name, errbf)

    # Lane-aligned H: fused (S, B, nd*H) output path, single time chunk.
    check("bidir_h128", seq=8, batch=8, latent=32, hidden=128,
          layers=2, bidir=True)
    # Multi-chunk recurrence + ragged-tail masking + concat fallback (H=32).
    check("bidir_h32_ragged", seq=10, batch=8, latent=16, hidden=32,
          layers=2, bidir=True, max_chunk=4)
    # Unidirectional, ragged sequence, fused lane-dense output.
    check("unidir_h32_ragged", seq=9, batch=8, latent=16, hidden=32,
          layers=1, bidir=False, max_chunk=4)

    print("KERNEL_OK")
</pallas_src>

<mosaic_0001>
module attributes {stable_mosaic.version = 11 : i64} {
  func.func @_lstm_chunk_kernel(%arg0: i32, %arg1: i32, %arg2: memref<64x256xf32, #tpu.memory_space<vmem>>, %arg3: memref<1x256x512xf32, #tpu.memory_space<vmem>>, %arg4: memref<1x128x512xf32, #tpu.memory_space<vmem>>, %arg5: memref<1x1x512xf32, #tpu.memory_space<vmem>>, %arg6: memref<64x128xf32, #tpu.memory_space<vmem>>, %arg7: memref<8x128xf32, #tpu.memory_space<vmem>>, %arg8: memref<8x128xf32, #tpu.memory_space<vmem>>, %arg9: memref<64x512xf32, #tpu.memory_space<vmem>>) attributes {dimension_semantics = [#tpu.dimension_semantics<parallel>, #tpu.dimension_semantics<arbitrary>], iteration_bounds = array<i64: 2, 1>, scalar_prefetch = 0 : i64, scratch_operands = 3 : i64, tpu.core_type = #tpu.core_type<tc>, window_params = [{transform_indices = @transform_0, window_bounds = array<i64: 64, 256>}, {pipeline_mode = #tpu.pipeline_mode<synchronous>, transform_indices = @transform_1, window_bounds = array<i64: 1, 256, 512>}, {pipeline_mode = #tpu.pipeline_mode<synchronous>, transform_indices = @transform_2, window_bounds = array<i64: 1, 128, 512>}, {pipeline_mode = #tpu.pipeline_mode<synchronous>, transform_indices = @transform_3, window_bounds = array<i64: 1, 1, 512>}, {transform_indices = @transform_4, window_bounds = array<i64: 64, 128>}]} {
    %c0_i32 = arith.constant 0 : i32
    %0 = arith.cmpi eq, %arg1, %c0_i32 : i32
    %1 = arith.extui %0 : i1 to i32
    %c0_i32_0 = arith.constant 0 : i32
    %2 = arith.cmpi ne, %1, %c0_i32_0 : i32
    scf.if %2 {
      %cst_86 = arith.constant 0.000000e+00 : f32
      %243 = vector.broadcast %cst_86 : f32 to vector<8x128xf32>
      %c0_87 = arith.constant 0 : index
      %c0_88 = arith.constant 0 : index
      %244 = vector.load %arg7[%c0_87, %c0_88] : memref<8x128xf32, #tpu.memory_space<vmem>>, vector<8x128xf32>
      tpu.vector_store %arg7[%c0_87, %c0_88], %243 {strides = array<i32>} : memref<8x128xf32, #tpu.memory_space<vmem>>, vector<8x128xf32>,
      %cst_89 = arith.constant 0.000000e+00 : f32
      %245 = vector.broadcast %cst_89 : f32 to vector<8x128xf32>
      %c0_90 = arith.constant 0 : index
      %c0_91 = arith.constant 0 : index
      %246 = vector.load %arg8[%c0_90, %c0_91] : memref<8x128xf32, #tpu.memory_space<vmem>>, vector<8x128xf32>
      tpu.vector_store %arg8[%c0_90, %c0_91], %245 {strides = array<i32>} : memref<8x128xf32, #tpu.memory_space<vmem>>, vector<8x128xf32>,
    } else {
    }
    %c0 = arith.constant 0 : index
    %c0_1 = arith.constant 0 : index
    %3 = vector.load %arg2[%c0, %c0_1] : memref<64x256xf32, #tpu.memory_space<vmem>>, vector<64x256xf32>
    %c0_2 = arith.constant 0 : index
    %c0_3 = arith.constant 0 : index
    %c0_4 = arith.constant 0 : index
    %4 = vector.load %arg3[%c0_2, %c0_3, %c0_4] : memref<1x256x512xf32, #tpu.memory_space<vmem>>, vector<1x256x512xf32>
    %5 = vector.shape_cast %4 : vector<1x256x512xf32> to vector<256x512xf32>
    %cst = arith.constant dense<0.000000e+00> : vector<64x512xf32>
    %6 = tpu.matmul %3, %5, %cst {dimension_numbers = #tpu.dot_dimension_numbers<[1], [0], [0], [1], [0, 0, 1, 1], [], []>} : vector<64x256xf32>, vector<256x512xf32>, vector<64x512xf32> -> vector<64x512xf32>
    %c0_5 = arith.constant 0 : index
    %c0_6 = arith.constant 0 : index
    %c0_7 = arith.constant 0 : index
    %7 = vector.load %arg5[%c0_5, %c0_6, %c0_7] : memref<1x1x512xf32, #tpu.memory_space<vmem>>, vector<1x1x512xf32>
    %8 = vector.shape_cast %7 : vector<1x1x512xf32> to vector<1x512xf32>
    %9 = vector.broadcast %8 : vector<1x512xf32> to vector<64x512xf32>
    %10 = arith.addf %6, %9 : vector<64x512xf32>
    %c0_8 = arith.constant 0 : index
    %c0_9 = arith.constant 0 : index
    %11 = vector.load %arg9[%c0_8, %c0_9] : memref<64x512xf32, #tpu.memory_space<vmem>>, vector<64x512xf32>
    tpu.vector_store %arg9[%c0_8, %c0_9], %10 {strides = array<i32>} : memref<64x512xf32, #tpu.memory_space<vmem>>, vector<64x512xf32>,
    %c7_i32 = arith.constant 7 : i32
    %12 = arith.muli %arg0, %c7_i32 : i32
    %c2_i32 = arith.constant 2 : i32
    %13 = arith.muli %c2_i32, %arg0 : i32
    %c1_i32 = arith.constant 1 : i32
    %14 = arith.subi %c1_i32, %13 : i32
    %c0_10 = arith.constant 0 : index
    %c0_11 = arith.constant 0 : index
    %15 = vector.load %arg7[%c0_10, %c0_11] : memref<8x128xf32, #tpu.memory_space<vmem>>, vector<8x128xf32>
    %c0_12 = arith.constant 0 : index
    %c0_13 = arith.constant 0 : index
    %16 = vector.load %arg8[%c0_12, %c0_13] : memref<8x128xf32, #tpu.memory_space<vmem>>, vector<8x128xf32>
    %c0_i32_14 = arith.constant 0 : i32
    %17 = arith.muli %14, %c0_i32_14 : i32
    %18 = arith.addi %12, %17 : i32
    %c8_i32 = arith.constant 8 : i32
    %19 = arith.muli %18, %c8_i32 : i32
    %20 = tpu.assume_multiple %19, 8 : i32
    %21 = arith.index_cast %20 : i32 to index
    %c0_15 = arith.constant 0 : index
    %22 = vector.load %arg9[%21, %c0_15] : memref<64x512xf32, #tpu.memory_space<vmem>>, vector<8x512xf32>
    %c0_16 = arith.constant 0 : index
    %c0_17 = arith.constant 0 : index
    %c0_18 = arith.constant 0 : index
    %23 = vector.load %arg4[%c0_16, %c0_17, %c0_18] : memref<1x128x512xf32, #tpu.memory_space<vmem>>, vector<1x128x512xf32>
    %24 = vector.shape_cast %23 : vector<1x128x512xf32> to vector<128x512xf32>
    %cst_19 = arith.constant dense<0.000000e+00> : vector<8x512xf32>
    %25 = tpu.matmul %15, %24, %cst_19 {dimension_numbers = #tpu.dot_dimension_numbers<[1], [0], [0], [1], [0, 0, 1, 1], [], []>} : vector<8x128xf32>, vector<128x512xf32>, vector<8x512xf32> -> vector<8x512xf32>
    %26 = arith.addf %22, %25 : vector<8x512xf32>
    %27 = vector.extract_strided_slice %26 {offsets = [0, 0], sizes = [8, 384], strides = [1, 1]} : vector<8x512xf32> to vector<8x384xf32>
    %28 = arith.negf %27 : vector<8x384xf32>
    %29 = math.exp %28 : vector<8x384xf32>
    %cst_20 = arith.constant 1.000000e+00 : f32
    %30 = vector.broadcast %cst_20 : f32 to vector<8x384xf32>
    %31 = arith.addf %30, %29 : vector<8x384xf32>
    %32 = arith.divf %30, %31 : vector<8x384xf32>
    %33 = vector.extract_strided_slice %32 {offsets = [0, 0], sizes = [8, 128], strides = [1, 1]} : vector<8x384xf32> to vector<8x128xf32>
    %34 = vector.extract_strided_slice %32 {offsets = [0, 128], sizes = [8, 128], strides = [1, 1]} : vector<8x384xf32> to vector<8x128xf32>
    %35 = vector.extract_strided_slice %32 {offsets = [0, 256], sizes = [8, 128], strides = [1, 1]} : vector<8x384xf32> to vector<8x128xf32>
    %36 = vector.extract_strided_slice %26 {offsets = [0, 384], sizes = [8, 128], strides = [1, 1]} : vector<8x512xf32> to vector<8x128xf32>
    %37 = math.tanh %36 : vector<8x128xf32>
    %38 = arith.mulf %34, %16 : vector<8x128xf32>
    %39 = arith.mulf %33, %37 : vector<8x128xf32>
    %40 = arith.addf %38, %39 : vector<8x128xf32>
    %41 = math.tanh %40 : vector<8x128xf32>
    %42 = arith.mulf %35, %41 : vector<8x128xf32>
    %43 = arith.index_cast %20 : i32 to index
    %c0_21 = arith.constant 0 : index
    %44 = vector.load %arg6[%43, %c0_21] : memref<64x128xf32, #tpu.memory_space<vmem>>, vector<8x128xf32>
    tpu.vector_store %arg6[%43, %c0_21], %42 {strides = array<i32>} : memref<64x128xf32, #tpu.memory_space<vmem>>, vector<8x128xf32>,
    %c1_i32_22 = arith.constant 1 : i32
    %45 = arith.muli %14, %c1_i32_22 : i32
    %46 = arith.addi %12, %45 : i32
    %c8_i32_23 = arith.constant 8 : i32
    %47 = arith.muli %46, %c8_i32_23 : i32
    %48 = tpu.assume_multiple %47, 8 : i32
    %49 = arith.index_cast %48 : i32 to index
    %c0_24 = arith.constant 0 : index
    %50 = vector.load %arg9[%49, %c0_24] : memref<64x512xf32, #tpu.memory_space<vmem>>, vector<8x512xf32>
    %c0_25 = arith.constant 0 : index
    %c0_26 = arith.constant 0 : index
    %c0_27 = arith.constant 0 : index
    %51 = vector.load %arg4[%c0_25, %c0_26, %c0_27] : memref<1x128x512xf32, #tpu.memory_space<vmem>>, vector<1x128x512xf32>
    %52 = vector.shape_cast %51 : vector<1x128x512xf32> to vector<128x512xf32>
    %cst_28 = arith.constant dense<0.000000e+00> : vector<8x512xf32>
    %53 = tpu.matmul %42, %52, %cst_28 {dimension_numbers = #tpu.dot_dimension_numbers<[1], [0], [0], [1], [0, 0, 1, 1], [], []>} : vector<8x128xf32>, vector<128x512xf32>, vector<8x512xf32> -> vector<8x512xf32>
    %54 = arith.addf %50, %53 : vector<8x512xf32>
    %55 = vector.extract_strided_slice %54 {offsets = [0, 0], sizes = [8, 384], strides = [1, 1]} : vector<8x512xf32> to vector<8x384xf32>
    %56 = arith.negf %55 : vector<8x384xf32>
    %57 = math.exp %56 : vector<8x384xf32>
    %cst_29 = arith.constant 1.000000e+00 : f32
    %58 = vector.broadcast %cst_29 : f32 to vector<8x384xf32>
    %59 = arith.addf %58, %57 : vector<8x384xf32>
    %60 = arith.divf %58, %59 : vector<8x384xf32>
    %61 = vector.extract_strided_slice %60 {offsets = [0, 0], sizes = [8, 128], strides = [1, 1]} : vector<8x384xf32> to vector<8x128xf32>
    %62 = vector.extract_strided_slice %60 {offsets = [0, 128], sizes = [8, 128], strides = [1, 1]} : vector<8x384xf32> to vector<8x128xf32>
    %63 = vector.extract_strided_slice %60 {offsets = [0, 256], sizes = [8, 128], strides = [1, 1]} : vector<8x384xf32> to vector<8x128xf32>
    %64 = vector.extract_strided_slice %54 {offsets = [0, 384], sizes = [8, 128], strides = [1, 1]} : vector<8x512xf32> to vector<8x128xf32>
    %65 = math.tanh %64 : vector<8x128xf32>
    %66 = arith.mulf %62, %40 : vector<8x128xf32>
    %67 = arith.mulf %61, %65 : vector<8x128xf32>
    %68 = arith.addf %66, %67 : vector<8x128xf32>
    %69 = math.tanh %68 : vector<8x128xf32>
    %70 = arith.mulf %63, %69 : vector<8x128xf32>
    %71 = arith.index_cast %48 : i32 to index
    %c0_30 = arith.constant 0 : index
    %72 = vector.load %arg6[%71, %c0_30] : memref<64x128xf32, #tpu.memory_space<vmem>>, vector<8x128xf32>
    tpu.vector_store %arg6[%71, %c0_30], %70 {strides = array<i32>} : memref<64x128xf32, #tpu.memory_space<vmem>>, vector<8x128xf32>,
    %c2_i32_31 = arith.constant 2 : i32
    %73 = arith.muli %14, %c2_i32_31 : i32
    %74 = arith.addi %12, %73 : i32
    %c8_i32_32 = arith.constant 8 : i32
    %75 = arith.muli %74, %c8_i32_32 : i32
    %76 = tpu.assume_multiple %75, 8 : i32
    %77 = arith.index_cast %76 : i32 to index
    %c0_33 = arith.constant 0 : index
    %78 = vector.load %arg9[%77, %c0_33] : memref<64x512xf32, #tpu.memory_space<vmem>>, vector<8x512xf32>
    %c0_34 = arith.constant 0 : index
    %c0_35 = arith.constant 0 : index
    %c0_36 = arith.constant 0 : index
    %79 = vector.load %arg4[%c0_34, %c0_35, %c0_36] : memref<1x128x512xf32, #tpu.memory_space<vmem>>, vector<1x128x512xf32>
    %80 = vector.shape_cast %79 : vector<1x128x512xf32> to vector<128x512xf32>
    %cst_37 = arith.constant dense<0.000000e+00> : vector<8x512xf32>
    %81 = tpu.matmul %70, %80, %cst_37 {dimension_numbers = #tpu.dot_dimension_numbers<[1], [0], [0], [1], [0, 0, 1, 1], [], []>} : vector<8x128xf32>, vector<128x512xf32>, vector<8x512xf32> -> vector<8x512xf32>
    %82 = arith.addf %78, %81 : vector<8x512xf32>
    %83 = vector.extract_strided_slice %82 {offsets = [0, 0], sizes = [8, 384], strides = [1, 1]} : vector<8x512xf32> to vector<8x384xf32>
    %84 = arith.negf %83 : vector<8x384xf32>
    %85 = math.exp %84 : vector<8x384xf32>
    %cst_38 = arith.constant 1.000000e+00 : f32
    %86 = vector.broadcast %cst_38 : f32 to vector<8x384xf32>
    %87 = arith.addf %86, %85 : vector<8x384xf32>
    %88 = arith.divf %86, %87 : vector<8x384xf32>
    %89 = vector.extract_strided_slice %88 {offsets = [0, 0], sizes = [8, 128], strides = [1, 1]} : vector<8x384xf32> to vector<8x128xf32>
    %90 = vector.extract_strided_slice %88 {offsets = [0, 128], sizes = [8, 128], strides = [1, 1]} : vector<8x384xf32> to vector<8x128xf32>
    %91 = vector.extract_strided_slice %88 {offsets = [0, 256], sizes = [8, 128], strides = [1, 1]} : vector<8x384xf32> to vector<8x128xf32>
    %92 = vector.extract_strided_slice %82 {offsets = [0, 384], sizes = [8, 128], strides = [1, 1]} : vector<8x512xf32> to vector<8x128xf32>
    %93 = math.tanh %92 : vector<8x128xf32>
    %94 = arith.mulf %90, %68 : vector<8x128xf32>
    %95 = arith.mulf %89, %93 : vector<8x128xf32>
    %96 = arith.addf %94, %95 : vector<8x128xf32>
    %97 = math.tanh %96 : vector<8x128xf32>
    %98 = arith.mulf %91, %97 : vector<8x128xf32>
    %99 = arith.index_cast %76 : i32 to index
    %c0_39 = arith.constant 0 : index
    %100 = vector.load %arg6[%99, %c0_39] : memref<64x128xf32, #tpu.memory_space<vmem>>, vector<8x128xf32>
    tpu.vector_store %arg6[%99, %c0_39], %98 {strides = array<i32>} : memref<64x128xf32, #tpu.memory_space<vmem>>, vector<8x128xf32>,
    %c3_i32 = arith.constant 3 : i32
    %101 = arith.muli %14, %c3_i32 : i32
    %102 = arith.addi %12, %101 : i32
    %c8_i32_40 = arith.constant 8 : i32
    %103 = arith.muli %102, %c8_i32_40 : i32
    %104 = tpu.assume_multiple %103, 8 : i32
    %105 = arith.index_cast %104 : i32 to index
    %c0_41 = arith.constant 0 : index
    %106 = vector.load %arg9[%105, %c0_41] : memref<64x512xf32, #tpu.memory_space<vmem>>, vector<8x512xf32>
    %c0_42 = arith.constant 0 : index
    %c0_43 = arith.constant 0 : index
    %c0_44 = arith.constant 0 : index
    %107 = vector.load %arg4[%c0_42, %c0_43, %c0_44] : memref<1x128x512xf32, #tpu.memory_space<vmem>>, vector<1x128x512xf32>
    %108 = vector.shape_cast %107 : vector<1x128x512xf32> to vector<128x512xf32>
    %cst_45 = arith.constant dense<0.000000e+00> : vector<8x512xf32>
    %109 = tpu.matmul %98, %108, %cst_45 {dimension_numbers = #tpu.dot_dimension_numbers<[1], [0], [0], [1], [0, 0, 1, 1], [], []>} : vector<8x128xf32>, vector<128x512xf32>, vector<8x512xf32> -> vector<8x512xf32>
    %110 = arith.addf %106, %109 : vector<8x512xf32>
    %111 = vector.extract_strided_slice %110 {offsets = [0, 0], sizes = [8, 384], strides = [1, 1]} : vector<8x512xf32> to vector<8x384xf32>
    %112 = arith.negf %111 : vector<8x384xf32>
    %113 = math.exp %112 : vector<8x384xf32>
    %cst_46 = arith.constant 1.000000e+00 : f32
    %114 = vector.broadcast %cst_46 : f32 to vector<8x384xf32>
    %115 = arith.addf %114, %113 : vector<8x384xf32>
    %116 = arith.divf %114, %115 : vector<8x384xf32>
    %117 = vector.extract_strided_slice %116 {offsets = [0, 0], sizes = [8, 128], strides = [1, 1]} : vector<8x384xf32> to vector<8x128xf32>
    %118 = vector.extract_strided_slice %116 {offsets = [0, 128], sizes = [8, 128], strides = [1, 1]} : vector<8x384xf32> to vector<8x128xf32>
    %119 = vector.extract_strided_slice %116 {offsets = [0, 256], sizes = [8, 128], strides = [1, 1]} : vector<8x384xf32> to vector<8x128xf32>
    %120 = vector.extract_strided_slice %110 {offsets = [0, 384], sizes = [8, 128], strides = [1, 1]} : vector<8x512xf32> to vector<8x128xf32>
    %121 = math.tanh %120 : vector<8x128xf32>
    %122 = arith.mulf %118, %96 : vector<8x128xf32>
    %123 = arith.mulf %117, %121 : vector<8x128xf32>
    %124 = arith.addf %122, %123 : vector<8x128xf32>
    %125 = math.tanh %124 : vector<8x128xf32>
    %126 = arith.mulf %119, %125 : vector<8x128xf32>
    %127 = arith.index_cast %104 : i32 to index
    %c0_47 = arith.constant 0 : index
    %128 = vector.load %arg6[%127, %c0_47] : memref<64x128xf32, #tpu.memory_space<vmem>>, vector<8x128xf32>
    tpu.vector_store %arg6[%127, %c0_47], %126 {strides = array<i32>} : memref<64x128xf32, #tpu.memory_space<vmem>>, vector<8x128xf32>,
    %c4_i32 = arith.constant 4 : i32
    %129 = arith.muli %14, %c4_i32 : i32
    %130 = arith.addi %12, %129 : i32
    %c8_i32_48 = arith.constant 8 : i32
    %131 = arith.muli %130, %c8_i32_48 : i32
    %132 = tpu.assume_multiple %131, 8 : i32
    %133 = arith.index_cast %132 : i32 to index
    %c0_49 = arith.constant 0 : index
    %134 = vector.load %arg9[%133, %c0_49] : memref<64x512xf32, #tpu.memory_space<vmem>>, vector<8x512xf32>
    %c0_50 = arith.constant 0 : index
    %c0_51 = arith.constant 0 : index
    %c0_52 = arith.constant 0 : index
    %135 = vector.load %arg4[%c0_50, %c0_51, %c0_52] : memref<1x128x512xf32, #tpu.memory_space<vmem>>, vector<1x128x512xf32>
    %136 = vector.shape_cast %135 : vector<1x128x512xf32> to vector<128x512xf32>
    %cst_53 = arith.constant dense<0.000000e+00> : vector<8x512xf32>
    %137 = tpu.matmul %126, %136, %cst_53 {dimension_numbers = #tpu.dot_dimension_numbers<[1], [0], [0], [1], [0, 0, 1, 1], [], []>} : vector<8x128xf32>, vector<128x512xf32>, vector<8x512xf32> -> vector<8x512xf32>
    %138 = arith.addf %134, %137 : vector<8x512xf32>
    %139 = vector.extract_strided_slice %138 {offsets = [0, 0], sizes = [8, 384], strides = [1, 1]} : vector<8x512xf32> to vector<8x384xf32>
    %140 = arith.negf %139 : vector<8x384xf32>
    %141 = math.exp %140 : vector<8x384xf32>
    %cst_54 = arith.constant 1.000000e+00 : f32
    %142 = vector.broadcast %cst_54 : f32 to vector<8x384xf32>
    %143 = arith.addf %142, %141 : vector<8x384xf32>
    %144 = arith.divf %142, %143 : vector<8x384xf32>
    %145 = vector.extract_strided_slice %144 {offsets = [0, 0], sizes = [8, 128], strides = [1, 1]} : vector<8x384xf32> to vector<8x128xf32>
    %146 = vector.extract_strided_slice %144 {offsets = [0, 128], sizes = [8, 128], strides = [1, 1]} : vector<8x384xf32> to vector<8x128xf32>
    %147 = vector.extract_strided_slice %144 {offsets = [0, 256], sizes = [8, 128], strides = [1, 1]} : vector<8x384xf32> to vector<8x128xf32>
    %148 = vector.extract_strided_slice %138 {offsets = [0, 384], sizes = [8, 128], strides = [1, 1]} : vector<8x512xf32> to vector<8x128xf32>
    %149 = math.tanh %148 : vector<8x128xf32>
    %150 = arith.mulf %146, %124 : vector<8x128xf32>
    %151 = arith.mulf %145, %149 : vector<8x128xf32>
    %152 = arith.addf %150, %151 : vector<8x128xf32>
    %153 = math.tanh %152 : vector<8x128xf32>
    %154 = arith.mulf %147, %153 : vector<8x128xf32>
    %155 = arith.index_cast %132 : i32 to index
    %c0_55 = arith.constant 0 : index
    %156 = vector.load %arg6[%155, %c0_55] : memref<64x128xf32, #tpu.memory_space<vmem>>, vector<8x128xf32>
    tpu.vector_store %arg6[%155, %c0_55], %154 {strides = array<i32>} : memref<64x128xf32, #tpu.memory_space<vmem>>, vector<8x128xf32>,
    %c5_i32 = arith.constant 5 : i32
    %157 = arith.muli %14, %c5_i32 : i32
    %158 = arith.addi %12, %157 : i32
    %c8_i32_56 = arith.constant 8 : i32
    %159 = arith.muli %158, %c8_i32_56 : i32
    %160 = tpu.assume_multiple %159, 8 : i32
    %161 = arith.index_cast %160 : i32 to index
    %c0_57 = arith.constant 0 : index
    %162 = vector.load %arg9[%161, %c0_57] : memref<64x512xf32, #tpu.memory_space<vmem>>, vector<8x512xf32>
    %c0_58 = arith.constant 0 : index
    %c0_59 = arith.constant 0 : index
    %c0_60 = arith.constant 0 : index
    %163 = vector.load %arg4[%c0_58, %c0_59, %c0_60] : memref<1x128x512xf32, #tpu.memory_space<vmem>>, vector<1x128x512xf32>
    %164 = vector.shape_cast %163 : vector<1x128x512xf32> to vector<128x512xf32>
    %cst_61 = arith.constant dense<0.000000e+00> : vector<8x512xf32>
    %165 = tpu.matmul %154, %164, %cst_61 {dimension_numbers = #tpu.dot_dimension_numbers<[1], [0], [0], [1], [0, 0, 1, 1], [], []>} : vector<8x128xf32>, vector<128x512xf32>, vector<8x512xf32> -> vector<8x512xf32>
    %166 = arith.addf %162, %165 : vector<8x512xf32>
    %167 = vector.extract_strided_slice %166 {offsets = [0, 0], sizes = [8, 384], strides = [1, 1]} : vector<8x512xf32> to vector<8x384xf32>
    %168 = arith.negf %167 : vector<8x384xf32>
    %169 = math.exp %168 : vector<8x384xf32>
    %cst_62 = arith.constant 1.000000e+00 : f32
    %170 = vector.broadcast %cst_62 : f32 to vector<8x384xf32>
    %171 = arith.addf %170, %169 : vector<8x384xf32>
    %172 = arith.divf %170, %171 : vector<8x384xf32>
    %173 = vector.extract_strided_slice %172 {offsets = [0, 0], sizes = [8, 128], strides = [1, 1]} : vector<8x384xf32> to vector<8x128xf32>
    %174 = vector.extract_strided_slice %172 {offsets = [0, 128], sizes = [8, 128], strides = [1, 1]} : vector<8x384xf32> to vector<8x128xf32>
    %175 = vector.extract_strided_slice %172 {offsets = [0, 256], sizes = [8, 128], strides = [1, 1]} : vector<8x384xf32> to vector<8x128xf32>
    %176 = vector.extract_strided_slice %166 {offsets = [0, 384], sizes = [8, 128], strides = [1, 1]} : vector<8x512xf32> to vector<8x128xf32>
    %177 = math.tanh %176 : vector<8x128xf32>
    %178 = arith.mulf %174, %152 : vector<8x128xf32>
    %179 = arith.mulf %173, %177 : vector<8x128xf32>
    %180 = arith.addf %178, %179 : vector<8x128xf32>
    %181 = math.tanh %180 : vector<8x128xf32>
    %182 = arith.mulf %175, %181 : vector<8x128xf32>
    %183 = arith.index_cast %160 : i32 to index
    %c0_63 = arith.constant 0 : index
    %184 = vector.load %arg6[%183, %c0_63] : memref<64x128xf32, #tpu.memory_space<vmem>>, vector<8x128xf32>
    tpu.vector_store %arg6[%183, %c0_63], %182 {strides = array<i32>} : memref<64x128xf32, #tpu.memory_space<vmem>>, vector<8x128xf32>,
    %c6_i32 = arith.constant 6 : i32
    %185 = arith.muli %14, %c6_i32 : i32
    %186 = arith.addi %12, %185 : i32
    %c8_i32_64 = arith.constant 8 : i32
    %187 = arith.muli %186, %c8_i32_64 : i32
    %188 = tpu.assume_multiple %187, 8 : i32
    %189 = arith.index_cast %188 : i32 to index
    %c0_65 = arith.constant 0 : index
    %190 = vector.load %arg9[%189, %c0_65] : memref<64x512xf32, #tpu.memory_space<vmem>>, vector<8x512xf32>
    %c0_66 = arith.constant 0 : index
    %c0_67 = arith.constant 0 : index
    %c0_68 = arith.constant 0 : index
    %191 = vector.load %arg4[%c0_66, %c0_67, %c0_68] : memref<1x128x512xf32, #tpu.memory_space<vmem>>, vector<1x128x512xf32>
    %192 = vector.shape_cast %191 : vector<1x128x512xf32> to vector<128x512xf32>
    %cst_69 = arith.constant dense<0.000000e+00> : vector<8x512xf32>
    %193 = tpu.matmul %182, %192, %cst_69 {dimension_numbers = #tpu.dot_dimension_numbers<[1], [0], [0], [1], [0, 0, 1, 1], [], []>} : vector<8x128xf32>, vector<128x512xf32>, vector<8x512xf32> -> vector<8x512xf32>
    %194 = arith.addf %190, %193 : vector<8x512xf32>
    %195 = vector.extract_strided_slice %194 {offsets = [0, 0], sizes = [8, 384], strides = [1, 1]} : vector<8x512xf32> to vector<8x384xf32>
    %196 = arith.negf %195 : vector<8x384xf32>
    %197 = math.exp %196 : vector<8x384xf32>
    %cst_70 = arith.constant 1.000000e+00 : f32
    %198 = vector.broadcast %cst_70 : f32 to vector<8x384xf32>
    %199 = arith.addf %198, %197 : vector<8x384xf32>
    %200 = arith.divf %198, %199 : vector<8x384xf32>
    %201 = vector.extract_strided_slice %200 {offsets = [0, 0], sizes = [8, 128], strides = [1, 1]} : vector<8x384xf32> to vector<8x128xf32>
    %202 = vector.extract_strided_slice %200 {offsets = [0, 128], sizes = [8, 128], strides = [1, 1]} : vector<8x384xf32> to vector<8x128xf32>
    %203 = vector.extract_strided_slice %200 {offsets = [0, 256], sizes = [8, 128], strides = [1, 1]} : vector<8x384xf32> to vector<8x128xf32>
    %204 = vector.extract_strided_slice %194 {offsets = [0, 384], sizes = [8, 128], strides = [1, 1]} : vector<8x512xf32> to vector<8x128xf32>
    %205 = math.tanh %204 : vector<8x128xf32>
    %206 = arith.mulf %202, %180 : vector<8x128xf32>
    %207 = arith.mulf %201, %205 : vector<8x128xf32>
    %208 = arith.addf %206, %207 : vector<8x128xf32>
    %209 = math.tanh %208 : vector<8x128xf32>
    %210 = arith.mulf %203, %209 : vector<8x128xf32>
    %211 = arith.index_cast %188 : i32 to index
    %c0_71 = arith.constant 0 : index
    %212 = vector.load %arg6[%211, %c0_71] : memref<64x128xf32, #tpu.memory_space<vmem>>, vector<8x128xf32>
    tpu.vector_store %arg6[%211, %c0_71], %210 {strides = array<i32>} : memref<64x128xf32, #tpu.memory_space<vmem>>, vector<8x128xf32>,
    %c7_i32_72 = arith.constant 7 : i32
    %213 = arith.muli %14, %c7_i32_72 : i32
    %214 = arith.addi %12, %213 : i32
    %c8_i32_73 = arith.constant 8 : i32
    %215 = arith.muli %214, %c8_i32_73 : i32
    %216 = tpu.assume_multiple %215, 8 : i32
    %217 = arith.index_cast %216 : i32 to index
    %c0_74 = arith.constant 0 : index
    %218 = vector.load %arg9[%217, %c0_74] : memref<64x512xf32, #tpu.memory_space<vmem>>, vector<8x512xf32>
    %c0_75 = arith.constant 0 : index
    %c0_76 = arith.constant 0 : index
    %c0_77 = arith.constant 0 : index
    %219 = vector.load %arg4[%c0_75, %c0_76, %c0_77] : memref<1x128x512xf32, #tpu.memory_space<vmem>>, vector<1x128x512xf32>
    %220 = vector.shape_cast %219 : vector<1x128x512xf32> to vector<128x512xf32>
    %cst_78 = arith.constant dense<0.000000e+00> : vector<8x512xf32>
    %221 = tpu.matmul %210, %220, %cst_78 {dimension_numbers = #tpu.dot_dimension_numbers<[1], [0], [0], [1], [0, 0, 1, 1], [], []>} : vector<8x128xf32>, vector<128x512xf32>, vector<8x512xf32> -> vector<8x512xf32>
    %222 = arith.addf %218, %221 : vector<8x512xf32>
    %223 = vector.extract_strided_slice %222 {offsets = [0, 0], sizes = [8, 384], strides = [1, 1]} : vector<8x512xf32> to vector<8x384xf32>
    %224 = arith.negf %223 : vector<8x384xf32>
    %225 = math.exp %224 : vector<8x384xf32>
    %cst_79 = arith.constant 1.000000e+00 : f32
    %226 = vector.broadcast %cst_79 : f32 to vector<8x384xf32>
    %227 = arith.addf %226, %225 : vector<8x384xf32>
    %228 = arith.divf %226, %227 : vector<8x384xf32>
    %229 = vector.extract_strided_slice %228 {offsets = [0, 0], sizes = [8, 128], strides = [1, 1]} : vector<8x384xf32> to vector<8x128xf32>
    %230 = vector.extract_strided_slice %228 {offsets = [0, 128], sizes = [8, 128], strides = [1, 1]} : vector<8x384xf32> to vector<8x128xf32>
    %231 = vector.extract_strided_slice %228 {offsets = [0, 256], sizes = [8, 128], strides = [1, 1]} : vector<8x384xf32> to vector<8x128xf32>
    %232 = vector.extract_strided_slice %222 {offsets = [0, 384], sizes = [8, 128], strides = [1, 1]} : vector<8x512xf32> to vector<8x128xf32>
    %233 = math.tanh %232 : vector<8x128xf32>
    %234 = arith.mulf %230, %208 : vector<8x128xf32>
    %235 = arith.mulf %229, %233 : vector<8x128xf32>
    %236 = arith.addf %234, %235 : vector<8x128xf32>
    %237 = math.tanh %236 : vector<8x128xf32>
    %238 = arith.mulf %231, %237 : vector<8x128xf32>
    %239 = arith.index_cast %216 : i32 to index
    %c0_80 = arith.constant 0 : index
    %240 = vector.load %arg6[%239, %c0_80] : memref<64x128xf32, #tpu.memory_space<vmem>>, vector<8x128xf32>
    tpu.vector_store %arg6[%239, %c0_80], %238 {strides = array<i32>} : memref<64x128xf32, #tpu.memory_space<vmem>>, vector<8x128xf32>,
    %c8_i32_81 = arith.constant 8 : i32
    %c0_82 = arith.constant 0 : index
    %c0_83 = arith.constant 0 : index
    %241 = vector.load %arg7[%c0_82, %c0_83] : memref<8x128xf32, #tpu.memory_space<vmem>>, vector<8x128xf32>
    tpu.vector_store %arg7[%c0_82, %c0_83], %238 {strides = array<i32>} : memref<8x128xf32, #tpu.memory_space<vmem>>, vector<8x128xf32>,
    %c0_84 = arith.constant 0 : index
    %c0_85 = arith.constant 0 : index
    %242 = vector.load %arg8[%c0_84, %c0_85] : memref<8x128xf32, #tpu.memory_space<vmem>>, vector<8x128xf32>
    tpu.vector_store %arg8[%c0_84, %c0_85], %236 {strides = array<i32>} : memref<8x128xf32, #tpu.memory_space<vmem>>, vector<8x128xf32>,
    return
  }
  func.func @transform_0(%arg0: i32, %arg1: i32) -> (i32, i32) {
    %c0_i32 = arith.constant 0 : i32
    %0 = arith.muli %arg0, %c0_i32 : i32
    %c2_i32 = arith.constant 2 : i32
    %1 = arith.muli %c2_i32, %arg0 : i32
    %c1_i32 = arith.constant 1 : i32
    %2 = arith.subi %c1_i32, %1 : i32
    %3 = arith.muli %2, %arg1 : i32
    %4 = arith.addi %0, %3 : i32
    %c0_i32_0 = arith.constant 0 : i32
    %c0_i32_1 = arith.constant 0 : i32
    return %4, %c0_i32_0 : i32, i32
  }
  func.func @transform_1(%arg0: i32, %arg1: i32) -> (i32, i32, i32) {
    %c0_i32 = arith.constant 0 : i32
    %c0_i32_0 = arith.constant 0 : i32
    %c0_i32_1 = arith.constant 0 : i32
    return %arg0, %c0_i32, %c0_i32_0 : i32, i32, i32
  }
  func.func @transform_2(%arg0: i32, %arg1: i32) -> (i32, i32, i32) {
    %c0_i32 = arith.constant 0 : i32
    %c0_i32_0 = arith.constant 0 : i32
    %c0_i32_1 = arith.constant 0 : i32
    return %arg0, %c0_i32, %c0_i32_0 : i32, i32, i32
  }
  func.func @transform_3(%arg0: i32, %arg1: i32) -> (i32, i32, i32) {
    %c0_i32 = arith.constant 0 : i32
    %c0_i32_0 = arith.constant 0 : i32
    %c0_i32_1 = arith.constant 0 : i32
    return %arg0, %c0_i32, %c0_i32_0 : i32, i32, i32
  }
  func.func @transform_4(%arg0: i32, %arg1: i32) -> (i32, i32) {
    %c0_i32 = arith.constant 0 : i32
    %0 = arith.muli %arg0, %c0_i32 : i32
    %c2_i32 = arith.constant 2 : i32
    %1 = arith.muli %c2_i32, %arg0 : i32
    %c1_i32 = arith.constant 1 : i32
    %2 = arith.subi %c1_i32, %1 : i32
    %3 = arith.muli %2, %arg1 : i32
    %4 = arith.addi %0, %3 : i32
    %c0_i32_0 = arith.constant 0 : i32
    return %4, %arg0 : i32, i32
  }
}

module attributes {stable_mosaic.version = 11 : i64} {
  func.func @_lstm_chunk_kernel(%arg0: i32, %arg1: i32, %arg2: memref<64x32xf32, #tpu.memory_space<vmem>>, %arg3: memref<1x32x512xf32, #tpu.memory_space<vmem>>, %arg4: memref<1x128x512xf32, #tpu.memory_space<vmem>>, %arg5: memref<1x1x512xf32, #tpu.memory_space<vmem>>, %arg6: memref<64x128xf32, #tpu.memory_space<vmem>>, %arg7: memref<8x128xf32, #tpu.memory_space<vmem>>, %arg8: memref<8x128xf32, #tpu.memory_space<vmem>>, %arg9: memref<64x512xf32, #tpu.memory_space<vmem>>) attributes {dimension_semantics = [#tpu.dimension_semantics<parallel>, #tpu.dimension_semantics<arbitrary>], iteration_bounds = array<i64: 2, 1>, scalar_prefetch = 0 : i64, scratch_operands = 3 : i64, tpu.core_type = #tpu.core_type<tc>, window_params = [{transform_indices = @transform_0, window_bounds = array<i64: 64, 32>}, {pipeline_mode = #tpu.pipeline_mode<synchronous>, transform_indices = @transform_1, window_bounds = array<i64: 1, 32, 512>}, {pipeline_mode = #tpu.pipeline_mode<synchronous>, transform_indices = @transform_2, window_bounds = array<i64: 1, 128, 512>}, {pipeline_mode = #tpu.pipeline_mode<synchronous>, transform_indices = @transform_3, window_bounds = array<i64: 1, 1, 512>}, {transform_indices = @transform_4, window_bounds = array<i64: 64, 128>}]} {
    %c0_i32 = arith.constant 0 : i32
    %0 = arith.cmpi eq, %arg1, %c0_i32 : i32
    %1 = arith.extui %0 : i1 to i32
    %c0_i32_0 = arith.constant 0 : i32
    %2 = arith.cmpi ne, %1, %c0_i32_0 : i32
    scf.if %2 {
      %cst_86 = arith.constant 0.000000e+00 : f32
      %243 = vector.broadcast %cst_86 : f32 to vector<8x128xf32>
      %c0_87 = arith.constant 0 : index
      %c0_88 = arith.constant 0 : index
      %244 = vector.load %arg7[%c0_87, %c0_88] : memref<8x128xf32, #tpu.memory_space<vmem>>, vector<8x128xf32>
      tpu.vector_store %arg7[%c0_87, %c0_88], %243 {strides = array<i32>} : memref<8x128xf32, #tpu.memory_space<vmem>>, vector<8x128xf32>,
      %cst_89 = arith.constant 0.000000e+00 : f32
      %245 = vector.broadcast %cst_89 : f32 to vector<8x128xf32>
      %c0_90 = arith.constant 0 : index
      %c0_91 = arith.constant 0 : index
      %246 = vector.load %arg8[%c0_90, %c0_91] : memref<8x128xf32, #tpu.memory_space<vmem>>, vector<8x128xf32>
      tpu.vector_store %arg8[%c0_90, %c0_91], %245 {strides = array<i32>} : memref<8x128xf32, #tpu.memory_space<vmem>>, vector<8x128xf32>,
    } else {
    }
    %c0 = arith.constant 0 : index
    %c0_1 = arith.constant 0 : index
    %3 = vector.load %arg2[%c0, %c0_1] : memref<64x32xf32, #tpu.memory_space<vmem>>, vector<64x32xf32>
    %c0_2 = arith.constant 0 : index
    %c0_3 = arith.constant 0 : index
    %c0_4 = arith.constant 0 : index
    %4 = vector.load %arg3[%c0_2, %c0_3, %c0_4] : memref<1x32x512xf32, #tpu.memory_space<vmem>>, vector<1x32x512xf32>
    %5 = vector.shape_cast %4 : vector<1x32x512xf32> to vector<32x512xf32>
    %cst = arith.constant dense<0.000000e+00> : vector<64x512xf32>
    %6 = tpu.matmul %3, %5, %cst {dimension_numbers = #tpu.dot_dimension_numbers<[1], [0], [0], [1], [0, 0, 1, 1], [], []>} : vector<64x32xf32>, vector<32x512xf32>, vector<64x512xf32> -> vector<64x512xf32>
    %c0_5 = arith.constant 0 : index
    %c0_6 = arith.constant 0 : index
    %c0_7 = arith.constant 0 : index
    %7 = vector.load %arg5[%c0_5, %c0_6, %c0_7] : memref<1x1x512xf32, #tpu.memory_space<vmem>>, vector<1x1x512xf32>
    %8 = vector.shape_cast %7 : vector<1x1x512xf32> to vector<1x512xf32>
    %9 = vector.broadcast %8 : vector<1x512xf32> to vector<64x512xf32>
    %10 = arith.addf %6, %9 : vector<64x512xf32>
    %c0_8 = arith.constant 0 : index
    %c0_9 = arith.constant 0 : index
    %11 = vector.load %arg9[%c0_8, %c0_9] : memref<64x512xf32, #tpu.memory_space<vmem>>, vector<64x512xf32>
    tpu.vector_store %arg9[%c0_8, %c0_9], %10 {strides = array<i32>} : memref<64x512xf32, #tpu.memory_space<vmem>>, vector<64x512xf32>,
    %c7_i32 = arith.constant 7 : i32
    %12 = arith.muli %arg0, %c7_i32 : i32
    %c2_i32 = arith.constant 2 : i32
    %13 = arith.muli %c2_i32, %arg0 : i32
    %c1_i32 = arith.constant 1 : i32
    %14 = arith.subi %c1_i32, %13 : i32
    %c0_10 = arith.constant 0 : index
    %c0_11 = arith.constant 0 : index
    %15 = vector.load %arg7[%c0_10, %c0_11] : memref<8x128xf32, #tpu.memory_space<vmem>>, vector<8x128xf32>
    %c0_12 = arith.constant 0 : index
    %c0_13 = arith.constant 0 : index
    %16 = vector.load %arg8[%c0_12, %c0_13] : memref<8x128xf32, #tpu.memory_space<vmem>>, vector<8x128xf32>
    %c0_i32_14 = arith.constant 0 : i32
    %17 = arith.muli %14, %c0_i32_14 : i32
    %18 = arith.addi %12, %17 : i32
    %c8_i32 = arith.constant 8 : i32
    %19 = arith.muli %18, %c8_i32 : i32
    %20 = tpu.assume_multiple %19, 8 : i32
    %21 = arith.index_cast %20 : i32 to index
    %c0_15 = arith.constant 0 : index
    %22 = vector.load %arg9[%21, %c0_15] : memref<64x512xf32, #tpu.memory_space<vmem>>, vector<8x512xf32>
    %c0_16 = arith.constant 0 : index
    %c0_17 = arith.constant 0 : index
    %c0_18 = arith.constant 0 : index
    %23 = vector.load %arg4[%c0_16, %c0_17, %c0_18] : memref<1x128x512xf32, #tpu.memory_space<vmem>>, vector<1x128x512xf32>
    %24 = vector.shape_cast %23 : vector<1x128x512xf32> to vector<128x512xf32>
    %cst_19 = arith.constant dense<0.000000e+00> : vector<8x512xf32>
    %25 = tpu.matmul %15, %24, %cst_19 {dimension_numbers = #tpu.dot_dimension_numbers<[1], [0], [0], [1], [0, 0, 1, 1], [], []>} : vector<8x128xf32>, vector<128x512xf32>, vector<8x512xf32> -> vector<8x512xf32>
    %26 = arith.addf %22, %25 : vector<8x512xf32>
    %27 = vector.extract_strided_slice %26 {offsets = [0, 0], sizes = [8, 384], strides = [1, 1]} : vector<8x512xf32> to vector<8x384xf32>
    %28 = arith.negf %27 : vector<8x384xf32>
    %29 = math.exp %28 : vector<8x384xf32>
    %cst_20 = arith.constant 1.000000e+00 : f32
    %30 = vector.broadcast %cst_20 : f32 to vector<8x384xf32>
    %31 = arith.addf %30, %29 : vector<8x384xf32>
    %32 = arith.divf %30, %31 : vector<8x384xf32>
    %33 = vector.extract_strided_slice %32 {offsets = [0, 0], sizes = [8, 128], strides = [1, 1]} : vector<8x384xf32> to vector<8x128xf32>
    %34 = vector.extract_strided_slice %32 {offsets = [0, 128], sizes = [8, 128], strides = [1, 1]} : vector<8x384xf32> to vector<8x128xf32>
    %35 = vector.extract_strided_slice %32 {offsets = [0, 256], sizes = [8, 128], strides = [1, 1]} : vector<8x384xf32> to vector<8x128xf32>
    %36 = vector.extract_strided_slice %26 {offsets = [0, 384], sizes = [8, 128], strides = [1, 1]} : vector<8x512xf32> to vector<8x128xf32>
    %37 = math.tanh %36 : vector<8x128xf32>
    %38 = arith.mulf %34, %16 : vector<8x128xf32>
    %39 = arith.mulf %33, %37 : vector<8x128xf32>
    %40 = arith.addf %38, %39 : vector<8x128xf32>
    %41 = math.tanh %40 : vector<8x128xf32>
    %42 = arith.mulf %35, %41 : vector<8x128xf32>
    %43 = arith.index_cast %20 : i32 to index
    %c0_21 = arith.constant 0 : index
    %44 = vector.load %arg6[%43, %c0_21] : memref<64x128xf32, #tpu.memory_space<vmem>>, vector<8x128xf32>
    tpu.vector_store %arg6[%43, %c0_21], %42 {strides = array<i32>} : memref<64x128xf32, #tpu.memory_space<vmem>>, vector<8x128xf32>,
    %c1_i32_22 = arith.constant 1 : i32
    %45 = arith.muli %14, %c1_i32_22 : i32
    %46 = arith.addi %12, %45 : i32
    %c8_i32_23 = arith.constant 8 : i32
    %47 = arith.muli %46, %c8_i32_23 : i32
    %48 = tpu.assume_multiple %47, 8 : i32
    %49 = arith.index_cast %48 : i32 to index
    %c0_24 = arith.constant 0 : index
    %50 = vector.load %arg9[%49, %c0_24] : memref<64x512xf32, #tpu.memory_space<vmem>>, vector<8x512xf32>
    %c0_25 = arith.constant 0 : index
    %c0_26 = arith.constant 0 : index
    %c0_27 = arith.constant 0 : index
    %51 = vector.load %arg4[%c0_25, %c0_26, %c0_27] : memref<1x128x512xf32, #tpu.memory_space<vmem>>, vector<1x128x512xf32>
    %52 = vector.shape_cast %51 : vector<1x128x512xf32> to vector<128x512xf32>
    %cst_28 = arith.constant dense<0.000000e+00> : vector<8x512xf32>
    %53 = tpu.matmul %42, %52, %cst_28 {dimension_numbers = #tpu.dot_dimension_numbers<[1], [0], [0], [1], [0, 0, 1, 1], [], []>} : vector<8x128xf32>, vector<128x512xf32>, vector<8x512xf32> -> vector<8x512xf32>
    %54 = arith.addf %50, %53 : vector<8x512xf32>
    %55 = vector.extract_strided_slice %54 {offsets = [0, 0], sizes = [8, 384], strides = [1, 1]} : vector<8x512xf32> to vector<8x384xf32>
    %56 = arith.negf %55 : vector<8x384xf32>
    %57 = math.exp %56 : vector<8x384xf32>
    %cst_29 = arith.constant 1.000000e+00 : f32
    %58 = vector.broadcast %cst_29 : f32 to vector<8x384xf32>
    %59 = arith.addf %58, %57 : vector<8x384xf32>
    %60 = arith.divf %58, %59 : vector<8x384xf32>
    %61 = vector.extract_strided_slice %60 {offsets = [0, 0], sizes = [8, 128], strides = [1, 1]} : vector<8x384xf32> to vector<8x128xf32>
    %62 = vector.extract_strided_slice %60 {offsets = [0, 128], sizes = [8, 128], strides = [1, 1]} : vector<8x384xf32> to vector<8x128xf32>
    %63 = vector.extract_strided_slice %60 {offsets = [0, 256], sizes = [8, 128], strides = [1, 1]} : vector<8x384xf32> to vector<8x128xf32>
    %64 = vector.extract_strided_slice %54 {offsets = [0, 384], sizes = [8, 128], strides = [1, 1]} : vector<8x512xf32> to vector<8x128xf32>
    %65 = math.tanh %64 : vector<8x128xf32>
    %66 = arith.mulf %62, %40 : vector<8x128xf32>
    %67 = arith.mulf %61, %65 : vector<8x128xf32>
    %68 = arith.addf %66, %67 : vector<8x128xf32>
    %69 = math.tanh %68 : vector<8x128xf32>
    %70 = arith.mulf %63, %69 : vector<8x128xf32>
    %71 = arith.index_cast %48 : i32 to index
    %c0_30 = arith.constant 0 : index
    %72 = vector.load %arg6[%71, %c0_30] : memref<64x128xf32, #tpu.memory_space<vmem>>, vector<8x128xf32>
    tpu.vector_store %arg6[%71, %c0_30], %70 {strides = array<i32>} : memref<64x128xf32, #tpu.memory_space<vmem>>, vector<8x128xf32>,
    %c2_i32_31 = arith.constant 2 : i32
    %73 = arith.muli %14, %c2_i32_31 : i32
    %74 = arith.addi %12, %73 : i32
    %c8_i32_32 = arith.constant 8 : i32
    %75 = arith.muli %74, %c8_i32_32 : i32
    %76 = tpu.assume_multiple %75, 8 : i32
    %77 = arith.index_cast %76 : i32 to index
    %c0_33 = arith.constant 0 : index
    %78 = vector.load %arg9[%77, %c0_33] : memref<64x512xf32, #tpu.memory_space<vmem>>, vector<8x512xf32>
    %c0_34 = arith.constant 0 : index
    %c0_35 = arith.constant 0 : index
    %c0_36 = arith.constant 0 : index
    %79 = vector.load %arg4[%c0_34, %c0_35, %c0_36] : memref<1x128x512xf32, #tpu.memory_space<vmem>>, vector<1x128x512xf32>
    %80 = vector.shape_cast %79 : vector<1x128x512xf32> to vector<128x512xf32>
    %cst_37 = arith.constant dense<0.000000e+00> : vector<8x512xf32>
    %81 = tpu.matmul %70, %80, %cst_37 {dimension_numbers = #tpu.dot_dimension_numbers<[1], [0], [0], [1], [0, 0, 1, 1], [], []>} : vector<8x128xf32>, vector<128x512xf32>, vector<8x512xf32> -> vector<8x512xf32>
    %82 = arith.addf %78, %81 : vector<8x512xf32>
    %83 = vector.extract_strided_slice %82 {offsets = [0, 0], sizes = [8, 384], strides = [1, 1]} : vector<8x512xf32> to vector<8x384xf32>
    %84 = arith.negf %83 : vector<8x384xf32>
    %85 = math.exp %84 : vector<8x384xf32>
    %cst_38 = arith.constant 1.000000e+00 : f32
    %86 = vector.broadcast %cst_38 : f32 to vector<8x384xf32>
    %87 = arith.addf %86, %85 : vector<8x384xf32>
    %88 = arith.divf %86, %87 : vector<8x384xf32>
    %89 = vector.extract_strided_slice %88 {offsets = [0, 0], sizes = [8, 128], strides = [1, 1]} : vector<8x384xf32> to vector<8x128xf32>
    %90 = vector.extract_strided_slice %88 {offsets = [0, 128], sizes = [8, 128], strides = [1, 1]} : vector<8x384xf32> to vector<8x128xf32>
    %91 = vector.extract_strided_slice %88 {offsets = [0, 256], sizes = [8, 128], strides = [1, 1]} : vector<8x384xf32> to vector<8x128xf32>
    %92 = vector.extract_strided_slice %82 {offsets = [0, 384], sizes = [8, 128], strides = [1, 1]} : vector<8x512xf32> to vector<8x128xf32>
    %93 = math.tanh %92 : vector<8x128xf32>
    %94 = arith.mulf %90, %68 : vector<8x128xf32>
    %95 = arith.mulf %89, %93 : vector<8x128xf32>
    %96 = arith.addf %94, %95 : vector<8x128xf32>
    %97 = math.tanh %96 : vector<8x128xf32>
    %98 = arith.mulf %91, %97 : vector<8x128xf32>
    %99 = arith.index_cast %76 : i32 to index
    %c0_39 = arith.constant 0 : index
    %100 = vector.load %arg6[%99, %c0_39] : memref<64x128xf32, #tpu.memory_space<vmem>>, vector<8x128xf32>
    tpu.vector_store %arg6[%99, %c0_39], %98 {strides = array<i32>} : memref<64x128xf32, #tpu.memory_space<vmem>>, vector<8x128xf32>,
    %c3_i32 = arith.constant 3 : i32
    %101 = arith.muli %14, %c3_i32 : i32
    %102 = arith.addi %12, %101 : i32
    %c8_i32_40 = arith.constant 8 : i32
    %103 = arith.muli %102, %c8_i32_40 : i32
    %104 = tpu.assume_multiple %103, 8 : i32
    %105 = arith.index_cast %104 : i32 to index
    %c0_41 = arith.constant 0 : index
    %106 = vector.load %arg9[%105, %c0_41] : memref<64x512xf32, #tpu.memory_space<vmem>>, vector<8x512xf32>
    %c0_42 = arith.constant 0 : index
    %c0_43 = arith.constant 0 : index
    %c0_44 = arith.constant 0 : index
    %107 = vector.load %arg4[%c0_42, %c0_43, %c0_44] : memref<1x128x512xf32, #tpu.memory_space<vmem>>, vector<1x128x512xf32>
    %108 = vector.shape_cast %107 : vector<1x128x512xf32> to vector<128x512xf32>
    %cst_45 = arith.constant dense<0.000000e+00> : vector<8x512xf32>
    %109 = tpu.matmul %98, %108, %cst_45 {dimension_numbers = #tpu.dot_dimension_numbers<[1], [0], [0], [1], [0, 0, 1, 1], [], []>} : vector<8x128xf32>, vector<128x512xf32>, vector<8x512xf32> -> vector<8x512xf32>
    %110 = arith.addf %106, %109 : vector<8x512xf32>
    %111 = vector.extract_strided_slice %110 {offsets = [0, 0], sizes = [8, 384], strides = [1, 1]} : vector<8x512xf32> to vector<8x384xf32>
    %112 = arith.negf %111 : vector<8x384xf32>
    %113 = math.exp %112 : vector<8x384xf32>
    %cst_46 = arith.constant 1.000000e+00 : f32
    %114 = vector.broadcast %cst_46 : f32 to vector<8x384xf32>
    %115 = arith.addf %114, %113 : vector<8x384xf32>
    %116 = arith.divf %114, %115 : vector<8x384xf32>
    %117 = vector.extract_strided_slice %116 {offsets = [0, 0], sizes = [8, 128], strides = [1, 1]} : vector<8x384xf32> to vector<8x128xf32>
    %118 = vector.extract_strided_slice %116 {offsets = [0, 128], sizes = [8, 128], strides = [1, 1]} : vector<8x384xf32> to vector<8x128xf32>
    %119 = vector.extract_strided_slice %116 {offsets = [0, 256], sizes = [8, 128], strides = [1, 1]} : vector<8x384xf32> to vector<8x128xf32>
    %120 = vector.extract_strided_slice %110 {offsets = [0, 384], sizes = [8, 128], strides = [1, 1]} : vector<8x512xf32> to vector<8x128xf32>
    %121 = math.tanh %120 : vector<8x128xf32>
    %122 = arith.mulf %118, %96 : vector<8x128xf32>
    %123 = arith.mulf %117, %121 : vector<8x128xf32>
    %124 = arith.addf %122, %123 : vector<8x128xf32>
    %125 = math.tanh %124 : vector<8x128xf32>
    %126 = arith.mulf %119, %125 : vector<8x128xf32>
    %127 = arith.index_cast %104 : i32 to index
    %c0_47 = arith.constant 0 : index
    %128 = vector.load %arg6[%127, %c0_47] : memref<64x128xf32, #tpu.memory_space<vmem>>, vector<8x128xf32>
    tpu.vector_store %arg6[%127, %c0_47], %126 {strides = array<i32>} : memref<64x128xf32, #tpu.memory_space<vmem>>, vector<8x128xf32>,
    %c4_i32 = arith.constant 4 : i32
    %129 = arith.muli %14, %c4_i32 : i32
    %130 = arith.addi %12, %129 : i32
    %c8_i32_48 = arith.constant 8 : i32
    %131 = arith.muli %130, %c8_i32_48 : i32
    %132 = tpu.assume_multiple %131, 8 : i32
    %133 = arith.index_cast %132 : i32 to index
    %c0_49 = arith.constant 0 : index
    %134 = vector.load %arg9[%133, %c0_49] : memref<64x512xf32, #tpu.memory_space<vmem>>, vector<8x512xf32>
    %c0_50 = arith.constant 0 : index
    %c0_51 = arith.constant 0 : index
    %c0_52 = arith.constant 0 : index
    %135 = vector.load %arg4[%c0_50, %c0_51, %c0_52] : memref<1x128x512xf32, #tpu.memory_space<vmem>>, vector<1x128x512xf32>
    %136 = vector.shape_cast %135 : vector<1x128x512xf32> to vector<128x512xf32>
    %cst_53 = arith.constant dense<0.000000e+00> : vector<8x512xf32>
    %137 = tpu.matmul %126, %136, %cst_53 {dimension_numbers = #tpu.dot_dimension_numbers<[1], [0], [0], [1], [0, 0, 1, 1], [], []>} : vector<8x128xf32>, vector<128x512xf32>, vector<8x512xf32> -> vector<8x512xf32>
    %138 = arith.addf %134, %137 : vector<8x512xf32>
    %139 = vector.extract_strided_slice %138 {offsets = [0, 0], sizes = [8, 384], strides = [1, 1]} : vector<8x512xf32> to vector<8x384xf32>
    %140 = arith.negf %139 : vector<8x384xf32>
    %141 = math.exp %140 : vector<8x384xf32>
    %cst_54 = arith.constant 1.000000e+00 : f32
    %142 = vector.broadcast %cst_54 : f32 to vector<8x384xf32>
    %143 = arith.addf %142, %141 : vector<8x384xf32>
    %144 = arith.divf %142, %143 : vector<8x384xf32>
    %145 = vector.extract_strided_slice %144 {offsets = [0, 0], sizes = [8, 128], strides = [1, 1]} : vector<8x384xf32> to vector<8x128xf32>
    %146 = vector.extract_strided_slice %144 {offsets = [0, 128], sizes = [8, 128], strides = [1, 1]} : vector<8x384xf32> to vector<8x128xf32>
    %147 = vector.extract_strided_slice %144 {offsets = [0, 256], sizes = [8, 128], strides = [1, 1]} : vector<8x384xf32> to vector<8x128xf32>
    %148 = vector.extract_strided_slice %138 {offsets = [0, 384], sizes = [8, 128], strides = [1, 1]} : vector<8x512xf32> to vector<8x128xf32>
    %149 = math.tanh %148 : vector<8x128xf32>
    %150 = arith.mulf %146, %124 : vector<8x128xf32>
    %151 = arith.mulf %145, %149 : vector<8x128xf32>
    %152 = arith.addf %150, %151 : vector<8x128xf32>
    %153 = math.tanh %152 : vector<8x128xf32>
    %154 = arith.mulf %147, %153 : vector<8x128xf32>
    %155 = arith.index_cast %132 : i32 to index
    %c0_55 = arith.constant 0 : index
    %156 = vector.load %arg6[%155, %c0_55] : memref<64x128xf32, #tpu.memory_space<vmem>>, vector<8x128xf32>
    tpu.vector_store %arg6[%155, %c0_55], %154 {strides = array<i32>} : memref<64x128xf32, #tpu.memory_space<vmem>>, vector<8x128xf32>,
    %c5_i32 = arith.constant 5 : i32
    %157 = arith.muli %14, %c5_i32 : i32
    %158 = arith.addi %12, %157 : i32
    %c8_i32_56 = arith.constant 8 : i32
    %159 = arith.muli %158, %c8_i32_56 : i32
    %160 = tpu.assume_multiple %159, 8 : i32
    %161 = arith.index_cast %160 : i32 to index
    %c0_57 = arith.constant 0 : index
    %162 = vector.load %arg9[%161, %c0_57] : memref<64x512xf32, #tpu.memory_space<vmem>>, vector<8x512xf32>
    %c0_58 = arith.constant 0 : index
    %c0_59 = arith.constant 0 : index
    %c0_60 = arith.constant 0 : index
    %163 = vector.load %arg4[%c0_58, %c0_59, %c0_60] : memref<1x128x512xf32, #tpu.memory_space<vmem>>, vector<1x128x512xf32>
    %164 = vector.shape_cast %163 : vector<1x128x512xf32> to vector<128x512xf32>
    %cst_61 = arith.constant dense<0.000000e+00> : vector<8x512xf32>
    %165 = tpu.matmul %154, %164, %cst_61 {dimension_numbers = #tpu.dot_dimension_numbers<[1], [0], [0], [1], [0, 0, 1, 1], [], []>} : vector<8x128xf32>, vector<128x512xf32>, vector<8x512xf32> -> vector<8x512xf32>
    %166 = arith.addf %162, %165 : vector<8x512xf32>
    %167 = vector.extract_strided_slice %166 {offsets = [0, 0], sizes = [8, 384], strides = [1, 1]} : vector<8x512xf32> to vector<8x384xf32>
    %168 = arith.negf %167 : vector<8x384xf32>
    %169 = math.exp %168 : vector<8x384xf32>
    %cst_62 = arith.constant 1.000000e+00 : f32
    %170 = vector.broadcast %cst_62 : f32 to vector<8x384xf32>
    %171 = arith.addf %170, %169 : vector<8x384xf32>
    %172 = arith.divf %170, %171 : vector<8x384xf32>
    %173 = vector.extract_strided_slice %172 {offsets = [0, 0], sizes = [8, 128], strides = [1, 1]} : vector<8x384xf32> to vector<8x128xf32>
    %174 = vector.extract_strided_slice %172 {offsets = [0, 128], sizes = [8, 128], strides = [1, 1]} : vector<8x384xf32> to vector<8x128xf32>
    %175 = vector.extract_strided_slice %172 {offsets = [0, 256], sizes = [8, 128], strides = [1, 1]} : vector<8x384xf32> to vector<8x128xf32>
    %176 = vector.extract_strided_slice %166 {offsets = [0, 384], sizes = [8, 128], strides = [1, 1]} : vector<8x512xf32> to vector<8x128xf32>
    %177 = math.tanh %176 : vector<8x128xf32>
    %178 = arith.mulf %174, %152 : vector<8x128xf32>
    %179 = arith.mulf %173, %177 : vector<8x128xf32>
    %180 = arith.addf %178, %179 : vector<8x128xf32>
    %181 = math.tanh %180 : vector<8x128xf32>
    %182 = arith.mulf %175, %181 : vector<8x128xf32>
    %183 = arith.index_cast %160 : i32 to index
    %c0_63 = arith.constant 0 : index
    %184 = vector.load %arg6[%183, %c0_63] : memref<64x128xf32, #tpu.memory_space<vmem>>, vector<8x128xf32>
    tpu.vector_store %arg6[%183, %c0_63], %182 {strides = array<i32>} : memref<64x128xf32, #tpu.memory_space<vmem>>, vector<8x128xf32>,
    %c6_i32 = arith.constant 6 : i32
    %185 = arith.muli %14, %c6_i32 : i32
    %186 = arith.addi %12, %185 : i32
    %c8_i32_64 = arith.constant 8 : i32
    %187 = arith.muli %186, %c8_i32_64 : i32
    %188 = tpu.assume_multiple %187, 8 : i32
    %189 = arith.index_cast %188 : i32 to index
    %c0_65 = arith.constant 0 : index
    %190 = vector.load %arg9[%189, %c0_65] : memref<64x512xf32, #tpu.memory_space<vmem>>, vector<8x512xf32>
    %c0_66 = arith.constant 0 : index
    %c0_67 = arith.constant 0 : index
    %c0_68 = arith.constant 0 : index
    %191 = vector.load %arg4[%c0_66, %c0_67, %c0_68] : memref<1x128x512xf32, #tpu.memory_space<vmem>>, vector<1x128x512xf32>
    %192 = vector.shape_cast %191 : vector<1x128x512xf32> to vector<128x512xf32>
    %cst_69 = arith.constant dense<0.000000e+00> : vector<8x512xf32>
    %193 = tpu.matmul %182, %192, %cst_69 {dimension_numbers = #tpu.dot_dimension_numbers<[1], [0], [0], [1], [0, 0, 1, 1], [], []>} : vector<8x128xf32>, vector<128x512xf32>, vector<8x512xf32> -> vector<8x512xf32>
    %194 = arith.addf %190, %193 : vector<8x512xf32>
    %195 = vector.extract_strided_slice %194 {offsets = [0, 0], sizes = [8, 384], strides = [1, 1]} : vector<8x512xf32> to vector<8x384xf32>
    %196 = arith.negf %195 : vector<8x384xf32>
    %197 = math.exp %196 : vector<8x384xf32>
    %cst_70 = arith.constant 1.000000e+00 : f32
    %198 = vector.broadcast %cst_70 : f32 to vector<8x384xf32>
    %199 = arith.addf %198, %197 : vector<8x384xf32>
    %200 = arith.divf %198, %199 : vector<8x384xf32>
    %201 = vector.extract_strided_slice %200 {offsets = [0, 0], sizes = [8, 128], strides = [1, 1]} : vector<8x384xf32> to vector<8x128xf32>
    %202 = vector.extract_strided_slice %200 {offsets = [0, 128], sizes = [8, 128], strides = [1, 1]} : vector<8x384xf32> to vector<8x128xf32>
    %203 = vector.extract_strided_slice %200 {offsets = [0, 256], sizes = [8, 128], strides = [1, 1]} : vector<8x384xf32> to vector<8x128xf32>
    %204 = vector.extract_strided_slice %194 {offsets = [0, 384], sizes = [8, 128], strides = [1, 1]} : vector<8x512xf32> to vector<8x128xf32>
    %205 = math.tanh %204 : vector<8x128xf32>
    %206 = arith.mulf %202, %180 : vector<8x128xf32>
    %207 = arith.mulf %201, %205 : vector<8x128xf32>
    %208 = arith.addf %206, %207 : vector<8x128xf32>
    %209 = math.tanh %208 : vector<8x128xf32>
    %210 = arith.mulf %203, %209 : vector<8x128xf32>
    %211 = arith.index_cast %188 : i32 to index
    %c0_71 = arith.constant 0 : index
    %212 = vector.load %arg6[%211, %c0_71] : memref<64x128xf32, #tpu.memory_space<vmem>>, vector<8x128xf32>
    tpu.vector_store %arg6[%211, %c0_71], %210 {strides = array<i32>} : memref<64x128xf32, #tpu.memory_space<vmem>>, vector<8x128xf32>,
    %c7_i32_72 = arith.constant 7 : i32
    %213 = arith.muli %14, %c7_i32_72 : i32
    %214 = arith.addi %12, %213 : i32
    %c8_i32_73 = arith.constant 8 : i32
    %215 = arith.muli %214, %c8_i32_73 : i32
    %216 = tpu.assume_multiple %215, 8 : i32
    %217 = arith.index_cast %216 : i32 to index
    %c0_74 = arith.constant 0 : index
    %218 = vector.load %arg9[%217, %c0_74] : memref<64x512xf32, #tpu.memory_space<vmem>>, vector<8x512xf32>
    %c0_75 = arith.constant 0 : index
    %c0_76 = arith.constant 0 : index
    %c0_77 = arith.constant 0 : index
    %219 = vector.load %arg4[%c0_75, %c0_76, %c0_77] : memref<1x128x512xf32, #tpu.memory_space<vmem>>, vector<1x128x512xf32>
    %220 = vector.shape_cast %219 : vector<1x128x512xf32> to vector<128x512xf32>
    %cst_78 = arith.constant dense<0.000000e+00> : vector<8x512xf32>
    %221 = tpu.matmul %210, %220, %cst_78 {dimension_numbers = #tpu.dot_dimension_numbers<[1], [0], [0], [1], [0, 0, 1, 1], [], []>} : vector<8x128xf32>, vector<128x512xf32>, vector<8x512xf32> -> vector<8x512xf32>
    %222 = arith.addf %218, %221 : vector<8x512xf32>
    %223 = vector.extract_strided_slice %222 {offsets = [0, 0], sizes = [8, 384], strides = [1, 1]} : vector<8x512xf32> to vector<8x384xf32>
    %224 = arith.negf %223 : vector<8x384xf32>
    %225 = math.exp %224 : vector<8x384xf32>
    %cst_79 = arith.constant 1.000000e+00 : f32
    %226 = vector.broadcast %cst_79 : f32 to vector<8x384xf32>
    %227 = arith.addf %226, %225 : vector<8x384xf32>
    %228 = arith.divf %226, %227 : vector<8x384xf32>
    %229 = vector.extract_strided_slice %228 {offsets = [0, 0], sizes = [8, 128], strides = [1, 1]} : vector<8x384xf32> to vector<8x128xf32>
    %230 = vector.extract_strided_slice %228 {offsets = [0, 128], sizes = [8, 128], strides = [1, 1]} : vector<8x384xf32> to vector<8x128xf32>
    %231 = vector.extract_strided_slice %228 {offsets = [0, 256], sizes = [8, 128], strides = [1, 1]} : vector<8x384xf32> to vector<8x128xf32>
    %232 = vector.extract_strided_slice %222 {offsets = [0, 384], sizes = [8, 128], strides = [1, 1]} : vector<8x512xf32> to vector<8x128xf32>
    %233 = math.tanh %232 : vector<8x128xf32>
    %234 = arith.mulf %230, %208 : vector<8x128xf32>
    %235 = arith.mulf %229, %233 : vector<8x128xf32>
    %236 = arith.addf %234, %235 : vector<8x128xf32>
    %237 = math.tanh %236 : vector<8x128xf32>
    %238 = arith.mulf %231, %237 : vector<8x128xf32>
    %239 = arith.index_cast %216 : i32 to index
    %c0_80 = arith.constant 0 : index
    %240 = vector.load %arg6[%239, %c0_80] : memref<64x128xf32, #tpu.memory_space<vmem>>, vector<8x128xf32>
    tpu.vector_store %arg6[%239, %c0_80], %238 {strides = array<i32>} : memref<64x128xf32, #tpu.memory_space<vmem>>, vector<8x128xf32>,
    %c8_i32_81 = arith.constant 8 : i32
    %c0_82 = arith.constant 0 : index
    %c0_83 = arith.constant 0 : index
    %241 = vector.load %arg7[%c0_82, %c0_83] : memref<8x128xf32, #tpu.memory_space<vmem>>, vector<8x128xf32>
    tpu.vector_store %arg7[%c0_82, %c0_83], %238 {strides = array<i32>} : memref<8x128xf32, #tpu.memory_space<vmem>>, vector<8x128xf32>,
    %c0_84 = arith.constant 0 : index
    %c0_85 = arith.constant 0 : index
    %242 = vector.load %arg8[%c0_84, %c0_85] : memref<8x128xf32, #tpu.memory_space<vmem>>, vector<8x128xf32>
    tpu.vector_store %arg8[%c0_84, %c0_85], %236 {strides = array<i32>} : memref<8x128xf32, #tpu.memory_space<vmem>>, vector<8x128xf32>,
    return
  }
  func.func @transform_0(%arg0: i32, %arg1: i32) -> (i32, i32) {
    %c0_i32 = arith.constant 0 : i32
    %0 = arith.muli %arg0, %c0_i32 : i32
    %c2_i32 = arith.constant 2 : i32
    %1 = arith.muli %c2_i32, %arg0 : i32
    %c1_i32 = arith.constant 1 : i32
    %2 = arith.subi %c1_i32, %1 : i32
    %3 = arith.muli %2, %arg1 : i32
    %4 = arith.addi %0, %3 : i32
    %c0_i32_0 = arith.constant 0 : i32
    %c0_i32_1 = arith.constant 0 : i32
    return %4, %c0_i32_0 : i32, i32
  }
  func.func @transform_1(%arg0: i32, %arg1: i32) -> (i32, i32, i32) {
    %c0_i32 = arith.constant 0 : i32
    %c0_i32_0 = arith.constant 0 : i32
    %c0_i32_1 = arith.constant 0 : i32
    return %arg0, %c0_i32, %c0_i32_0 : i32, i32, i32
  }
  func.func @transform_2(%arg0: i32, %arg1: i32) -> (i32, i32, i32) {
    %c0_i32 = arith.constant 0 : i32
    %c0_i32_0 = arith.constant 0 : i32
    %c0_i32_1 = arith.constant 0 : i32
    return %arg0, %c0_i32, %c0_i32_0 : i32, i32, i32
  }
  func.func @transform_3(%arg0: i32, %arg1: i32) -> (i32, i32, i32) {
    %c0_i32 = arith.constant 0 : i32
    %c0_i32_0 = arith.constant 0 : i32
    %c0_i32_1 = arith.constant 0 : i32
    return %arg0, %c0_i32, %c0_i32_0 : i32, i32, i32
  }
  func.func @transform_4(%arg0: i32, %arg1: i32) -> (i32, i32) {
    %c0_i32 = arith.constant 0 : i32
    %0 = arith.muli %arg0, %c0_i32 : i32
    %c2_i32 = arith.constant 2 : i32
    %1 = arith.muli %c2_i32, %arg0 : i32
    %c1_i32 = arith.constant 1 : i32
    %2 = arith.subi %c1_i32, %1 : i32
    %3 = arith.muli %2, %arg1 : i32
    %4 = arith.addi %0, %3 : i32
    %c0_i32_0 = arith.constant 0 : i32
    return %4, %arg0 : i32, i32
  }
}

</mosaic_0001>

<llo_original>
// kernel: lstm_block_forward.2
$region0: #{lstm_block_forward.2}
  #allocation0 [shape = 'u32[]', space=smem, size = 0x4, offset = 0x4, fixed_abs, tag = 'smem constant byte address 0x4 - core index']
  #allocation1 [shape = 'u32[72,128]{1,0:T(1,128)}', space=vmem, size = 0x9000, scoped, tag = 'internal scratch']
  #allocation2 [shape = 'f32[8,128]{1,0:T(8,128)}', space=vmem, size = 0x1000, scoped, tag = 'scratch operand']
  #allocation3 [shape = 'f32[8,128]{1,0:T(8,128)}', space=vmem, size = 0x1000, scoped, tag = 'scratch operand']
  #allocation4 [shape = 'f32[64,512]{1,0:T(8,128)}', space=vmem, size = 0x20000, scoped, tag = 'scratch operand']
  %s0 = inlined_call_operand.hbm [shape: f32[64,32], index: 0, kind: input, shape index: {}]
  %s1 = inlined_call_operand.hbm [shape: f32[2,32,512], index: 1, kind: input, shape index: {}]
  %s2 = inlined_call_operand.hbm [shape: f32[2,128,512], index: 2, kind: input, shape index: {}]
  %s3 = inlined_call_operand.hbm [shape: f32[2,1,512], index: 3, kind: input, shape index: {}]
  %s4 = inlined_call_operand.vmem [shape: f32[64,256], index: 4, kind: output, shape index: {}]
  %s5 = sld [smem:[#allocation0]]
  $region103: #{lstm_block_forward.2} parent=0
    _
  %s7 = ssub.s32 1, %s5
  %s8 = scalar_select 0, %s7, %s5
  $region1: #{lstm_block_forward.2} parent=0
    #allocation5 [shape = 'u8[65536]{0}', space=vmem, size = 0x10000, scoped, tag = 'input window, operand 0']
    #allocation6 [shape = 's32[2]{0}', space=sflag, size = 0x8, scoped, tag = 'scoped memory for lstm_block_forward.2']
    #allocation7 [shape = 'u8[65536]{0}', space=vmem, size = 0x10000, scoped, tag = 'input window, operand 1, single buffered']
    #allocation8 [shape = 's32[1]{0}', space=sflag, size = 0x4, scoped, tag = 'scoped memory for lstm_block_forward.2']
    #allocation9 [shape = 'u8[262144]{0}', space=vmem, size = 0x40000, scoped, tag = 'input window, operand 2, single buffered']
    #allocation10 [shape = 'u8[2048]{0}', space=vmem, size = 0x800, scoped, tag = 'input window, operand 3, single buffered']
    #allocation11 [shape = 's32[1]{0}', space=sflag, size = 0x4, scoped, tag = 'scoped memory for lstm_block_forward.2']
    #allocation12 [shape = 'u8[65536]{0}', space=vmem, size = 0x10000, scoped, tag = 'output window, operand 0']
    %9 = vsyncpa [#allocation6], 0
    %s10 = scalar_lea.sflag [#allocation6], 1
    %11 = vsyncpa %s10, 0
    %12 = vsyncpa [#allocation8], 0
    %13 = vsyncpa [#allocation11], 0
    loop: start=0, step=1, limit=4
    $region2: #{lstm_block_forward.2} parent=1 // loop_pre_header
      _
    $region3: #{lstm_block_forward.2} parent=1 // loop_header
      %s15 = sphi 0, %s19
      %p16 = scmp.ge.s32.totalorder %s15, 4
      %s22 = sphi 0, %s34
      %s23 = sphi 0, %s30
      %s24 = sphi 0, %s22
      %s25 = sphi 0, %s23
      %s26 = sphi 0, %s24
      %s27 = sphi 0, %s25
      %s43 = sphi 0, %s45
      %s46 = sphi 0, %s43
      %s47 = sphi 0, %s46
      %s63 = sphi 0, %s47
      %s69 = sphi 0, %s71
      %s72 = sphi 0, %s69
      %s73 = sphi 0, %s72
      %s89 = sphi 0, %s73
      %s95 = sphi 0, %s97
      %s98 = sphi 0, %s95
      %s99 = sphi 0, %s98
      %s115 = sphi 0, %s99
      %s121 = sphi 0, %s123
      %s124 = sphi 0, %s121
      %s125 = sphi 0, %s124
      %s141 = sphi 0, %s125
      %s155 = sphi 0, %s157
      %s158 = sphi 0, %s155
      %s159 = sphi 0, %s158
      %s175 = sphi 0, %s159
    $region4: #{lstm_block_forward.2} parent=1 // loop_header_branch
      %18 = sbr.rel (%p16) target = $region8
    $region5: #{lstm_block_forward.2} parent=1 // loop_body
      %s20 = ssub.s32 %s15, 1
      %s21 = ssub.s32 %s15, 2
      %s28 = sadd.s32 1, %s23
      %p29 = scmp.ge.s32.totalorder %s28, 1
      %s30 = scalar_select %p29, 0, %s28
      %s31 = sadd.s32 1, %s22
      %s32 = scalar_select %p29, %s31, %s22
      %p33 = scmp.ge.s32.totalorder %s32, 2
      %s34 = scalar_select %p33, 0, %s32
      %s35 = smul.u32 %s22, 2
      %s36 = ssub.s32 1, %s35
      %s37 = smul.u32 %s36, %s23
      %s38 = smul.u32 %s34, 2
      %s39 = ssub.s32 1, %s38
      %s40 = smul.u32 %s39, %s30
      %s41 = ssub.s32 %s37, %s40
      %p42 = scmp.eq.s32.totalorder %s41, 0
      %s44 = sadd.s32 %s43, 1
      %s45 = scalar_select %p42, %s43, %s44
      %p48 = pneg %p42
      %p49 = scmp.eq.s32.totalorder %s15, 1
      %p50 = por %p48, %p49
      %p51 = scmp.ne.s32.totalorder %s43, %s46
      %p52 = scmp.eq.s32.totalorder %s15, 0
      %p53 = por %p51, %p52
      %p54 = scmp.ne.s32.totalorder %s43, %s46
      %p55 = scmp.eq.s32.totalorder %s20, 1
      %p56 = por %p54, %p55
      %p57 = scmp.ne.s32.totalorder %s46, %s47
      %p58 = scmp.eq.s32.totalorder %s20, 0
      %p59 = por %p57, %p58
      %p60 = scmp.ne.s32.totalorder %s46, %s47
      %p61 = scmp.eq.s32.totalorder %s21, 1
      %p62 = por %p60, %p61
      %p64 = scmp.ne.s32.totalorder %s47, %s63
      %p65 = scmp.eq.s32.totalorder %s21, 0
      %p66 = por %p64, %p65
      %s67 = ssub.s32 %s22, %s34
      %p68 = scmp.eq.s32.totalorder %s67, 0
      %s70 = sadd.s32 %s69, 1
      %s71 = scalar_select %p68, %s69, %s70
      %p74 = pneg %p68
      %p75 = scmp.eq.s32.totalorder %s15, 1
      %p76 = por %p74, %p75
      %p77 = scmp.ne.s32.totalorder %s69, %s72
      %p78 = scmp.eq.s32.totalorder %s15, 0
      %p79 = por %p77, %p78
      %p80 = scmp.ne.s32.totalorder %s69, %s72
      %p81 = scmp.eq.s32.totalorder %s20, 1
      %p82 = por %p80, %p81
      %p83 = scmp.ne.s32.totalorder %s72, %s73
      %p84 = scmp.eq.s32.totalorder %s20, 0
      %p85 = por %p83, %p84
      %p86 = scmp.ne.s32.totalorder %s72, %s73
      %p87 = scmp.eq.s32.totalorder %s21, 1
      %p88 = por %p86, %p87
      %p90 = scmp.ne.s32.totalorder %s73, %s89
      %p91 = scmp.eq.s32.totalorder %s21, 0
      %p92 = por %p90, %p91
      %s93 = ssub.s32 %s22, %s34
      %p94 = scmp.eq.s32.totalorder %s93, 0
      %s96 = sadd.s32 %s95, 1
      %s97 = scalar_select %p94, %s95, %s96
      %p100 = pneg %p94
      %p101 = scmp.eq.s32.totalorder %s15, 1
      %p102 = por %p100, %p101
      %p103 = scmp.ne.s32.totalorder %s95, %s98
      %p104 = scmp.eq.s32.totalorder %s15, 0
      %p105 = por %p103, %p104
      %p106 = scmp.ne.s32.totalorder %s95, %s98
      %p107 = scmp.eq.s32.totalorder %s20, 1
      %p108 = por %p106, %p107
      %p109 = scmp.ne.s32.totalorder %s98, %s99
      %p110 = scmp.eq.s32.totalorder %s20, 0
      %p111 = por %p109, %p110
      %p112 = scmp.ne.s32.totalorder %s98, %s99
      %p113 = scmp.eq.s32.totalorder %s21, 1
      %p114 = por %p112, %p113
      %p116 = scmp.ne.s32.totalorder %s99, %s115
      %p117 = scmp.eq.s32.totalorder %s21, 0
      %p118 = por %p116, %p117
      %s119 = ssub.s32 %s22, %s34
      %p120 = scmp.eq.s32.totalorder %s119, 0
      %s122 = sadd.s32 %s121, 1
      %s123 = scalar_select %p120, %s121, %s122
      %p126 = pneg %p120
      %p127 = scmp.eq.s32.totalorder %s15, 1
      %p128 = por %p126, %p127
      %p129 = scmp.ne.s32.totalorder %s121, %s124
      %p130 = scmp.eq.s32.totalorder %s15, 0
      %p131 = por %p129, %p130
      %p132 = scmp.ne.s32.totalorder %s121, %s124
      %p133 = scmp.eq.s32.totalorder %s20, 1
      %p134 = por %p132, %p133
      %p135 = scmp.ne.s32.totalorder %s124, %s125
      %p136 = scmp.eq.s32.totalorder %s20, 0
      %p137 = por %p135, %p136
      %p138 = scmp.ne.s32.totalorder %s124, %s125
      %p139 = scmp.eq.s32.totalorder %s21, 1
      %p140 = por %p138, %p139
      %p142 = scmp.ne.s32.totalorder %s125, %s141
      %p143 = scmp.eq.s32.totalorder %s21, 0
      %p144 = por %p142, %p143
      %s145 = smul.u32 %s22, 2
      %s146 = ssub.s32 1, %s145
      %s147 = smul.u32 %s146, %s23
      %s148 = smul.u32 %s34, 2
      %s149 = ssub.s32 1, %s148
      %s150 = smul.u32 %s149, %s30
      %s151 = ssub.s32 %s147, %s150
      %s152 = ssub.s32 %s22, %s34
      %s153 = sor.u32 %s151, %s152
      %p154 = scmp.eq.s32.totalorder %s153, 0
      %s156 = sadd.s32 %s155, 1
      %s157 = scalar_select %p154, %s155, %s156
      %p160 = pneg %p154
      %p161 = scmp.eq.s32.totalorder %s15, 1
      %p162 = por %p160, %p161
      %p163 = scmp.ne.s32.totalorder %s155, %s158
      %p164 = scmp.eq.s32.totalorder %s15, 0
      %p165 = por %p163, %p164
      %p166 = scmp.ne.s32.totalorder %s155, %s158
      %p167 = scmp.eq.s32.totalorder %s20, 1
      %p168 = por %p166, %p167
      %p169 = scmp.ne.s32.totalorder %s158, %s159
      %p170 = scmp.eq.s32.totalorder %s20, 0
      %p171 = por %p169, %p170
      %p172 = scmp.ne.s32.totalorder %s158, %s159
      %p173 = scmp.eq.s32.totalorder %s21, 1
      %p174 = por %p172, %p173
      %p176 = scmp.ne.s32.totalorder %s159, %s175
      %p177 = scmp.eq.s32.totalorder %s21, 0
      %p178 = por %p176, %p177
      %p179 = scmp.le.s32.totalorder 1, %s15
      %p180 = scmp.lt.s32.totalorder %s15, 3
      %p181 = pnand %p179, %p180
      %p182 = pneg %p181
      // Predicated region
      $region9: #{lstm_block_forward.2} parent=5 // pred_check
        _
      $region10: #{lstm_block_forward.2} parent=5 // pred_check_branch
        %184 = sbr.rel (%p181) target = $region12
      $region11: #{lstm_block_forward.2} parent=5 // pred_region
        %s185 = ssub.s32 %s15, 1
        // Predicated region
        $region13: #{lstm_block_forward.2} parent=11 // pred_check
          %p186 = pneg %p85
        $region14: #{lstm_block_forward.2} parent=11 // pred_check_branch
          %188 = sbr.rel (%p186) target = $region16
        $region15: #{lstm_block_forward.2} parent=11 // pred_region
          %190 = vsyncadd [#allocation8], 0
          %s191 = smul.addr %s24, 16
          %s192 = smul.addr %s191, 8
          %s193 = scalar_lea.hbm %s1, %s192
          %s194 = sshll.u32 %s193, 4
          %s195 = int_to_ptr.hbm [resolvable:$true] %s194
          %s196 = sshll.u32 [#allocation7], 4
          %s197 = int_to_ptr.vmem [resolvable:$true] %s196
          %202 = dma.hbm_to_vmem [thread:$0]  %s195, 2048, %s197, [#allocation8], 512, 512, 32
        $region16: #{lstm_block_forward.2} parent=11 // pred_fallthru
          _
        // Predicated region
        $region17: #{lstm_block_forward.2} parent=11 // pred_check
          %p203 = pneg %p111
        $region18: #{lstm_block_forward.2} parent=11 // pred_check_branch
          %205 = sbr.rel (%p203) target = $region20
        $region19: #{lstm_block_forward.2} parent=11 // pred_region
          %207 = vsyncadd [#allocation8], 0
          %s208 = smul.addr %s24, 64
          %s209 = smul.addr %s208, 8
          %s210 = scalar_lea.hbm %s2, %s209
          %s211 = sshll.u32 %s210, 4
          %s212 = int_to_ptr.hbm [resolvable:$true] %s211
          %s213 = sshll.u32 [#allocation9], 4
          %s214 = int_to_ptr.vmem [resolvable:$true] %s213
          %219 = dma.hbm_to_vmem [thread:$0]  %s212, 8192, %s214, [#allocation8], 512, 512, 32
        $region20: #{lstm_block_forward.2} parent=11 // pred_fallthru
          _
        // Predicated region
        $region21: #{lstm_block_forward.2} parent=11 // pred_check
          %p220 = pneg %p137
        $region22: #{lstm_block_forward.2} parent=11 // pred_check_branch
          %222 = sbr.rel (%p220) target = $region24
        $region23: #{lstm_block_forward.2} parent=11 // pred_region
          %224 = vsyncadd [#allocation11], 0
          %s225 = smul.addr %s24, 4
          %s226 = scalar_lea.hbm %s3, %s225
          %s228 = sshll.u32 %s226, 4
          %s229 = int_to_ptr.hbm [resolvable:$true] %s228
          %s230 = sshll.u32 [#allocation10], 4
          %s231 = int_to_ptr.vmem [resolvable:$true] %s230
          %233 = dma.hbm_to_vmem [thread:$0]  %s229, 64, %s231, [#allocation11]
        $region24: #{lstm_block_forward.2} parent=11 // pred_fallthru
          _
      $region12: #{lstm_block_forward.2} parent=5 // pred_fallthru
        _
      %p234 = scmp.lt.s32.totalorder %s15, 2
      // Predicated region
      $region25: #{lstm_block_forward.2} parent=5 // pred_check
        %p235 = pneg %p234
      $region26: #{lstm_block_forward.2} parent=5 // pred_check_branch
        %237 = sbr.rel (%p235) target = $region28
      $region27: #{lstm_block_forward.2} parent=5 // pred_region
        // Predicated region
        $region29: #{lstm_block_forward.2} parent=27 // pred_check
          %p238 = pneg %p53
        $region30: #{lstm_block_forward.2} parent=27 // pred_check_branch
          %240 = sbr.rel (%p238) target = $region32
        $region31: #{lstm_block_forward.2} parent=27 // pred_region
          %s241 = sand.u32 %s43, 1
          %s242 = scalar_lea.sflag [#allocation6], %s241
          %s243 = sand.u32 %s43, 1
          %s244 = smul.addr %s243, 64
          %s245 = scalar_lea.vmem [#allocation5], %s244
          %s246 = smul.u32 %s22, 2
          %s247 = ssub.s32 1, %s246
          %s248 = smul.u32 %s247, %s23
          %s249 = smul.u32 8, %s248
          %251 = vsyncadd %s242, 0
          %s252 = smul.addr %s249, 8
          %s253 = scalar_lea.hbm %s0, %s252
          %s254 = sshll.u32 %s253, 4
          %s255 = int_to_ptr.hbm [resolvable:$true] %s254
          %s256 = sshll.u32 %s245, 4
          %s257 = int_to_ptr.vmem [resolvable:$true] %s256
          %262 = dma.hbm_to_vmem [thread:$0]  %s255, 1024, %s257, %s242, 128, 128, 8
        $region32: #{lstm_block_forward.2} parent=27 // pred_fallthru
          _
      $region28: #{lstm_block_forward.2} parent=5 // pred_fallthru
        _
      %p263 = scmp.le.s32.totalorder 1, %s15
      %p264 = scmp.lt.s32.totalorder %s15, 3
      %p265 = pnand %p263, %p264
      %p266 = pneg %p265
      // Predicated region
      $region33: #{lstm_block_forward.2} parent=5 // pred_check
        _
      $region34: #{lstm_block_forward.2} parent=5 // pred_check_branch
        %268 = sbr.rel (%p265) target = $region36
      $region35: #{lstm_block_forward.2} parent=5 // pred_region
        %s269 = ssub.s32 %s15, 1
        %s270 = sand.u32 %s46, 1
        %s271 = scalar_lea.sflag [#allocation6], %s270
        %s272 = sand.u32 %s46, 1
        %s273 = smul.addr %s272, 64
        %s274 = scalar_lea.vmem [#allocation5], %s273
        // Predicated region
        $region37: #{lstm_block_forward.2} parent=35 // pred_check
          %p275 = pneg %p59
        $region38: #{lstm_block_forward.2} parent=35 // pred_check_branch
          %277 = sbr.rel (%p275) target = $region40
        $region39: #{lstm_block_forward.2} parent=35 // pred_region
          %279 = dma.done %s271, 1024
        $region40: #{lstm_block_forward.2} parent=35 // pred_fallthru
          _
        // Predicated region
        $region41: #{lstm_block_forward.2} parent=35 // pred_check
          %p280 = pneg %p85
        $region42: #{lstm_block_forward.2} parent=35 // pred_check_branch
          %282 = sbr.rel (%p280) target = $region44
        $region43: #{lstm_block_forward.2} parent=35 // pred_region
          %284 = dma.done [#allocation8], 2048
        $region44: #{lstm_block_forward.2} parent=35 // pred_fallthru
          _
        // Predicated region
        $region45: #{lstm_block_forward.2} parent=35 // pred_check
          %p285 = pneg %p111
        $region46: #{lstm_block_forward.2} parent=35 // pred_check_branch
          %287 = sbr.rel (%p285) target = $region48
        $region47: #{lstm_block_forward.2} parent=35 // pred_region
          %289 = dma.done [#allocation8], 8192
        $region48: #{lstm_block_forward.2} parent=35 // pred_fallthru
          _
        // Predicated region
        $region49: #{lstm_block_forward.2} parent=35 // pred_check
          %p290 = pneg %p137
        $region50: #{lstm_block_forward.2} parent=35 // pred_check_branch
          %292 = sbr.rel (%p290) target = $region52
        $region51: #{lstm_block_forward.2} parent=35 // pred_region
          %294 = dma.done [#allocation11], 64
        $region52: #{lstm_block_forward.2} parent=35 // pred_fallthru
          _
        %s295 = sand.u32 %s46, 1
        %s296 = scalar_lea.sflag [#allocation6], %s295
        %s297 = sand.u32 %s46, 1
        %s298 = smul.addr %s297, 64
        %s299 = scalar_lea.vmem [#allocation5], %s298
        %p300 = pneg %p59
        %p301 = pneg %p56
        %p302 = pneg %p85
        %p303 = pneg %p82
        %p304 = pneg %p111
        %p305 = pneg %p108
        %p306 = pneg %p137
        %p307 = pneg %p134
        %p308 = pneg %p171
        %p309 = pneg %p168
        %s310 = sand.u32 %s158, 1
        %s311 = sand.u32 %s158, 1
        %s312 = smul.addr %s311, 64
        %s313 = scalar_lea.vmem [#allocation12], %s312
        %s314 = smul.u32 %s24, 2
        %s315 = ssub.s32 1, %s314
        %s316 = smul.u32 %s315, %s25
        %s317 = smul.u32 8, %s316
        %s318 = smul.u32 %s24, 2
        %s319 = ssub.s32 1, %s318
        %s320 = smul.u32 %s319, %s25
        %s321 = smul.u32 8, %s320
        %p322 = scmp.eq.s32.totalorder %s25, 0
        // Predicated region
        $region53: #{lstm_block_forward.2} parent=35 // pred_check
          %p323 = pneg %p322
        $region54: #{lstm_block_forward.2} parent=35 // pred_check_branch
          %325 = sbr.rel (%p323) target = $region56
        $region55: #{lstm_block_forward.2} parent=35 // pred_region
          %326 = vst [vmem:[#allocation2] sm:$0xff] 0.0
          %327 = vst [vmem:[#allocation3] sm:$0xff] 0.0
        $region56: #{lstm_block_forward.2} parent=35 // pred_fallthru
          _
        %v328 = vld [vmem:[%s274] sm:$0xff]
        %v329 = vld [vmem:[%s274 + $0x8] sm:$0xff]
        %v330 = vld [vmem:[%s274 + $0x10] sm:$0xff]
        %v331 = vld [vmem:[%s274 + $0x18] sm:$0xff]
        %v332 = vld [vmem:[%s274 + $0x20] sm:$0xff]
        %v333 = vld [vmem:[%s274 + $0x28] sm:$0xff]
        %v334 = vld [vmem:[%s274 + $0x30] sm:$0xff]
        %v335 = vld [vmem:[%s274 + $0x38] sm:$0xff]
        %v336 = vld [vmem:[#allocation7] sm:$0xff]
        %v337 = vld [vmem:[#allocation7 + $0x8] sm:$0xff]
        %v338 = vld [vmem:[#allocation7 + $0x10] sm:$0xff]
        %v339 = vld [vmem:[#allocation7 + $0x18] sm:$0xff]
        %v340 = vld [vmem:[#allocation7 + $0x20] sm:$0xff]
        %v341 = vld [vmem:[#allocation7 + $0x28] sm:$0xff]
        %v342 = vld [vmem:[#allocation7 + $0x30] sm:$0xff]
        %v343 = vld [vmem:[#allocation7 + $0x38] sm:$0xff]
        %v344 = vld [vmem:[#allocation7 + $0x40] sm:$0xff]
        %v345 = vld [vmem:[#allocation7 + $0x48] sm:$0xff]
        %v346 = vld [vmem:[#allocation7 + $0x50] sm:$0xff]
        %v347 = vld [vmem:[#allocation7 + $0x58] sm:$0xff]
        %v348 = vld [vmem:[#allocation7 + $0x60] sm:$0xff]
        %v349 = vld [vmem:[#allocation7 + $0x68] sm:$0xff]
        %v350 = vld [vmem:[#allocation7 + $0x70] sm:$0xff]
        %v351 = vld [vmem:[#allocation7 + $0x78] sm:$0xff]
        %v352 = vld [vmem:[#allocation10] sm:$0xf]
        %v354 = vperm.slane %v352, 0
        %v355 = vperm.slane %v352, 1
        %v356 = vperm.slane %v352, 2
        %v357 = vperm.slane %v352, 3
        %vm362 = vcmask 261120
        %v364 = vsel %vm362, %v328, 0
        %v367 = vsel %vm362, %v329, 0
        %v370 = vsel %vm362, %v330, 0
        %v373 = vsel %vm362, %v331, 0
        %v376 = vsel %vm362, %v332, 0
        %v379 = vsel %vm362, %v333, 0
        %v382 = vsel %vm362, %v334, 0
        %v385 = vsel %vm362, %v335, 0
        %387 = vmatpush.msra.mxu0 0.0
        %388 = vmatpush.msra.mxu0 0.0
        %389 = vmatpush.msra.mxu0 0.0
        %390 = vmatpush.msra.mxu0 0.0
        %391 = vmatpush.msra.mxu0 0.0
        %392 = vmatpush.msra.mxu0 0.0
        %393 = vmatpush.msra.mxu0 0.0
        %394 = vmatpush.msra.mxu0 0.0
        %395 = vmatpush.msra.mxu0 0.0
        %396 = vmatpush.msra.mxu0 0.0
        %397 = vmatpush.msra.mxu0 0.0
        %398 = vmatpush.msra.mxu0 0.0
        %399 = vmatpush.msra.mxu0 %v348
        %400 = vmatpush.msra.mxu0 %v344
        %401 = vmatpush.msra.mxu0 %v340
        %402 = vmatpush.msra.mxu0 %v336
        %403 = vmatmul.f32.gmra.mxu0 %v364
        %v404 = vpop.f32.mrf.mxu0
        %v405 = vadd.f32 %v354, %v404
        %406 = vmatmul.f32.gmra.mxu0 %v367
        %v407 = vpop.f32.mrf.mxu0
        %v408 = vadd.f32 %v354, %v407
        %409 = vmatmul.f32.gmra.mxu0 %v370
        %v410 = vpop.f32.mrf.mxu0
        %v411 = vadd.f32 %v354, %v410
        %412 = vmatmul.f32.gmra.mxu0 %v373
        %v413 = vpop.f32.mrf.mxu0
        %v414 = vadd.f32 %v354, %v413
        %415 = vmatmul.f32.gmra.mxu0 %v376
        %v416 = vpop.f32.mrf.mxu0
        %v417 = vadd.f32 %v354, %v416
        %418 = vmatmul.f32.gmra.mxu0 %v379
        %v419 = vpop.f32.mrf.mxu0
        %v420 = vadd.f32 %v354, %v419
        %421 = vmatmul.f32.gmra.mxu0 %v382
        %v422 = vpop.f32.mrf.mxu0
        %v423 = vadd.f32 %v354, %v422
        %424 = vmatmul.f32.gmra.mxu0 %v385
        %v425 = vpop.f32.mrf.mxu0
        %v426 = vadd.f32 %v354, %v425
        %427 = vdwg.mxu0
        %428 = vmatpush.msra.mxu0 0.0
        %429 = vmatpush.msra.mxu0 0.0
        %430 = vmatpush.msra.mxu0 0.0
        %431 = vmatpush.msra.mxu0 0.0
        %432 = vmatpush.msra.mxu0 0.0
        %433 = vmatpush.msra.mxu0 0.0
        %434 = vmatpush.msra.mxu0 0.0
        %435 = vmatpush.msra.mxu0 0.0
        %436 = vmatpush.msra.mxu0 0.0
        %437 = vmatpush.msra.mxu0 0.0
        %438 = vmatpush.msra.mxu0 0.0
        %439 = vmatpush.msra.mxu0 0.0
        %440 = vmatpush.msra.mxu0 %v349
        %441 = vmatpush.msra.mxu0 %v345
        %442 = vmatpush.msra.mxu0 %v341
        %443 = vmatpush.msra.mxu0 %v337
        %444 = vmatmul.f32.gmra.mxu0 %v364
        %v445 = vpop.f32.mrf.mxu0
        %v446 = vadd.f32 %v355, %v445
        %447 = vmatmul.f32.gmra.mxu0 %v367
        %v448 = vpop.f32.mrf.mxu0
        %v449 = vadd.f32 %v355, %v448
        %450 = vmatmul.f32.gmra.mxu0 %v370
        %v451 = vpop.f32.mrf.mxu0
        %v452 = vadd.f32 %v355, %v451
        %453 = vmatmul.f32.gmra.mxu0 %v373
        %v454 = vpop.f32.mrf.mxu0
        %v455 = vadd.f32 %v355, %v454
        %456 = vmatmul.f32.gmra.mxu0 %v376
        %v457 = vpop.f32.mrf.mxu0
        %v458 = vadd.f32 %v355, %v457
        %459 = vmatmul.f32.gmra.mxu0 %v379
        %v460 = vpop.f32.mrf.mxu0
        %v461 = vadd.f32 %v355, %v460
        %462 = vmatmul.f32.gmra.mxu0 %v382
        %v463 = vpop.f32.mrf.mxu0
        %v464 = vadd.f32 %v355, %v463
        %465 = vmatmul.f32.gmra.mxu0 %v385
        %v466 = vpop.f32.mrf.mxu0
        %v467 = vadd.f32 %v355, %v466
        %468 = vdwg.mxu0
        %469 = vmatpush.msra.mxu0 0.0
        %470 = vmatpush.msra.mxu0 0.0
        %471 = vmatpush.msra.mxu0 0.0
        %472 = vmatpush.msra.mxu0 0.0
        %473 = vmatpush.msra.mxu0 0.0
        %474 = vmatpush.msra.mxu0 0.0
        %475 = vmatpush.msra.mxu0 0.0
        %476 = vmatpush.msra.mxu0 0.0
        %477 = vmatpush.msra.mxu0 0.0
        %478 = vmatpush.msra.mxu0 0.0
        %479 = vmatpush.msra.mxu0 0.0
        %480 = vmatpush.msra.mxu0 0.0
        %481 = vmatpush.msra.mxu0 %v350
        %482 = vmatpush.msra.mxu0 %v346
        %483 = vmatpush.msra.mxu0 %v342
        %484 = vmatpush.msra.mxu0 %v338
        %485 = vmatmul.f32.gmra.mxu0 %v364
        %v486 = vpop.f32.mrf.mxu0
        %v487 = vadd.f32 %v356, %v486
        %488 = vmatmul.f32.gmra.mxu0 %v367
        %v489 = vpop.f32.mrf.mxu0
        %v490 = vadd.f32 %v356, %v489
        %491 = vmatmul.f32.gmra.mxu0 %v370
        %v492 = vpop.f32.mrf.mxu0
        %v493 = vadd.f32 %v356, %v492
        %494 = vmatmul.f32.gmra.mxu0 %v373
        %v495 = vpop.f32.mrf.mxu0
        %v496 = vadd.f32 %v356, %v495
        %497 = vmatmul.f32.gmra.mxu0 %v376
        %v498 = vpop.f32.mrf.mxu0
        %v499 = vadd.f32 %v356, %v498
        %500 = vmatmul.f32.gmra.mxu0 %v379
        %v501 = vpop.f32.mrf.mxu0
        %v502 = vadd.f32 %v356, %v501
        %503 = vmatmul.f32.gmra.mxu0 %v382
        %v504 = vpop.f32.mrf.mxu0
        %v505 = vadd.f32 %v356, %v504
        %506 = vmatmul.f32.gmra.mxu0 %v385
        %v507 = vpop.f32.mrf.mxu0
        %v508 = vadd.f32 %v356, %v507
        %509 = vdwg.mxu0
        %510 = vmatpush.msra.mxu0 0.0
        %511 = vmatpush.msra.mxu0 0.0
        %512 = vmatpush.msra.mxu0 0.0
        %513 = vmatpush.msra.mxu0 0.0
        %514 = vmatpush.msra.mxu0 0.0
        %515 = vmatpush.msra.mxu0 0.0
        %516 = vmatpush.msra.mxu0 0.0
        %517 = vmatpush.msra.mxu0 0.0
        %518 = vmatpush.msra.mxu0 0.0
        %519 = vmatpush.msra.mxu0 0.0
        %520 = vmatpush.msra.mxu0 0.0
        %521 = vmatpush.msra.mxu0 0.0
        %522 = vmatpush.msra.mxu0 %v351
        %523 = vmatpush.msra.mxu0 %v347
        %524 = vmatpush.msra.mxu0 %v343
        %525 = vmatpush.msra.mxu0 %v339
        %526 = vmatmul.f32.gmra.mxu0 %v364
        %v527 = vpop.f32.mrf.mxu0
        %v528 = vadd.f32 %v357, %v527
        %529 = vmatmul.f32.gmra.mxu0 %v367
        %v530 = vpop.f32.mrf.mxu0
        %v531 = vadd.f32 %v357, %v530
        %532 = vmatmul.f32.gmra.mxu0 %v370
        %v533 = vpop.f32.mrf.mxu0
        %v534 = vadd.f32 %v357, %v533
        %535 = vmatmul.f32.gmra.mxu0 %v373
        %v536 = vpop.f32.mrf.mxu0
        %v537 = vadd.f32 %v357, %v536
        %538 = vmatmul.f32.gmra.mxu0 %v376
        %v539 = vpop.f32.mrf.mxu0
        %v540 = vadd.f32 %v357, %v539
        %541 = vmatmul.f32.gmra.mxu0 %v379
        %v542 = vpop.f32.mrf.mxu0
        %v543 = vadd.f32 %v357, %v542
        %544 = vmatmul.f32.gmra.mxu0 %v382
        %v545 = vpop.f32.mrf.mxu0
        %v546 = vadd.f32 %v357, %v545
        %547 = vmatmul.f32.gmra.mxu0 %v385
        %v548 = vpop.f32.mrf.mxu0
        %v549 = vadd.f32 %v357, %v548
        %550 = vdwg.mxu0
        %551 = vst [vmem:[#allocation4] sm:$0xff] %v405
        %552 = vst [vmem:[#allocation4 + $0x8] sm:$0xff] %v446
        %553 = vst [vmem:[#allocation4 + $0x10] sm:$0xff] %v487
        %554 = vst [vmem:[#allocation4 + $0x18] sm:$0xff] %v528
        %555 = vst [vmem:[#allocation4 + $0x20] sm:$0xff] %v408
        %556 = vst [vmem:[#allocation4 + $0x28] sm:$0xff] %v449
        %557 = vst [vmem:[#allocation4 + $0x30] sm:$0xff] %v490
        %558 = vst [vmem:[#allocation4 + $0x38] sm:$0xff] %v531
        %559 = vst [vmem:[#allocation4 + $0x40] sm:$0xff] %v411
        %560 = vst [vmem:[#allocation4 + $0x48] sm:$0xff] %v452
        %561 = vst [vmem:[#allocation4 + $0x50] sm:$0xff] %v493
        %562 = vst [vmem:[#allocation4 + $0x58] sm:$0xff] %v534
        %563 = vst [vmem:[#allocation4 + $0x60] sm:$0xff] %v414
        %564 = vst [vmem:[#allocation4 + $0x68] sm:$0xff] %v455
        %565 = vst [vmem:[#allocation4 + $0x70] sm:$0xff] %v496
        %566 = vst [vmem:[#allocation4 + $0x78] sm:$0xff] %v537
        %567 = vst [vmem:[#allocation4 + $0x80] sm:$0xff] %v417
        %568 = vst [vmem:[#allocation4 + $0x88] sm:$0xff] %v458
        %569 = vst [vmem:[#allocation4 + $0x90] sm:$0xff] %v499
        %570 = vst [vmem:[#allocation4 + $0x98] sm:$0xff] %v540
        %571 = vst [vmem:[#allocation4 + $0xa0] sm:$0xff] %v420
        %572 = vst [vmem:[#allocation4 + $0xa8] sm:$0xff] %v461
        %573 = vst [vmem:[#allocation4 + $0xb0] sm:$0xff] %v502
        %574 = vst [vmem:[#allocation4 + $0xb8] sm:$0xff] %v543
        %575 = vst [vmem:[#allocation4 + $0xc0] sm:$0xff] %v423
        %576 = vst [vmem:[#allocation4 + $0xc8] sm:$0xff] %v464
        %577 = vst [vmem:[#allocation4 + $0xd0] sm:$0xff] %v505
        %578 = vst [vmem:[#allocation4 + $0xd8] sm:$0xff] %v546
        %579 = vst [vmem:[#allocation4 + $0xe0] sm:$0xff] %v426
        %580 = vst [vmem:[#allocation4 + $0xe8] sm:$0xff] %v467
        %581 = vst [vmem:[#allocation4 + $0xf0] sm:$0xff] %v508
        %582 = vst [vmem:[#allocation4 + $0xf8] sm:$0xff] %v549
        %s583 = smul.u32 %s24, 7
        %s584 = smul.u32 %s24, 2
        %s585 = ssub.s32 1, %s584
        %v586 = vld [vmem:[#allocation2] sm:$0xff]
        %v587 = vld [vmem:[#allocation3] sm:$0xff]
        %s588 = smul.u32 %s24, 56
        %s589 = sshra.s32 %s588, 3
        %s590 = sand.u32 %s588, 7
        %s591 = smul.u32 %s589, 4
        %s592 = smul.addr %s591, 8
        %s593 = scalar_lea.vmem [#allocation4], %s592
        %v594 = vld [vmem:[%s593] sm:$0xff]
        %v595 = vld [vmem:[%s593 + $0x8] sm:$0xff]
        %v596 = vld [vmem:[%s593 + $0x10] sm:$0xff]
        %v597 = vld [vmem:[%s593 + $0x18] sm:$0xff]
        %v598 = vld [vmem:[#allocation9] sm:$0xff]
        %v599 = vld [vmem:[#allocation9 + $0x8] sm:$0xff]
        %v600 = vld [vmem:[#allocation9 + $0x10] sm:$0xff]
        %v601 = vld [vmem:[#allocation9 + $0x18] sm:$0xff]
        %v602 = vld [vmem:[#allocation9 + $0x20] sm:$0xff]
        %v603 = vld [vmem:[#allocation9 + $0x28] sm:$0xff]
        %v604 = vld [vmem:[#allocation9 + $0x30] sm:$0xff]
        %v605 = vld [vmem:[#allocation9 + $0x38] sm:$0xff]
        %v606 = vld [vmem:[#allocation9 + $0x40] sm:$0xff]
        %v607 = vld [vmem:[#allocation9 + $0x48] sm:$0xff]
        %v608 = vld [vmem:[#allocation9 + $0x50] sm:$0xff]
        %v609 = vld [vmem:[#allocation9 + $0x58] sm:$0xff]
        %v610 = vld [vmem:[#allocation9 + $0x60] sm:$0xff]
        %v611 = vld [vmem:[#allocation9 + $0x68] sm:$0xff]
        %v612 = vld [vmem:[#allocation9 + $0x70] sm:$0xff]
        %v613 = vld [vmem:[#allocation9 + $0x78] sm:$0xff]
        %v614 = vld [vmem:[#allocation9 + $0x80] sm:$0xff]
        %v615 = vld [vmem:[#allocation9 + $0x88] sm:$0xff]
        %v616 = vld [vmem:[#allocation9 + $0x90] sm:$0xff]
        %v617 = vld [vmem:[#allocation9 + $0x98] sm:$0xff]
        %v618 = vld [vmem:[#allocation9 + $0xa0] sm:$0xff]
        %v619 = vld [vmem:[#allocation9 + $0xa8] sm:$0xff]
        %v620 = vld [vmem:[#allocation9 + $0xb0] sm:$0xff]
        %v621 = vld [vmem:[#allocation9 + $0xb8] sm:$0xff]
        %v622 = vld [vmem:[#allocation9 + $0xc0] sm:$0xff]
        %v623 = vld [vmem:[#allocation9 + $0xc8] sm:$0xff]
        %v624 = vld [vmem:[#allocation9 + $0xd0] sm:$0xff]
        %v625 = vld [vmem:[#allocation9 + $0xd8] sm:$0xff]
        %v626 = vld [vmem:[#allocation9 + $0xe0] sm:$0xff]
        %v627 = vld [vmem:[#allocation9 + $0xe8] sm:$0xff]
        %v628 = vld [vmem:[#allocation9 + $0xf0] sm:$0xff]
        %v629 = vld [vmem:[#allocation9 + $0xf8] sm:$0xff]
        %v630 = vld [vmem:[#allocation9 + $0x100] sm:$0xff]
        %v631 = vld [vmem:[#allocation9 + $0x108] sm:$0xff]
        %v632 = vld [vmem:[#allocation9 + $0x110] sm:$0xff]
        %v633 = vld [vmem:[#allocation9 + $0x118] sm:$0xff]
        %v634 = vld [vmem:[#allocation9 + $0x120] sm:$0xff]
        %v635 = vld [vmem:[#allocation9 + $0x128] sm:$0xff]
        %v636 = vld [vmem:[#allocation9 + $0x130] sm:$0xff]
        %v637 = vld [vmem:[#allocation9 + $0x138] sm:$0xff]
        %v638 = vld [vmem:[#allocation9 + $0x140] sm:$0xff]
        %v639 = vld [vmem:[#allocation9 + $0x148] sm:$0xff]
        %v640 = vld [vmem:[#allocation9 + $0x150] sm:$0xff]
        %v641 = vld [vmem:[#allocation9 + $0x158] sm:$0xff]
        %v642 = vld [vmem:[#allocation9 + $0x160] sm:$0xff]
        %v643 = vld [vmem:[#allocation9 + $0x168] sm:$0xff]
        %v644 = vld [vmem:[#allocation9 + $0x170] sm:$0xff]
        %v645 = vld [vmem:[#allocation9 + $0x178] sm:$0xff]
        %v646 = vld [vmem:[#allocation9 + $0x180] sm:$0xff]
        %v647 = vld [vmem:[#allocation9 + $0x188] sm:$0xff]
        %v648 = vld [vmem:[#allocation9 + $0x190] sm:$0xff]
        %v649 = vld [vmem:[#allocation9 + $0x198] sm:$0xff]
        %v650 = vld [vmem:[#allocation9 + $0x1a0] sm:$0xff]
        %v651 = vld [vmem:[#allocation9 + $0x1a8] sm:$0xff]
        %v652 = vld [vmem:[#allocation9 + $0x1b0] sm:$0xff]
        %v653 = vld [vmem:[#allocation9 + $0x1b8] sm:$0xff]
        %v654 = vld [vmem:[#allocation9 + $0x1c0] sm:$0xff]
        %v655 = vld [vmem:[#allocation9 + $0x1c8] sm:$0xff]
        %v656 = vld [vmem:[#allocation9 + $0x1d0] sm:$0xff]
        %v657 = vld [vmem:[#allocation9 + $0x1d8] sm:$0xff]
        %v658 = vld [vmem:[#allocation9 + $0x1e0] sm:$0xff]
        %v659 = vld [vmem:[#allocation9 + $0x1e8] sm:$0xff]
        %v660 = vld [vmem:[#allocation9 + $0x1f0] sm:$0xff]
        %v661 = vld [vmem:[#allocation9 + $0x1f8] sm:$0xff]
        %662 = vmatpush.msra.mxu0 %v658
        %663 = vmatpush.msra.mxu0 %v654
        %664 = vmatpush.msra.mxu0 %v650
        %665 = vmatpush.msra.mxu0 %v646
        %666 = vmatpush.msra.mxu0 %v642
        %667 = vmatpush.msra.mxu0 %v638
        %668 = vmatpush.msra.mxu0 %v634
        %669 = vmatpush.msra.mxu0 %v630
        %670 = vmatpush.msra.mxu0 %v626
        %671 = vmatpush.msra.mxu0 %v622
        %672 = vmatpush.msra.mxu0 %v618
        %673 = vmatpush.msra.mxu0 %v614
        %674 = vmatpush.msra.mxu0 %v610
        %675 = vmatpush.msra.mxu0 %v606
        %676 = vmatpush.msra.mxu0 %v602
        %677 = vmatpush.msra.mxu0 %v598
        %678 = vmatmul.f32.gmra.mxu0 %v586
        %v679 = vpop.f32.mrf.mxu0
        %v680 = vadd.f32 0.0, %v679
        %681 = vdwg.mxu0
        %682 = vmatpush.msra.mxu0 %v659
        %683 = vmatpush.msra.mxu0 %v655
        %684 = vmatpush.msra.mxu0 %v651
        %685 = vmatpush.msra.mxu0 %v647
        %686 = vmatpush.msra.mxu0 %v643
        %687 = vmatpush.msra.mxu0 %v639
        %688 = vmatpush.msra.mxu0 %v635
        %689 = vmatpush.msra.mxu0 %v631
        %690 = vmatpush.msra.mxu0 %v627
        %691 = vmatpush.msra.mxu0 %v623
        %692 = vmatpush.msra.mxu0 %v619
        %693 = vmatpush.msra.mxu0 %v615
        %694 = vmatpush.msra.mxu0 %v611
        %695 = vmatpush.msra.mxu0 %v607
        %696 = vmatpush.msra.mxu0 %v603
        %697 = vmatpush.msra.mxu0 %v599
        %698 = vmatmul.f32.gmra.mxu0 %v586
        %v699 = vpop.f32.mrf.mxu0
        %v700 = vadd.f32 0.0, %v699
        %701 = vdwg.mxu0
        %702 = vmatpush.msra.mxu0 %v660
        %703 = vmatpush.msra.mxu0 %v656
        %704 = vmatpush.msra.mxu0 %v652
        %705 = vmatpush.msra.mxu0 %v648
        %706 = vmatpush.msra.mxu0 %v644
        %707 = vmatpush.msra.mxu0 %v640
        %708 = vmatpush.msra.mxu0 %v636
        %709 = vmatpush.msra.mxu0 %v632
        %710 = vmatpush.msra.mxu0 %v628
        %711 = vmatpush.msra.mxu0 %v624
        %712 = vmatpush.msra.mxu0 %v620
        %713 = vmatpush.msra.mxu0 %v616
        %714 = vmatpush.msra.mxu0 %v612
        %715 = vmatpush.msra.mxu0 %v608
        %716 = vmatpush.msra.mxu0 %v604
        %717 = vmatpush.msra.mxu0 %v600
        %718 = vmatmul.f32.gmra.mxu0 %v586
        %v719 = vpop.f32.mrf.mxu0
        %v720 = vadd.f32 0.0, %v719
        %721 = vdwg.mxu0
        %722 = vmatpush.msra.mxu0 %v661
        %723 = vmatpush.msra.mxu0 %v657
        %724 = vmatpush.msra.mxu0 %v653
        %725 = vmatpush.msra.mxu0 %v649
        %726 = vmatpush.msra.mxu0 %v645
        %727 = vmatpush.msra.mxu0 %v641
        %728 = vmatpush.msra.mxu0 %v637
        %729 = vmatpush.msra.mxu0 %v633
        %730 = vmatpush.msra.mxu0 %v629
        %731 = vmatpush.msra.mxu0 %v625
        %732 = vmatpush.msra.mxu0 %v621
        %733 = vmatpush.msra.mxu0 %v617
        %734 = vmatpush.msra.mxu0 %v613
        %735 = vmatpush.msra.mxu0 %v609
        %736 = vmatpush.msra.mxu0 %v605
        %737 = vmatpush.msra.mxu0 %v601
        %738 = vmatmul.f32.gmra.mxu0 %v586
        %v739 = vpop.f32.mrf.mxu0
        %v740 = vadd.f32 0.0, %v739
        %741 = vdwg.mxu0
        %v742 = vadd.f32 %v594, %v680
        %v743 = vadd.f32 %v595, %v700
        %v744 = vadd.f32 %v596, %v720
        %v745 = vadd.f32 %v597, %v740
        %v746 = vxor.u32 %v742, 2147483648
        %v747 = vxor.u32 %v743, 2147483648
        %v748 = vxor.u32 %v744, 2147483648
        %v749 = vmul.f32 %v746, 1.442695
        %v750 = vpow.pop %v749
        %v751 = vmul.f32 %v747, 1.442695
        %v752 = vpow.pop %v751
        %v753 = vmul.f32 %v748, 1.442695
        %v754 = vpow.pop %v753
        %v755 = vadd.f32 %v750, 1.0
        %v756 = vadd.f32 %v752, 1.0
        %v757 = vadd.f32 %v754, 1.0
        %v758 = vrcp.pop %v755
        %v759 = vmul.f32 %v755, %v758
        %v760 = vsub.f32 1.0, %v759
        %v761 = vmul.f32 %v758, %v760
        %v762 = vadd.f32 %v758, %v761
        %vm763 = vweird.f32 %v755
        %vm764 = vweird.f32 %v758
        %vm765 = vmor %vm763, %vm764
        %v766 = vsel %vm765, %v758, %v762
        %v767 = vand.u32 2147483647, %v755
        %vm768 = vcmp.eq.f32.partialorder %v767, 8.507059e+37
        %v769 = vand.u32 %v755, 2147483648
        %v770 = vor.u32 1.1754944e-38, %v769
        %v771 = vsel %vm768, %v770, %v766
        %v772 = vmul.f32 1.0, %v771
        %v773 = vrcp.pop %v756
        %v774 = vmul.f32 %v756, %v773
        %v775 = vsub.f32 1.0, %v774
        %v776 = vmul.f32 %v773, %v775
        %v777 = vadd.f32 %v773, %v776
        %vm778 = vweird.f32 %v756
        %vm779 = vweird.f32 %v773
        %vm780 = vmor %vm778, %vm779
        %v781 = vsel %vm780, %v773, %v777
        %v782 = vand.u32 2147483647, %v756
        %vm783 = vcmp.eq.f32.partialorder %v782, 8.507059e+37
        %v784 = vand.u32 %v756, 2147483648
        %v785 = vor.u32 1.1754944e-38, %v784
        %v786 = vsel %vm783, %v785, %v781
        %v787 = vmul.f32 1.0, %v786
        %v788 = vrcp.pop %v757
        %v789 = vmul.f32 %v757, %v788
        %v790 = vsub.f32 1.0, %v789
        %v791 = vmul.f32 %v788, %v790
        %v792 = vadd.f32 %v788, %v791
        %vm793 = vweird.f32 %v757
        %vm794 = vweird.f32 %v788
        %vm795 = vmor %vm793, %vm794
        %v796 = vsel %vm795, %v788, %v792
        %v797 = vand.u32 2147483647, %v757
        %vm798 = vcmp.eq.f32.partialorder %v797, 8.507059e+37
        %v799 = vand.u32 %v757, 2147483648
        %v800 = vor.u32 1.1754944e-38, %v799
        %v801 = vsel %vm798, %v800, %v796
        %v802 = vmul.f32 1.0, %v801
        %v803 = vtanh.pop %v745
        %v804 = vmul.f32 %v787, %v587
        %v805 = vmul.f32 %v772, %v803
        %v806 = vadd.f32 %v804, %v805
        %v807 = vtanh.pop %v806
        %v808 = vmul.f32 %v802, %v807
        %s809 = scalar_lea.vmem %s313, %s588 [#allocation12]
        %810 = vst [vmem:[%s809] sm:$0xff] %v808
        %s811 = sadd.s32 %s583, %s585
        %s812 = smul.u32 %s811, 8
        %s813 = sshra.s32 %s812, 3
        %s814 = sand.u32 %s812, 7
        %s815 = smul.u32 %s813, 4
        %s816 = smul.addr %s815, 8
        %s817 = scalar_lea.vmem [#allocation4], %s816
        %v818 = vld [vmem:[%s817] sm:$0xff]
        %v819 = vld [vmem:[%s817 + $0x8] sm:$0xff]
        %v820 = vld [vmem:[%s817 + $0x10] sm:$0xff]
        %v821 = vld [vmem:[%s817 + $0x18] sm:$0xff]
        %v822 = vld [vmem:[#allocation9] sm:$0xff]
        %v823 = vld [vmem:[#allocation9 + $0x8] sm:$0xff]
        %v824 = vld [vmem:[#allocation9 + $0x10] sm:$0xff]
        %v825 = vld [vmem:[#allocation9 + $0x18] sm:$0xff]
        %v826 = vld [vmem:[#allocation9 + $0x20] sm:$0xff]
        %v827 = vld [vmem:[#allocation9 + $0x28] sm:$0xff]
        %v828 = vld [vmem:[#allocation9 + $0x30] sm:$0xff]
        %v829 = vld [vmem:[#allocation9 + $0x38] sm:$0xff]
        %v830 = vld [vmem:[#allocation9 + $0x40] sm:$0xff]
        %v831 = vld [vmem:[#allocation9 + $0x48] sm:$0xff]
        %v832 = vld [vmem:[#allocation9 + $0x50] sm:$0xff]
        %v833 = vld [vmem:[#allocation9 + $0x58] sm:$0xff]
        %v834 = vld [vmem:[#allocation9 + $0x60] sm:$0xff]
        %v835 = vld [vmem:[#allocation9 + $0x68] sm:$0xff]
        %v836 = vld [vmem:[#allocation9 + $0x70] sm:$0xff]
        %v837 = vld [vmem:[#allocation9 + $0x78] sm:$0xff]
        %v838 = vld [vmem:[#allocation9 + $0x80] sm:$0xff]
        %v839 = vld [vmem:[#allocation9 + $0x88] sm:$0xff]
        %v840 = vld [vmem:[#allocation9 + $0x90] sm:$0xff]
        %v841 = vld [vmem:[#allocation9 + $0x98] sm:$0xff]
        %v842 = vld [vmem:[#allocation9 + $0xa0] sm:$0xff]
        %v843 = vld [vmem:[#allocation9 + $0xa8] sm:$0xff]
        %v844 = vld [vmem:[#allocation9 + $0xb0] sm:$0xff]
        %v845 = vld [vmem:[#allocation9 + $0xb8] sm:$0xff]
        %v846 = vld [vmem:[#allocation9 + $0xc0] sm:$0xff]
        %v847 = vld [vmem:[#allocation9 + $0xc8] sm:$0xff]
        %v848 = vld [vmem:[#allocation9 + $0xd0] sm:$0xff]
        %v849 = vld [vmem:[#allocation9 + $0xd8] sm:$0xff]
        %v850 = vld [vmem:[#allocation9 + $0xe0] sm:$0xff]
        %v851 = vld [vmem:[#allocation9 + $0xe8] sm:$0xff]
        %v852 = vld [vmem:[#allocation9 + $0xf0] sm:$0xff]
        %v853 = vld [vmem:[#allocation9 + $0xf8] sm:$0xff]
        %v854 = vld [vmem:[#allocation9 + $0x100] sm:$0xff]
        %v855 = vld [vmem:[#allocation9 + $0x108] sm:$0xff]
        %v856 = vld [vmem:[#allocation9 + $0x110] sm:$0xff]
        %v857 = vld [vmem:[#allocation9 + $0x118] sm:$0xff]
        %v858 = vld [vmem:[#allocation9 + $0x120] sm:$0xff]
        %v859 = vld [vmem:[#allocation9 + $0x128] sm:$0xff]
        %v860 = vld [vmem:[#allocation9 + $0x130] sm:$0xff]
        %v861 = vld [vmem:[#allocation9 + $0x138] sm:$0xff]
        %v862 = vld [vmem:[#allocation9 + $0x140] sm:$0xff]
        %v863 = vld [vmem:[#allocation9 + $0x148] sm:$0xff]
        %v864 = vld [vmem:[#allocation9 + $0x150] sm:$0xff]
        %v865 = vld [vmem:[#allocation9 + $0x158] sm:$0xff]
        %v866 = vld [vmem:[#allocation9 + $0x160] sm:$0xff]
        %v867 = vld [vmem:[#allocation9 + $0x168] sm:$0xff]
        %v868 = vld [vmem:[#allocation9 + $0x170] sm:$0xff]
        %v869 = vld [vmem:[#allocation9 + $0x178] sm:$0xff]
        %v870 = vld [vmem:[#allocation9 + $0x180] sm:$0xff]
        %v871 = vld [vmem:[#allocation9 + $0x188] sm:$0xff]
        %v872 = vld [vmem:[#allocation9 + $0x190] sm:$0xff]
        %v873 = vld [vmem:[#allocation9 + $0x198] sm:$0xff]
        %v874 = vld [vmem:[#allocation9 + $0x1a0] sm:$0xff]
        %v875 = vld [vmem:[#allocation9 + $0x1a8] sm:$0xff]
        %v876 = vld [vmem:[#allocation9 + $0x1b0] sm:$0xff]
        %v877 = vld [vmem:[#allocation9 + $0x1b8] sm:$0xff]
        %v878 = vld [vmem:[#allocation9 + $0x1c0] sm:$0xff]
        %v879 = vld [vmem:[#allocation9 + $0x1c8] sm:$0xff]
        %v880 = vld [vmem:[#allocation9 + $0x1d0] sm:$0xff]
        %v881 = vld [vmem:[#allocation9 + $0x1d8] sm:$0xff]
        %v882 = vld [vmem:[#allocation9 + $0x1e0] sm:$0xff]
        %v883 = vld [vmem:[#allocation9 + $0x1e8] sm:$0xff]
        %v884 = vld [vmem:[#allocation9 + $0x1f0] sm:$0xff]
        %v885 = vld [vmem:[#allocation9 + $0x1f8] sm:$0xff]
        %886 = vmatpush.msra.mxu0 %v882
        %887 = vmatpush.msra.mxu0 %v878
        %888 = vmatpush.msra.mxu0 %v874
        %889 = vmatpush.msra.mxu0 %v870
        %890 = vmatpush.msra.mxu0 %v866
        %891 = vmatpush.msra.mxu0 %v862
        %892 = vmatpush.msra.mxu0 %v858
        %893 = vmatpush.msra.mxu0 %v854
        %894 = vmatpush.msra.mxu0 %v850
        %895 = vmatpush.msra.mxu0 %v846
        %896 = vmatpush.msra.mxu0 %v842
        %897 = vmatpush.msra.mxu0 %v838
        %898 = vmatpush.msra.mxu0 %v834
        %899 = vmatpush.msra.mxu0 %v830
        %900 = vmatpush.msra.mxu0 %v826
        %901 = vmatpush.msra.mxu0 %v822
        %902 = vmatmul.f32.gmra.mxu0 %v808
        %v903 = vpop.f32.mrf.mxu0
        %v904 = vadd.f32 0.0, %v903
        %905 = vdwg.mxu0
        %906 = vmatpush.msra.mxu0 %v883
        %907 = vmatpush.msra.mxu0 %v879
        %908 = vmatpush.msra.mxu0 %v875
        %909 = vmatpush.msra.mxu0 %v871
        %910 = vmatpush.msra.mxu0 %v867
        %911 = vmatpush.msra.mxu0 %v863
        %912 = vmatpush.msra.mxu0 %v859
        %913 = vmatpush.msra.mxu0 %v855
        %914 = vmatpush.msra.mxu0 %v851
        %915 = vmatpush.msra.mxu0 %v847
        %916 = vmatpush.msra.mxu0 %v843
        %917 = vmatpush.msra.mxu0 %v839
        %918 = vmatpush.msra.mxu0 %v835
        %919 = vmatpush.msra.mxu0 %v831
        %920 = vmatpush.msra.mxu0 %v827
        %921 = vmatpush.msra.mxu0 %v823
        %922 = vmatmul.f32.gmra.mxu0 %v808
        %v923 = vpop.f32.mrf.mxu0
        %v924 = vadd.f32 0.0, %v923
        %925 = vdwg.mxu0
        %926 = vmatpush.msra.mxu0 %v884
        %927 = vmatpush.msra.mxu0 %v880
        %928 = vmatpush.msra.mxu0 %v876
        %929 = vmatpush.msra.mxu0 %v872
        %930 = vmatpush.msra.mxu0 %v868
        %931 = vmatpush.msra.mxu0 %v864
        %932 = vmatpush.msra.mxu0 %v860
        %933 = vmatpush.msra.mxu0 %v856
        %934 = vmatpush.msra.mxu0 %v852
        %935 = vmatpush.msra.mxu0 %v848
        %936 = vmatpush.msra.mxu0 %v844
        %937 = vmatpush.msra.mxu0 %v840
        %938 = vmatpush.msra.mxu0 %v836
        %939 = vmatpush.msra.mxu0 %v832
        %940 = vmatpush.msra.mxu0 %v828
        %941 = vmatpush.msra.mxu0 %v824
        %942 = vmatmul.f32.gmra.mxu0 %v808
        %v943 = vpop.f32.mrf.mxu0
        %v944 = vadd.f32 0.0, %v943
        %945 = vdwg.mxu0
        %946 = vmatpush.msra.mxu0 %v885
        %947 = vmatpush.msra.mxu0 %v881
        %948 = vmatpush.msra.mxu0 %v877
        %949 = vmatpush.msra.mxu0 %v873
        %950 = vmatpush.msra.mxu0 %v869
        %951 = vmatpush.msra.mxu0 %v865
        %952 = vmatpush.msra.mxu0 %v861
        %953 = vmatpush.msra.mxu0 %v857
        %954 = vmatpush.msra.mxu0 %v853
        %955 = vmatpush.msra.mxu0 %v849
        %956 = vmatpush.msra.mxu0 %v845
        %957 = vmatpush.msra.mxu0 %v841
        %958 = vmatpush.msra.mxu0 %v837
        %959 = vmatpush.msra.mxu0 %v833
        %960 = vmatpush.msra.mxu0 %v829
        %961 = vmatpush.msra.mxu0 %v825
        %962 = vmatmul.f32.gmra.mxu0 %v808
        %v963 = vpop.f32.mrf.mxu0
        %v964 = vadd.f32 0.0, %v963
        %965 = vdwg.mxu0
        %v966 = vadd.f32 %v818, %v904
        %v967 = vadd.f32 %v819, %v924
        %v968 = vadd.f32 %v820, %v944
        %v969 = vadd.f32 %v821, %v964
        %v970 = vxor.u32 %v966, 2147483648
        %v971 = vxor.u32 %v967, 2147483648
        %v972 = vxor.u32 %v968, 2147483648
        %v973 = vmul.f32 %v970, 1.442695
        %v974 = vpow.pop %v973
        %v975 = vmul.f32 %v971, 1.442695
        %v976 = vpow.pop %v975
        %v977 = vmul.f32 %v972, 1.442695
        %v978 = vpow.pop %v977
        %v979 = vadd.f32 %v974, 1.0
        %v980 = vadd.f32 %v976, 1.0
        %v981 = vadd.f32 %v978, 1.0
        %v982 = vrcp.pop %v979
        %v983 = vmul.f32 %v979, %v982
        %v984 = vsub.f32 1.0, %v983
        %v985 = vmul.f32 %v982, %v984
        %v986 = vadd.f32 %v982, %v985
        %vm987 = vweird.f32 %v979
        %vm988 = vweird.f32 %v982
        %vm989 = vmor %vm987, %vm988
        %v990 = vsel %vm989, %v982, %v986
        %v991 = vand.u32 2147483647, %v979
        %vm992 = vcmp.eq.f32.partialorder %v991, 8.507059e+37
        %v993 = vand.u32 %v979, 2147483648
        %v994 = vor.u32 1.1754944e-38, %v993
        %v995 = vsel %vm992, %v994, %v990
        %v996 = vmul.f32 1.0, %v995
        %v997 = vrcp.pop %v980
        %v998 = vmul.f32 %v980, %v997
        %v999 = vsub.f32 1.0, %v998
        %v1000 = vmul.f32 %v997, %v999
        %v1001 = vadd.f32 %v997, %v1000
        %vm1002 = vweird.f32 %v980
        %vm1003 = vweird.f32 %v997
        %vm1004 = vmor %vm1002, %vm1003
        %v1005 = vsel %vm1004, %v997, %v1001
        %v1006 = vand.u32 2147483647, %v980
        %vm1007 = vcmp.eq.f32.partialorder %v1006, 8.507059e+37
        %v1008 = vand.u32 %v980, 2147483648
        %v1009 = vor.u32 1.1754944e-38, %v1008
        %v1010 = vsel %vm1007, %v1009, %v1005
        %v1011 = vmul.f32 1.0, %v1010
        %v1012 = vrcp.pop %v981
        %v1013 = vmul.f32 %v981, %v1012
        %v1014 = vsub.f32 1.0, %v1013
        %v1015 = vmul.f32 %v1012, %v1014
        %v1016 = vadd.f32 %v1012, %v1015
        %vm1017 = vweird.f32 %v981
        %vm1018 = vweird.f32 %v1012
        %vm1019 = vmor %vm1017, %vm1018
        %v1020 = vsel %vm1019, %v1012, %v1016
        %v1021 = vand.u32 2147483647, %v981
        %vm1022 = vcmp.eq.f32.partialorder %v1021, 8.507059e+37
        %v1023 = vand.u32 %v981, 2147483648
        %v1024 = vor.u32 1.1754944e-38, %v1023
        %v1025 = vsel %vm1022, %v1024, %v1020
        %v1026 = vmul.f32 1.0, %v1025
        %v1027 = vtanh.pop %v969
        %v1028 = vmul.f32 %v1011, %v806
        %v1029 = vmul.f32 %v996, %v1027
        %v1030 = vadd.f32 %v1028, %v1029
        %v1031 = vtanh.pop %v1030
        %v1032 = vmul.f32 %v1026, %v1031
        %s1033 = scalar_lea.vmem %s313, %s812 [#allocation12]
        %1034 = vst [vmem:[%s1033] sm:$0xff] %v1032
        %s1035 = smul.u32 %s585, 2
        %s1036 = sadd.s32 %s583, %s1035
        %s1037 = smul.u32 %s1036, 8
        %s1038 = sshra.s32 %s1037, 3
        %s1039 = sand.u32 %s1037, 7
        %s1040 = smul.u32 %s1038, 4
        %s1041 = smul.addr %s1040, 8
        %s1042 = scalar_lea.vmem [#allocation4], %s1041
        %v1043 = vld [vmem:[%s1042] sm:$0xff]
        %v1044 = vld [vmem:[%s1042 + $0x8] sm:$0xff]
        %v1045 = vld [vmem:[%s1042 + $0x10] sm:$0xff]
        %v1046 = vld [vmem:[%s1042 + $0x18] sm:$0xff]
        %v1047 = vld [vmem:[#allocation9] sm:$0xff]
        %v1048 = vld [vmem:[#allocation9 + $0x8] sm:$0xff]
        %v1049 = vld [vmem:[#allocation9 + $0x10] sm:$0xff]
        %v1050 = vld [vmem:[#allocation9 + $0x18] sm:$0xff]
        %v1051 = vld [vmem:[#allocation9 + $0x20] sm:$0xff]
        %v1052 = vld [vmem:[#allocation9 + $0x28] sm:$0xff]
        %v1053 = vld [vmem:[#allocation9 + $0x30] sm:$0xff]
        %v1054 = vld [vmem:[#allocation9 + $0x38] sm:$0xff]
        %v1055 = vld [vmem:[#allocation9 + $0x40] sm:$0xff]
        %v1056 = vld [vmem:[#allocation9 + $0x48] sm:$0xff]
        %v1057 = vld [vmem:[#allocation9 + $0x50] sm:$0xff]
        %v1058 = vld [vmem:[#allocation9 + $0x58] sm:$0xff]
        %v1059 = vld [vmem:[#allocation9 + $0x60] sm:$0xff]
        %v1060 = vld [vmem:[#allocation9 + $0x68] sm:$0xff]
        %v1061 = vld [vmem:[#allocation9 + $0x70] sm:$0xff]
        %v1062 = vld [vmem:[#allocation9 + $0x78] sm:$0xff]
        %v1063 = vld [vmem:[#allocation9 + $0x80] sm:$0xff]
        %v1064 = vld [vmem:[#allocation9 + $0x88] sm:$0xff]
        %v1065 = vld [vmem:[#allocation9 + $0x90] sm:$0xff]
        %v1066 = vld [vmem:[#allocation9 + $0x98] sm:$0xff]
        %v1067 = vld [vmem:[#allocation9 + $0xa0] sm:$0xff]
        %v1068 = vld [vmem:[#allocation9 + $0xa8] sm:$0xff]
        %v1069 = vld [vmem:[#allocation9 + $0xb0] sm:$0xff]
        %v1070 = vld [vmem:[#allocation9 + $0xb8] sm:$0xff]
        %v1071 = vld [vmem:[#allocation9 + $0xc0] sm:$0xff]
        %v1072 = vld [vmem:[#allocation9 + $0xc8] sm:$0xff]
        %v1073 = vld [vmem:[#allocation9 + $0xd0] sm:$0xff]
        %v1074 = vld [vmem:[#allocation9 + $0xd8] sm:$0xff]
        %v1075 = vld [vmem:[#allocation9 + $0xe0] sm:$0xff]
        %v1076 = vld [vmem:[#allocation9 + $0xe8] sm:$0xff]
        %v1077 = vld [vmem:[#allocation9 + $0xf0] sm:$0xff]
        %v1078 = vld [vmem:[#allocation9 + $0xf8] sm:$0xff]
        %v1079 = vld [vmem:[#allocation9 + $0x100] sm:$0xff]
        %v1080 = vld [vmem:[#allocation9 + $0x108] sm:$0xff]
        %v1081 = vld [vmem:[#allocation9 + $0x110] sm:$0xff]
        %v1082 = vld [vmem:[#allocation9 + $0x118] sm:$0xff]
        %v1083 = vld [vmem:[#allocation9 + $0x120] sm:$0xff]
        %v1084 = vld [vmem:[#allocation9 + $0x128] sm:$0xff]
        %v1085 = vld [vmem:[#allocation9 + $0x130] sm:$0xff]
        %v1086 = vld [vmem:[#allocation9 + $0x138] sm:$0xff]
        %v1087 = vld [vmem:[#allocation9 + $0x140] sm:$0xff]
        %v1088 = vld [vmem:[#allocation9 + $0x148] sm:$0xff]
        %v1089 = vld [vmem:[#allocation9 + $0x150] sm:$0xff]
        %v1090 = vld [vmem:[#allocation9 + $0x158] sm:$0xff]
        %v1091 = vld [vmem:[#allocation9 + $0x160] sm:$0xff]
        %v1092 = vld [vmem:[#allocation9 + $0x168] sm:$0xff]
        %v1093 = vld [vmem:[#allocation9 + $0x170] sm:$0xff]
        %v1094 = vld [vmem:[#allocation9 + $0x178] sm:$0xff]
        %v1095 = vld [vmem:[#allocation9 + $0x180] sm:$0xff]
        %v1096 = vld [vmem:[#allocation9 + $0x188] sm:$0xff]
        %v1097 = vld [vmem:[#allocation9 + $0x190] sm:$0xff]
        %v1098 = vld [vmem:[#allocation9 + $0x198] sm:$0xff]
        %v1099 = vld [vmem:[#allocation9 + $0x1a0] sm:$0xff]
        %v1100 = vld [vmem:[#allocation9 + $0x1a8] sm:$0xff]
        %v1101 = vld [vmem:[#allocation9 + $0x1b0] sm:$0xff]
        %v1102 = vld [vmem:[#allocation9 + $0x1b8] sm:$0xff]
        %v1103 = vld [vmem:[#allocation9 + $0x1c0] sm:$0xff]
        %v1104 = vld [vmem:[#allocation9 + $0x1c8] sm:$0xff]
        %v1105 = vld [vmem:[#allocation9 + $0x1d0] sm:$0xff]
        %v1106 = vld [vmem:[#allocation9 + $0x1d8] sm:$0xff]
        %v1107 = vld [vmem:[#allocation9 + $0x1e0] sm:$0xff]
        %v1108 = vld [vmem:[#allocation9 + $0x1e8] sm:$0xff]
        %v1109 = vld [vmem:[#allocation9 + $0x1f0] sm:$0xff]
        %v1110 = vld [vmem:[#allocation9 + $0x1f8] sm:$0xff]
        %1111 = vmatpush.msra.mxu0 %v1107
        %1112 = vmatpush.msra.mxu0 %v1103
        %1113 = vmatpush.msra.mxu0 %v1099
        %1114 = vmatpush.msra.mxu0 %v1095
        %1115 = vmatpush.msra.mxu0 %v1091
        %1116 = vmatpush.msra.mxu0 %v1087
        %1117 = vmatpush.msra.mxu0 %v1083
        %1118 = vmatpush.msra.mxu0 %v1079
        %1119 = vmatpush.msra.mxu0 %v1075
        %1120 = vmatpush.msra.mxu0 %v1071
        %1121 = vmatpush.msra.mxu0 %v1067
        %1122 = vmatpush.msra.mxu0 %v1063
        %1123 = vmatpush.msra.mxu0 %v1059
        %1124 = vmatpush.msra.mxu0 %v1055
        %1125 = vmatpush.msra.mxu0 %v1051
        %1126 = vmatpush.msra.mxu0 %v1047
        %1127 = vmatmul.f32.gmra.mxu0 %v1032
        %v1128 = vpop.f32.mrf.mxu0
        %v1129 = vadd.f32 0.0, %v1128
        %1130 = vdwg.mxu0
        %1131 = vmatpush.msra.mxu0 %v1108
        %1132 = vmatpush.msra.mxu0 %v1104
        %1133 = vmatpush.msra.mxu0 %v1100
        %1134 = vmatpush.msra.mxu0 %v1096
        %1135 = vmatpush.msra.mxu0 %v1092
        %1136 = vmatpush.msra.mxu0 %v1088
        %1137 = vmatpush.msra.mxu0 %v1084
        %1138 = vmatpush.msra.mxu0 %v1080
        %1139 = vmatpush.msra.mxu0 %v1076
        %1140 = vmatpush.msra.mxu0 %v1072
        %1141 = vmatpush.msra.mxu0 %v1068
        %1142 = vmatpush.msra.mxu0 %v1064
        %1143 = vmatpush.msra.mxu0 %v1060
        %1144 = vmatpush.msra.mxu0 %v1056
        %1145 = vmatpush.msra.mxu0 %v1052
        %1146 = vmatpush.msra.mxu0 %v1048
        %1147 = vmatmul.f32.gmra.mxu0 %v1032
        %v1148 = vpop.f32.mrf.mxu0
        %v1149 = vadd.f32 0.0, %v1148
        %1150 = vdwg.mxu0
        %1151 = vmatpush.msra.mxu0 %v1109
        %1152 = vmatpush.msra.mxu0 %v1105
        %1153 = vmatpush.msra.mxu0 %v1101
        %1154 = vmatpush.msra.mxu0 %v1097
        %1155 = vmatpush.msra.mxu0 %v1093
        %1156 = vmatpush.msra.mxu0 %v1089
        %1157 = vmatpush.msra.mxu0 %v1085
        %1158 = vmatpush.msra.mxu0 %v1081
        %1159 = vmatpush.msra.mxu0 %v1077
        %1160 = vmatpush.msra.mxu0 %v1073
        %1161 = vmatpush.msra.mxu0 %v1069
        %1162 = vmatpush.msra.mxu0 %v1065
        %1163 = vmatpush.msra.mxu0 %v1061
        %1164 = vmatpush.msra.mxu0 %v1057
        %1165 = vmatpush.msra.mxu0 %v1053
        %1166 = vmatpush.msra.mxu0 %v1049
        %1167 = vmatmul.f32.gmra.mxu0 %v1032
        %v1168 = vpop.f32.mrf.mxu0
        %v1169 = vadd.f32 0.0, %v1168
        %1170 = vdwg.mxu0
        %1171 = vmatpush.msra.mxu0 %v1110
        %1172 = vmatpush.msra.mxu0 %v1106
        %1173 = vmatpush.msra.mxu0 %v1102
        %1174 = vmatpush.msra.mxu0 %v1098
        %1175 = vmatpush.msra.mxu0 %v1094
        %1176 = vmatpush.msra.mxu0 %v1090
        %1177 = vmatpush.msra.mxu0 %v1086
        %1178 = vmatpush.msra.mxu0 %v1082
        %1179 = vmatpush.msra.mxu0 %v1078
        %1180 = vmatpush.msra.mxu0 %v1074
        %1181 = vmatpush.msra.mxu0 %v1070
        %1182 = vmatpush.msra.mxu0 %v1066
        %1183 = vmatpush.msra.mxu0 %v1062
        %1184 = vmatpush.msra.mxu0 %v1058
        %1185 = vmatpush.msra.mxu0 %v1054
        %1186 = vmatpush.msra.mxu0 %v1050
        %1187 = vmatmul.f32.gmra.mxu0 %v1032
        %v1188 = vpop.f32.mrf.mxu0
        %v1189 = vadd.f32 0.0, %v1188
        %1190 = vdwg.mxu0
        %v1191 = vadd.f32 %v1043, %v1129
        %v1192 = vadd.f32 %v1044, %v1149
        %v1193 = vadd.f32 %v1045, %v1169
        %v1194 = vadd.f32 %v1046, %v1189
        %v1195 = vxor.u32 %v1191, 2147483648
        %v1196 = vxor.u32 %v1192, 2147483648
        %v1197 = vxor.u32 %v1193, 2147483648
        %v1198 = vmul.f32 %v1195, 1.442695
        %v1199 = vpow.pop %v1198
        %v1200 = vmul.f32 %v1196, 1.442695
        %v1201 = vpow.pop %v1200
        %v1202 = vmul.f32 %v1197, 1.442695
        %v1203 = vpow.pop %v1202
        %v1204 = vadd.f32 %v1199, 1.0
        %v1205 = vadd.f32 %v1201, 1.0
        %v1206 = vadd.f32 %v1203, 1.0
        %v1207 = vrcp.pop %v1204
        %v1208 = vmul.f32 %v1204, %v1207
        %v1209 = vsub.f32 1.0, %v1208
        %v1210 = vmul.f32 %v1207, %v1209
        %v1211 = vadd.f32 %v1207, %v1210
        %vm1212 = vweird.f32 %v1204
        %vm1213 = vweird.f32 %v1207
        %vm1214 = vmor %vm1212, %vm1213
        %v1215 = vsel %vm1214, %v1207, %v1211
        %v1216 = vand.u32 2147483647, %v1204
        %vm1217 = vcmp.eq.f32.partialorder %v1216, 8.507059e+37
        %v1218 = vand.u32 %v1204, 2147483648
        %v1219 = vor.u32 1.1754944e-38, %v1218
        %v1220 = vsel %vm1217, %v1219, %v1215
        %v1221 = vmul.f32 1.0, %v1220
        %v1222 = vrcp.pop %v1205
        %v1223 = vmul.f32 %v1205, %v1222
        %v1224 = vsub.f32 1.0, %v1223
        %v1225 = vmul.f32 %v1222, %v1224
        %v1226 = vadd.f32 %v1222, %v1225
        %vm1227 = vweird.f32 %v1205
        %vm1228 = vweird.f32 %v1222
        %vm1229 = vmor %vm1227, %vm1228
        %v1230 = vsel %vm1229, %v1222, %v1226
        %v1231 = vand.u32 2147483647, %v1205
        %vm1232 = vcmp.eq.f32.partialorder %v1231, 8.507059e+37
        %v1233 = vand.u32 %v1205, 2147483648
        %v1234 = vor.u32 1.1754944e-38, %v1233
        %v1235 = vsel %vm1232, %v1234, %v1230
        %v1236 = vmul.f32 1.0, %v1235
        %v1237 = vrcp.pop %v1206
        %v1238 = vmul.f32 %v1206, %v1237
        %v1239 = vsub.f32 1.0, %v1238
        %v1240 = vmul.f32 %v1237, %v1239
        %v1241 = vadd.f32 %v1237, %v1240
        %vm1242 = vweird.f32 %v1206
        %vm1243 = vweird.f32 %v1237
        %vm1244 = vmor %vm1242, %vm1243
        %v1245 = vsel %vm1244, %v1237, %v1241
        %v1246 = vand.u32 2147483647, %v1206
        %vm1247 = vcmp.eq.f32.partialorder %v1246, 8.507059e+37
        %v1248 = vand.u32 %v1206, 2147483648
        %v1249 = vor.u32 1.1754944e-38, %v1248
        %v1250 = vsel %vm1247, %v1249, %v1245
        %v1251 = vmul.f32 1.0, %v1250
        %v1252 = vtanh.pop %v1194
        %v1253 = vmul.f32 %v1236, %v1030
        %v1254 = vmul.f32 %v1221, %v1252
        %v1255 = vadd.f32 %v1253, %v1254
        %v1256 = vtanh.pop %v1255
        %v1257 = vmul.f32 %v1251, %v1256
        %s1258 = scalar_lea.vmem %s313, %s1037 [#allocation12]
        %1259 = vst [vmem:[%s1258] sm:$0xff] %v1257
        %s1260 = smul.u32 %s585, 3
        %s1261 = sadd.s32 %s583, %s1260
        %s1262 = smul.u32 %s1261, 8
        %s1263 = sshra.s32 %s1262, 3
        %s1264 = sand.u32 %s1262, 7
        %s1265 = smul.u32 %s1263, 4
        %s1266 = smul.addr %s1265, 8
        %s1267 = scalar_lea.vmem [#allocation4], %s1266
        %v1268 = vld [vmem:[%s1267] sm:$0xff]
        %v1269 = vld [vmem:[%s1267 + $0x8] sm:$0xff]
        %v1270 = vld [vmem:[%s1267 + $0x10] sm:$0xff]
        %v1271 = vld [vmem:[%s1267 + $0x18] sm:$0xff]
        %v1272 = vld [vmem:[#allocation9] sm:$0xff]
        %v1273 = vld [vmem:[#allocation9 + $0x8] sm:$0xff]
        %v1274 = vld [vmem:[#allocation9 + $0x10] sm:$0xff]
        %v1275 = vld [vmem:[#allocation9 + $0x18] sm:$0xff]
        %v1276 = vld [vmem:[#allocation9 + $0x20] sm:$0xff]
        %v1277 = vld [vmem:[#allocation9 + $0x28] sm:$0xff]
        %v1278 = vld [vmem:[#allocation9 + $0x30] sm:$0xff]
        %v1279 = vld [vmem:[#allocation9 + $0x38] sm:$0xff]
        %v1280 = vld [vmem:[#allocation9 + $0x40] sm:$0xff]
        %v1281 = vld [vmem:[#allocation9 + $0x48] sm:$0xff]
        %v1282 = vld [vmem:[#allocation9 + $0x50] sm:$0xff]
        %v1283 = vld [vmem:[#allocation9 + $0x58] sm:$0xff]
        %v1284 = vld [vmem:[#allocation9 + $0x60] sm:$0xff]
        %v1285 = vld [vmem:[#allocation9 + $0x68] sm:$0xff]
        %v1286 = vld [vmem:[#allocation9 + $0x70] sm:$0xff]
        %v1287 = vld [vmem:[#allocation9 + $0x78] sm:$0xff]
        %v1288 = vld [vmem:[#allocation9 + $0x80] sm:$0xff]
        %v1289 = vld [vmem:[#allocation9 + $0x88] sm:$0xff]
        %v1290 = vld [vmem:[#allocation9 + $0x90] sm:$0xff]
        %v1291 = vld [vmem:[#allocation9 + $0x98] sm:$0xff]
        %v1292 = vld [vmem:[#allocation9 + $0xa0] sm:$0xff]
        %v1293 = vld [vmem:[#allocation9 + $0xa8] sm:$0xff]
        %v1294 = vld [vmem:[#allocation9 + $0xb0] sm:$0xff]
        %v1295 = vld [vmem:[#allocation9 + $0xb8] sm:$0xff]
        %v1296 = vld [vmem:[#allocation9 + $0xc0] sm:$0xff]
        %v1297 = vld [vmem:[#allocation9 + $0xc8] sm:$0xff]
        %v1298 = vld [vmem:[#allocation9 + $0xd0] sm:$0xff]
        %v1299 = vld [vmem:[#allocation9 + $0xd8] sm:$0xff]
        %v1300 = vld [vmem:[#allocation9 + $0xe0] sm:$0xff]
        %v1301 = vld [vmem:[#allocation9 + $0xe8] sm:$0xff]
        %v1302 = vld [vmem:[#allocation9 + $0xf0] sm:$0xff]
        %v1303 = vld [vmem:[#allocation9 + $0xf8] sm:$0xff]
        %v1304 = vld [vmem:[#allocation9 + $0x100] sm:$0xff]
        %v1305 = vld [vmem:[#allocation9 + $0x108] sm:$0xff]
        %v1306 = vld [vmem:[#allocation9 + $0x110] sm:$0xff]
        %v1307 = vld [vmem:[#allocation9 + $0x118] sm:$0xff]
        %v1308 = vld [vmem:[#allocation9 + $0x120] sm:$0xff]
        %v1309 = vld [vmem:[#allocation9 + $0x128] sm:$0xff]
        %v1310 = vld [vmem:[#allocation9 + $0x130] sm:$0xff]
        %v1311 = vld [vmem:[#allocation9 + $0x138] sm:$0xff]
        %v1312 = vld [vmem:[#allocation9 + $0x140] sm:$0xff]
        %v1313 = vld [vmem:[#allocation9 + $0x148] sm:$0xff]
        %v1314 = vld [vmem:[#allocation9 + $0x150] sm:$0xff]
        %v1315 = vld [vmem:[#allocation9 + $0x158] sm:$0xff]
        %v1316 = vld [vmem:[#allocation9 + $0x160] sm:$0xff]
        %v1317 = vld [vmem:[#allocation9 + $0x168] sm:$0xff]
        %v1318 = vld [vmem:[#allocation9 + $0x170] sm:$0xff]
        %v1319 = vld [vmem:[#allocation9 + $0x178] sm:$0xff]
        %v1320 = vld [vmem:[#allocation9 + $0x180] sm:$0xff]
        %v1321 = vld [vmem:[#allocation9 + $0x188] sm:$0xff]
        %v1322 = vld [vmem:[#allocation9 + $0x190] sm:$0xff]
        %v1323 = vld [vmem:[#allocation9 + $0x198] sm:$0xff]
        %v1324 = vld [vmem:[#allocation9 + $0x1a0] sm:$0xff]
        %v1325 = vld [vmem:[#allocation9 + $0x1a8] sm:$0xff]
        %v1326 = vld [vmem:[#allocation9 + $0x1b0] sm:$0xff]
        %v1327 = vld [vmem:[#allocation9 + $0x1b8] sm:$0xff]
        %v1328 = vld [vmem:[#allocation9 + $0x1c0] sm:$0xff]
        %v1329 = vld [vmem:[#allocation9 + $0x1c8] sm:$0xff]
        %v1330 = vld [vmem:[#allocation9 + $0x1d0] sm:$0xff]
        %v1331 = vld [vmem:[#allocation9 + $0x1d8] sm:$0xff]
        %v1332 = vld [vmem:[#allocation9 + $0x1e0] sm:$0xff]
        %v1333 = vld [vmem:[#allocation9 + $0x1e8] sm:$0xff]
        %v1334 = vld [vmem:[#allocation9 + $0x1f0] sm:$0xff]
        %v1335 = vld [vmem:[#allocation9 + $0x1f8] sm:$0xff]
        %1336 = vmatpush.msra.mxu0 %v1332
        %1337 = vmatpush.msra.mxu0 %v1328
        %1338 = vmatpush.msra.mxu0 %v1324
        %1339 = vmatpush.msra.mxu0 %v1320
        %1340 = vmatpush.msra.mxu0 %v1316
        %1341 = vmatpush.msra.mxu0 %v1312
        %1342 = vmatpush.msra.mxu0 %v1308
        %1343 = vmatpush.msra.mxu0 %v1304
        %1344 = vmatpush.msra.mxu0 %v1300
        %1345 = vmatpush.msra.mxu0 %v1296
        %1346 = vmatpush.msra.mxu0 %v1292
        %1347 = vmatpush.msra.mxu0 %v1288
        %1348 = vmatpush.msra.mxu0 %v1284
        %1349 = vmatpush.msra.mxu0 %v1280
        %1350 = vmatpush.msra.mxu0 %v1276
        %1351 = vmatpush.msra.mxu0 %v1272
        %1352 = vmatmul.f32.gmra.mxu0 %v1257
        %v1353 = vpop.f32.mrf.mxu0
        %v1354 = vadd.f32 0.0, %v1353
        %1355 = vdwg.mxu0
        %1356 = vmatpush.msra.mxu0 %v1333
        %1357 = vmatpush.msra.mxu0 %v1329
        %1358 = vmatpush.msra.mxu0 %v1325
        %1359 = vmatpush.msra.mxu0 %v1321
        %1360 = vmatpush.msra.mxu0 %v1317
        %1361 = vmatpush.msra.mxu0 %v1313
        %1362 = vmatpush.msra.mxu0 %v1309
        %1363 = vmatpush.msra.mxu0 %v1305
        %1364 = vmatpush.msra.mxu0 %v1301
        %1365 = vmatpush.msra.mxu0 %v1297
        %1366 = vmatpush.msra.mxu0 %v1293
        %1367 = vmatpush.msra.mxu0 %v1289
        %1368 = vmatpush.msra.mxu0 %v1285
        %1369 = vmatpush.msra.mxu0 %v1281
        %1370 = vmatpush.msra.mxu0 %v1277
        %1371 = vmatpush.msra.mxu0 %v1273
        %1372 = vmatmul.f32.gmra.mxu0 %v1257
        %v1373 = vpop.f32.mrf.mxu0
        %v1374 = vadd.f32 0.0, %v1373
        %1375 = vdwg.mxu0
        %1376 = vmatpush.msra.mxu0 %v1334
        %1377 = vmatpush.msra.mxu0 %v1330
        %1378 = vmatpush.msra.mxu0 %v1326
        %1379 = vmatpush.msra.mxu0 %v1322
        %1380 = vmatpush.msra.mxu0 %v1318
        %1381 = vmatpush.msra.mxu0 %v1314
        %1382 = vmatpush.msra.mxu0 %v1310
        %1383 = vmatpush.msra.mxu0 %v1306
        %1384 = vmatpush.msra.mxu0 %v1302
        %1385 = vmatpush.msra.mxu0 %v1298
        %1386 = vmatpush.msra.mxu0 %v1294
        %1387 = vmatpush.msra.mxu0 %v1290
        %1388 = vmatpush.msra.mxu0 %v1286
        %1389 = vmatpush.msra.mxu0 %v1282
        %1390 = vmatpush.msra.mxu0 %v1278
        %1391 = vmatpush.msra.mxu0 %v1274
        %1392 = vmatmul.f32.gmra.mxu0 %v1257
        %v1393 = vpop.f32.mrf.mxu0
        %v1394 = vadd.f32 0.0, %v1393
        %1395 = vdwg.mxu0
        %1396 = vmatpush.msra.mxu0 %v1335
        %1397 = vmatpush.msra.mxu0 %v1331
        %1398 = vmatpush.msra.mxu0 %v1327
        %1399 = vmatpush.msra.mxu0 %v1323
        %1400 = vmatpush.msra.mxu0 %v1319
        %1401 = vmatpush.msra.mxu0 %v1315
        %1402 = vmatpush.msra.mxu0 %v1311
        %1403 = vmatpush.msra.mxu0 %v1307
        %1404 = vmatpush.msra.mxu0 %v1303
        %1405 = vmatpush.msra.mxu0 %v1299
        %1406 = vmatpush.msra.mxu0 %v1295
        %1407 = vmatpush.msra.mxu0 %v1291
        %1408 = vmatpush.msra.mxu0 %v1287
        %1409 = vmatpush.msra.mxu0 %v1283
        %1410 = vmatpush.msra.mxu0 %v1279
        %1411 = vmatpush.msra.mxu0 %v1275
        %1412 = vmatmul.f32.gmra.mxu0 %v1257
        %v1413 = vpop.f32.mrf.mxu0
        %v1414 = vadd.f32 0.0, %v1413
        %1415 = vdwg.mxu0
        %v1416 = vadd.f32 %v1268, %v1354
        %v1417 = vadd.f32 %v1269, %v1374
        %v1418 = vadd.f32 %v1270, %v1394
        %v1419 = vadd.f32 %v1271, %v1414
        %v1420 = vxor.u32 %v1416, 2147483648
        %v1421 = vxor.u32 %v1417, 2147483648
        %v1422 = vxor.u32 %v1418, 2147483648
        %v1423 = vmul.f32 %v1420, 1.442695
        %v1424 = vpow.pop %v1423
        %v1425 = vmul.f32 %v1421, 1.442695
        %v1426 = vpow.pop %v1425
        %v1427 = vmul.f32 %v1422, 1.442695
        %v1428 = vpow.pop %v1427
        %v1429 = vadd.f32 %v1424, 1.0
        %v1430 = vadd.f32 %v1426, 1.0
        %v1431 = vadd.f32 %v1428, 1.0
        %v1432 = vrcp.pop %v1429
        %v1433 = vmul.f32 %v1429, %v1432
        %v1434 = vsub.f32 1.0, %v1433
        %v1435 = vmul.f32 %v1432, %v1434
        %v1436 = vadd.f32 %v1432, %v1435
        %vm1437 = vweird.f32 %v1429
        %vm1438 = vweird.f32 %v1432
        %vm1439 = vmor %vm1437, %vm1438
        %v1440 = vsel %vm1439, %v1432, %v1436
        %v1441 = vand.u32 2147483647, %v1429
        %vm1442 = vcmp.eq.f32.partialorder %v1441, 8.507059e+37
        %v1443 = vand.u32 %v1429, 2147483648
        %v1444 = vor.u32 1.1754944e-38, %v1443
        %v1445 = vsel %vm1442, %v1444, %v1440
        %v1446 = vmul.f32 1.0, %v1445
        %v1447 = vrcp.pop %v1430
        %v1448 = vmul.f32 %v1430, %v1447
        %v1449 = vsub.f32 1.0, %v1448
        %v1450 = vmul.f32 %v1447, %v1449
        %v1451 = vadd.f32 %v1447, %v1450
        %vm1452 = vweird.f32 %v1430
        %vm1453 = vweird.f32 %v1447
        %vm1454 = vmor %vm1452, %vm1453
        %v1455 = vsel %vm1454, %v1447, %v1451
        %v1456 = vand.u32 2147483647, %v1430
        %vm1457 = vcmp.eq.f32.partialorder %v1456, 8.507059e+37
        %v1458 = vand.u32 %v1430, 2147483648
        %v1459 = vor.u32 1.1754944e-38, %v1458
        %v1460 = vsel %vm1457, %v1459, %v1455
        %v1461 = vmul.f32 1.0, %v1460
        %v1462 = vrcp.pop %v1431
        %v1463 = vmul.f32 %v1431, %v1462
        %v1464 = vsub.f32 1.0, %v1463
        %v1465 = vmul.f32 %v1462, %v1464
        %v1466 = vadd.f32 %v1462, %v1465
        %vm1467 = vweird.f32 %v1431
        %vm1468 = vweird.f32 %v1462
        %vm1469 = vmor %vm1467, %vm1468
        %v1470 = vsel %vm1469, %v1462, %v1466
        %v1471 = vand.u32 2147483647, %v1431
        %vm1472 = vcmp.eq.f32.partialorder %v1471, 8.507059e+37
        %v1473 = vand.u32 %v1431, 2147483648
        %v1474 = vor.u32 1.1754944e-38, %v1473
        %v1475 = vsel %vm1472, %v1474, %v1470
        %v1476 = vmul.f32 1.0, %v1475
        %v1477 = vtanh.pop %v1419
        %v1478 = vmul.f32 %v1461, %v1255
        %v1479 = vmul.f32 %v1446, %v1477
        %v1480 = vadd.f32 %v1478, %v1479
        %v1481 = vtanh.pop %v1480
        %v1482 = vmul.f32 %v1476, %v1481
        %s1483 = scalar_lea.vmem %s313, %s1262 [#allocation12]
        %1484 = vst [vmem:[%s1483] sm:$0xff] %v1482
        %s1485 = smul.u32 %s585, 4
        %s1486 = sadd.s32 %s583, %s1485
        %s1487 = smul.u32 %s1486, 8
        %s1488 = sshra.s32 %s1487, 3
        %s1489 = sand.u32 %s1487, 7
        %s1490 = smul.u32 %s1488, 4
        %s1491 = smul.addr %s1490, 8
        %s1492 = scalar_lea.vmem [#allocation4], %s1491
        %v1493 = vld [vmem:[%s1492] sm:$0xff]
        %v1494 = vld [vmem:[%s1492 + $0x8] sm:$0xff]
        %v1495 = vld [vmem:[%s1492 + $0x10] sm:$0xff]
        %v1496 = vld [vmem:[%s1492 + $0x18] sm:$0xff]
        %v1497 = vld [vmem:[#allocation9] sm:$0xff]
        %v1498 = vld [vmem:[#allocation9 + $0x8] sm:$0xff]
        %v1499 = vld [vmem:[#allocation9 + $0x10] sm:$0xff]
        %v1500 = vld [vmem:[#allocation9 + $0x18] sm:$0xff]
        %v1501 = vld [vmem:[#allocation9 + $0x20] sm:$0xff]
        %v1502 = vld [vmem:[#allocation9 + $0x28] sm:$0xff]
        %v1503 = vld [vmem:[#allocation9 + $0x30] sm:$0xff]
        %v1504 = vld [vmem:[#allocation9 + $0x38] sm:$0xff]
        %v1505 = vld [vmem:[#allocation9 + $0x40] sm:$0xff]
        %v1506 = vld [vmem:[#allocation9 + $0x48] sm:$0xff]
        %v1507 = vld [vmem:[#allocation9 + $0x50] sm:$0xff]
        %v1508 = vld [vmem:[#allocation9 + $0x58] sm:$0xff]
        %v1509 = vld [vmem:[#allocation9 + $0x60] sm:$0xff]
        %v1510 = vld [vmem:[#allocation9 + $0x68] sm:$0xff]
        %v1511 = vld [vmem:[#allocation9 + $0x70] sm:$0xff]
        %v1512 = vld [vmem:[#allocation9 + $0x78] sm:$0xff]
        %v1513 = vld [vmem:[#allocation9 + $0x80] sm:$0xff]
        %v1514 = vld [vmem:[#allocation9 + $0x88] sm:$0xff]
        %v1515 = vld [vmem:[#allocation9 + $0x90] sm:$0xff]
        %v1516 = vld [vmem:[#allocation9 + $0x98] sm:$0xff]
        %v1517 = vld [vmem:[#allocation9 + $0xa0] sm:$0xff]
        %v1518 = vld [vmem:[#allocation9 + $0xa8] sm:$0xff]
        %v1519 = vld [vmem:[#allocation9 + $0xb0] sm:$0xff]
        %v1520 = vld [vmem:[#allocation9 + $0xb8] sm:$0xff]
        %v1521 = vld [vmem:[#allocation9 + $0xc0] sm:$0xff]
        %v1522 = vld [vmem:[#allocation9 + $0xc8] sm:$0xff]
        %v1523 = vld [vmem:[#allocation9 + $0xd0] sm:$0xff]
        %v1524 = vld [vmem:[#allocation9 + $0xd8] sm:$0xff]
        %v1525 = vld [vmem:[#allocation9 + $0xe0] sm:$0xff]
        %v1526 = vld [vmem:[#allocation9 + $0xe8] sm:$0xff]
        %v1527 = vld [vmem:[#allocation9 + $0xf0] sm:$0xff]
        %v1528 = vld [vmem:[#allocation9 + $0xf8] sm:$0xff]
        %v1529 = vld [vmem:[#allocation9 + $0x100] sm:$0xff]
        %v1530 = vld [vmem:[#allocation9 + $0x108] sm:$0xff]
        %v1531 = vld [vmem:[#allocation9 + $0x110] sm:$0xff]
        %v1532 = vld [vmem:[#allocation9 + $0x118] sm:$0xff]
        %v1533 = vld [vmem:[#allocation9 + $0x120] sm:$0xff]
        %v1534 = vld [vmem:[#allocation9 + $0x128] sm:$0xff]
        %v1535 = vld [vmem:[#allocation9 + $0x130] sm:$0xff]
        %v1536 = vld [vmem:[#allocation9 + $0x138] sm:$0xff]
        %v1537 = vld [vmem:[#allocation9 + $0x140] sm:$0xff]
        %v1538 = vld [vmem:[#allocation9 + $0x148] sm:$0xff]
        %v1539 = vld [vmem:[#allocation9 + $0x150] sm:$0xff]
        %v1540 = vld [vmem:[#allocation9 + $0x158] sm:$0xff]
        %v1541 = vld [vmem:[#allocation9 + $0x160] sm:$0xff]
        %v1542 = vld [vmem:[#allocation9 + $0x168] sm:$0xff]
        %v1543 = vld [vmem:[#allocation9 + $0x170] sm:$0xff]
        %v1544 = vld [vmem:[#allocation9 + $0x178] sm:$0xff]
        %v1545 = vld [vmem:[#allocation9 + $0x180] sm:$0xff]
        %v1546 = vld [vmem:[#allocation9 + $0x188] sm:$0xff]
        %v1547 = vld [vmem:[#allocation9 + $0x190] sm:$0xff]
        %v1548 = vld [vmem:[#allocation9 + $0x198] sm:$0xff]
        %v1549 = vld [vmem:[#allocation9 + $0x1a0] sm:$0xff]
        %v1550 = vld [vmem:[#allocation9 + $0x1a8] sm:$0xff]
        %v1551 = vld [vmem:[#allocation9 + $0x1b0] sm:$0xff]
        %v1552 = vld [vmem:[#allocation9 + $0x1b8] sm:$0xff]
        %v1553 = vld [vmem:[#allocation9 + $0x1c0] sm:$0xff]
        %v1554 = vld [vmem:[#allocation9 + $0x1c8] sm:$0xff]
        %v1555 = vld [vmem:[#allocation9 + $0x1d0] sm:$0xff]
        %v1556 = vld [vmem:[#allocation9 + $0x1d8] sm:$0xff]
        %v1557 = vld [vmem:[#allocation9 + $0x1e0] sm:$0xff]
        %v1558 = vld [vmem:[#allocation9 + $0x1e8] sm:$0xff]
        %v1559 = vld [vmem:[#allocation9 + $0x1f0] sm:$0xff]
        %v1560 = vld [vmem:[#allocation9 + $0x1f8] sm:$0xff]
        %1561 = vmatpush.msra.mxu0 %v1557
        %1562 = vmatpush.msra.mxu0 %v1553
        %1563 = vmatpush.msra.mxu0 %v1549
        %1564 = vmatpush.msra.mxu0 %v1545
        %1565 = vmatpush.msra.mxu0 %v1541
        %1566 = vmatpush.msra.mxu0 %v1537
        %1567 = vmatpush.msra.mxu0 %v1533
        %1568 = vmatpush.msra.mxu0 %v1529
        %1569 = vmatpush.msra.mxu0 %v1525
        %1570 = vmatpush.msra.mxu0 %v1521
        %1571 = vmatpush.msra.mxu0 %v1517
        %1572 = vmatpush.msra.mxu0 %v1513
        %1573 = vmatpush.msra.mxu0 %v1509
        %1574 = vmatpush.msra.mxu0 %v1505
        %1575 = vmatpush.msra.mxu0 %v1501
        %1576 = vmatpush.msra.mxu0 %v1497
        %1577 = vmatmul.f32.gmra.mxu0 %v1482
        %v1578 = vpop.f32.mrf.mxu0
        %v1579 = vadd.f32 0.0, %v1578
        %1580 = vdwg.mxu0
        %1581 = vmatpush.msra.mxu0 %v1558
        %1582 = vmatpush.msra.mxu0 %v1554
        %1583 = vmatpush.msra.mxu0 %v1550
        %1584 = vmatpush.msra.mxu0 %v1546
        %1585 = vmatpush.msra.mxu0 %v1542
        %1586 = vmatpush.msra.mxu0 %v1538
        %1587 = vmatpush.msra.mxu0 %v1534
        %1588 = vmatpush.msra.mxu0 %v1530
        %1589 = vmatpush.msra.mxu0 %v1526
        %1590 = vmatpush.msra.mxu0 %v1522
        %1591 = vmatpush.msra.mxu0 %v1518
        %1592 = vmatpush.msra.mxu0 %v1514
        %1593 = vmatpush.msra.mxu0 %v1510
        %1594 = vmatpush.msra.mxu0 %v1506
        %1595 = vmatpush.msra.mxu0 %v1502
        %1596 = vmatpush.msra.mxu0 %v1498
        %1597 = vmatmul.f32.gmra.mxu0 %v1482
        %v1598 = vpop.f32.mrf.mxu0
        %v1599 = vadd.f32 0.0, %v1598
        %1600 = vdwg.mxu0
        %1601 = vmatpush.msra.mxu0 %v1559
        %1602 = vmatpush.msra.mxu0 %v1555
        %1603 = vmatpush.msra.mxu0 %v1551
        %1604 = vmatpush.msra.mxu0 %v1547
        %1605 = vmatpush.msra.mxu0 %v1543
        %1606 = vmatpush.msra.mxu0 %v1539
        %1607 = vmatpush.msra.mxu0 %v1535
        %1608 = vmatpush.msra.mxu0 %v1531
        %1609 = vmatpush.msra.mxu0 %v1527
        %1610 = vmatpush.msra.mxu0 %v1523
        %1611 = vmatpush.msra.mxu0 %v1519
        %1612 = vmatpush.msra.mxu0 %v1515
        %1613 = vmatpush.msra.mxu0 %v1511
        %1614 = vmatpush.msra.mxu0 %v1507
        %1615 = vmatpush.msra.mxu0 %v1503
        %1616 = vmatpush.msra.mxu0 %v1499
        %1617 = vmatmul.f32.gmra.mxu0 %v1482
        %v1618 = vpop.f32.mrf.mxu0
        %v1619 = vadd.f32 0.0, %v1618
        %1620 = vdwg.mxu0
        %1621 = vmatpush.msra.mxu0 %v1560
        %1622 = vmatpush.msra.mxu0 %v1556
        %1623 = vmatpush.msra.mxu0 %v1552
        %1624 = vmatpush.msra.mxu0 %v1548
        %1625 = vmatpush.msra.mxu0 %v1544
        %1626 = vmatpush.msra.mxu0 %v1540
        %1627 = vmatpush.msra.mxu0 %v1536
        %1628 = vmatpush.msra.mxu0 %v1532
        %1629 = vmatpush.msra.mxu0 %v1528
        %1630 = vmatpush.msra.mxu0 %v1524
        %1631 = vmatpush.msra.mxu0 %v1520
        %1632 = vmatpush.msra.mxu0 %v1516
        %1633 = vmatpush.msra.mxu0 %v1512
        %1634 = vmatpush.msra.mxu0 %v1508
        %1635 = vmatpush.msra.mxu0 %v1504
        %1636 = vmatpush.msra.mxu0 %v1500
        %1637 = vmatmul.f32.gmra.mxu0 %v1482
        %v1638 = vpop.f32.mrf.mxu0
        %v1639 = vadd.f32 0.0, %v1638
        %1640 = vdwg.mxu0
        %v1641 = vadd.f32 %v1493, %v1579
        %v1642 = vadd.f32 %v1494, %v1599
        %v1643 = vadd.f32 %v1495, %v1619
        %v1644 = vadd.f32 %v1496, %v1639
        %v1645 = vxor.u32 %v1641, 2147483648
        %v1646 = vxor.u32 %v1642, 2147483648
        %v1647 = vxor.u32 %v1643, 2147483648
        %v1648 = vmul.f32 %v1645, 1.442695
        %v1649 = vpow.pop %v1648
        %v1650 = vmul.f32 %v1646, 1.442695
        %v1651 = vpow.pop %v1650
        %v1652 = vmul.f32 %v1647, 1.442695
        %v1653 = vpow.pop %v1652
        %v1654 = vadd.f32 %v1649, 1.0
        %v1655 = vadd.f32 %v1651, 1.0
        %v1656 = vadd.f32 %v1653, 1.0
        %v1657 = vrcp.pop %v1654
        %v1658 = vmul.f32 %v1654, %v1657
        %v1659 = vsub.f32 1.0, %v1658
        %v1660 = vmul.f32 %v1657, %v1659
        %v1661 = vadd.f32 %v1657, %v1660
        %vm1662 = vweird.f32 %v1654
        %vm1663 = vweird.f32 %v1657
        %vm1664 = vmor %vm1662, %vm1663
        %v1665 = vsel %vm1664, %v1657, %v1661
        %v1666 = vand.u32 2147483647, %v1654
        %vm1667 = vcmp.eq.f32.partialorder %v1666, 8.507059e+37
        %v1668 = vand.u32 %v1654, 2147483648
        %v1669 = vor.u32 1.1754944e-38, %v1668
        %v1670 = vsel %vm1667, %v1669, %v1665
        %v1671 = vmul.f32 1.0, %v1670
        %v1672 = vrcp.pop %v1655
        %v1673 = vmul.f32 %v1655, %v1672
        %v1674 = vsub.f32 1.0, %v1673
        %v1675 = vmul.f32 %v1672, %v1674
        %v1676 = vadd.f32 %v1672, %v1675
        %vm1677 = vweird.f32 %v1655
        %vm1678 = vweird.f32 %v1672
        %vm1679 = vmor %vm1677, %vm1678
        %v1680 = vsel %vm1679, %v1672, %v1676
        %v1681 = vand.u32 2147483647, %v1655
        %vm1682 = vcmp.eq.f32.partialorder %v1681, 8.507059e+37
        %v1683 = vand.u32 %v1655, 2147483648
        %v1684 = vor.u32 1.1754944e-38, %v1683
        %v1685 = vsel %vm1682, %v1684, %v1680
        %v1686 = vmul.f32 1.0, %v1685
        %v1687 = vrcp.pop %v1656
        %v1688 = vmul.f32 %v1656, %v1687
        %v1689 = vsub.f32 1.0, %v1688
        %v1690 = vmul.f32 %v1687, %v1689
        %v1691 = vadd.f32 %v1687, %v1690
        %vm1692 = vweird.f32 %v1656
        %vm1693 = vweird.f32 %v1687
        %vm1694 = vmor %vm1692, %vm1693
        %v1695 = vsel %vm1694, %v1687, %v1691
        %v1696 = vand.u32 2147483647, %v1656
        %vm1697 = vcmp.eq.f32.partialorder %v1696, 8.507059e+37
        %v1698 = vand.u32 %v1656, 2147483648
        %v1699 = vor.u32 1.1754944e-38, %v1698
        %v1700 = vsel %vm1697, %v1699, %v1695
        %v1701 = vmul.f32 1.0, %v1700
        %v1702 = vtanh.pop %v1644
        %v1703 = vmul.f32 %v1686, %v1480
        %v1704 = vmul.f32 %v1671, %v1702
        %v1705 = vadd.f32 %v1703, %v1704
        %v1706 = vtanh.pop %v1705
        %v1707 = vmul.f32 %v1701, %v1706
        %s1708 = scalar_lea.vmem %s313, %s1487 [#allocation12]
        %1709 = vst [vmem:[%s1708] sm:$0xff] %v1707
        %s1710 = smul.u32 %s585, 5
        %s1711 = sadd.s32 %s583, %s1710
        %s1712 = smul.u32 %s1711, 8
        %s1713 = sshra.s32 %s1712, 3
        %s1714 = sand.u32 %s1712, 7
        %s1715 = smul.u32 %s1713, 4
        %s1716 = smul.addr %s1715, 8
        %s1717 = scalar_lea.vmem [#allocation4], %s1716
        %v1718 = vld [vmem:[%s1717] sm:$0xff]
        %v1719 = vld [vmem:[%s1717 + $0x8] sm:$0xff]
        %v1720 = vld [vmem:[%s1717 + $0x10] sm:$0xff]
        %v1721 = vld [vmem:[%s1717 + $0x18] sm:$0xff]
        %v1722 = vld [vmem:[#allocation9] sm:$0xff]
        %v1723 = vld [vmem:[#allocation9 + $0x8] sm:$0xff]
        %v1724 = vld [vmem:[#allocation9 + $0x10] sm:$0xff]
        %v1725 = vld [vmem:[#allocation9 + $0x18] sm:$0xff]
        %v1726 = vld [vmem:[#allocation9 + $0x20] sm:$0xff]
        %v1727 = vld [vmem:[#allocation9 + $0x28] sm:$0xff]
        %v1728 = vld [vmem:[#allocation9 + $0x30] sm:$0xff]
        %v1729 = vld [vmem:[#allocation9 + $0x38] sm:$0xff]
        %v1730 = vld [vmem:[#allocation9 + $0x40] sm:$0xff]
        %v1731 = vld [vmem:[#allocation9 + $0x48] sm:$0xff]
        %v1732 = vld [vmem:[#allocation9 + $0x50] sm:$0xff]
        %v1733 = vld [vmem:[#allocation9 + $0x58] sm:$0xff]
        %v1734 = vld [vmem:[#allocation9 + $0x60] sm:$0xff]
        %v1735 = vld [vmem:[#allocation9 + $0x68] sm:$0xff]
        %v1736 = vld [vmem:[#allocation9 + $0x70] sm:$0xff]
        %v1737 = vld [vmem:[#allocation9 + $0x78] sm:$0xff]
        %v1738 = vld [vmem:[#allocation9 + $0x80] sm:$0xff]
        %v1739 = vld [vmem:[#allocation9 + $0x88] sm:$0xff]
        %v1740 = vld [vmem:[#allocation9 + $0x90] sm:$0xff]
        %v1741 = vld [vmem:[#allocation9 + $0x98] sm:$0xff]
        %v1742 = vld [vmem:[#allocation9 + $0xa0] sm:$0xff]
        %v1743 = vld [vmem:[#allocation9 + $0xa8] sm:$0xff]
        %v1744 = vld [vmem:[#allocation9 + $0xb0] sm:$0xff]
        %v1745 = vld [vmem:[#allocation9 + $0xb8] sm:$0xff]
        %v1746 = vld [vmem:[#allocation9 + $0xc0] sm:$0xff]
        %v1747 = vld [vmem:[#allocation9 + $0xc8] sm:$0xff]
        %v1748 = vld [vmem:[#allocation9 + $0xd0] sm:$0xff]
        %v1749 = vld [vmem:[#allocation9 + $0xd8] sm:$0xff]
        %v1750 = vld [vmem:[#allocation9 + $0xe0] sm:$0xff]
        %v1751 = vld [vmem:[#allocation9 + $0xe8] sm:$0xff]
        %v1752 = vld [vmem:[#allocation9 + $0xf0] sm:$0xff]
        %v1753 = vld [vmem:[#allocation9 + $0xf8] sm:$0xff]
        %v1754 = vld [vmem:[#allocation9 + $0x100] sm:$0xff]
        %v1755 = vld [vmem:[#allocation9 + $0x108] sm:$0xff]
        %v1756 = vld [vmem:[#allocation9 + $0x110] sm:$0xff]
        %v1757 = vld [vmem:[#allocation9 + $0x118] sm:$0xff]
        %v1758 = vld [vmem:[#allocation9 + $0x120] sm:$0xff]
        %v1759 = vld [vmem:[#allocation9 + $0x128] sm:$0xff]
        %v1760 = vld [vmem:[#allocation9 + $0x130] sm:$0xff]
        %v1761 = vld [vmem:[#allocation9 + $0x138] sm:$0xff]
        %v1762 = vld [vmem:[#allocation9 + $0x140] sm:$0xff]
        %v1763 = vld [vmem:[#allocation9 + $0x148] sm:$0xff]
        %v1764 = vld [vmem:[#allocation9 + $0x150] sm:$0xff]
        %v1765 = vld [vmem:[#allocation9 + $0x158] sm:$0xff]
        %v1766 = vld [vmem:[#allocation9 + $0x160] sm:$0xff]
        %v1767 = vld [vmem:[#allocation9 + $0x168] sm:$0xff]
        %v1768 = vld [vmem:[#allocation9 + $0x170] sm:$0xff]
        %v1769 = vld [vmem:[#allocation9 + $0x178] sm:$0xff]
        %v1770 = vld [vmem:[#allocation9 + $0x180] sm:$0xff]
        %v1771 = vld [vmem:[#allocation9 + $0x188] sm:$0xff]
        %v1772 = vld [vmem:[#allocation9 + $0x190] sm:$0xff]
        %v1773 = vld [vmem:[#allocation9 + $0x198] sm:$0xff]
        %v1774 = vld [vmem:[#allocation9 + $0x1a0] sm:$0xff]
        %v1775 = vld [vmem:[#allocation9 + $0x1a8] sm:$0xff]
        %v1776 = vld [vmem:[#allocation9 + $0x1b0] sm:$0xff]
        %v1777 = vld [vmem:[#allocation9 + $0x1b8] sm:$0xff]
        %v1778 = vld [vmem:[#allocation9 + $0x1c0] sm:$0xff]
        %v1779 = vld [vmem:[#allocation9 + $0x1c8] sm:$0xff]
        %v1780 = vld [vmem:[#allocation9 + $0x1d0] sm:$0xff]
        %v1781 = vld [vmem:[#allocation9 + $0x1d8] sm:$0xff]
        %v1782 = vld [vmem:[#allocation9 + $0x1e0] sm:$0xff]
        %v1783 = vld [vmem:[#allocation9 + $0x1e8] sm:$0xff]
        %v1784 = vld [vmem:[#allocation9 + $0x1f0] sm:$0xff]
        %v1785 = vld [vmem:[#allocation9 + $0x1f8] sm:$0xff]
        %1786 = vmatpush.msra.mxu0 %v1782
        %1787 = vmatpush.msra.mxu0 %v1778
        %1788 = vmatpush.msra.mxu0 %v1774
        %1789 = vmatpush.msra.mxu0 %v1770
        %1790 = vmatpush.msra.mxu0 %v1766
        %1791 = vmatpush.msra.mxu0 %v1762
        %1792 = vmatpush.msra.mxu0 %v1758
        %1793 = vmatpush.msra.mxu0 %v1754
        %1794 = vmatpush.msra.mxu0 %v1750
        %1795 = vmatpush.msra.mxu0 %v1746
        %1796 = vmatpush.msra.mxu0 %v1742
        %1797 = vmatpush.msra.mxu0 %v1738
        %1798 = vmatpush.msra.mxu0 %v1734
        %1799 = vmatpush.msra.mxu0 %v1730
        %1800 = vmatpush.msra.mxu0 %v1726
        %1801 = vmatpush.msra.mxu0 %v1722
        %1802 = vmatmul.f32.gmra.mxu0 %v1707
        %v1803 = vpop.f32.mrf.mxu0
        %v1804 = vadd.f32 0.0, %v1803
        %1805 = vdwg.mxu0
        %1806 = vmatpush.msra.mxu0 %v1783
        %1807 = vmatpush.msra.mxu0 %v1779
        %1808 = vmatpush.msra.mxu0 %v1775
        %1809 = vmatpush.msra.mxu0 %v1771
        %1810 = vmatpush.msra.mxu0 %v1767
        %1811 = vmatpush.msra.mxu0 %v1763
        %1812 = vmatpush.msra.mxu0 %v1759
        %1813 = vmatpush.msra.mxu0 %v1755
        %1814 = vmatpush.msra.mxu0 %v1751
        %1815 = vmatpush.msra.mxu0 %v1747
        %1816 = vmatpush.msra.mxu0 %v1743
        %1817 = vmatpush.msra.mxu0 %v1739
        %1818 = vmatpush.msra.mxu0 %v1735
        %1819 = vmatpush.msra.mxu0 %v1731
        %1820 = vmatpush.msra.mxu0 %v1727
        %1821 = vmatpush.msra.mxu0 %v1723
        %1822 = vmatmul.f32.gmra.mxu0 %v1707
        %v1823 = vpop.f32.mrf.mxu0
        %v1824 = vadd.f32 0.0, %v1823
        %1825 = vdwg.mxu0
        %1826 = vmatpush.msra.mxu0 %v1784
        %1827 = vmatpush.msra.mxu0 %v1780
        %1828 = vmatpush.msra.mxu0 %v1776
        %1829 = vmatpush.msra.mxu0 %v1772
        %1830 = vmatpush.msra.mxu0 %v1768
        %1831 = vmatpush.msra.mxu0 %v1764
        %1832 = vmatpush.msra.mxu0 %v1760
        %1833 = vmatpush.msra.mxu0 %v1756
        %1834 = vmatpush.msra.mxu0 %v1752
        %1835 = vmatpush.msra.mxu0 %v1748
        %1836 = vmatpush.msra.mxu0 %v1744
        %1837 = vmatpush.msra.mxu0 %v1740
        %1838 = vmatpush.msra.mxu0 %v1736
        %1839 = vmatpush.msra.mxu0 %v1732
        %1840 = vmatpush.msra.mxu0 %v1728
        %1841 = vmatpush.msra.mxu0 %v1724
        %1842 = vmatmul.f32.gmra.mxu0 %v1707
        %v1843 = vpop.f32.mrf.mxu0
        %v1844 = vadd.f32 0.0, %v1843
        %1845 = vdwg.mxu0
        %1846 = vmatpush.msra.mxu0 %v1785
        %1847 = vmatpush.msra.mxu0 %v1781
        %1848 = vmatpush.msra.mxu0 %v1777
        %1849 = vmatpush.msra.mxu0 %v1773
        %1850 = vmatpush.msra.mxu0 %v1769
        %1851 = vmatpush.msra.mxu0 %v1765
        %1852 = vmatpush.msra.mxu0 %v1761
        %1853 = vmatpush.msra.mxu0 %v1757
        %1854 = vmatpush.msra.mxu0 %v1753
        %1855 = vmatpush.msra.mxu0 %v1749
        %1856 = vmatpush.msra.mxu0 %v1745
        %1857 = vmatpush.msra.mxu0 %v1741
        %1858 = vmatpush.msra.mxu0 %v1737
        %1859 = vmatpush.msra.mxu0 %v1733
        %1860 = vmatpush.msra.mxu0 %v1729
        %1861 = vmatpush.msra.mxu0 %v1725
        %1862 = vmatmul.f32.gmra.mxu0 %v1707
        %v1863 = vpop.f32.mrf.mxu0
        %v1864 = vadd.f32 0.0, %v1863
        %1865 = vdwg.mxu0
        %v1866 = vadd.f32 %v1718, %v1804
        %v1867 = vadd.f32 %v1719, %v1824
        %v1868 = vadd.f32 %v1720, %v1844
        %v1869 = vadd.f32 %v1721, %v1864
        %v1870 = vxor.u32 %v1866, 2147483648
        %v1871 = vxor.u32 %v1867, 2147483648
        %v1872 = vxor.u32 %v1868, 2147483648
        %v1873 = vmul.f32 %v1870, 1.442695
        %v1874 = vpow.pop %v1873
        %v1875 = vmul.f32 %v1871, 1.442695
        %v1876 = vpow.pop %v1875
        %v1877 = vmul.f32 %v1872, 1.442695
        %v1878 = vpow.pop %v1877
        %v1879 = vadd.f32 %v1874, 1.0
        %v1880 = vadd.f32 %v1876, 1.0
        %v1881 = vadd.f32 %v1878, 1.0
        %v1882 = vrcp.pop %v1879
        %v1883 = vmul.f32 %v1879, %v1882
        %v1884 = vsub.f32 1.0, %v1883
        %v1885 = vmul.f32 %v1882, %v1884
        %v1886 = vadd.f32 %v1882, %v1885
        %vm1887 = vweird.f32 %v1879
        %vm1888 = vweird.f32 %v1882
        %vm1889 = vmor %vm1887, %vm1888
        %v1890 = vsel %vm1889, %v1882, %v1886
        %v1891 = vand.u32 2147483647, %v1879
        %vm1892 = vcmp.eq.f32.partialorder %v1891, 8.507059e+37
        %v1893 = vand.u32 %v1879, 2147483648
        %v1894 = vor.u32 1.1754944e-38, %v1893
        %v1895 = vsel %vm1892, %v1894, %v1890
        %v1896 = vmul.f32 1.0, %v1895
        %v1897 = vrcp.pop %v1880
        %v1898 = vmul.f32 %v1880, %v1897
        %v1899 = vsub.f32 1.0, %v1898
        %v1900 = vmul.f32 %v1897, %v1899
        %v1901 = vadd.f32 %v1897, %v1900
        %vm1902 = vweird.f32 %v1880
        %vm1903 = vweird.f32 %v1897
        %vm1904 = vmor %vm1902, %vm1903
        %v1905 = vsel %vm1904, %v1897, %v1901
        %v1906 = vand.u32 2147483647, %v1880
        %vm1907 = vcmp.eq.f32.partialorder %v1906, 8.507059e+37
        %v1908 = vand.u32 %v1880, 2147483648
        %v1909 = vor.u32 1.1754944e-38, %v1908
        %v1910 = vsel %vm1907, %v1909, %v1905
        %v1911 = vmul.f32 1.0, %v1910
        %v1912 = vrcp.pop %v1881
        %v1913 = vmul.f32 %v1881, %v1912
        %v1914 = vsub.f32 1.0, %v1913
        %v1915 = vmul.f32 %v1912, %v1914
        %v1916 = vadd.f32 %v1912, %v1915
        %vm1917 = vweird.f32 %v1881
        %vm1918 = vweird.f32 %v1912
        %vm1919 = vmor %vm1917, %vm1918
        %v1920 = vsel %vm1919, %v1912, %v1916
        %v1921 = vand.u32 2147483647, %v1881
        %vm1922 = vcmp.eq.f32.partialorder %v1921, 8.507059e+37
        %v1923 = vand.u32 %v1881, 2147483648
        %v1924 = vor.u32 1.1754944e-38, %v1923
        %v1925 = vsel %vm1922, %v1924, %v1920
        %v1926 = vmul.f32 1.0, %v1925
        %v1927 = vtanh.pop %v1869
        %v1928 = vmul.f32 %v1911, %v1705
        %v1929 = vmul.f32 %v1896, %v1927
        %v1930 = vadd.f32 %v1928, %v1929
        %v1931 = vtanh.pop %v1930
        %v1932 = vmul.f32 %v1926, %v1931
        %s1933 = scalar_lea.vmem %s313, %s1712 [#allocation12]
        %1934 = vst [vmem:[%s1933] sm:$0xff] %v1932
        %s1935 = smul.u32 %s585, 6
        %s1936 = sadd.s32 %s583, %s1935
        %s1937 = smul.u32 %s1936, 8
        %s1938 = sshra.s32 %s1937, 3
        %s1939 = sand.u32 %s1937, 7
        %s1940 = smul.u32 %s1938, 4
        %s1941 = smul.addr %s1940, 8
        %s1942 = scalar_lea.vmem [#allocation4], %s1941
        %v1943 = vld [vmem:[%s1942] sm:$0xff]
        %v1944 = vld [vmem:[%s1942 + $0x8] sm:$0xff]
        %v1945 = vld [vmem:[%s1942 + $0x10] sm:$0xff]
        %v1946 = vld [vmem:[%s1942 + $0x18] sm:$0xff]
        %v1947 = vld [vmem:[#allocation9] sm:$0xff]
        %v1948 = vld [vmem:[#allocation9 + $0x8] sm:$0xff]
        %v1949 = vld [vmem:[#allocation9 + $0x10] sm:$0xff]
        %v1950 = vld [vmem:[#allocation9 + $0x18] sm:$0xff]
        %v1951 = vld [vmem:[#allocation9 + $0x20] sm:$0xff]
        %v1952 = vld [vmem:[#allocation9 + $0x28] sm:$0xff]
        %v1953 = vld [vmem:[#allocation9 + $0x30] sm:$0xff]
        %v1954 = vld [vmem:[#allocation9 + $0x38] sm:$0xff]
        %v1955 = vld [vmem:[#allocation9 + $0x40] sm:$0xff]
        %v1956 = vld [vmem:[#allocation9 + $0x48] sm:$0xff]
        %v1957 = vld [vmem:[#allocation9 + $0x50] sm:$0xff]
        %v1958 = vld [vmem:[#allocation9 + $0x58] sm:$0xff]
        %v1959 = vld [vmem:[#allocation9 + $0x60] sm:$0xff]
        %v1960 = vld [vmem:[#allocation9 + $0x68] sm:$0xff]
        %v1961 = vld [vmem:[#allocation9 + $0x70] sm:$0xff]
        %v1962 = vld [vmem:[#allocation9 + $0x78] sm:$0xff]
        %v1963 = vld [vmem:[#allocation9 + $0x80] sm:$0xff]
        %v1964 = vld [vmem:[#allocation9 + $0x88] sm:$0xff]
        %v1965 = vld [vmem:[#allocation9 + $0x90] sm:$0xff]
        %v1966 = vld [vmem:[#allocation9 + $0x98] sm:$0xff]
        %v1967 = vld [vmem:[#allocation9 + $0xa0] sm:$0xff]
        %v1968 = vld [vmem:[#allocation9 + $0xa8] sm:$0xff]
        %v1969 = vld [vmem:[#allocation9 + $0xb0] sm:$0xff]
        %v1970 = vld [vmem:[#allocation9 + $0xb8] sm:$0xff]
        %v1971 = vld [vmem:[#allocation9 + $0xc0] sm:$0xff]
        %v1972 = vld [vmem:[#allocation9 + $0xc8] sm:$0xff]
        %v1973 = vld [vmem:[#allocation9 + $0xd0] sm:$0xff]
        %v1974 = vld [vmem:[#allocation9 + $0xd8] sm:$0xff]
        %v1975 = vld [vmem:[#allocation9 + $0xe0] sm:$0xff]
        %v1976 = vld [vmem:[#allocation9 + $0xe8] sm:$0xff]
        %v1977 = vld [vmem:[#allocation9 + $0xf0] sm:$0xff]
        %v1978 = vld [vmem:[#allocation9 + $0xf8] sm:$0xff]
        %v1979 = vld [vmem:[#allocation9 + $0x100] sm:$0xff]
        %v1980 = vld [vmem:[#allocation9 + $0x108] sm:$0xff]
        %v1981 = vld [vmem:[#allocation9 + $0x110] sm:$0xff]
        %v1982 = vld [vmem:[#allocation9 + $0x118] sm:$0xff]
        %v1983 = vld [vmem:[#allocation9 + $0x120] sm:$0xff]
        %v1984 = vld [vmem:[#allocation9 + $0x128] sm:$0xff]
        %v1985 = vld [vmem:[#allocation9 + $0x130] sm:$0xff]
        %v1986 = vld [vmem:[#allocation9 + $0x138] sm:$0xff]
        %v1987 = vld [vmem:[#allocation9 + $0x140] sm:$0xff]
        %v1988 = vld [vmem:[#allocation9 + $0x148] sm:$0xff]
        %v1989 = vld [vmem:[#allocation9 + $0x150] sm:$0xff]
        %v1990 = vld [vmem:[#allocation9 + $0x158] sm:$0xff]
        %v1991 = vld [vmem:[#allocation9 + $0x160] sm:$0xff]
        %v1992 = vld [vmem:[#allocation9 + $0x168] sm:$0xff]
        %v1993 = vld [vmem:[#allocation9 + $0x170] sm:$0xff]
        %v1994 = vld [vmem:[#allocation9 + $0x178] sm:$0xff]
        %v1995 = vld [vmem:[#allocation9 + $0x180] sm:$0xff]
        %v1996 = vld [vmem:[#allocation9 + $0x188] sm:$0xff]
        %v1997 = vld [vmem:[#allocation9 + $0x190] sm:$0xff]
        %v1998 = vld [vmem:[#allocation9 + $0x198] sm:$0xff]
        %v1999 = vld [vmem:[#allocation9 + $0x1a0] sm:$0xff]
        %v2000 = vld [vmem:[#allocation9 + $0x1a8] sm:$0xff]
        %v2001 = vld [vmem:[#allocation9 + $0x1b0] sm:$0xff]
        %v2002 = vld [vmem:[#allocation9 + $0x1b8] sm:$0xff]
        %v2003 = vld [vmem:[#allocation9 + $0x1c0] sm:$0xff]
        %v2004 = vld [vmem:[#allocation9 + $0x1c8] sm:$0xff]
        %v2005 = vld [vmem:[#allocation9 + $0x1d0] sm:$0xff]
        %v2006 = vld [vmem:[#allocation9 + $0x1d8] sm:$0xff]
        %v2007 = vld [vmem:[#allocation9 + $0x1e0] sm:$0xff]
        %v2008 = vld [vmem:[#allocation9 + $0x1e8] sm:$0xff]
        %v2009 = vld [vmem:[#allocation9 + $0x1f0] sm:$0xff]
        %v2010 = vld [vmem:[#allocation9 + $0x1f8] sm:$0xff]
        %2011 = vmatpush.msra.mxu0 %v2007
        %2012 = vmatpush.msra.mxu0 %v2003
        %2013 = vmatpush.msra.mxu0 %v1999
        %2014 = vmatpush.msra.mxu0 %v1995
        %2015 = vmatpush.msra.mxu0 %v1991
        %2016 = vmatpush.msra.mxu0 %v1987
        %2017 = vmatpush.msra.mxu0 %v1983
        %2018 = vmatpush.msra.mxu0 %v1979
        %2019 = vmatpush.msra.mxu0 %v1975
        %2020 = vmatpush.msra.mxu0 %v1971
        %2021 = vmatpush.msra.mxu0 %v1967
        %2022 = vmatpush.msra.mxu0 %v1963
        %2023 = vmatpush.msra.mxu0 %v1959
        %2024 = vmatpush.msra.mxu0 %v1955
        %2025 = vmatpush.msra.mxu0 %v1951
        %2026 = vmatpush.msra.mxu0 %v1947
        %2027 = vmatmul.f32.gmra.mxu0 %v1932
        %v2028 = vpop.f32.mrf.mxu0
        %v2029 = vadd.f32 0.0, %v2028
        %2030 = vdwg.mxu0
        %2031 = vmatpush.msra.mxu0 %v2008
        %2032 = vmatpush.msra.mxu0 %v2004
        %2033 = vmatpush.msra.mxu0 %v2000
        %2034 = vmatpush.msra.mxu0 %v1996
        %2035 = vmatpush.msra.mxu0 %v1992
        %2036 = vmatpush.msra.mxu0 %v1988
        %2037 = vmatpush.msra.mxu0 %v1984
        %2038 = vmatpush.msra.mxu0 %v1980
        %2039 = vmatpush.msra.mxu0 %v1976
        %2040 = vmatpush.msra.mxu0 %v1972
        %2041 = vmatpush.msra.mxu0 %v1968
        %2042 = vmatpush.msra.mxu0 %v1964
        %2043 = vmatpush.msra.mxu0 %v1960
        %2044 = vmatpush.msra.mxu0 %v1956
        %2045 = vmatpush.msra.mxu0 %v1952
        %2046 = vmatpush.msra.mxu0 %v1948
        %2047 = vmatmul.f32.gmra.mxu0 %v1932
        %v2048 = vpop.f32.mrf.mxu0
        %v2049 = vadd.f32 0.0, %v2048
        %2050 = vdwg.mxu0
        %2051 = vmatpush.msra.mxu0 %v2009
        %2052 = vmatpush.msra.mxu0 %v2005
        %2053 = vmatpush.msra.mxu0 %v2001
        %2054 = vmatpush.msra.mxu0 %v1997
        %2055 = vmatpush.msra.mxu0 %v1993
        %2056 = vmatpush.msra.mxu0 %v1989
        %2057 = vmatpush.msra.mxu0 %v1985
        %2058 = vmatpush.msra.mxu0 %v1981
        %2059 = vmatpush.msra.mxu0 %v1977
        %2060 = vmatpush.msra.mxu0 %v1973
        %2061 = vmatpush.msra.mxu0 %v1969
        %2062 = vmatpush.msra.mxu0 %v1965
        %2063 = vmatpush.msra.mxu0 %v1961
        %2064 = vmatpush.msra.mxu0 %v1957
        %2065 = vmatpush.msra.mxu0 %v1953
        %2066 = vmatpush.msra.mxu0 %v1949
        %2067 = vmatmul.f32.gmra.mxu0 %v1932
        %v2068 = vpop.f32.mrf.mxu0
        %v2069 = vadd.f32 0.0, %v2068
        %2070 = vdwg.mxu0
        %2071 = vmatpush.msra.mxu0 %v2010
        %2072 = vmatpush.msra.mxu0 %v2006
        %2073 = vmatpush.msra.mxu0 %v2002
        %2074 = vmatpush.msra.mxu0 %v1998
        %2075 = vmatpush.msra.mxu0 %v1994
        %2076 = vmatpush.msra.mxu0 %v1990
        %2077 = vmatpush.msra.mxu0 %v1986
        %2078 = vmatpush.msra.mxu0 %v1982
        %2079 = vmatpush.msra.mxu0 %v1978
        %2080 = vmatpush.msra.mxu0 %v1974
        %2081 = vmatpush.msra.mxu0 %v1970
        %2082 = vmatpush.msra.mxu0 %v1966
        %2083 = vmatpush.msra.mxu0 %v1962
        %2084 = vmatpush.msra.mxu0 %v1958
        %2085 = vmatpush.msra.mxu0 %v1954
        %2086 = vmatpush.msra.mxu0 %v1950
        %2087 = vmatmul.f32.gmra.mxu0 %v1932
        %v2088 = vpop.f32.mrf.mxu0
        %v2089 = vadd.f32 0.0, %v2088
        %2090 = vdwg.mxu0
        %v2091 = vadd.f32 %v1943, %v2029
        %v2092 = vadd.f32 %v1944, %v2049
        %v2093 = vadd.f32 %v1945, %v2069
        %v2094 = vadd.f32 %v1946, %v2089
        %v2095 = vxor.u32 %v2091, 2147483648
        %v2096 = vxor.u32 %v2092, 2147483648
        %v2097 = vxor.u32 %v2093, 2147483648
        %v2098 = vmul.f32 %v2095, 1.442695
        %v2099 = vpow.pop %v2098
        %v2100 = vmul.f32 %v2096, 1.442695
        %v2101 = vpow.pop %v2100
        %v2102 = vmul.f32 %v2097, 1.442695
        %v2103 = vpow.pop %v2102
        %v2104 = vadd.f32 %v2099, 1.0
        %v2105 = vadd.f32 %v2101, 1.0
        %v2106 = vadd.f32 %v2103, 1.0
        %v2107 = vrcp.pop %v2104
        %v2108 = vmul.f32 %v2104, %v2107
        %v2109 = vsub.f32 1.0, %v2108
        %v2110 = vmul.f32 %v2107, %v2109
        %v2111 = vadd.f32 %v2107, %v2110
        %vm2112 = vweird.f32 %v2104
        %vm2113 = vweird.f32 %v2107
        %vm2114 = vmor %vm2112, %vm2113
        %v2115 = vsel %vm2114, %v2107, %v2111
        %v2116 = vand.u32 2147483647, %v2104
        %vm2117 = vcmp.eq.f32.partialorder %v2116, 8.507059e+37
        %v2118 = vand.u32 %v2104, 2147483648
        %v2119 = vor.u32 1.1754944e-38, %v2118
        %v2120 = vsel %vm2117, %v2119, %v2115
        %v2121 = vmul.f32 1.0, %v2120
        %v2122 = vrcp.pop %v2105
        %v2123 = vmul.f32 %v2105, %v2122
        %v2124 = vsub.f32 1.0, %v2123
        %v2125 = vmul.f32 %v2122, %v2124
        %v2126 = vadd.f32 %v2122, %v2125
        %vm2127 = vweird.f32 %v2105
        %vm2128 = vweird.f32 %v2122
        %vm2129 = vmor %vm2127, %vm2128
        %v2130 = vsel %vm2129, %v2122, %v2126
        %v2131 = vand.u32 2147483647, %v2105
        %vm2132 = vcmp.eq.f32.partialorder %v2131, 8.507059e+37
        %v2133 = vand.u32 %v2105, 2147483648
        %v2134 = vor.u32 1.1754944e-38, %v2133
        %v2135 = vsel %vm2132, %v2134, %v2130
        %v2136 = vmul.f32 1.0, %v2135
        %v2137 = vrcp.pop %v2106
        %v2138 = vmul.f32 %v2106, %v2137
        %v2139 = vsub.f32 1.0, %v2138
        %v2140 = vmul.f32 %v2137, %v2139
        %v2141 = vadd.f32 %v2137, %v2140
        %vm2142 = vweird.f32 %v2106
        %vm2143 = vweird.f32 %v2137
        %vm2144 = vmor %vm2142, %vm2143
        %v2145 = vsel %vm2144, %v2137, %v2141
        %v2146 = vand.u32 2147483647, %v2106
        %vm2147 = vcmp.eq.f32.partialorder %v2146, 8.507059e+37
        %v2148 = vand.u32 %v2106, 2147483648
        %v2149 = vor.u32 1.1754944e-38, %v2148
        %v2150 = vsel %vm2147, %v2149, %v2145
        %v2151 = vmul.f32 1.0, %v2150
        %v2152 = vtanh.pop %v2094
        %v2153 = vmul.f32 %v2136, %v1930
        %v2154 = vmul.f32 %v2121, %v2152
        %v2155 = vadd.f32 %v2153, %v2154
        %v2156 = vtanh.pop %v2155
        %v2157 = vmul.f32 %v2151, %v2156
        %s2158 = scalar_lea.vmem %s313, %s1937 [#allocation12]
        %2159 = vst [vmem:[%s2158] sm:$0xff] %v2157
        %s2160 = smul.u32 %s585, 7
        %s2161 = sadd.s32 %s583, %s2160
        %s2162 = smul.u32 %s2161, 8
        %s2163 = sshra.s32 %s2162, 3
        %s2164 = sand.u32 %s2162, 7
        %s2165 = smul.u32 %s2163, 4
        %s2166 = smul.addr %s2165, 8
        %s2167 = scalar_lea.vmem [#allocation4], %s2166
        %v2168 = vld [vmem:[%s2167] sm:$0xff]
        %v2169 = vld [vmem:[%s2167 + $0x8] sm:$0xff]
        %v2170 = vld [vmem:[%s2167 + $0x10] sm:$0xff]
        %v2171 = vld [vmem:[%s2167 + $0x18] sm:$0xff]
        %v2172 = vld [vmem:[#allocation9] sm:$0xff]
        %v2173 = vld [vmem:[#allocation9 + $0x8] sm:$0xff]
        %v2174 = vld [vmem:[#allocation9 + $0x10] sm:$0xff]
        %v2175 = vld [vmem:[#allocation9 + $0x18] sm:$0xff]
        %v2176 = vld [vmem:[#allocation9 + $0x20] sm:$0xff]
        %v2177 = vld [vmem:[#allocation9 + $0x28] sm:$0xff]
        %v2178 = vld [vmem:[#allocation9 + $0x30] sm:$0xff]
        %v2179 = vld [vmem:[#allocation9 + $0x38] sm:$0xff]
        %v2180 = vld [vmem:[#allocation9 + $0x40] sm:$0xff]
        %v2181 = vld [vmem:[#allocation9 + $0x48] sm:$0xff]
        %v2182 = vld [vmem:[#allocation9 + $0x50] sm:$0xff]
        %v2183 = vld [vmem:[#allocation9 + $0x58] sm:$0xff]
        %v2184 = vld [vmem:[#allocation9 + $0x60] sm:$0xff]
        %v2185 = vld [vmem:[#allocation9 + $0x68] sm:$0xff]
        %v2186 = vld [vmem:[#allocation9 + $0x70] sm:$0xff]
        %v2187 = vld [vmem:[#allocation9 + $0x78] sm:$0xff]
        %v2188 = vld [vmem:[#allocation9 + $0x80] sm:$0xff]
        %v2189 = vld [vmem:[#allocation9 + $0x88] sm:$0xff]
        %v2190 = vld [vmem:[#allocation9 + $0x90] sm:$0xff]
        %v2191 = vld [vmem:[#allocation9 + $0x98] sm:$0xff]
        %v2192 = vld [vmem:[#allocation9 + $0xa0] sm:$0xff]
        %v2193 = vld [vmem:[#allocation9 + $0xa8] sm:$0xff]
        %v2194 = vld [vmem:[#allocation9 + $0xb0] sm:$0xff]
        %v2195 = vld [vmem:[#allocation9 + $0xb8] sm:$0xff]
        %v2196 = vld [vmem:[#allocation9 + $0xc0] sm:$0xff]
        %v2197 = vld [vmem:[#allocation9 + $0xc8] sm:$0xff]
        %v2198 = vld [vmem:[#allocation9 + $0xd0] sm:$0xff]
        %v2199 = vld [vmem:[#allocation9 + $0xd8] sm:$0xff]
        %v2200 = vld [vmem:[#allocation9 + $0xe0] sm:$0xff]
        %v2201 = vld [vmem:[#allocation9 + $0xe8] sm:$0xff]
        %v2202 = vld [vmem:[#allocation9 + $0xf0] sm:$0xff]
        %v2203 = vld [vmem:[#allocation9 + $0xf8] sm:$0xff]
        %v2204 = vld [vmem:[#allocation9 + $0x100] sm:$0xff]
        %v2205 = vld [vmem:[#allocation9 + $0x108] sm:$0xff]
        %v2206 = vld [vmem:[#allocation9 + $0x110] sm:$0xff]
        %v2207 = vld [vmem:[#allocation9 + $0x118] sm:$0xff]
        %v2208 = vld [vmem:[#allocation9 + $0x120] sm:$0xff]
        %v2209 = vld [vmem:[#allocation9 + $0x128] sm:$0xff]
        %v2210 = vld [vmem:[#allocation9 + $0x130] sm:$0xff]
        %v2211 = vld [vmem:[#allocation9 + $0x138] sm:$0xff]
        %v2212 = vld [vmem:[#allocation9 + $0x140] sm:$0xff]
        %v2213 = vld [vmem:[#allocation9 + $0x148] sm:$0xff]
        %v2214 = vld [vmem:[#allocation9 + $0x150] sm:$0xff]
        %v2215 = vld [vmem:[#allocation9 + $0x158] sm:$0xff]
        %v2216 = vld [vmem:[#allocation9 + $0x160] sm:$0xff]
        %v2217 = vld [vmem:[#allocation9 + $0x168] sm:$0xff]
        %v2218 = vld [vmem:[#allocation9 + $0x170] sm:$0xff]
        %v2219 = vld [vmem:[#allocation9 + $0x178] sm:$0xff]
        %v2220 = vld [vmem:[#allocation9 + $0x180] sm:$0xff]
        %v2221 = vld [vmem:[#allocation9 + $0x188] sm:$0xff]
        %v2222 = vld [vmem:[#allocation9 + $0x190] sm:$0xff]
        %v2223 = vld [vmem:[#allocation9 + $0x198] sm:$0xff]
        %v2224 = vld [vmem:[#allocation9 + $0x1a0] sm:$0xff]
        %v2225 = vld [vmem:[#allocation9 + $0x1a8] sm:$0xff]
        %v2226 = vld [vmem:[#allocation9 + $0x1b0] sm:$0xff]
        %v2227 = vld [vmem:[#allocation9 + $0x1b8] sm:$0xff]
        %v2228 = vld [vmem:[#allocation9 + $0x1c0] sm:$0xff]
        %v2229 = vld [vmem:[#allocation9 + $0x1c8] sm:$0xff]
        %v2230 = vld [vmem:[#allocation9 + $0x1d0] sm:$0xff]
        %v2231 = vld [vmem:[#allocation9 + $0x1d8] sm:$0xff]
        %v2232 = vld [vmem:[#allocation9 + $0x1e0] sm:$0xff]
        %v2233 = vld [vmem:[#allocation9 + $0x1e8] sm:$0xff]
        %v2234 = vld [vmem:[#allocation9 + $0x1f0] sm:$0xff]
        %v2235 = vld [vmem:[#allocation9 + $0x1f8] sm:$0xff]
        %2236 = vmatpush.msra.mxu0 %v2232
        %2237 = vmatpush.msra.mxu0 %v2228
        %2238 = vmatpush.msra.mxu0 %v2224
        %2239 = vmatpush.msra.mxu0 %v2220
        %2240 = vmatpush.msra.mxu0 %v2216
        %2241 = vmatpush.msra.mxu0 %v2212
        %2242 = vmatpush.msra.mxu0 %v2208
        %2243 = vmatpush.msra.mxu0 %v2204
        %2244 = vmatpush.msra.mxu0 %v2200
        %2245 = vmatpush.msra.mxu0 %v2196
        %2246 = vmatpush.msra.mxu0 %v2192
        %2247 = vmatpush.msra.mxu0 %v2188
        %2248 = vmatpush.msra.mxu0 %v2184
        %2249 = vmatpush.msra.mxu0 %v2180
        %2250 = vmatpush.msra.mxu0 %v2176
        %2251 = vmatpush.msra.mxu0 %v2172
        %2252 = vmatmul.f32.gmra.mxu0 %v2157
        %v2253 = vpop.f32.mrf.mxu0
        %v2254 = vadd.f32 0.0, %v2253
        %2255 = vdwg.mxu0
        %2256 = vmatpush.msra.mxu0 %v2233
        %2257 = vmatpush.msra.mxu0 %v2229
        %2258 = vmatpush.msra.mxu0 %v2225
        %2259 = vmatpush.msra.mxu0 %v2221
        %2260 = vmatpush.msra.mxu0 %v2217
        %2261 = vmatpush.msra.mxu0 %v2213
        %2262 = vmatpush.msra.mxu0 %v2209
        %2263 = vmatpush.msra.mxu0 %v2205
        %2264 = vmatpush.msra.mxu0 %v2201
        %2265 = vmatpush.msra.mxu0 %v2197
        %2266 = vmatpush.msra.mxu0 %v2193
        %2267 = vmatpush.msra.mxu0 %v2189
        %2268 = vmatpush.msra.mxu0 %v2185
        %2269 = vmatpush.msra.mxu0 %v2181
        %2270 = vmatpush.msra.mxu0 %v2177
        %2271 = vmatpush.msra.mxu0 %v2173
        %2272 = vmatmul.f32.gmra.mxu0 %v2157
        %v2273 = vpop.f32.mrf.mxu0
        %v2274 = vadd.f32 0.0, %v2273
        %2275 = vdwg.mxu0
        %2276 = vmatpush.msra.mxu0 %v2234
        %2277 = vmatpush.msra.mxu0 %v2230
        %2278 = vmatpush.msra.mxu0 %v2226
        %2279 = vmatpush.msra.mxu0 %v2222
        %2280 = vmatpush.msra.mxu0 %v2218
        %2281 = vmatpush.msra.mxu0 %v2214
        %2282 = vmatpush.msra.mxu0 %v2210
        %2283 = vmatpush.msra.mxu0 %v2206
        %2284 = vmatpush.msra.mxu0 %v2202
        %2285 = vmatpush.msra.mxu0 %v2198
        %2286 = vmatpush.msra.mxu0 %v2194
        %2287 = vmatpush.msra.mxu0 %v2190
        %2288 = vmatpush.msra.mxu0 %v2186
        %2289 = vmatpush.msra.mxu0 %v2182
        %2290 = vmatpush.msra.mxu0 %v2178
        %2291 = vmatpush.msra.mxu0 %v2174
        %2292 = vmatmul.f32.gmra.mxu0 %v2157
        %v2293 = vpop.f32.mrf.mxu0
        %v2294 = vadd.f32 0.0, %v2293
        %2295 = vdwg.mxu0
        %2296 = vmatpush.msra.mxu0 %v2235
        %2297 = vmatpush.msra.mxu0 %v2231
        %2298 = vmatpush.msra.mxu0 %v2227
        %2299 = vmatpush.msra.mxu0 %v2223
        %2300 = vmatpush.msra.mxu0 %v2219
        %2301 = vmatpush.msra.mxu0 %v2215
        %2302 = vmatpush.msra.mxu0 %v2211
        %2303 = vmatpush.msra.mxu0 %v2207
        %2304 = vmatpush.msra.mxu0 %v2203
        %2305 = vmatpush.msra.mxu0 %v2199
        %2306 = vmatpush.msra.mxu0 %v2195
        %2307 = vmatpush.msra.mxu0 %v2191
        %2308 = vmatpush.msra.mxu0 %v2187
        %2309 = vmatpush.msra.mxu0 %v2183
        %2310 = vmatpush.msra.mxu0 %v2179
        %2311 = vmatpush.msra.mxu0 %v2175
        %2312 = vmatmul.f32.gmra.mxu0 %v2157
        %v2313 = vpop.f32.mrf.mxu0
        %v2314 = vadd.f32 0.0, %v2313
        %2315 = vdwg.mxu0
        %v2316 = vadd.f32 %v2168, %v2254
        %v2317 = vadd.f32 %v2169, %v2274
        %v2318 = vadd.f32 %v2170, %v2294
        %v2319 = vadd.f32 %v2171, %v2314
        %v2320 = vxor.u32 %v2316, 2147483648
        %v2321 = vxor.u32 %v2317, 2147483648
        %v2322 = vxor.u32 %v2318, 2147483648
        %v2323 = vmul.f32 %v2320, 1.442695
        %v2324 = vpow.pop %v2323
        %v2325 = vmul.f32 %v2321, 1.442695
        %v2326 = vpow.pop %v2325
        %v2327 = vmul.f32 %v2322, 1.442695
        %v2328 = vpow.pop %v2327
        %v2329 = vadd.f32 %v2324, 1.0
        %v2330 = vadd.f32 %v2326, 1.0
        %v2331 = vadd.f32 %v2328, 1.0
        %v2332 = vrcp.pop %v2329
        %v2333 = vmul.f32 %v2329, %v2332
        %v2334 = vsub.f32 1.0, %v2333
        %v2335 = vmul.f32 %v2332, %v2334
        %v2336 = vadd.f32 %v2332, %v2335
        %vm2337 = vweird.f32 %v2329
        %vm2338 = vweird.f32 %v2332
        %vm2339 = vmor %vm2337, %vm2338
        %v2340 = vsel %vm2339, %v2332, %v2336
        %v2341 = vand.u32 2147483647, %v2329
        %vm2342 = vcmp.eq.f32.partialorder %v2341, 8.507059e+37
        %v2343 = vand.u32 %v2329, 2147483648
        %v2344 = vor.u32 1.1754944e-38, %v2343
        %v2345 = vsel %vm2342, %v2344, %v2340
        %v2346 = vmul.f32 1.0, %v2345
        %v2347 = vrcp.pop %v2330
        %v2348 = vmul.f32 %v2330, %v2347
        %v2349 = vsub.f32 1.0, %v2348
        %v2350 = vmul.f32 %v2347, %v2349
        %v2351 = vadd.f32 %v2347, %v2350
        %vm2352 = vweird.f32 %v2330
        %vm2353 = vweird.f32 %v2347
        %vm2354 = vmor %vm2352, %vm2353
        %v2355 = vsel %vm2354, %v2347, %v2351
        %v2356 = vand.u32 2147483647, %v2330
        %vm2357 = vcmp.eq.f32.partialorder %v2356, 8.507059e+37
        %v2358 = vand.u32 %v2330, 2147483648
        %v2359 = vor.u32 1.1754944e-38, %v2358
        %v2360 = vsel %vm2357, %v2359, %v2355
        %v2361 = vmul.f32 1.0, %v2360
        %v2362 = vrcp.pop %v2331
        %v2363 = vmul.f32 %v2331, %v2362
        %v2364 = vsub.f32 1.0, %v2363
        %v2365 = vmul.f32 %v2362, %v2364
        %v2366 = vadd.f32 %v2362, %v2365
        %vm2367 = vweird.f32 %v2331
        %vm2368 = vweird.f32 %v2362
        %vm2369 = vmor %vm2367, %vm2368
        %v2370 = vsel %vm2369, %v2362, %v2366
        %v2371 = vand.u32 2147483647, %v2331
        %vm2372 = vcmp.eq.f32.partialorder %v2371, 8.507059e+37
        %v2373 = vand.u32 %v2331, 2147483648
        %v2374 = vor.u32 1.1754944e-38, %v2373
        %v2375 = vsel %vm2372, %v2374, %v2370
        %v2376 = vmul.f32 1.0, %v2375
        %v2377 = vtanh.pop %v2319
        %v2378 = vmul.f32 %v2361, %v2155
        %v2379 = vmul.f32 %v2346, %v2377
        %v2380 = vadd.f32 %v2378, %v2379
        %v2381 = vtanh.pop %v2380
        %v2382 = vmul.f32 %v2376, %v2381
        %s2383 = scalar_lea.vmem %s313, %s2162 [#allocation12]
        %2384 = vst [vmem:[%s2383] sm:$0xff] %v2382
        %2385 = vst [vmem:[#allocation2] sm:$0xff] %v2382
        %2386 = vst [vmem:[#allocation3] sm:$0xff] %v2380
        %s2387 = sand.u32 %s158, 1
        %s2388 = sand.u32 %s158, 1
        %s2389 = smul.addr %s2388, 64
        %s2390 = scalar_lea.vmem [#allocation12], %s2389
        // Predicated region
        $region57: #{lstm_block_forward.2} parent=35 // pred_check
          %p2391 = pneg %p168
        $region58: #{lstm_block_forward.2} parent=35 // pred_check_branch
          %2393 = sbr.rel (%p2391) target = $region60
        $region59: #{lstm_block_forward.2} parent=35 // pred_region
          %s2394 = smul.u32 %s24, 2
          %s2395 = ssub.s32 1, %s2394
          %s2396 = smul.u32 %s2395, %s25
          %s2397 = smul.u32 8, %s2396
          %s2398 = smul.addr %s2397, 2
          %s2399 = sadd.s32 %s24, %s2398
          %s2400 = smul.addr %s2399, 8
          %s2401 = scalar_lea.vmem %s4, %s2400
          // Predicated region
          $region61: #{lstm_block_forward.2} parent=59 // pred_check
            _
          $region62: #{lstm_block_forward.2} parent=59 // pred_check_branch
            %2403 = sbr.rel (0) target = $region64
          $region63: #{lstm_block_forward.2} parent=59 // pred_region
            // Predicated region
            $region65: #{lstm_block_forward.2} parent=63 // pred_check
              _
            $region66: #{lstm_block_forward.2} parent=63 // pred_check_branch
              %2405 = sbr.rel (0) target = $region68
            $region67: #{lstm_block_forward.2} parent=63 // pred_region
              // Predicated region
              $region80: #{lstm_block_forward.2} parent=67 // pred_check
                _
              $region81: #{lstm_block_forward.2} parent=67 // pred_check_branch
                %2435 = sbr.rel (0) target = $region83
              $region82: #{lstm_block_forward.2} parent=67 // pred_region
                loop: start=0, step=1, limit=1
                $region84: #{lstm_block_forward.2} parent=82 // loop_pre_header
                  _
                $region85: #{lstm_block_forward.2} parent=82 // loop_header
                  %s2437 = sphi 0, %s2441
                  %p2438 = scmp.ge.s32.totalorder %s2437, 1
                  %s2442 = sphi %s2390, %s2390
                  %s2443 = sphi %s2401, %s2401
                $region86: #{lstm_block_forward.2} parent=82 // loop_header_branch
                  %2440 = sbr.rel (%p2438) target = $region90
                $region87: #{lstm_block_forward.2} parent=82 // loop_body
                  %v2444 = vld [vmem:[%s2442] sm:$0xff]
                  %2445 = vst [vmem:[%s2443] sm:$0xff] %v2444
                  %v2446 = vld [vmem:[%s2442 + $0x8] sm:$0xff]
                  %2447 = vst [vmem:[%s2443 + $0x10] sm:$0xff] %v2446
                  %v2448 = vld [vmem:[%s2442 + $0x10] sm:$0xff]
                  %2449 = vst [vmem:[%s2443 + $0x20] sm:$0xff] %v2448
                  %v2450 = vld [vmem:[%s2442 + $0x18] sm:$0xff]
                  %2451 = vst [vmem:[%s2443 + $0x30] sm:$0xff] %v2450
                  %v2452 = vld [vmem:[%s2442 + $0x20] sm:$0xff]
                  %2453 = vst [vmem:[%s2443 + $0x40] sm:$0xff] %v2452
                  %v2454 = vld [vmem:[%s2442 + $0x28] sm:$0xff]
                  %2455 = vst [vmem:[%s2443 + $0x50] sm:$0xff] %v2454
                  %v2456 = vld [vmem:[%s2442 + $0x30] sm:$0xff]
                  %2457 = vst [vmem:[%s2443 + $0x60] sm:$0xff] %v2456
                  %v2458 = vld [vmem:[%s2442 + $0x38] sm:$0xff]
                  %2459 = vst [vmem:[%s2443 + $0x70] sm:$0xff] %v2458
                $region88: #{lstm_block_forward.2} parent=82 // loop_footer
                  %s2441 = sadd.s32 1, %s2437
                $region89: #{lstm_block_forward.2} parent=82 // loop_footer_branch
                  %2436 = sbr.rel target = $region85
                $region90: #{lstm_block_forward.2} parent=82 // loop_exit
                  _
              $region83: #{lstm_block_forward.2} parent=67 // pred_fallthru
                _
              // Predicated region
              $region91: #{lstm_block_forward.2} parent=67 // pred_check
                _
              $region92: #{lstm_block_forward.2} parent=67 // pred_check_branch
                %2461 = sbr.rel target = $region94
              $region93: #{lstm_block_forward.2} parent=67 // pred_region
                _
              $region94: #{lstm_block_forward.2} parent=67 // pred_fallthru
                _
            $region68: #{lstm_block_forward.2} parent=63 // pred_fallthru
              _
            // Predicated region
            $region69: #{lstm_block_forward.2} parent=63 // pred_check
              _
            $region70: #{lstm_block_forward.2} parent=63 // pred_check_branch
              %2407 = sbr.rel target = $region72
            $region71: #{lstm_block_forward.2} parent=63 // pred_region
              %s2409 = ssub.s32 256, 1
              loop: start=0, step=1, limit=1
              $region73: #{lstm_block_forward.2} parent=71 // loop_pre_header
                _
              $region74: #{lstm_block_forward.2} parent=71 // loop_header
                %s2411 = sphi 0, %s2415
                %p2412 = scmp.ge.s32.totalorder %s2411, 1
                %s2416 = sphi %s2390, %s2390
                %s2417 = sphi %s2401, %s2401
              $region75: #{lstm_block_forward.2} parent=71 // loop_header_branch
                %2414 = sbr.rel (%p2412) target = $region79
              $region76: #{lstm_block_forward.2} parent=71 // loop_body
                %v2418 = vld [vmem:[%s2416] sm:%s2409]
                %2419 = vst [vmem:[%s2417] sm:%s2409] %v2418
                %v2420 = vld [vmem:[%s2416 + $0x8] sm:%s2409]
                %2421 = vst [vmem:[%s2417 + $0x10] sm:%s2409] %v2420
                %v2422 = vld [vmem:[%s2416 + $0x10] sm:%s2409]
                %2423 = vst [vmem:[%s2417 + $0x20] sm:%s2409] %v2422
                %v2424 = vld [vmem:[%s2416 + $0x18] sm:%s2409]
                %2425 = vst [vmem:[%s2417 + $0x30] sm:%s2409] %v2424
                %v2426 = vld [vmem:[%s2416 + $0x20] sm:%s2409]
                %2427 = vst [vmem:[%s2417 + $0x40] sm:%s2409] %v2426
                %v2428 = vld [vmem:[%s2416 + $0x28] sm:%s2409]
                %2429 = vst [vmem:[%s2417 + $0x50] sm:%s2409] %v2428
                %v2430 = vld [vmem:[%s2416 + $0x30] sm:%s2409]
                %2431 = vst [vmem:[%s2417 + $0x60] sm:%s2409] %v2430
                %v2432 = vld [vmem:[%s2416 + $0x38] sm:%s2409]
                %2433 = vst [vmem:[%s2417 + $0x70] sm:%s2409] %v2432
              $region77: #{lstm_block_forward.2} parent=71 // loop_footer
                %s2415 = sadd.s32 1, %s2411
              $region78: #{lstm_block_forward.2} parent=71 // loop_footer_branch
                %2410 = sbr.rel target = $region74
              $region79: #{lstm_block_forward.2} parent=71 // loop_exit
                _
            $region72: #{lstm_block_forward.2} parent=63 // pred_fallthru
              _
          $region64: #{lstm_block_forward.2} parent=59 // pred_fallthru
            _
          %2462 = vnop
        $region60: #{lstm_block_forward.2} parent=35 // pred_fallthru
          _
      $region36: #{lstm_block_forward.2} parent=5 // pred_fallthru
        _
      %p2463 = scmp.le.s32.totalorder 2, %s15
      // Predicated region
      $region95: #{lstm_block_forward.2} parent=5 // pred_check
        %p2464 = pneg %p2463
      $region96: #{lstm_block_forward.2} parent=5 // pred_check_branch
        %2466 = sbr.rel (%p2464) target = $region98
      $region97: #{lstm_block_forward.2} parent=5 // pred_region
        %s2467 = ssub.s32 %s15, 2
        // Predicated region
        $region99: #{lstm_block_forward.2} parent=97 // pred_check
          %p2468 = pneg %p174
        $region100: #{lstm_block_forward.2} parent=97 // pred_check_branch
          %2470 = sbr.rel (%p2468) target = $region102
        $region101: #{lstm_block_forward.2} parent=97 // pred_region
          %s2471 = sand.u32 %s159, 1
          %s2472 = sand.u32 %s159, 1
          %s2473 = smul.addr %s2472, 64
          %s2474 = scalar_lea.vmem [#allocation12], %s2473
        $region102: #{lstm_block_forward.2} parent=97 // pred_fallthru
          _
      $region98: #{lstm_block_forward.2} parent=5 // pred_fallthru
        _
    $region6: #{lstm_block_forward.2} parent=1 // loop_footer
      %s19 = sadd.s32 1, %s15
    $region7: #{lstm_block_forward.2} parent=1 // loop_footer_branch
      %14 = sbr.rel target = $region3
    $region8: #{lstm_block_forward.2} parent=1 // loop_exit
      _
    %2475 = vsyncpa [#allocation6], 1
    %s2476 = scalar_lea.sflag [#allocation6], 1
    %2477 = vsyncpa %s2476, 1
    %2478 = vsyncpa [#allocation8], 1
    %2479 = vsyncpa [#allocation11], 1

// kernel: lstm_block_forward.3
$region0: #{lstm_block_forward.3}
  #allocation0 [shape = 'u32[]', space=smem, size = 0x4, offset = 0x4, fixed_abs, tag = 'smem constant byte address 0x4 - core index']
  #allocation1 [shape = 'u32[72,128]{1,0:T(1,128)}', space=vmem, size = 0x9000, scoped, tag = 'internal scratch']
  #allocation2 [shape = 'f32[8,128]{1,0:T(8,128)}', space=vmem, size = 0x1000, scoped, tag = 'scratch operand']
  #allocation3 [shape = 'f32[8,128]{1,0:T(8,128)}', space=vmem, size = 0x1000, scoped, tag = 'scratch operand']
  #allocation4 [shape = 'f32[64,512]{1,0:T(8,128)}', space=vmem, size = 0x20000, scoped, tag = 'scratch operand']
  %s0 = inlined_call_operand.vmem [shape: f32[64,256], index: 0, kind: input, shape index: {}]
  %s1 = inlined_call_operand.hbm [shape: f32[2,256,512], index: 1, kind: input, shape index: {}]
  %s2 = inlined_call_operand.hbm [shape: f32[2,128,512], index: 2, kind: input, shape index: {}]
  %s3 = inlined_call_operand.hbm [shape: f32[2,1,512], index: 3, kind: input, shape index: {}]
  %s4 = inlined_call_operand.hbm [shape: f32[64,256], index: 4, kind: output, shape index: {}]
  %s5 = sld [smem:[#allocation0]]
  $region65: #{lstm_block_forward.3} parent=0
    _
  %s7 = ssub.s32 1, %s5
  %s8 = scalar_select 0, %s7, %s5
  $region1: #{lstm_block_forward.3} parent=0
    #allocation5 [shape = 'u8[524288]{0}', space=vmem, size = 0x80000, scoped, tag = 'input window, operand 1, single buffered']
    #allocation6 [shape = 's32[2]{0}', space=sflag, size = 0x8, scoped, tag = 'scoped memory for lstm_block_forward.3']
    #allocation7 [shape = 's32[2]{0}', space=sflag, size = 0x8, scoped, tag = 'scoped memory for lstm_block_forward.3']
    #allocation8 [shape = 'u8[262144]{0}', space=vmem, size = 0x40000, scoped, tag = 'input window, operand 2, single buffered']
    #allocation9 [shape = 's32[1]{0}', space=sflag, size = 0x4, scoped, tag = 'scoped memory for lstm_block_forward.3']
    #allocation10 [shape = 'u8[2048]{0}', space=vmem, size = 0x800, scoped, tag = 'input window, operand 3, single buffered']
    #allocation11 [shape = 'u8[65536]{0}', space=vmem, size = 0x10000, scoped, tag = 'output window, operand 0']
    %9 = vsyncpa [#allocation6], 0
    %10 = vsyncpa [#allocation9], 0
    %11 = vsyncpa [#allocation7], 0
    %s12 = scalar_lea.sflag [#allocation7], 1
    %13 = vsyncpa %s12, 0
    loop: start=0, step=1, limit=4
    $region2: #{lstm_block_forward.3} parent=1 // loop_pre_header
      _
    $region3: #{lstm_block_forward.3} parent=1 // loop_header
      %s15 = sphi 0, %s19
      %p16 = scmp.ge.s32.totalorder %s15, 4
      %s22 = sphi 0, %s34
      %s23 = sphi 0, %s30
      %s24 = sphi 0, %s22
      %s25 = sphi 0, %s23
      %s26 = sphi 0, %s24
      %s27 = sphi 0, %s25
      %s43 = sphi 0, %s45
      %s46 = sphi 0, %s43
      %s47 = sphi 0, %s46
      %s63 = sphi 0, %s47
      %s69 = sphi 0, %s71
      %s72 = sphi 0, %s69
      %s73 = sphi 0, %s72
      %s89 = sphi 0, %s73
      %s95 = sphi 0, %s97
      %s98 = sphi 0, %s95
      %s99 = sphi 0, %s98
      %s115 = sphi 0, %s99
      %s121 = sphi 0, %s123
      %s124 = sphi 0, %s121
      %s125 = sphi 0, %s124
      %s141 = sphi 0, %s125
      %s155 = sphi 0, %s157
      %s158 = sphi 0, %s155
      %s159 = sphi 0, %s158
      %s175 = sphi 0, %s159
    $region4: #{lstm_block_forward.3} parent=1 // loop_header_branch
      %18 = sbr.rel (%p16) target = $region8
    $region5: #{lstm_block_forward.3} parent=1 // loop_body
      %s20 = ssub.s32 %s15, 1
      %s21 = ssub.s32 %s15, 2
      %s28 = sadd.s32 1, %s23
      %p29 = scmp.ge.s32.totalorder %s28, 1
      %s30 = scalar_select %p29, 0, %s28
      %s31 = sadd.s32 1, %s22
      %s32 = scalar_select %p29, %s31, %s22
      %p33 = scmp.ge.s32.totalorder %s32, 2
      %s34 = scalar_select %p33, 0, %s32
      %s35 = smul.u32 %s22, 2
      %s36 = ssub.s32 1, %s35
      %s37 = smul.u32 %s36, %s23
      %s38 = smul.u32 %s34, 2
      %s39 = ssub.s32 1, %s38
      %s40 = smul.u32 %s39, %s30
      %s41 = ssub.s32 %s37, %s40
      %p42 = scmp.eq.s32.totalorder %s41, 0
      %s44 = sadd.s32 %s43, 1
      %s45 = scalar_select %p42, %s43, %s44
      %p48 = pneg %p42
      %p49 = scmp.eq.s32.totalorder %s15, 1
      %p50 = por %p48, %p49
      %p51 = scmp.ne.s32.totalorder %s43, %s46
      %p52 = scmp.eq.s32.totalorder %s15, 0
      %p53 = por %p51, %p52
      %p54 = scmp.ne.s32.totalorder %s43, %s46
      %p55 = scmp.eq.s32.totalorder %s20, 1
      %p56 = por %p54, %p55
      %p57 = scmp.ne.s32.totalorder %s46, %s47
      %p58 = scmp.eq.s32.totalorder %s20, 0
      %p59 = por %p57, %p58
      %p60 = scmp.ne.s32.totalorder %s46, %s47
      %p61 = scmp.eq.s32.totalorder %s21, 1
      %p62 = por %p60, %p61
      %p64 = scmp.ne.s32.totalorder %s47, %s63
      %p65 = scmp.eq.s32.totalorder %s21, 0
      %p66 = por %p64, %p65
      %s67 = ssub.s32 %s22, %s34
      %p68 = scmp.eq.s32.totalorder %s67, 0
      %s70 = sadd.s32 %s69, 1
      %s71 = scalar_select %p68, %s69, %s70
      %p74 = pneg %p68
      %p75 = scmp.eq.s32.totalorder %s15, 1
      %p76 = por %p74, %p75
      %p77 = scmp.ne.s32.totalorder %s69, %s72
      %p78 = scmp.eq.s32.totalorder %s15, 0
      %p79 = por %p77, %p78
      %p80 = scmp.ne.s32.totalorder %s69, %s72
      %p81 = scmp.eq.s32.totalorder %s20, 1
      %p82 = por %p80, %p81
      %p83 = scmp.ne.s32.totalorder %s72, %s73
      %p84 = scmp.eq.s32.totalorder %s20, 0
      %p85 = por %p83, %p84
      %p86 = scmp.ne.s32.totalorder %s72, %s73
      %p87 = scmp.eq.s32.totalorder %s21, 1
      %p88 = por %p86, %p87
      %p90 = scmp.ne.s32.totalorder %s73, %s89
      %p91 = scmp.eq.s32.totalorder %s21, 0
      %p92 = por %p90, %p91
      %s93 = ssub.s32 %s22, %s34
      %p94 = scmp.eq.s32.totalorder %s93, 0
      %s96 = sadd.s32 %s95, 1
      %s97 = scalar_select %p94, %s95, %s96
      %p100 = pneg %p94
      %p101 = scmp.eq.s32.totalorder %s15, 1
      %p102 = por %p100, %p101
      %p103 = scmp.ne.s32.totalorder %s95, %s98
      %p104 = scmp.eq.s32.totalorder %s15, 0
      %p105 = por %p103, %p104
      %p106 = scmp.ne.s32.totalorder %s95, %s98
      %p107 = scmp.eq.s32.totalorder %s20, 1
      %p108 = por %p106, %p107
      %p109 = scmp.ne.s32.totalorder %s98, %s99
      %p110 = scmp.eq.s32.totalorder %s20, 0
      %p111 = por %p109, %p110
      %p112 = scmp.ne.s32.totalorder %s98, %s99
      %p113 = scmp.eq.s32.totalorder %s21, 1
      %p114 = por %p112, %p113
      %p116 = scmp.ne.s32.totalorder %s99, %s115
      %p117 = scmp.eq.s32.totalorder %s21, 0
      %p118 = por %p116, %p117
      %s119 = ssub.s32 %s22, %s34
      %p120 = scmp.eq.s32.totalorder %s119, 0
      %s122 = sadd.s32 %s121, 1
      %s123 = scalar_select %p120, %s121, %s122
      %p126 = pneg %p120
      %p127 = scmp.eq.s32.totalorder %s15, 1
      %p128 = por %p126, %p127
      %p129 = scmp.ne.s32.totalorder %s121, %s124
      %p130 = scmp.eq.s32.totalorder %s15, 0
      %p131 = por %p129, %p130
      %p132 = scmp.ne.s32.totalorder %s121, %s124
      %p133 = scmp.eq.s32.totalorder %s20, 1
      %p134 = por %p132, %p133
      %p135 = scmp.ne.s32.totalorder %s124, %s125
      %p136 = scmp.eq.s32.totalorder %s20, 0
      %p137 = por %p135, %p136
      %p138 = scmp.ne.s32.totalorder %s124, %s125
      %p139 = scmp.eq.s32.totalorder %s21, 1
      %p140 = por %p138, %p139
      %p142 = scmp.ne.s32.totalorder %s125, %s141
      %p143 = scmp.eq.s32.totalorder %s21, 0
      %p144 = por %p142, %p143
      %s145 = smul.u32 %s22, 2
      %s146 = ssub.s32 1, %s145
      %s147 = smul.u32 %s146, %s23
      %s148 = smul.u32 %s34, 2
      %s149 = ssub.s32 1, %s148
      %s150 = smul.u32 %s149, %s30
      %s151 = ssub.s32 %s147, %s150
      %s152 = ssub.s32 %s22, %s34
      %s153 = sor.u32 %s151, %s152
      %p154 = scmp.eq.s32.totalorder %s153, 0
      %s156 = sadd.s32 %s155, 1
      %s157 = scalar_select %p154, %s155, %s156
      %p160 = pneg %p154
      %p161 = scmp.eq.s32.totalorder %s15, 1
      %p162 = por %p160, %p161
      %p163 = scmp.ne.s32.totalorder %s155, %s158
      %p164 = scmp.eq.s32.totalorder %s15, 0
      %p165 = por %p163, %p164
      %p166 = scmp.ne.s32.totalorder %s155, %s158
      %p167 = scmp.eq.s32.totalorder %s20, 1
      %p168 = por %p166, %p167
      %p169 = scmp.ne.s32.totalorder %s158, %s159
      %p170 = scmp.eq.s32.totalorder %s20, 0
      %p171 = por %p169, %p170
      %p172 = scmp.ne.s32.totalorder %s158, %s159
      %p173 = scmp.eq.s32.totalorder %s21, 1
      %p174 = por %p172, %p173
      %p176 = scmp.ne.s32.totalorder %s159, %s175
      %p177 = scmp.eq.s32.totalorder %s21, 0
      %p178 = por %p176, %p177
      %p179 = scmp.le.s32.totalorder 1, %s15
      %p180 = scmp.lt.s32.totalorder %s15, 3
      %p181 = pnand %p179, %p180
      %p182 = pneg %p181
      // Predicated region
      $region9: #{lstm_block_forward.3} parent=5 // pred_check
        _
      $region10: #{lstm_block_forward.3} parent=5 // pred_check_branch
        %184 = sbr.rel (%p181) target = $region12
      $region11: #{lstm_block_forward.3} parent=5 // pred_region
        %s185 = ssub.s32 %s15, 1
        // Predicated region
        $region13: #{lstm_block_forward.3} parent=11 // pred_check
          %p186 = pneg %p85
        $region14: #{lstm_block_forward.3} parent=11 // pred_check_branch
          %188 = sbr.rel (%p186) target = $region16
        $region15: #{lstm_block_forward.3} parent=11 // pred_region
          %190 = vsyncadd [#allocation6], 0
          %s191 = smul.addr %s24, 128
          %s192 = smul.addr %s191, 8
          %s193 = scalar_lea.hbm %s1, %s192
          %s194 = sshll.u32 %s193, 4
          %s195 = int_to_ptr.hbm [resolvable:$true] %s194
          %s196 = sshll.u32 [#allocation5], 4
          %s197 = int_to_ptr.vmem [resolvable:$true] %s196
          %202 = dma.hbm_to_vmem [thread:$0]  %s195, 16384, %s197, [#allocation6], 512, 512, 32
        $region16: #{lstm_block_forward.3} parent=11 // pred_fallthru
          _
        // Predicated region
        $region17: #{lstm_block_forward.3} parent=11 // pred_check
          %p203 = pneg %p111
        $region18: #{lstm_block_forward.3} parent=11 // pred_check_branch
          %205 = sbr.rel (%p203) target = $region20
        $region19: #{lstm_block_forward.3} parent=11 // pred_region
          %207 = vsyncadd [#allocation9], 0
          %s208 = smul.addr %s24, 64
          %s209 = smul.addr %s208, 8
          %s210 = scalar_lea.hbm %s2, %s209
          %s211 = sshll.u32 %s210, 4
          %s212 = int_to_ptr.hbm [resolvable:$true] %s211
          %s213 = sshll.u32 [#allocation8], 4
          %s214 = int_to_ptr.vmem [resolvable:$true] %s213
          %219 = dma.hbm_to_vmem [thread:$0]  %s212, 8192, %s214, [#allocation9], 512, 512, 32
        $region20: #{lstm_block_forward.3} parent=11 // pred_fallthru
          _
        // Predicated region
        $region21: #{lstm_block_forward.3} parent=11 // pred_check
          %p220 = pneg %p137
        $region22: #{lstm_block_forward.3} parent=11 // pred_check_branch
          %222 = sbr.rel (%p220) target = $region24
        $region23: #{lstm_block_forward.3} parent=11 // pred_region
          %224 = vsyncadd [#allocation9], 0
          %s225 = smul.addr %s24, 4
          %s226 = scalar_lea.hbm %s3, %s225
          %s228 = sshll.u32 %s226, 4
          %s229 = int_to_ptr.hbm [resolvable:$true] %s228
          %s230 = sshll.u32 [#allocation10], 4
          %s231 = int_to_ptr.vmem [resolvable:$true] %s230
          %233 = dma.hbm_to_vmem [thread:$0]  %s229, 64, %s231, [#allocation9]
        $region24: #{lstm_block_forward.3} parent=11 // pred_fallthru
          _
      $region12: #{lstm_block_forward.3} parent=5 // pred_fallthru
        _
      %p234 = scmp.lt.s32.totalorder %s15, 2
      // Predicated region
      $region25: #{lstm_block_forward.3} parent=5 // pred_check
        %p235 = pneg %p234
      $region26: #{lstm_block_forward.3} parent=5 // pred_check_branch
        %237 = sbr.rel (%p235) target = $region28
      $region27: #{lstm_block_forward.3} parent=5 // pred_region
        // Predicated region
        $region29: #{lstm_block_forward.3} parent=27 // pred_check
          %p238 = pneg %p53
        $region30: #{lstm_block_forward.3} parent=27 // pred_check_branch
          %240 = sbr.rel (%p238) target = $region32
        $region31: #{lstm_block_forward.3} parent=27 // pred_region
          %s241 = smul.u32 %s22, 2
          %s242 = ssub.s32 1, %s241
          %s243 = smul.u32 %s242, %s23
          %s244 = smul.u32 8, %s243
          %p245 = scmp.lt.s32.totalorder %s244, 7
          %s246 = scalar_select %p245, %s244, 7
          %s247 = smul.addr %s246, 2
          %s248 = smul.addr %s247, 8
          %s249 = scalar_lea.vmem %s0, %s248
          %s250 = smul.u32 %s22, 2
          %s251 = ssub.s32 1, %s250
          %s252 = smul.u32 %s251, %s23
          %s253 = smul.u32 8, %s252
        $region32: #{lstm_block_forward.3} parent=27 // pred_fallthru
          _
      $region28: #{lstm_block_forward.3} parent=5 // pred_fallthru
        _
      %p254 = scmp.le.s32.totalorder 1, %s15
      %p255 = scmp.lt.s32.totalorder %s15, 3
      %p256 = pnand %p254, %p255
      %p257 = pneg %p256
      // Predicated region
      $region33: #{lstm_block_forward.3} parent=5 // pred_check
        _
      $region34: #{lstm_block_forward.3} parent=5 // pred_check_branch
        %259 = sbr.rel (%p256) target = $region36
      $region35: #{lstm_block_forward.3} parent=5 // pred_region
        %s260 = ssub.s32 %s15, 1
        // Predicated region
        $region37: #{lstm_block_forward.3} parent=35 // pred_check
          %p261 = pneg %p85
        $region38: #{lstm_block_forward.3} parent=35 // pred_check_branch
          %263 = sbr.rel (%p261) target = $region40
        $region39: #{lstm_block_forward.3} parent=35 // pred_region
          %265 = dma.done [#allocation6], 16384
        $region40: #{lstm_block_forward.3} parent=35 // pred_fallthru
          _
        // Predicated region
        $region41: #{lstm_block_forward.3} parent=35 // pred_check
          %p266 = pneg %p111
        $region42: #{lstm_block_forward.3} parent=35 // pred_check_branch
          %268 = sbr.rel (%p266) target = $region44
        $region43: #{lstm_block_forward.3} parent=35 // pred_region
          %270 = dma.done [#allocation9], 8192
        $region44: #{lstm_block_forward.3} parent=35 // pred_fallthru
          _
        // Predicated region
        $region45: #{lstm_block_forward.3} parent=35 // pred_check
          %p271 = pneg %p137
        $region46: #{lstm_block_forward.3} parent=35 // pred_check_branch
          %273 = sbr.rel (%p271) target = $region48
        $region47: #{lstm_block_forward.3} parent=35 // pred_region
          %275 = dma.done [#allocation9], 64
        $region48: #{lstm_block_forward.3} parent=35 // pred_fallthru
          _
        %s276 = smul.u32 %s24, 2
        %s277 = ssub.s32 1, %s276
        %s278 = smul.u32 %s277, %s25
        %s279 = smul.u32 8, %s278
        %p280 = scmp.lt.s32.totalorder %s279, 7
        %s281 = scalar_select %p280, %s279, 7
        %s282 = smul.addr %s281, 2
        %s283 = smul.addr %s282, 8
        %s284 = scalar_lea.vmem %s0, %s283
        %p285 = pneg %p59
        %p286 = pneg %p56
        %p287 = pneg %p85
        %p288 = pneg %p82
        %p289 = pneg %p111
        %p290 = pneg %p108
        %p291 = pneg %p137
        %p292 = pneg %p134
        %p293 = pneg %p171
        %p294 = pneg %p168
        %s295 = sand.u32 %s158, 1
        %s296 = scalar_lea.sflag [#allocation7], %s295
        %s297 = sand.u32 %s158, 1
        %s298 = smul.addr %s297, 64
        %s299 = scalar_lea.vmem [#allocation11], %s298
        %s300 = smul.u32 %s24, 2
        %s301 = ssub.s32 1, %s300
        %s302 = smul.u32 %s301, %s25
        %s303 = smul.u32 8, %s302
        %p304 = scmp.lt.s32.totalorder %s303, 7
        %s305 = scalar_select %p304, %s303, 7
        %s306 = smul.addr %s305, 2
        %s307 = smul.addr %s306, 8
        %s308 = scalar_lea.vmem %s0, %s307
        %s309 = smul.u32 %s24, 2
        %s310 = ssub.s32 1, %s309
        %s311 = smul.u32 %s310, %s25
        %s312 = smul.u32 8, %s311
        %s313 = smul.u32 %s24, 2
        %s314 = ssub.s32 1, %s313
        %s315 = smul.u32 %s314, %s25
        %s316 = smul.u32 8, %s315
        %p317 = scmp.eq.s32.totalorder %s25, 0
        // Predicated region
        $region49: #{lstm_block_forward.3} parent=35 // pred_check
          %p318 = pneg %p317
        $region50: #{lstm_block_forward.3} parent=35 // pred_check_branch
          %320 = sbr.rel (%p318) target = $region52
        $region51: #{lstm_block_forward.3} parent=35 // pred_region
          %321 = vst [vmem:[#allocation2] sm:$0xff] 0.0
          %322 = vst [vmem:[#allocation3] sm:$0xff] 0.0
        $region52: #{lstm_block_forward.3} parent=35 // pred_fallthru
          _
        %v323 = vld [vmem:[%s308] sm:$0xff]
        %v324 = vld [vmem:[%s308 + $0x8] sm:$0xff]
        %v325 = vld [vmem:[%s308 + $0x10] sm:$0xff]
        %v326 = vld [vmem:[%s308 + $0x18] sm:$0xff]
        %v327 = vld [vmem:[%s308 + $0x20] sm:$0xff]
        %v328 = vld [vmem:[%s308 + $0x28] sm:$0xff]
        %v329 = vld [vmem:[%s308 + $0x30] sm:$0xff]
        %v330 = vld [vmem:[%s308 + $0x38] sm:$0xff]
        %v331 = vld [vmem:[%s308 + $0x40] sm:$0xff]
        %v332 = vld [vmem:[%s308 + $0x48] sm:$0xff]
        %v333 = vld [vmem:[%s308 + $0x50] sm:$0xff]
        %v334 = vld [vmem:[%s308 + $0x58] sm:$0xff]
        %v335 = vld [vmem:[%s308 + $0x60] sm:$0xff]
        %v336 = vld [vmem:[%s308 + $0x68] sm:$0xff]
        %v337 = vld [vmem:[%s308 + $0x70] sm:$0xff]
        %v338 = vld [vmem:[%s308 + $0x78] sm:$0xff]
        %v339 = vld [vmem:[#allocation5] sm:$0xff]
        %v340 = vld [vmem:[#allocation5 + $0x8] sm:$0xff]
        %v341 = vld [vmem:[#allocation5 + $0x10] sm:$0xff]
        %v342 = vld [vmem:[#allocation5 + $0x18] sm:$0xff]
        %v343 = vld [vmem:[#allocation5 + $0x20] sm:$0xff]
        %v344 = vld [vmem:[#allocation5 + $0x28] sm:$0xff]
        %v345 = vld [vmem:[#allocation5 + $0x30] sm:$0xff]
        %v346 = vld [vmem:[#allocation5 + $0x38] sm:$0xff]
        %v347 = vld [vmem:[#allocation5 + $0x40] sm:$0xff]
        %v348 = vld [vmem:[#allocation5 + $0x48] sm:$0xff]
        %v349 = vld [vmem:[#allocation5 + $0x50] sm:$0xff]
        %v350 = vld [vmem:[#allocation5 + $0x58] sm:$0xff]
        %v351 = vld [vmem:[#allocation5 + $0x60] sm:$0xff]
        %v352 = vld [vmem:[#allocation5 + $0x68] sm:$0xff]
        %v353 = vld [vmem:[#allocation5 + $0x70] sm:$0xff]
        %v354 = vld [vmem:[#allocation5 + $0x78] sm:$0xff]
        %v355 = vld [vmem:[#allocation5 + $0x80] sm:$0xff]
        %v356 = vld [vmem:[#allocation5 + $0x88] sm:$0xff]
        %v357 = vld [vmem:[#allocation5 + $0x90] sm:$0xff]
        %v358 = vld [vmem:[#allocation5 + $0x98] sm:$0xff]
        %v359 = vld [vmem:[#allocation5 + $0xa0] sm:$0xff]
        %v360 = vld [vmem:[#allocation5 + $0xa8] sm:$0xff]
        %v361 = vld [vmem:[#allocation5 + $0xb0] sm:$0xff]
        %v362 = vld [vmem:[#allocation5 + $0xb8] sm:$0xff]
        %v363 = vld [vmem:[#allocation5 + $0xc0] sm:$0xff]
        %v364 = vld [vmem:[#allocation5 + $0xc8] sm:$0xff]
        %v365 = vld [vmem:[#allocation5 + $0xd0] sm:$0xff]
        %v366 = vld [vmem:[#allocation5 + $0xd8] sm:$0xff]
        %v367 = vld [vmem:[#allocation5 + $0xe0] sm:$0xff]
        %v368 = vld [vmem:[#allocation5 + $0xe8] sm:$0xff]
        %v369 = vld [vmem:[#allocation5 + $0xf0] sm:$0xff]
        %v370 = vld [vmem:[#allocation5 + $0xf8] sm:$0xff]
        %v371 = vld [vmem:[#allocation5 + $0x100] sm:$0xff]
        %v372 = vld [vmem:[#allocation5 + $0x108] sm:$0xff]
        %v373 = vld [vmem:[#allocation5 + $0x110] sm:$0xff]
        %v374 = vld [vmem:[#allocation5 + $0x118] sm:$0xff]
        %v375 = vld [vmem:[#allocation5 + $0x120] sm:$0xff]
        %v376 = vld [vmem:[#allocation5 + $0x128] sm:$0xff]
        %v377 = vld [vmem:[#allocation5 + $0x130] sm:$0xff]
        %v378 = vld [vmem:[#allocation5 + $0x138] sm:$0xff]
        %v379 = vld [vmem:[#allocation5 + $0x140] sm:$0xff]
        %v380 = vld [vmem:[#allocation5 + $0x148] sm:$0xff]
        %v381 = vld [vmem:[#allocation5 + $0x150] sm:$0xff]
        %v382 = vld [vmem:[#allocation5 + $0x158] sm:$0xff]
        %v383 = vld [vmem:[#allocation5 + $0x160] sm:$0xff]
        %v384 = vld [vmem:[#allocation5 + $0x168] sm:$0xff]
        %v385 = vld [vmem:[#allocation5 + $0x170] sm:$0xff]
        %v386 = vld [vmem:[#allocation5 + $0x178] sm:$0xff]
        %v387 = vld [vmem:[#allocation5 + $0x180] sm:$0xff]
        %v388 = vld [vmem:[#allocation5 + $0x188] sm:$0xff]
        %v389 = vld [vmem:[#allocation5 + $0x190] sm:$0xff]
        %v390 = vld [vmem:[#allocation5 + $0x198] sm:$0xff]
        %v391 = vld [vmem:[#allocation5 + $0x1a0] sm:$0xff]
        %v392 = vld [vmem:[#allocation5 + $0x1a8] sm:$0xff]
        %v393 = vld [vmem:[#allocation5 + $0x1b0] sm:$0xff]
        %v394 = vld [vmem:[#allocation5 + $0x1b8] sm:$0xff]
        %v395 = vld [vmem:[#allocation5 + $0x1c0] sm:$0xff]
        %v396 = vld [vmem:[#allocation5 + $0x1c8] sm:$0xff]
        %v397 = vld [vmem:[#allocation5 + $0x1d0] sm:$0xff]
        %v398 = vld [vmem:[#allocation5 + $0x1d8] sm:$0xff]
        %v399 = vld [vmem:[#allocation5 + $0x1e0] sm:$0xff]
        %v400 = vld [vmem:[#allocation5 + $0x1e8] sm:$0xff]
        %v401 = vld [vmem:[#allocation5 + $0x1f0] sm:$0xff]
        %v402 = vld [vmem:[#allocation5 + $0x1f8] sm:$0xff]
        %v403 = vld [vmem:[#allocation5 + $0x200] sm:$0xff]
        %v404 = vld [vmem:[#allocation5 + $0x208] sm:$0xff]
        %v405 = vld [vmem:[#allocation5 + $0x210] sm:$0xff]
        %v406 = vld [vmem:[#allocation5 + $0x218] sm:$0xff]
        %v407 = vld [vmem:[#allocation5 + $0x220] sm:$0xff]
        %v408 = vld [vmem:[#allocation5 + $0x228] sm:$0xff]
        %v409 = vld [vmem:[#allocation5 + $0x230] sm:$0xff]
        %v410 = vld [vmem:[#allocation5 + $0x238] sm:$0xff]
        %v411 = vld [vmem:[#allocation5 + $0x240] sm:$0xff]
        %v412 = vld [vmem:[#allocation5 + $0x248] sm:$0xff]
        %v413 = vld [vmem:[#allocation5 + $0x250] sm:$0xff]
        %v414 = vld [vmem:[#allocation5 + $0x258] sm:$0xff]
        %v415 = vld [vmem:[#allocation5 + $0x260] sm:$0xff]
        %v416 = vld [vmem:[#allocation5 + $0x268] sm:$0xff]
        %v417 = vld [vmem:[#allocation5 + $0x270] sm:$0xff]
        %v418 = vld [vmem:[#allocation5 + $0x278] sm:$0xff]
        %v419 = vld [vmem:[#allocation5 + $0x280] sm:$0xff]
        %v420 = vld [vmem:[#allocation5 + $0x288] sm:$0xff]
        %v421 = vld [vmem:[#allocation5 + $0x290] sm:$0xff]
        %v422 = vld [vmem:[#allocation5 + $0x298] sm:$0xff]
        %v423 = vld [vmem:[#allocation5 + $0x2a0] sm:$0xff]
        %v424 = vld [vmem:[#allocation5 + $0x2a8] sm:$0xff]
        %v425 = vld [vmem:[#allocation5 + $0x2b0] sm:$0xff]
        %v426 = vld [vmem:[#allocation5 + $0x2b8] sm:$0xff]
        %v427 = vld [vmem:[#allocation5 + $0x2c0] sm:$0xff]
        %v428 = vld [vmem:[#allocation5 + $0x2c8] sm:$0xff]
        %v429 = vld [vmem:[#allocation5 + $0x2d0] sm:$0xff]
        %v430 = vld [vmem:[#allocation5 + $0x2d8] sm:$0xff]
        %v431 = vld [vmem:[#allocation5 + $0x2e0] sm:$0xff]
        %v432 = vld [vmem:[#allocation5 + $0x2e8] sm:$0xff]
        %v433 = vld [vmem:[#allocation5 + $0x2f0] sm:$0xff]
        %v434 = vld [vmem:[#allocation5 + $0x2f8] sm:$0xff]
        %v435 = vld [vmem:[#allocation5 + $0x300] sm:$0xff]
        %v436 = vld [vmem:[#allocation5 + $0x308] sm:$0xff]
        %v437 = vld [vmem:[#allocation5 + $0x310] sm:$0xff]
        %v438 = vld [vmem:[#allocation5 + $0x318] sm:$0xff]
        %v439 = vld [vmem:[#allocation5 + $0x320] sm:$0xff]
        %v440 = vld [vmem:[#allocation5 + $0x328] sm:$0xff]
        %v441 = vld [vmem:[#allocation5 + $0x330] sm:$0xff]
        %v442 = vld [vmem:[#allocation5 + $0x338] sm:$0xff]
        %v443 = vld [vmem:[#allocation5 + $0x340] sm:$0xff]
        %v444 = vld [vmem:[#allocation5 + $0x348] sm:$0xff]
        %v445 = vld [vmem:[#allocation5 + $0x350] sm:$0xff]
        %v446 = vld [vmem:[#allocation5 + $0x358] sm:$0xff]
        %v447 = vld [vmem:[#allocation5 + $0x360] sm:$0xff]
        %v448 = vld [vmem:[#allocation5 + $0x368] sm:$0xff]
        %v449 = vld [vmem:[#allocation5 + $0x370] sm:$0xff]
        %v450 = vld [vmem:[#allocation5 + $0x378] sm:$0xff]
        %v451 = vld [vmem:[#allocation5 + $0x380] sm:$0xff]
        %v452 = vld [vmem:[#allocation5 + $0x388] sm:$0xff]
        %v453 = vld [vmem:[#allocation5 + $0x390] sm:$0xff]
        %v454 = vld [vmem:[#allocation5 + $0x398] sm:$0xff]
        %v455 = vld [vmem:[#allocation5 + $0x3a0] sm:$0xff]
        %v456 = vld [vmem:[#allocation5 + $0x3a8] sm:$0xff]
        %v457 = vld [vmem:[#allocation5 + $0x3b0] sm:$0xff]
        %v458 = vld [vmem:[#allocation5 + $0x3b8] sm:$0xff]
        %v459 = vld [vmem:[#allocation5 + $0x3c0] sm:$0xff]
        %v460 = vld [vmem:[#allocation5 + $0x3c8] sm:$0xff]
        %v461 = vld [vmem:[#allocation5 + $0x3d0] sm:$0xff]
        %v462 = vld [vmem:[#allocation5 + $0x3d8] sm:$0xff]
        %v463 = vld [vmem:[#allocation5 + $0x3e0] sm:$0xff]
        %v464 = vld [vmem:[#allocation5 + $0x3e8] sm:$0xff]
        %v465 = vld [vmem:[#allocation5 + $0x3f0] sm:$0xff]
        %v466 = vld [vmem:[#allocation5 + $0x3f8] sm:$0xff]
        %v467 = vld [vmem:[#allocation10] sm:$0xf]
        %v469 = vperm.slane %v467, 0
        %v470 = vperm.slane %v467, 1
        %v471 = vperm.slane %v467, 2
        %v472 = vperm.slane %v467, 3
        %477 = vmatpush.msra.mxu0 %v399
        %478 = vmatpush.msra.mxu0 %v395
        %479 = vmatpush.msra.mxu0 %v391
        %480 = vmatpush.msra.mxu0 %v387
        %481 = vmatpush.msra.mxu0 %v383
        %482 = vmatpush.msra.mxu0 %v379
        %483 = vmatpush.msra.mxu0 %v375
        %484 = vmatpush.msra.mxu0 %v371
        %485 = vmatpush.msra.mxu0 %v367
        %486 = vmatpush.msra.mxu0 %v363
        %487 = vmatpush.msra.mxu0 %v359
        %488 = vmatpush.msra.mxu0 %v355
        %489 = vmatpush.msra.mxu0 %v351
        %490 = vmatpush.msra.mxu0 %v347
        %491 = vmatpush.msra.mxu0 %v343
        %492 = vmatpush.msra.mxu0 %v339
        %493 = vmatmul.f32.gmra.mxu0 %v323
        %v494 = vpop.f32.mrf.mxu0
        %v495 = vadd.f32 %v469, %v494
        %496 = vmatmul.f32.gmra.mxu0 %v325
        %v497 = vpop.f32.mrf.mxu0
        %v498 = vadd.f32 %v469, %v497
        %499 = vmatmul.f32.gmra.mxu0 %v327
        %v500 = vpop.f32.mrf.mxu0
        %v501 = vadd.f32 %v469, %v500
        %502 = vmatmul.f32.gmra.mxu0 %v329
        %v503 = vpop.f32.mrf.mxu0
        %v504 = vadd.f32 %v469, %v503
        %505 = vmatmul.f32.gmra.mxu0 %v331
        %v506 = vpop.f32.mrf.mxu0
        %v507 = vadd.f32 %v469, %v506
        %508 = vmatmul.f32.gmra.mxu0 %v333
        %v509 = vpop.f32.mrf.mxu0
        %v510 = vadd.f32 %v469, %v509
        %511 = vmatmul.f32.gmra.mxu0 %v335
        %v512 = vpop.f32.mrf.mxu0
        %v513 = vadd.f32 %v469, %v512
        %514 = vmatmul.f32.gmra.mxu0 %v337
        %v515 = vpop.f32.mrf.mxu0
        %v516 = vadd.f32 %v469, %v515
        %517 = vdwg.mxu0
        %518 = vmatpush.msra.mxu0 %v463
        %519 = vmatpush.msra.mxu0 %v459
        %520 = vmatpush.msra.mxu0 %v455
        %521 = vmatpush.msra.mxu0 %v451
        %522 = vmatpush.msra.mxu0 %v447
        %523 = vmatpush.msra.mxu0 %v443
        %524 = vmatpush.msra.mxu0 %v439
        %525 = vmatpush.msra.mxu0 %v435
        %526 = vmatpush.msra.mxu0 %v431
        %527 = vmatpush.msra.mxu0 %v427
        %528 = vmatpush.msra.mxu0 %v423
        %529 = vmatpush.msra.mxu0 %v419
        %530 = vmatpush.msra.mxu0 %v415
        %531 = vmatpush.msra.mxu0 %v411
        %532 = vmatpush.msra.mxu0 %v407
        %533 = vmatpush.msra.mxu0 %v403
        %534 = vmatmul.f32.gmra.mxu0 %v324
        %v535 = vpop.f32.mrf.mxu0
        %v536 = vadd.f32 %v495, %v535
        %537 = vmatmul.f32.gmra.mxu0 %v326
        %v538 = vpop.f32.mrf.mxu0
        %v539 = vadd.f32 %v498, %v538
        %540 = vmatmul.f32.gmra.mxu0 %v328
        %v541 = vpop.f32.mrf.mxu0
        %v542 = vadd.f32 %v501, %v541
        %543 = vmatmul.f32.gmra.mxu0 %v330
        %v544 = vpop.f32.mrf.mxu0
        %v545 = vadd.f32 %v504, %v544
        %546 = vmatmul.f32.gmra.mxu0 %v332
        %v547 = vpop.f32.mrf.mxu0
        %v548 = vadd.f32 %v507, %v547
        %549 = vmatmul.f32.gmra.mxu0 %v334
        %v550 = vpop.f32.mrf.mxu0
        %v551 = vadd.f32 %v510, %v550
        %552 = vmatmul.f32.gmra.mxu0 %v336
        %v553 = vpop.f32.mrf.mxu0
        %v554 = vadd.f32 %v513, %v553
        %555 = vmatmul.f32.gmra.mxu0 %v338
        %v556 = vpop.f32.mrf.mxu0
        %v557 = vadd.f32 %v516, %v556
        %558 = vdwg.mxu0
        %559 = vmatpush.msra.mxu0 %v400
        %560 = vmatpush.msra.mxu0 %v396
        %561 = vmatpush.msra.mxu0 %v392
        %562 = vmatpush.msra.mxu0 %v388
        %563 = vmatpush.msra.mxu0 %v384
        %564 = vmatpush.msra.mxu0 %v380
        %565 = vmatpush.msra.mxu0 %v376
        %566 = vmatpush.msra.mxu0 %v372
        %567 = vmatpush.msra.mxu0 %v368
        %568 = vmatpush.msra.mxu0 %v364
        %569 = vmatpush.msra.mxu0 %v360
        %570 = vmatpush.msra.mxu0 %v356
        %571 = vmatpush.msra.mxu0 %v352
        %572 = vmatpush.msra.mxu0 %v348
        %573 = vmatpush.msra.mxu0 %v344
        %574 = vmatpush.msra.mxu0 %v340
        %575 = vmatmul.f32.gmra.mxu0 %v323
        %v576 = vpop.f32.mrf.mxu0
        %v577 = vadd.f32 %v470, %v576
        %578 = vmatmul.f32.gmra.mxu0 %v325
        %v579 = vpop.f32.mrf.mxu0
        %v580 = vadd.f32 %v470, %v579
        %581 = vmatmul.f32.gmra.mxu0 %v327
        %v582 = vpop.f32.mrf.mxu0
        %v583 = vadd.f32 %v470, %v582
        %584 = vmatmul.f32.gmra.mxu0 %v329
        %v585 = vpop.f32.mrf.mxu0
        %v586 = vadd.f32 %v470, %v585
        %587 = vmatmul.f32.gmra.mxu0 %v331
        %v588 = vpop.f32.mrf.mxu0
        %v589 = vadd.f32 %v470, %v588
        %590 = vmatmul.f32.gmra.mxu0 %v333
        %v591 = vpop.f32.mrf.mxu0
        %v592 = vadd.f32 %v470, %v591
        %593 = vmatmul.f32.gmra.mxu0 %v335
        %v594 = vpop.f32.mrf.mxu0
        %v595 = vadd.f32 %v470, %v594
        %596 = vmatmul.f32.gmra.mxu0 %v337
        %v597 = vpop.f32.mrf.mxu0
        %v598 = vadd.f32 %v470, %v597
        %599 = vdwg.mxu0
        %600 = vmatpush.msra.mxu0 %v464
        %601 = vmatpush.msra.mxu0 %v460
        %602 = vmatpush.msra.mxu0 %v456
        %603 = vmatpush.msra.mxu0 %v452
        %604 = vmatpush.msra.mxu0 %v448
        %605 = vmatpush.msra.mxu0 %v444
        %606 = vmatpush.msra.mxu0 %v440
        %607 = vmatpush.msra.mxu0 %v436
        %608 = vmatpush.msra.mxu0 %v432
        %609 = vmatpush.msra.mxu0 %v428
        %610 = vmatpush.msra.mxu0 %v424
        %611 = vmatpush.msra.mxu0 %v420
        %612 = vmatpush.msra.mxu0 %v416
        %613 = vmatpush.msra.mxu0 %v412
        %614 = vmatpush.msra.mxu0 %v408
        %615 = vmatpush.msra.mxu0 %v404
        %616 = vmatmul.f32.gmra.mxu0 %v324
        %v617 = vpop.f32.mrf.mxu0
        %v618 = vadd.f32 %v577, %v617
        %619 = vmatmul.f32.gmra.mxu0 %v326
        %v620 = vpop.f32.mrf.mxu0
        %v621 = vadd.f32 %v580, %v620
        %622 = vmatmul.f32.gmra.mxu0 %v328
        %v623 = vpop.f32.mrf.mxu0
        %v624 = vadd.f32 %v583, %v623
        %625 = vmatmul.f32.gmra.mxu0 %v330
        %v626 = vpop.f32.mrf.mxu0
        %v627 = vadd.f32 %v586, %v626
        %628 = vmatmul.f32.gmra.mxu0 %v332
        %v629 = vpop.f32.mrf.mxu0
        %v630 = vadd.f32 %v589, %v629
        %631 = vmatmul.f32.gmra.mxu0 %v334
        %v632 = vpop.f32.mrf.mxu0
        %v633 = vadd.f32 %v592, %v632
        %634 = vmatmul.f32.gmra.mxu0 %v336
        %v635 = vpop.f32.mrf.mxu0
        %v636 = vadd.f32 %v595, %v635
        %637 = vmatmul.f32.gmra.mxu0 %v338
        %v638 = vpop.f32.mrf.mxu0
        %v639 = vadd.f32 %v598, %v638
        %640 = vdwg.mxu0
        %641 = vmatpush.msra.mxu0 %v401
        %642 = vmatpush.msra.mxu0 %v397
        %643 = vmatpush.msra.mxu0 %v393
        %644 = vmatpush.msra.mxu0 %v389
        %645 = vmatpush.msra.mxu0 %v385
        %646 = vmatpush.msra.mxu0 %v381
        %647 = vmatpush.msra.mxu0 %v377
        %648 = vmatpush.msra.mxu0 %v373
        %649 = vmatpush.msra.mxu0 %v369
        %650 = vmatpush.msra.mxu0 %v365
        %651 = vmatpush.msra.mxu0 %v361
        %652 = vmatpush.msra.mxu0 %v357
        %653 = vmatpush.msra.mxu0 %v353
        %654 = vmatpush.msra.mxu0 %v349
        %655 = vmatpush.msra.mxu0 %v345
        %656 = vmatpush.msra.mxu0 %v341
        %657 = vmatmul.f32.gmra.mxu0 %v323
        %v658 = vpop.f32.mrf.mxu0
        %v659 = vadd.f32 %v471, %v658
        %660 = vmatmul.f32.gmra.mxu0 %v325
        %v661 = vpop.f32.mrf.mxu0
        %v662 = vadd.f32 %v471, %v661
        %663 = vmatmul.f32.gmra.mxu0 %v327
        %v664 = vpop.f32.mrf.mxu0
        %v665 = vadd.f32 %v471, %v664
        %666 = vmatmul.f32.gmra.mxu0 %v329
        %v667 = vpop.f32.mrf.mxu0
        %v668 = vadd.f32 %v471, %v667
        %669 = vmatmul.f32.gmra.mxu0 %v331
        %v670 = vpop.f32.mrf.mxu0
        %v671 = vadd.f32 %v471, %v670
        %672 = vmatmul.f32.gmra.mxu0 %v333
        %v673 = vpop.f32.mrf.mxu0
        %v674 = vadd.f32 %v471, %v673
        %675 = vmatmul.f32.gmra.mxu0 %v335
        %v676 = vpop.f32.mrf.mxu0
        %v677 = vadd.f32 %v471, %v676
        %678 = vmatmul.f32.gmra.mxu0 %v337
        %v679 = vpop.f32.mrf.mxu0
        %v680 = vadd.f32 %v471, %v679
        %681 = vdwg.mxu0
        %682 = vmatpush.msra.mxu0 %v465
        %683 = vmatpush.msra.mxu0 %v461
        %684 = vmatpush.msra.mxu0 %v457
        %685 = vmatpush.msra.mxu0 %v453
        %686 = vmatpush.msra.mxu0 %v449
        %687 = vmatpush.msra.mxu0 %v445
        %688 = vmatpush.msra.mxu0 %v441
        %689 = vmatpush.msra.mxu0 %v437
        %690 = vmatpush.msra.mxu0 %v433
        %691 = vmatpush.msra.mxu0 %v429
        %692 = vmatpush.msra.mxu0 %v425
        %693 = vmatpush.msra.mxu0 %v421
        %694 = vmatpush.msra.mxu0 %v417
        %695 = vmatpush.msra.mxu0 %v413
        %696 = vmatpush.msra.mxu0 %v409
        %697 = vmatpush.msra.mxu0 %v405
        %698 = vmatmul.f32.gmra.mxu0 %v324
        %v699 = vpop.f32.mrf.mxu0
        %v700 = vadd.f32 %v659, %v699
        %701 = vmatmul.f32.gmra.mxu0 %v326
        %v702 = vpop.f32.mrf.mxu0
        %v703 = vadd.f32 %v662, %v702
        %704 = vmatmul.f32.gmra.mxu0 %v328
        %v705 = vpop.f32.mrf.mxu0
        %v706 = vadd.f32 %v665, %v705
        %707 = vmatmul.f32.gmra.mxu0 %v330
        %v708 = vpop.f32.mrf.mxu0
        %v709 = vadd.f32 %v668, %v708
        %710 = vmatmul.f32.gmra.mxu0 %v332
        %v711 = vpop.f32.mrf.mxu0
        %v712 = vadd.f32 %v671, %v711
        %713 = vmatmul.f32.gmra.mxu0 %v334
        %v714 = vpop.f32.mrf.mxu0
        %v715 = vadd.f32 %v674, %v714
        %716 = vmatmul.f32.gmra.mxu0 %v336
        %v717 = vpop.f32.mrf.mxu0
        %v718 = vadd.f32 %v677, %v717
        %719 = vmatmul.f32.gmra.mxu0 %v338
        %v720 = vpop.f32.mrf.mxu0
        %v721 = vadd.f32 %v680, %v720
        %722 = vdwg.mxu0
        %723 = vmatpush.msra.mxu0 %v402
        %724 = vmatpush.msra.mxu0 %v398
        %725 = vmatpush.msra.mxu0 %v394
        %726 = vmatpush.msra.mxu0 %v390
        %727 = vmatpush.msra.mxu0 %v386
        %728 = vmatpush.msra.mxu0 %v382
        %729 = vmatpush.msra.mxu0 %v378
        %730 = vmatpush.msra.mxu0 %v374
        %731 = vmatpush.msra.mxu0 %v370
        %732 = vmatpush.msra.mxu0 %v366
        %733 = vmatpush.msra.mxu0 %v362
        %734 = vmatpush.msra.mxu0 %v358
        %735 = vmatpush.msra.mxu0 %v354
        %736 = vmatpush.msra.mxu0 %v350
        %737 = vmatpush.msra.mxu0 %v346
        %738 = vmatpush.msra.mxu0 %v342
        %739 = vmatmul.f32.gmra.mxu0 %v323
        %v740 = vpop.f32.mrf.mxu0
        %v741 = vadd.f32 %v472, %v740
        %742 = vmatmul.f32.gmra.mxu0 %v325
        %v743 = vpop.f32.mrf.mxu0
        %v744 = vadd.f32 %v472, %v743
        %745 = vmatmul.f32.gmra.mxu0 %v327
        %v746 = vpop.f32.mrf.mxu0
        %v747 = vadd.f32 %v472, %v746
        %748 = vmatmul.f32.gmra.mxu0 %v329
        %v749 = vpop.f32.mrf.mxu0
        %v750 = vadd.f32 %v472, %v749
        %751 = vmatmul.f32.gmra.mxu0 %v331
        %v752 = vpop.f32.mrf.mxu0
        %v753 = vadd.f32 %v472, %v752
        %754 = vmatmul.f32.gmra.mxu0 %v333
        %v755 = vpop.f32.mrf.mxu0
        %v756 = vadd.f32 %v472, %v755
        %757 = vmatmul.f32.gmra.mxu0 %v335
        %v758 = vpop.f32.mrf.mxu0
        %v759 = vadd.f32 %v472, %v758
        %760 = vmatmul.f32.gmra.mxu0 %v337
        %v761 = vpop.f32.mrf.mxu0
        %v762 = vadd.f32 %v472, %v761
        %763 = vdwg.mxu0
        %764 = vmatpush.msra.mxu0 %v466
        %765 = vmatpush.msra.mxu0 %v462
        %766 = vmatpush.msra.mxu0 %v458
        %767 = vmatpush.msra.mxu0 %v454
        %768 = vmatpush.msra.mxu0 %v450
        %769 = vmatpush.msra.mxu0 %v446
        %770 = vmatpush.msra.mxu0 %v442
        %771 = vmatpush.msra.mxu0 %v438
        %772 = vmatpush.msra.mxu0 %v434
        %773 = vmatpush.msra.mxu0 %v430
        %774 = vmatpush.msra.mxu0 %v426
        %775 = vmatpush.msra.mxu0 %v422
        %776 = vmatpush.msra.mxu0 %v418
        %777 = vmatpush.msra.mxu0 %v414
        %778 = vmatpush.msra.mxu0 %v410
        %779 = vmatpush.msra.mxu0 %v406
        %780 = vmatmul.f32.gmra.mxu0 %v324
        %v781 = vpop.f32.mrf.mxu0
        %v782 = vadd.f32 %v741, %v781
        %783 = vmatmul.f32.gmra.mxu0 %v326
        %v784 = vpop.f32.mrf.mxu0
        %v785 = vadd.f32 %v744, %v784
        %786 = vmatmul.f32.gmra.mxu0 %v328
        %v787 = vpop.f32.mrf.mxu0
        %v788 = vadd.f32 %v747, %v787
        %789 = vmatmul.f32.gmra.mxu0 %v330
        %v790 = vpop.f32.mrf.mxu0
        %v791 = vadd.f32 %v750, %v790
        %792 = vmatmul.f32.gmra.mxu0 %v332
        %v793 = vpop.f32.mrf.mxu0
        %v794 = vadd.f32 %v753, %v793
        %795 = vmatmul.f32.gmra.mxu0 %v334
        %v796 = vpop.f32.mrf.mxu0
        %v797 = vadd.f32 %v756, %v796
        %798 = vmatmul.f32.gmra.mxu0 %v336
        %v799 = vpop.f32.mrf.mxu0
        %v800 = vadd.f32 %v759, %v799
        %801 = vmatmul.f32.gmra.mxu0 %v338
        %v802 = vpop.f32.mrf.mxu0
        %v803 = vadd.f32 %v762, %v802
        %804 = vdwg.mxu0
        %805 = vst [vmem:[#allocation4] sm:$0xff] %v536
        %806 = vst [vmem:[#allocation4 + $0x8] sm:$0xff] %v618
        %807 = vst [vmem:[#allocation4 + $0x10] sm:$0xff] %v700
        %808 = vst [vmem:[#allocation4 + $0x18] sm:$0xff] %v782
        %809 = vst [vmem:[#allocation4 + $0x20] sm:$0xff] %v539
        %810 = vst [vmem:[#allocation4 + $0x28] sm:$0xff] %v621
        %811 = vst [vmem:[#allocation4 + $0x30] sm:$0xff] %v703
        %812 = vst [vmem:[#allocation4 + $0x38] sm:$0xff] %v785
        %813 = vst [vmem:[#allocation4 + $0x40] sm:$0xff] %v542
        %814 = vst [vmem:[#allocation4 + $0x48] sm:$0xff] %v624
        %815 = vst [vmem:[#allocation4 + $0x50] sm:$0xff] %v706
        %816 = vst [vmem:[#allocation4 + $0x58] sm:$0xff] %v788
        %817 = vst [vmem:[#allocation4 + $0x60] sm:$0xff] %v545
        %818 = vst [vmem:[#allocation4 + $0x68] sm:$0xff] %v627
        %819 = vst [vmem:[#allocation4 + $0x70] sm:$0xff] %v709
        %820 = vst [vmem:[#allocation4 + $0x78] sm:$0xff] %v791
        %821 = vst [vmem:[#allocation4 + $0x80] sm:$0xff] %v548
        %822 = vst [vmem:[#allocation4 + $0x88] sm:$0xff] %v630
        %823 = vst [vmem:[#allocation4 + $0x90] sm:$0xff] %v712
        %824 = vst [vmem:[#allocation4 + $0x98] sm:$0xff] %v794
        %825 = vst [vmem:[#allocation4 + $0xa0] sm:$0xff] %v551
        %826 = vst [vmem:[#allocation4 + $0xa8] sm:$0xff] %v633
        %827 = vst [vmem:[#allocation4 + $0xb0] sm:$0xff] %v715
        %828 = vst [vmem:[#allocation4 + $0xb8] sm:$0xff] %v797
        %829 = vst [vmem:[#allocation4 + $0xc0] sm:$0xff] %v554
        %830 = vst [vmem:[#allocation4 + $0xc8] sm:$0xff] %v636
        %831 = vst [vmem:[#allocation4 + $0xd0] sm:$0xff] %v718
        %832 = vst [vmem:[#allocation4 + $0xd8] sm:$0xff] %v800
        %833 = vst [vmem:[#allocation4 + $0xe0] sm:$0xff] %v557
        %834 = vst [vmem:[#allocation4 + $0xe8] sm:$0xff] %v639
        %835 = vst [vmem:[#allocation4 + $0xf0] sm:$0xff] %v721
        %836 = vst [vmem:[#allocation4 + $0xf8] sm:$0xff] %v803
        %s837 = smul.u32 %s24, 7
        %s838 = smul.u32 %s24, 2
        %s839 = ssub.s32 1, %s838
        %v840 = vld [vmem:[#allocation2] sm:$0xff]
        %v841 = vld [vmem:[#allocation3] sm:$0xff]
        %s842 = smul.u32 %s24, 56
        %s843 = sshra.s32 %s842, 3
        %s844 = sand.u32 %s842, 7
        %s845 = smul.u32 %s843, 4
        %s846 = smul.addr %s845, 8
        %s847 = scalar_lea.vmem [#allocation4], %s846
        %v848 = vld [vmem:[%s847] sm:$0xff]
        %v849 = vld [vmem:[%s847 + $0x8] sm:$0xff]
        %v850 = vld [vmem:[%s847 + $0x10] sm:$0xff]
        %v851 = vld [vmem:[%s847 + $0x18] sm:$0xff]
        %v852 = vld [vmem:[#allocation8] sm:$0xff]
        %v853 = vld [vmem:[#allocation8 + $0x8] sm:$0xff]
        %v854 = vld [vmem:[#allocation8 + $0x10] sm:$0xff]
        %v855 = vld [vmem:[#allocation8 + $0x18] sm:$0xff]
        %v856 = vld [vmem:[#allocation8 + $0x20] sm:$0xff]
        %v857 = vld [vmem:[#allocation8 + $0x28] sm:$0xff]
        %v858 = vld [vmem:[#allocation8 + $0x30] sm:$0xff]
        %v859 = vld [vmem:[#allocation8 + $0x38] sm:$0xff]
        %v860 = vld [vmem:[#allocation8 + $0x40] sm:$0xff]
        %v861 = vld [vmem:[#allocation8 + $0x48] sm:$0xff]
        %v862 = vld [vmem:[#allocation8 + $0x50] sm:$0xff]
        %v863 = vld [vmem:[#allocation8 + $0x58] sm:$0xff]
        %v864 = vld [vmem:[#allocation8 + $0x60] sm:$0xff]
        %v865 = vld [vmem:[#allocation8 + $0x68] sm:$0xff]
        %v866 = vld [vmem:[#allocation8 + $0x70] sm:$0xff]
        %v867 = vld [vmem:[#allocation8 + $0x78] sm:$0xff]
        %v868 = vld [vmem:[#allocation8 + $0x80] sm:$0xff]
        %v869 = vld [vmem:[#allocation8 + $0x88] sm:$0xff]
        %v870 = vld [vmem:[#allocation8 + $0x90] sm:$0xff]
        %v871 = vld [vmem:[#allocation8 + $0x98] sm:$0xff]
        %v872 = vld [vmem:[#allocation8 + $0xa0] sm:$0xff]
        %v873 = vld [vmem:[#allocation8 + $0xa8] sm:$0xff]
        %v874 = vld [vmem:[#allocation8 + $0xb0] sm:$0xff]
        %v875 = vld [vmem:[#allocation8 + $0xb8] sm:$0xff]
        %v876 = vld [vmem:[#allocation8 + $0xc0] sm:$0xff]
        %v877 = vld [vmem:[#allocation8 + $0xc8] sm:$0xff]
        %v878 = vld [vmem:[#allocation8 + $0xd0] sm:$0xff]
        %v879 = vld [vmem:[#allocation8 + $0xd8] sm:$0xff]
        %v880 = vld [vmem:[#allocation8 + $0xe0] sm:$0xff]
        %v881 = vld [vmem:[#allocation8 + $0xe8] sm:$0xff]
        %v882 = vld [vmem:[#allocation8 + $0xf0] sm:$0xff]
        %v883 = vld [vmem:[#allocation8 + $0xf8] sm:$0xff]
        %v884 = vld [vmem:[#allocation8 + $0x100] sm:$0xff]
        %v885 = vld [vmem:[#allocation8 + $0x108] sm:$0xff]
        %v886 = vld [vmem:[#allocation8 + $0x110] sm:$0xff]
        %v887 = vld [vmem:[#allocation8 + $0x118] sm:$0xff]
        %v888 = vld [vmem:[#allocation8 + $0x120] sm:$0xff]
        %v889 = vld [vmem:[#allocation8 + $0x128] sm:$0xff]
        %v890 = vld [vmem:[#allocation8 + $0x130] sm:$0xff]
        %v891 = vld [vmem:[#allocation8 + $0x138] sm:$0xff]
        %v892 = vld [vmem:[#allocation8 + $0x140] sm:$0xff]
        %v893 = vld [vmem:[#allocation8 + $0x148] sm:$0xff]
        %v894 = vld [vmem:[#allocation8 + $0x150] sm:$0xff]
        %v895 = vld [vmem:[#allocation8 + $0x158] sm:$0xff]
        %v896 = vld [vmem:[#allocation8 + $0x160] sm:$0xff]
        %v897 = vld [vmem:[#allocation8 + $0x168] sm:$0xff]
        %v898 = vld [vmem:[#allocation8 + $0x170] sm:$0xff]
        %v899 = vld [vmem:[#allocation8 + $0x178] sm:$0xff]
        %v900 = vld [vmem:[#allocation8 + $0x180] sm:$0xff]
        %v901 = vld [vmem:[#allocation8 + $0x188] sm:$0xff]
        %v902 = vld [vmem:[#allocation8 + $0x190] sm:$0xff]
        %v903 = vld [vmem:[#allocation8 + $0x198] sm:$0xff]
        %v904 = vld [vmem:[#allocation8 + $0x1a0] sm:$0xff]
        %v905 = vld [vmem:[#allocation8 + $0x1a8] sm:$0xff]
        %v906 = vld [vmem:[#allocation8 + $0x1b0] sm:$0xff]
        %v907 = vld [vmem:[#allocation8 + $0x1b8] sm:$0xff]
        %v908 = vld [vmem:[#allocation8 + $0x1c0] sm:$0xff]
        %v909 = vld [vmem:[#allocation8 + $0x1c8] sm:$0xff]
        %v910 = vld [vmem:[#allocation8 + $0x1d0] sm:$0xff]
        %v911 = vld [vmem:[#allocation8 + $0x1d8] sm:$0xff]
        %v912 = vld [vmem:[#allocation8 + $0x1e0] sm:$0xff]
        %v913 = vld [vmem:[#allocation8 + $0x1e8] sm:$0xff]
        %v914 = vld [vmem:[#allocation8 + $0x1f0] sm:$0xff]
        %v915 = vld [vmem:[#allocation8 + $0x1f8] sm:$0xff]
        %916 = vmatpush.msra.mxu0 %v912
        %917 = vmatpush.msra.mxu0 %v908
        %918 = vmatpush.msra.mxu0 %v904
        %919 = vmatpush.msra.mxu0 %v900
        %920 = vmatpush.msra.mxu0 %v896
        %921 = vmatpush.msra.mxu0 %v892
        %922 = vmatpush.msra.mxu0 %v888
        %923 = vmatpush.msra.mxu0 %v884
        %924 = vmatpush.msra.mxu0 %v880
        %925 = vmatpush.msra.mxu0 %v876
        %926 = vmatpush.msra.mxu0 %v872
        %927 = vmatpush.msra.mxu0 %v868
        %928 = vmatpush.msra.mxu0 %v864
        %929 = vmatpush.msra.mxu0 %v860
        %930 = vmatpush.msra.mxu0 %v856
        %931 = vmatpush.msra.mxu0 %v852
        %932 = vmatmul.f32.gmra.mxu0 %v840
        %v933 = vpop.f32.mrf.mxu0
        %v934 = vadd.f32 0.0, %v933
        %935 = vdwg.mxu0
        %936 = vmatpush.msra.mxu0 %v913
        %937 = vmatpush.msra.mxu0 %v909
        %938 = vmatpush.msra.mxu0 %v905
        %939 = vmatpush.msra.mxu0 %v901
        %940 = vmatpush.msra.mxu0 %v897
        %941 = vmatpush.msra.mxu0 %v893
        %942 = vmatpush.msra.mxu0 %v889
        %943 = vmatpush.msra.mxu0 %v885
        %944 = vmatpush.msra.mxu0 %v881
        %945 = vmatpush.msra.mxu0 %v877
        %946 = vmatpush.msra.mxu0 %v873
        %947 = vmatpush.msra.mxu0 %v869
        %948 = vmatpush.msra.mxu0 %v865
        %949 = vmatpush.msra.mxu0 %v861
        %950 = vmatpush.msra.mxu0 %v857
        %951 = vmatpush.msra.mxu0 %v853
        %952 = vmatmul.f32.gmra.mxu0 %v840
        %v953 = vpop.f32.mrf.mxu0
        %v954 = vadd.f32 0.0, %v953
        %955 = vdwg.mxu0
        %956 = vmatpush.msra.mxu0 %v914
        %957 = vmatpush.msra.mxu0 %v910
        %958 = vmatpush.msra.mxu0 %v906
        %959 = vmatpush.msra.mxu0 %v902
        %960 = vmatpush.msra.mxu0 %v898
        %961 = vmatpush.msra.mxu0 %v894
        %962 = vmatpush.msra.mxu0 %v890
        %963 = vmatpush.msra.mxu0 %v886
        %964 = vmatpush.msra.mxu0 %v882
        %965 = vmatpush.msra.mxu0 %v878
        %966 = vmatpush.msra.mxu0 %v874
        %967 = vmatpush.msra.mxu0 %v870
        %968 = vmatpush.msra.mxu0 %v866
        %969 = vmatpush.msra.mxu0 %v862
        %970 = vmatpush.msra.mxu0 %v858
        %971 = vmatpush.msra.mxu0 %v854
        %972 = vmatmul.f32.gmra.mxu0 %v840
        %v973 = vpop.f32.mrf.mxu0
        %v974 = vadd.f32 0.0, %v973
        %975 = vdwg.mxu0
        %976 = vmatpush.msra.mxu0 %v915
        %977 = vmatpush.msra.mxu0 %v911
        %978 = vmatpush.msra.mxu0 %v907
        %979 = vmatpush.msra.mxu0 %v903
        %980 = vmatpush.msra.mxu0 %v899
        %981 = vmatpush.msra.mxu0 %v895
        %982 = vmatpush.msra.mxu0 %v891
        %983 = vmatpush.msra.mxu0 %v887
        %984 = vmatpush.msra.mxu0 %v883
        %985 = vmatpush.msra.mxu0 %v879
        %986 = vmatpush.msra.mxu0 %v875
        %987 = vmatpush.msra.mxu0 %v871
        %988 = vmatpush.msra.mxu0 %v867
        %989 = vmatpush.msra.mxu0 %v863
        %990 = vmatpush.msra.mxu0 %v859
        %991 = vmatpush.msra.mxu0 %v855
        %992 = vmatmul.f32.gmra.mxu0 %v840
        %v993 = vpop.f32.mrf.mxu0
        %v994 = vadd.f32 0.0, %v993
        %995 = vdwg.mxu0
        %v996 = vadd.f32 %v848, %v934
        %v997 = vadd.f32 %v849, %v954
        %v998 = vadd.f32 %v850, %v974
        %v999 = vadd.f32 %v851, %v994
        %v1000 = vxor.u32 %v996, 2147483648
        %v1001 = vxor.u32 %v997, 2147483648
        %v1002 = vxor.u32 %v998, 2147483648
        %v1003 = vmul.f32 %v1000, 1.442695
        %v1004 = vpow.pop %v1003
        %v1005 = vmul.f32 %v1001, 1.442695
        %v1006 = vpow.pop %v1005
        %v1007 = vmul.f32 %v1002, 1.442695
        %v1008 = vpow.pop %v1007
        %v1009 = vadd.f32 %v1004, 1.0
        %v1010 = vadd.f32 %v1006, 1.0
        %v1011 = vadd.f32 %v1008, 1.0
        %v1012 = vrcp.pop %v1009
        %v1013 = vmul.f32 %v1009, %v1012
        %v1014 = vsub.f32 1.0, %v1013
        %v1015 = vmul.f32 %v1012, %v1014
        %v1016 = vadd.f32 %v1012, %v1015
        %vm1017 = vweird.f32 %v1009
        %vm1018 = vweird.f32 %v1012
        %vm1019 = vmor %vm1017, %vm1018
        %v1020 = vsel %vm1019, %v1012, %v1016
        %v1021 = vand.u32 2147483647, %v1009
        %vm1022 = vcmp.eq.f32.partialorder %v1021, 8.507059e+37
        %v1023 = vand.u32 %v1009, 2147483648
        %v1024 = vor.u32 1.1754944e-38, %v1023
        %v1025 = vsel %vm1022, %v1024, %v1020
        %v1026 = vmul.f32 1.0, %v1025
        %v1027 = vrcp.pop %v1010
        %v1028 = vmul.f32 %v1010, %v1027
        %v1029 = vsub.f32 1.0, %v1028
        %v1030 = vmul.f32 %v1027, %v1029
        %v1031 = vadd.f32 %v1027, %v1030
        %vm1032 = vweird.f32 %v1010
        %vm1033 = vweird.f32 %v1027
        %vm1034 = vmor %vm1032, %vm1033
        %v1035 = vsel %vm1034, %v1027, %v1031
        %v1036 = vand.u32 2147483647, %v1010
        %vm1037 = vcmp.eq.f32.partialorder %v1036, 8.507059e+37
        %v1038 = vand.u32 %v1010, 2147483648
        %v1039 = vor.u32 1.1754944e-38, %v1038
        %v1040 = vsel %vm1037, %v1039, %v1035
        %v1041 = vmul.f32 1.0, %v1040
        %v1042 = vrcp.pop %v1011
        %v1043 = vmul.f32 %v1011, %v1042
        %v1044 = vsub.f32 1.0, %v1043
        %v1045 = vmul.f32 %v1042, %v1044
        %v1046 = vadd.f32 %v1042, %v1045
        %vm1047 = vweird.f32 %v1011
        %vm1048 = vweird.f32 %v1042
        %vm1049 = vmor %vm1047, %vm1048
        %v1050 = vsel %vm1049, %v1042, %v1046
        %v1051 = vand.u32 2147483647, %v1011
        %vm1052 = vcmp.eq.f32.partialorder %v1051, 8.507059e+37
        %v1053 = vand.u32 %v1011, 2147483648
        %v1054 = vor.u32 1.1754944e-38, %v1053
        %v1055 = vsel %vm1052, %v1054, %v1050
        %v1056 = vmul.f32 1.0, %v1055
        %v1057 = vtanh.pop %v999
        %v1058 = vmul.f32 %v1041, %v841
        %v1059 = vmul.f32 %v1026, %v1057
        %v1060 = vadd.f32 %v1058, %v1059
        %v1061 = vtanh.pop %v1060
        %v1062 = vmul.f32 %v1056, %v1061
        %s1063 = scalar_lea.vmem %s299, %s842 [#allocation11]
        %1064 = vst [vmem:[%s1063] sm:$0xff] %v1062
        %s1065 = sadd.s32 %s837, %s839
        %s1066 = smul.u32 %s1065, 8
        %s1067 = sshra.s32 %s1066, 3
        %s1068 = sand.u32 %s1066, 7
        %s1069 = smul.u32 %s1067, 4
        %s1070 = smul.addr %s1069, 8
        %s1071 = scalar_lea.vmem [#allocation4], %s1070
        %v1072 = vld [vmem:[%s1071] sm:$0xff]
        %v1073 = vld [vmem:[%s1071 + $0x8] sm:$0xff]
        %v1074 = vld [vmem:[%s1071 + $0x10] sm:$0xff]
        %v1075 = vld [vmem:[%s1071 + $0x18] sm:$0xff]
        %v1076 = vld [vmem:[#allocation8] sm:$0xff]
        %v1077 = vld [vmem:[#allocation8 + $0x8] sm:$0xff]
        %v1078 = vld [vmem:[#allocation8 + $0x10] sm:$0xff]
        %v1079 = vld [vmem:[#allocation8 + $0x18] sm:$0xff]
        %v1080 = vld [vmem:[#allocation8 + $0x20] sm:$0xff]
        %v1081 = vld [vmem:[#allocation8 + $0x28] sm:$0xff]
        %v1082 = vld [vmem:[#allocation8 + $0x30] sm:$0xff]
        %v1083 = vld [vmem:[#allocation8 + $0x38] sm:$0xff]
        %v1084 = vld [vmem:[#allocation8 + $0x40] sm:$0xff]
        %v1085 = vld [vmem:[#allocation8 + $0x48] sm:$0xff]
        %v1086 = vld [vmem:[#allocation8 + $0x50] sm:$0xff]
        %v1087 = vld [vmem:[#allocation8 + $0x58] sm:$0xff]
        %v1088 = vld [vmem:[#allocation8 + $0x60] sm:$0xff]
        %v1089 = vld [vmem:[#allocation8 + $0x68] sm:$0xff]
        %v1090 = vld [vmem:[#allocation8 + $0x70] sm:$0xff]
        %v1091 = vld [vmem:[#allocation8 + $0x78] sm:$0xff]
        %v1092 = vld [vmem:[#allocation8 + $0x80] sm:$0xff]
        %v1093 = vld [vmem:[#allocation8 + $0x88] sm:$0xff]
        %v1094 = vld [vmem:[#allocation8 + $0x90] sm:$0xff]
        %v1095 = vld [vmem:[#allocation8 + $0x98] sm:$0xff]
        %v1096 = vld [vmem:[#allocation8 + $0xa0] sm:$0xff]
        %v1097 = vld [vmem:[#allocation8 + $0xa8] sm:$0xff]
        %v1098 = vld [vmem:[#allocation8 + $0xb0] sm:$0xff]
        %v1099 = vld [vmem:[#allocation8 + $0xb8] sm:$0xff]
        %v1100 = vld [vmem:[#allocation8 + $0xc0] sm:$0xff]
        %v1101 = vld [vmem:[#allocation8 + $0xc8] sm:$0xff]
        %v1102 = vld [vmem:[#allocation8 + $0xd0] sm:$0xff]
        %v1103 = vld [vmem:[#allocation8 + $0xd8] sm:$0xff]
        %v1104 = vld [vmem:[#allocation8 + $0xe0] sm:$0xff]
        %v1105 = vld [vmem:[#allocation8 + $0xe8] sm:$0xff]
        %v1106 = vld [vmem:[#allocation8 + $0xf0] sm:$0xff]
        %v1107 = vld [vmem:[#allocation8 + $0xf8] sm:$0xff]
        %v1108 = vld [vmem:[#allocation8 + $0x100] sm:$0xff]
        %v1109 = vld [vmem:[#allocation8 + $0x108] sm:$0xff]
        %v1110 = vld [vmem:[#allocation8 + $0x110] sm:$0xff]
        %v1111 = vld [vmem:[#allocation8 + $0x118] sm:$0xff]
        %v1112 = vld [vmem:[#allocation8 + $0x120] sm:$0xff]
        %v1113 = vld [vmem:[#allocation8 + $0x128] sm:$0xff]
        %v1114 = vld [vmem:[#allocation8 + $0x130] sm:$0xff]
        %v1115 = vld [vmem:[#allocation8 + $0x138] sm:$0xff]
        %v1116 = vld [vmem:[#allocation8 + $0x140] sm:$0xff]
        %v1117 = vld [vmem:[#allocation8 + $0x148] sm:$0xff]
        %v1118 = vld [vmem:[#allocation8 + $0x150] sm:$0xff]
        %v1119 = vld [vmem:[#allocation8 + $0x158] sm:$0xff]
        %v1120 = vld [vmem:[#allocation8 + $0x160] sm:$0xff]
        %v1121 = vld [vmem:[#allocation8 + $0x168] sm:$0xff]
        %v1122 = vld [vmem:[#allocation8 + $0x170] sm:$0xff]
        %v1123 = vld [vmem:[#allocation8 + $0x178] sm:$0xff]
        %v1124 = vld [vmem:[#allocation8 + $0x180] sm:$0xff]
        %v1125 = vld [vmem:[#allocation8 + $0x188] sm:$0xff]
        %v1126 = vld [vmem:[#allocation8 + $0x190] sm:$0xff]
        %v1127 = vld [vmem:[#allocation8 + $0x198] sm:$0xff]
        %v1128 = vld [vmem:[#allocation8 + $0x1a0] sm:$0xff]
        %v1129 = vld [vmem:[#allocation8 + $0x1a8] sm:$0xff]
        %v1130 = vld [vmem:[#allocation8 + $0x1b0] sm:$0xff]
        %v1131 = vld [vmem:[#allocation8 + $0x1b8] sm:$0xff]
        %v1132 = vld [vmem:[#allocation8 + $0x1c0] sm:$0xff]
        %v1133 = vld [vmem:[#allocation8 + $0x1c8] sm:$0xff]
        %v1134 = vld [vmem:[#allocation8 + $0x1d0] sm:$0xff]
        %v1135 = vld [vmem:[#allocation8 + $0x1d8] sm:$0xff]
        %v1136 = vld [vmem:[#allocation8 + $0x1e0] sm:$0xff]
        %v1137 = vld [vmem:[#allocation8 + $0x1e8] sm:$0xff]
        %v1138 = vld [vmem:[#allocation8 + $0x1f0] sm:$0xff]
        %v1139 = vld [vmem:[#allocation8 + $0x1f8] sm:$0xff]
        %1140 = vmatpush.msra.mxu0 %v1136
        %1141 = vmatpush.msra.mxu0 %v1132
        %1142 = vmatpush.msra.mxu0 %v1128
        %1143 = vmatpush.msra.mxu0 %v1124
        %1144 = vmatpush.msra.mxu0 %v1120
        %1145 = vmatpush.msra.mxu0 %v1116
        %1146 = vmatpush.msra.mxu0 %v1112
        %1147 = vmatpush.msra.mxu0 %v1108
        %1148 = vmatpush.msra.mxu0 %v1104
        %1149 = vmatpush.msra.mxu0 %v1100
        %1150 = vmatpush.msra.mxu0 %v1096
        %1151 = vmatpush.msra.mxu0 %v1092
        %1152 = vmatpush.msra.mxu0 %v1088
        %1153 = vmatpush.msra.mxu0 %v1084
        %1154 = vmatpush.msra.mxu0 %v1080
        %1155 = vmatpush.msra.mxu0 %v1076
        %1156 = vmatmul.f32.gmra.mxu0 %v1062
        %v1157 = vpop.f32.mrf.mxu0
        %v1158 = vadd.f32 0.0, %v1157
        %1159 = vdwg.mxu0
        %1160 = vmatpush.msra.mxu0 %v1137
        %1161 = vmatpush.msra.mxu0 %v1133
        %1162 = vmatpush.msra.mxu0 %v1129
        %1163 = vmatpush.msra.mxu0 %v1125
        %1164 = vmatpush.msra.mxu0 %v1121
        %1165 = vmatpush.msra.mxu0 %v1117
        %1166 = vmatpush.msra.mxu0 %v1113
        %1167 = vmatpush.msra.mxu0 %v1109
        %1168 = vmatpush.msra.mxu0 %v1105
        %1169 = vmatpush.msra.mxu0 %v1101
        %1170 = vmatpush.msra.mxu0 %v1097
        %1171 = vmatpush.msra.mxu0 %v1093
        %1172 = vmatpush.msra.mxu0 %v1089
        %1173 = vmatpush.msra.mxu0 %v1085
        %1174 = vmatpush.msra.mxu0 %v1081
        %1175 = vmatpush.msra.mxu0 %v1077
        %1176 = vmatmul.f32.gmra.mxu0 %v1062
        %v1177 = vpop.f32.mrf.mxu0
        %v1178 = vadd.f32 0.0, %v1177
        %1179 = vdwg.mxu0
        %1180 = vmatpush.msra.mxu0 %v1138
        %1181 = vmatpush.msra.mxu0 %v1134
        %1182 = vmatpush.msra.mxu0 %v1130
        %1183 = vmatpush.msra.mxu0 %v1126
        %1184 = vmatpush.msra.mxu0 %v1122
        %1185 = vmatpush.msra.mxu0 %v1118
        %1186 = vmatpush.msra.mxu0 %v1114
        %1187 = vmatpush.msra.mxu0 %v1110
        %1188 = vmatpush.msra.mxu0 %v1106
        %1189 = vmatpush.msra.mxu0 %v1102
        %1190 = vmatpush.msra.mxu0 %v1098
        %1191 = vmatpush.msra.mxu0 %v1094
        %1192 = vmatpush.msra.mxu0 %v1090
        %1193 = vmatpush.msra.mxu0 %v1086
        %1194 = vmatpush.msra.mxu0 %v1082
        %1195 = vmatpush.msra.mxu0 %v1078
        %1196 = vmatmul.f32.gmra.mxu0 %v1062
        %v1197 = vpop.f32.mrf.mxu0
        %v1198 = vadd.f32 0.0, %v1197
        %1199 = vdwg.mxu0
        %1200 = vmatpush.msra.mxu0 %v1139
        %1201 = vmatpush.msra.mxu0 %v1135
        %1202 = vmatpush.msra.mxu0 %v1131
        %1203 = vmatpush.msra.mxu0 %v1127
        %1204 = vmatpush.msra.mxu0 %v1123
        %1205 = vmatpush.msra.mxu0 %v1119
        %1206 = vmatpush.msra.mxu0 %v1115
        %1207 = vmatpush.msra.mxu0 %v1111
        %1208 = vmatpush.msra.mxu0 %v1107
        %1209 = vmatpush.msra.mxu0 %v1103
        %1210 = vmatpush.msra.mxu0 %v1099
        %1211 = vmatpush.msra.mxu0 %v1095
        %1212 = vmatpush.msra.mxu0 %v1091
        %1213 = vmatpush.msra.mxu0 %v1087
        %1214 = vmatpush.msra.mxu0 %v1083
        %1215 = vmatpush.msra.mxu0 %v1079
        %1216 = vmatmul.f32.gmra.mxu0 %v1062
        %v1217 = vpop.f32.mrf.mxu0
        %v1218 = vadd.f32 0.0, %v1217
        %1219 = vdwg.mxu0
        %v1220 = vadd.f32 %v1072, %v1158
        %v1221 = vadd.f32 %v1073, %v1178
        %v1222 = vadd.f32 %v1074, %v1198
        %v1223 = vadd.f32 %v1075, %v1218
        %v1224 = vxor.u32 %v1220, 2147483648
        %v1225 = vxor.u32 %v1221, 2147483648
        %v1226 = vxor.u32 %v1222, 2147483648
        %v1227 = vmul.f32 %v1224, 1.442695
        %v1228 = vpow.pop %v1227
        %v1229 = vmul.f32 %v1225, 1.442695
        %v1230 = vpow.pop %v1229
        %v1231 = vmul.f32 %v1226, 1.442695
        %v1232 = vpow.pop %v1231
        %v1233 = vadd.f32 %v1228, 1.0
        %v1234 = vadd.f32 %v1230, 1.0
        %v1235 = vadd.f32 %v1232, 1.0
        %v1236 = vrcp.pop %v1233
        %v1237 = vmul.f32 %v1233, %v1236
        %v1238 = vsub.f32 1.0, %v1237
        %v1239 = vmul.f32 %v1236, %v1238
        %v1240 = vadd.f32 %v1236, %v1239
        %vm1241 = vweird.f32 %v1233
        %vm1242 = vweird.f32 %v1236
        %vm1243 = vmor %vm1241, %vm1242
        %v1244 = vsel %vm1243, %v1236, %v1240
        %v1245 = vand.u32 2147483647, %v1233
        %vm1246 = vcmp.eq.f32.partialorder %v1245, 8.507059e+37
        %v1247 = vand.u32 %v1233, 2147483648
        %v1248 = vor.u32 1.1754944e-38, %v1247
        %v1249 = vsel %vm1246, %v1248, %v1244
        %v1250 = vmul.f32 1.0, %v1249
        %v1251 = vrcp.pop %v1234
        %v1252 = vmul.f32 %v1234, %v1251
        %v1253 = vsub.f32 1.0, %v1252
        %v1254 = vmul.f32 %v1251, %v1253
        %v1255 = vadd.f32 %v1251, %v1254
        %vm1256 = vweird.f32 %v1234
        %vm1257 = vweird.f32 %v1251
        %vm1258 = vmor %vm1256, %vm1257
        %v1259 = vsel %vm1258, %v1251, %v1255
        %v1260 = vand.u32 2147483647, %v1234
        %vm1261 = vcmp.eq.f32.partialorder %v1260, 8.507059e+37
        %v1262 = vand.u32 %v1234, 2147483648
        %v1263 = vor.u32 1.1754944e-38, %v1262
        %v1264 = vsel %vm1261, %v1263, %v1259
        %v1265 = vmul.f32 1.0, %v1264
        %v1266 = vrcp.pop %v1235
        %v1267 = vmul.f32 %v1235, %v1266
        %v1268 = vsub.f32 1.0, %v1267
        %v1269 = vmul.f32 %v1266, %v1268
        %v1270 = vadd.f32 %v1266, %v1269
        %vm1271 = vweird.f32 %v1235
        %vm1272 = vweird.f32 %v1266
        %vm1273 = vmor %vm1271, %vm1272
        %v1274 = vsel %vm1273, %v1266, %v1270
        %v1275 = vand.u32 2147483647, %v1235
        %vm1276 = vcmp.eq.f32.partialorder %v1275, 8.507059e+37
        %v1277 = vand.u32 %v1235, 2147483648
        %v1278 = vor.u32 1.1754944e-38, %v1277
        %v1279 = vsel %vm1276, %v1278, %v1274
        %v1280 = vmul.f32 1.0, %v1279
        %v1281 = vtanh.pop %v1223
        %v1282 = vmul.f32 %v1265, %v1060
        %v1283 = vmul.f32 %v1250, %v1281
        %v1284 = vadd.f32 %v1282, %v1283
        %v1285 = vtanh.pop %v1284
        %v1286 = vmul.f32 %v1280, %v1285
        %s1287 = scalar_lea.vmem %s299, %s1066 [#allocation11]
        %1288 = vst [vmem:[%s1287] sm:$0xff] %v1286
        %s1289 = smul.u32 %s839, 2
        %s1290 = sadd.s32 %s837, %s1289
        %s1291 = smul.u32 %s1290, 8
        %s1292 = sshra.s32 %s1291, 3
        %s1293 = sand.u32 %s1291, 7
        %s1294 = smul.u32 %s1292, 4
        %s1295 = smul.addr %s1294, 8
        %s1296 = scalar_lea.vmem [#allocation4], %s1295
        %v1297 = vld [vmem:[%s1296] sm:$0xff]
        %v1298 = vld [vmem:[%s1296 + $0x8] sm:$0xff]
        %v1299 = vld [vmem:[%s1296 + $0x10] sm:$0xff]
        %v1300 = vld [vmem:[%s1296 + $0x18] sm:$0xff]
        %v1301 = vld [vmem:[#allocation8] sm:$0xff]
        %v1302 = vld [vmem:[#allocation8 + $0x8] sm:$0xff]
        %v1303 = vld [vmem:[#allocation8 + $0x10] sm:$0xff]
        %v1304 = vld [vmem:[#allocation8 + $0x18] sm:$0xff]
        %v1305 = vld [vmem:[#allocation8 + $0x20] sm:$0xff]
        %v1306 = vld [vmem:[#allocation8 + $0x28] sm:$0xff]
        %v1307 = vld [vmem:[#allocation8 + $0x30] sm:$0xff]
        %v1308 = vld [vmem:[#allocation8 + $0x38] sm:$0xff]
        %v1309 = vld [vmem:[#allocation8 + $0x40] sm:$0xff]
        %v1310 = vld [vmem:[#allocation8 + $0x48] sm:$0xff]
        %v1311 = vld [vmem:[#allocation8 + $0x50] sm:$0xff]
        %v1312 = vld [vmem:[#allocation8 + $0x58] sm:$0xff]
        %v1313 = vld [vmem:[#allocation8 + $0x60] sm:$0xff]
        %v1314 = vld [vmem:[#allocation8 + $0x68] sm:$0xff]
        %v1315 = vld [vmem:[#allocation8 + $0x70] sm:$0xff]
        %v1316 = vld [vmem:[#allocation8 + $0x78] sm:$0xff]
        %v1317 = vld [vmem:[#allocation8 + $0x80] sm:$0xff]
        %v1318 = vld [vmem:[#allocation8 + $0x88] sm:$0xff]
        %v1319 = vld [vmem:[#allocation8 + $0x90] sm:$0xff]
        %v1320 = vld [vmem:[#allocation8 + $0x98] sm:$0xff]
        %v1321 = vld [vmem:[#allocation8 + $0xa0] sm:$0xff]
        %v1322 = vld [vmem:[#allocation8 + $0xa8] sm:$0xff]
        %v1323 = vld [vmem:[#allocation8 + $0xb0] sm:$0xff]
        %v1324 = vld [vmem:[#allocation8 + $0xb8] sm:$0xff]
        %v1325 = vld [vmem:[#allocation8 + $0xc0] sm:$0xff]
        %v1326 = vld [vmem:[#allocation8 + $0xc8] sm:$0xff]
        %v1327 = vld [vmem:[#allocation8 + $0xd0] sm:$0xff]
        %v1328 = vld [vmem:[#allocation8 + $0xd8] sm:$0xff]
        %v1329 = vld [vmem:[#allocation8 + $0xe0] sm:$0xff]
        %v1330 = vld [vmem:[#allocation8 + $0xe8] sm:$0xff]
        %v1331 = vld [vmem:[#allocation8 + $0xf0] sm:$0xff]
        %v1332 = vld [vmem:[#allocation8 + $0xf8] sm:$0xff]
        %v1333 = vld [vmem:[#allocation8 + $0x100] sm:$0xff]
        %v1334 = vld [vmem:[#allocation8 + $0x108] sm:$0xff]
        %v1335 = vld [vmem:[#allocation8 + $0x110] sm:$0xff]
        %v1336 = vld [vmem:[#allocation8 + $0x118] sm:$0xff]
        %v1337 = vld [vmem:[#allocation8 + $0x120] sm:$0xff]
        %v1338 = vld [vmem:[#allocation8 + $0x128] sm:$0xff]
        %v1339 = vld [vmem:[#allocation8 + $0x130] sm:$0xff]
        %v1340 = vld [vmem:[#allocation8 + $0x138] sm:$0xff]
        %v1341 = vld [vmem:[#allocation8 + $0x140] sm:$0xff]
        %v1342 = vld [vmem:[#allocation8 + $0x148] sm:$0xff]
        %v1343 = vld [vmem:[#allocation8 + $0x150] sm:$0xff]
        %v1344 = vld [vmem:[#allocation8 + $0x158] sm:$0xff]
        %v1345 = vld [vmem:[#allocation8 + $0x160] sm:$0xff]
        %v1346 = vld [vmem:[#allocation8 + $0x168] sm:$0xff]
        %v1347 = vld [vmem:[#allocation8 + $0x170] sm:$0xff]
        %v1348 = vld [vmem:[#allocation8 + $0x178] sm:$0xff]
        %v1349 = vld [vmem:[#allocation8 + $0x180] sm:$0xff]
        %v1350 = vld [vmem:[#allocation8 + $0x188] sm:$0xff]
        %v1351 = vld [vmem:[#allocation8 + $0x190] sm:$0xff]
        %v1352 = vld [vmem:[#allocation8 + $0x198] sm:$0xff]
        %v1353 = vld [vmem:[#allocation8 + $0x1a0] sm:$0xff]
        %v1354 = vld [vmem:[#allocation8 + $0x1a8] sm:$0xff]
        %v1355 = vld [vmem:[#allocation8 + $0x1b0] sm:$0xff]
        %v1356 = vld [vmem:[#allocation8 + $0x1b8] sm:$0xff]
        %v1357 = vld [vmem:[#allocation8 + $0x1c0] sm:$0xff]
        %v1358 = vld [vmem:[#allocation8 + $0x1c8] sm:$0xff]
        %v1359 = vld [vmem:[#allocation8 + $0x1d0] sm:$0xff]
        %v1360 = vld [vmem:[#allocation8 + $0x1d8] sm:$0xff]
        %v1361 = vld [vmem:[#allocation8 + $0x1e0] sm:$0xff]
        %v1362 = vld [vmem:[#allocation8 + $0x1e8] sm:$0xff]
        %v1363 = vld [vmem:[#allocation8 + $0x1f0] sm:$0xff]
        %v1364 = vld [vmem:[#allocation8 + $0x1f8] sm:$0xff]
        %1365 = vmatpush.msra.mxu0 %v1361
        %1366 = vmatpush.msra.mxu0 %v1357
        %1367 = vmatpush.msra.mxu0 %v1353
        %1368 = vmatpush.msra.mxu0 %v1349
        %1369 = vmatpush.msra.mxu0 %v1345
        %1370 = vmatpush.msra.mxu0 %v1341
        %1371 = vmatpush.msra.mxu0 %v1337
        %1372 = vmatpush.msra.mxu0 %v1333
        %1373 = vmatpush.msra.mxu0 %v1329
        %1374 = vmatpush.msra.mxu0 %v1325
        %1375 = vmatpush.msra.mxu0 %v1321
        %1376 = vmatpush.msra.mxu0 %v1317
        %1377 = vmatpush.msra.mxu0 %v1313
        %1378 = vmatpush.msra.mxu0 %v1309
        %1379 = vmatpush.msra.mxu0 %v1305
        %1380 = vmatpush.msra.mxu0 %v1301
        %1381 = vmatmul.f32.gmra.mxu0 %v1286
        %v1382 = vpop.f32.mrf.mxu0
        %v1383 = vadd.f32 0.0, %v1382
        %1384 = vdwg.mxu0
        %1385 = vmatpush.msra.mxu0 %v1362
        %1386 = vmatpush.msra.mxu0 %v1358
        %1387 = vmatpush.msra.mxu0 %v1354
        %1388 = vmatpush.msra.mxu0 %v1350
        %1389 = vmatpush.msra.mxu0 %v1346
        %1390 = vmatpush.msra.mxu0 %v1342
        %1391 = vmatpush.msra.mxu0 %v1338
        %1392 = vmatpush.msra.mxu0 %v1334
        %1393 = vmatpush.msra.mxu0 %v1330
        %1394 = vmatpush.msra.mxu0 %v1326
        %1395 = vmatpush.msra.mxu0 %v1322
        %1396 = vmatpush.msra.mxu0 %v1318
        %1397 = vmatpush.msra.mxu0 %v1314
        %1398 = vmatpush.msra.mxu0 %v1310
        %1399 = vmatpush.msra.mxu0 %v1306
        %1400 = vmatpush.msra.mxu0 %v1302
        %1401 = vmatmul.f32.gmra.mxu0 %v1286
        %v1402 = vpop.f32.mrf.mxu0
        %v1403 = vadd.f32 0.0, %v1402
        %1404 = vdwg.mxu0
        %1405 = vmatpush.msra.mxu0 %v1363
        %1406 = vmatpush.msra.mxu0 %v1359
        %1407 = vmatpush.msra.mxu0 %v1355
        %1408 = vmatpush.msra.mxu0 %v1351
        %1409 = vmatpush.msra.mxu0 %v1347
        %1410 = vmatpush.msra.mxu0 %v1343
        %1411 = vmatpush.msra.mxu0 %v1339
        %1412 = vmatpush.msra.mxu0 %v1335
        %1413 = vmatpush.msra.mxu0 %v1331
        %1414 = vmatpush.msra.mxu0 %v1327
        %1415 = vmatpush.msra.mxu0 %v1323
        %1416 = vmatpush.msra.mxu0 %v1319
        %1417 = vmatpush.msra.mxu0 %v1315
        %1418 = vmatpush.msra.mxu0 %v1311
        %1419 = vmatpush.msra.mxu0 %v1307
        %1420 = vmatpush.msra.mxu0 %v1303
        %1421 = vmatmul.f32.gmra.mxu0 %v1286
        %v1422 = vpop.f32.mrf.mxu0
        %v1423 = vadd.f32 0.0, %v1422
        %1424 = vdwg.mxu0
        %1425 = vmatpush.msra.mxu0 %v1364
        %1426 = vmatpush.msra.mxu0 %v1360
        %1427 = vmatpush.msra.mxu0 %v1356
        %1428 = vmatpush.msra.mxu0 %v1352
        %1429 = vmatpush.msra.mxu0 %v1348
        %1430 = vmatpush.msra.mxu0 %v1344
        %1431 = vmatpush.msra.mxu0 %v1340
        %1432 = vmatpush.msra.mxu0 %v1336
        %1433 = vmatpush.msra.mxu0 %v1332
        %1434 = vmatpush.msra.mxu0 %v1328
        %1435 = vmatpush.msra.mxu0 %v1324
        %1436 = vmatpush.msra.mxu0 %v1320
        %1437 = vmatpush.msra.mxu0 %v1316
        %1438 = vmatpush.msra.mxu0 %v1312
        %1439 = vmatpush.msra.mxu0 %v1308
        %1440 = vmatpush.msra.mxu0 %v1304
        %1441 = vmatmul.f32.gmra.mxu0 %v1286
        %v1442 = vpop.f32.mrf.mxu0
        %v1443 = vadd.f32 0.0, %v1442
        %1444 = vdwg.mxu0
        %v1445 = vadd.f32 %v1297, %v1383
        %v1446 = vadd.f32 %v1298, %v1403
        %v1447 = vadd.f32 %v1299, %v1423
        %v1448 = vadd.f32 %v1300, %v1443
        %v1449 = vxor.u32 %v1445, 2147483648
        %v1450 = vxor.u32 %v1446, 2147483648
        %v1451 = vxor.u32 %v1447, 2147483648
        %v1452 = vmul.f32 %v1449, 1.442695
        %v1453 = vpow.pop %v1452
        %v1454 = vmul.f32 %v1450, 1.442695
        %v1455 = vpow.pop %v1454
        %v1456 = vmul.f32 %v1451, 1.442695
        %v1457 = vpow.pop %v1456
        %v1458 = vadd.f32 %v1453, 1.0
        %v1459 = vadd.f32 %v1455, 1.0
        %v1460 = vadd.f32 %v1457, 1.0
        %v1461 = vrcp.pop %v1458
        %v1462 = vmul.f32 %v1458, %v1461
        %v1463 = vsub.f32 1.0, %v1462
        %v1464 = vmul.f32 %v1461, %v1463
        %v1465 = vadd.f32 %v1461, %v1464
        %vm1466 = vweird.f32 %v1458
        %vm1467 = vweird.f32 %v1461
        %vm1468 = vmor %vm1466, %vm1467
        %v1469 = vsel %vm1468, %v1461, %v1465
        %v1470 = vand.u32 2147483647, %v1458
        %vm1471 = vcmp.eq.f32.partialorder %v1470, 8.507059e+37
        %v1472 = vand.u32 %v1458, 2147483648
        %v1473 = vor.u32 1.1754944e-38, %v1472
        %v1474 = vsel %vm1471, %v1473, %v1469
        %v1475 = vmul.f32 1.0, %v1474
        %v1476 = vrcp.pop %v1459
        %v1477 = vmul.f32 %v1459, %v1476
        %v1478 = vsub.f32 1.0, %v1477
        %v1479 = vmul.f32 %v1476, %v1478
        %v1480 = vadd.f32 %v1476, %v1479
        %vm1481 = vweird.f32 %v1459
        %vm1482 = vweird.f32 %v1476
        %vm1483 = vmor %vm1481, %vm1482
        %v1484 = vsel %vm1483, %v1476, %v1480
        %v1485 = vand.u32 2147483647, %v1459
        %vm1486 = vcmp.eq.f32.partialorder %v1485, 8.507059e+37
        %v1487 = vand.u32 %v1459, 2147483648
        %v1488 = vor.u32 1.1754944e-38, %v1487
        %v1489 = vsel %vm1486, %v1488, %v1484
        %v1490 = vmul.f32 1.0, %v1489
        %v1491 = vrcp.pop %v1460
        %v1492 = vmul.f32 %v1460, %v1491
        %v1493 = vsub.f32 1.0, %v1492
        %v1494 = vmul.f32 %v1491, %v1493
        %v1495 = vadd.f32 %v1491, %v1494
        %vm1496 = vweird.f32 %v1460
        %vm1497 = vweird.f32 %v1491
        %vm1498 = vmor %vm1496, %vm1497
        %v1499 = vsel %vm1498, %v1491, %v1495
        %v1500 = vand.u32 2147483647, %v1460
        %vm1501 = vcmp.eq.f32.partialorder %v1500, 8.507059e+37
        %v1502 = vand.u32 %v1460, 2147483648
        %v1503 = vor.u32 1.1754944e-38, %v1502
        %v1504 = vsel %vm1501, %v1503, %v1499
        %v1505 = vmul.f32 1.0, %v1504
        %v1506 = vtanh.pop %v1448
        %v1507 = vmul.f32 %v1490, %v1284
        %v1508 = vmul.f32 %v1475, %v1506
        %v1509 = vadd.f32 %v1507, %v1508
        %v1510 = vtanh.pop %v1509
        %v1511 = vmul.f32 %v1505, %v1510
        %s1512 = scalar_lea.vmem %s299, %s1291 [#allocation11]
        %1513 = vst [vmem:[%s1512] sm:$0xff] %v1511
        %s1514 = smul.u32 %s839, 3
        %s1515 = sadd.s32 %s837, %s1514
        %s1516 = smul.u32 %s1515, 8
        %s1517 = sshra.s32 %s1516, 3
        %s1518 = sand.u32 %s1516, 7
        %s1519 = smul.u32 %s1517, 4
        %s1520 = smul.addr %s1519, 8
        %s1521 = scalar_lea.vmem [#allocation4], %s1520
        %v1522 = vld [vmem:[%s1521] sm:$0xff]
        %v1523 = vld [vmem:[%s1521 + $0x8] sm:$0xff]
        %v1524 = vld [vmem:[%s1521 + $0x10] sm:$0xff]
        %v1525 = vld [vmem:[%s1521 + $0x18] sm:$0xff]
        %v1526 = vld [vmem:[#allocation8] sm:$0xff]
        %v1527 = vld [vmem:[#allocation8 + $0x8] sm:$0xff]
        %v1528 = vld [vmem:[#allocation8 + $0x10] sm:$0xff]
        %v1529 = vld [vmem:[#allocation8 + $0x18] sm:$0xff]
        %v1530 = vld [vmem:[#allocation8 + $0x20] sm:$0xff]
        %v1531 = vld [vmem:[#allocation8 + $0x28] sm:$0xff]
        %v1532 = vld [vmem:[#allocation8 + $0x30] sm:$0xff]
        %v1533 = vld [vmem:[#allocation8 + $0x38] sm:$0xff]
        %v1534 = vld [vmem:[#allocation8 + $0x40] sm:$0xff]
        %v1535 = vld [vmem:[#allocation8 + $0x48] sm:$0xff]
        %v1536 = vld [vmem:[#allocation8 + $0x50] sm:$0xff]
        %v1537 = vld [vmem:[#allocation8 + $0x58] sm:$0xff]
        %v1538 = vld [vmem:[#allocation8 + $0x60] sm:$0xff]
        %v1539 = vld [vmem:[#allocation8 + $0x68] sm:$0xff]
        %v1540 = vld [vmem:[#allocation8 + $0x70] sm:$0xff]
        %v1541 = vld [vmem:[#allocation8 + $0x78] sm:$0xff]
        %v1542 = vld [vmem:[#allocation8 + $0x80] sm:$0xff]
        %v1543 = vld [vmem:[#allocation8 + $0x88] sm:$0xff]
        %v1544 = vld [vmem:[#allocation8 + $0x90] sm:$0xff]
        %v1545 = vld [vmem:[#allocation8 + $0x98] sm:$0xff]
        %v1546 = vld [vmem:[#allocation8 + $0xa0] sm:$0xff]
        %v1547 = vld [vmem:[#allocation8 + $0xa8] sm:$0xff]
        %v1548 = vld [vmem:[#allocation8 + $0xb0] sm:$0xff]
        %v1549 = vld [vmem:[#allocation8 + $0xb8] sm:$0xff]
        %v1550 = vld [vmem:[#allocation8 + $0xc0] sm:$0xff]
        %v1551 = vld [vmem:[#allocation8 + $0xc8] sm:$0xff]
        %v1552 = vld [vmem:[#allocation8 + $0xd0] sm:$0xff]
        %v1553 = vld [vmem:[#allocation8 + $0xd8] sm:$0xff]
        %v1554 = vld [vmem:[#allocation8 + $0xe0] sm:$0xff]
        %v1555 = vld [vmem:[#allocation8 + $0xe8] sm:$0xff]
        %v1556 = vld [vmem:[#allocation8 + $0xf0] sm:$0xff]
        %v1557 = vld [vmem:[#allocation8 + $0xf8] sm:$0xff]
        %v1558 = vld [vmem:[#allocation8 + $0x100] sm:$0xff]
        %v1559 = vld [vmem:[#allocation8 + $0x108] sm:$0xff]
        %v1560 = vld [vmem:[#allocation8 + $0x110] sm:$0xff]
        %v1561 = vld [vmem:[#allocation8 + $0x118] sm:$0xff]
        %v1562 = vld [vmem:[#allocation8 + $0x120] sm:$0xff]
        %v1563 = vld [vmem:[#allocation8 + $0x128] sm:$0xff]
        %v1564 = vld [vmem:[#allocation8 + $0x130] sm:$0xff]
        %v1565 = vld [vmem:[#allocation8 + $0x138] sm:$0xff]
        %v1566 = vld [vmem:[#allocation8 + $0x140] sm:$0xff]
        %v1567 = vld [vmem:[#allocation8 + $0x148] sm:$0xff]
        %v1568 = vld [vmem:[#allocation8 + $0x150] sm:$0xff]
        %v1569 = vld [vmem:[#allocation8 + $0x158] sm:$0xff]
        %v1570 = vld [vmem:[#allocation8 + $0x160] sm:$0xff]
        %v1571 = vld [vmem:[#allocation8 + $0x168] sm:$0xff]
        %v1572 = vld [vmem:[#allocation8 + $0x170] sm:$0xff]
        %v1573 = vld [vmem:[#allocation8 + $0x178] sm:$0xff]
        %v1574 = vld [vmem:[#allocation8 + $0x180] sm:$0xff]
        %v1575 = vld [vmem:[#allocation8 + $0x188] sm:$0xff]
        %v1576 = vld [vmem:[#allocation8 + $0x190] sm:$0xff]
        %v1577 = vld [vmem:[#allocation8 + $0x198] sm:$0xff]
        %v1578 = vld [vmem:[#allocation8 + $0x1a0] sm:$0xff]
        %v1579 = vld [vmem:[#allocation8 + $0x1a8] sm:$0xff]
        %v1580 = vld [vmem:[#allocation8 + $0x1b0] sm:$0xff]
        %v1581 = vld [vmem:[#allocation8 + $0x1b8] sm:$0xff]
        %v1582 = vld [vmem:[#allocation8 + $0x1c0] sm:$0xff]
        %v1583 = vld [vmem:[#allocation8 + $0x1c8] sm:$0xff]
        %v1584 = vld [vmem:[#allocation8 + $0x1d0] sm:$0xff]
        %v1585 = vld [vmem:[#allocation8 + $0x1d8] sm:$0xff]
        %v1586 = vld [vmem:[#allocation8 + $0x1e0] sm:$0xff]
        %v1587 = vld [vmem:[#allocation8 + $0x1e8] sm:$0xff]
        %v1588 = vld [vmem:[#allocation8 + $0x1f0] sm:$0xff]
        %v1589 = vld [vmem:[#allocation8 + $0x1f8] sm:$0xff]
        %1590 = vmatpush.msra.mxu0 %v1586
        %1591 = vmatpush.msra.mxu0 %v1582
        %1592 = vmatpush.msra.mxu0 %v1578
        %1593 = vmatpush.msra.mxu0 %v1574
        %1594 = vmatpush.msra.mxu0 %v1570
        %1595 = vmatpush.msra.mxu0 %v1566
        %1596 = vmatpush.msra.mxu0 %v1562
        %1597 = vmatpush.msra.mxu0 %v1558
        %1598 = vmatpush.msra.mxu0 %v1554
        %1599 = vmatpush.msra.mxu0 %v1550
        %1600 = vmatpush.msra.mxu0 %v1546
        %1601 = vmatpush.msra.mxu0 %v1542
        %1602 = vmatpush.msra.mxu0 %v1538
        %1603 = vmatpush.msra.mxu0 %v1534
        %1604 = vmatpush.msra.mxu0 %v1530
        %1605 = vmatpush.msra.mxu0 %v1526
        %1606 = vmatmul.f32.gmra.mxu0 %v1511
        %v1607 = vpop.f32.mrf.mxu0
        %v1608 = vadd.f32 0.0, %v1607
        %1609 = vdwg.mxu0
        %1610 = vmatpush.msra.mxu0 %v1587
        %1611 = vmatpush.msra.mxu0 %v1583
        %1612 = vmatpush.msra.mxu0 %v1579
        %1613 = vmatpush.msra.mxu0 %v1575
        %1614 = vmatpush.msra.mxu0 %v1571
        %1615 = vmatpush.msra.mxu0 %v1567
        %1616 = vmatpush.msra.mxu0 %v1563
        %1617 = vmatpush.msra.mxu0 %v1559
        %1618 = vmatpush.msra.mxu0 %v1555
        %1619 = vmatpush.msra.mxu0 %v1551
        %1620 = vmatpush.msra.mxu0 %v1547
        %1621 = vmatpush.msra.mxu0 %v1543
        %1622 = vmatpush.msra.mxu0 %v1539
        %1623 = vmatpush.msra.mxu0 %v1535
        %1624 = vmatpush.msra.mxu0 %v1531
        %1625 = vmatpush.msra.mxu0 %v1527
        %1626 = vmatmul.f32.gmra.mxu0 %v1511
        %v1627 = vpop.f32.mrf.mxu0
        %v1628 = vadd.f32 0.0, %v1627
        %1629 = vdwg.mxu0
        %1630 = vmatpush.msra.mxu0 %v1588
        %1631 = vmatpush.msra.mxu0 %v1584
        %1632 = vmatpush.msra.mxu0 %v1580
        %1633 = vmatpush.msra.mxu0 %v1576
        %1634 = vmatpush.msra.mxu0 %v1572
        %1635 = vmatpush.msra.mxu0 %v1568
        %1636 = vmatpush.msra.mxu0 %v1564
        %1637 = vmatpush.msra.mxu0 %v1560
        %1638 = vmatpush.msra.mxu0 %v1556
        %1639 = vmatpush.msra.mxu0 %v1552
        %1640 = vmatpush.msra.mxu0 %v1548
        %1641 = vmatpush.msra.mxu0 %v1544
        %1642 = vmatpush.msra.mxu0 %v1540
        %1643 = vmatpush.msra.mxu0 %v1536
        %1644 = vmatpush.msra.mxu0 %v1532
        %1645 = vmatpush.msra.mxu0 %v1528
        %1646 = vmatmul.f32.gmra.mxu0 %v1511
        %v1647 = vpop.f32.mrf.mxu0
        %v1648 = vadd.f32 0.0, %v1647
        %1649 = vdwg.mxu0
        %1650 = vmatpush.msra.mxu0 %v1589
        %1651 = vmatpush.msra.mxu0 %v1585
        %1652 = vmatpush.msra.mxu0 %v1581
        %1653 = vmatpush.msra.mxu0 %v1577
        %1654 = vmatpush.msra.mxu0 %v1573
        %1655 = vmatpush.msra.mxu0 %v1569
        %1656 = vmatpush.msra.mxu0 %v1565
        %1657 = vmatpush.msra.mxu0 %v1561
        %1658 = vmatpush.msra.mxu0 %v1557
        %1659 = vmatpush.msra.mxu0 %v1553
        %1660 = vmatpush.msra.mxu0 %v1549
        %1661 = vmatpush.msra.mxu0 %v1545
        %1662 = vmatpush.msra.mxu0 %v1541
        %1663 = vmatpush.msra.mxu0 %v1537
        %1664 = vmatpush.msra.mxu0 %v1533
        %1665 = vmatpush.msra.mxu0 %v1529
        %1666 = vmatmul.f32.gmra.mxu0 %v1511
        %v1667 = vpop.f32.mrf.mxu0
        %v1668 = vadd.f32 0.0, %v1667
        %1669 = vdwg.mxu0
        %v1670 = vadd.f32 %v1522, %v1608
        %v1671 = vadd.f32 %v1523, %v1628
        %v1672 = vadd.f32 %v1524, %v1648
        %v1673 = vadd.f32 %v1525, %v1668
        %v1674 = vxor.u32 %v1670, 2147483648
        %v1675 = vxor.u32 %v1671, 2147483648
        %v1676 = vxor.u32 %v1672, 2147483648
        %v1677 = vmul.f32 %v1674, 1.442695
        %v1678 = vpow.pop %v1677
        %v1679 = vmul.f32 %v1675, 1.442695
        %v1680 = vpow.pop %v1679
        %v1681 = vmul.f32 %v1676, 1.442695
        %v1682 = vpow.pop %v1681
        %v1683 = vadd.f32 %v1678, 1.0
        %v1684 = vadd.f32 %v1680, 1.0
        %v1685 = vadd.f32 %v1682, 1.0
        %v1686 = vrcp.pop %v1683
        %v1687 = vmul.f32 %v1683, %v1686
        %v1688 = vsub.f32 1.0, %v1687
        %v1689 = vmul.f32 %v1686, %v1688
        %v1690 = vadd.f32 %v1686, %v1689
        %vm1691 = vweird.f32 %v1683
        %vm1692 = vweird.f32 %v1686
        %vm1693 = vmor %vm1691, %vm1692
        %v1694 = vsel %vm1693, %v1686, %v1690
        %v1695 = vand.u32 2147483647, %v1683
        %vm1696 = vcmp.eq.f32.partialorder %v1695, 8.507059e+37
        %v1697 = vand.u32 %v1683, 2147483648
        %v1698 = vor.u32 1.1754944e-38, %v1697
        %v1699 = vsel %vm1696, %v1698, %v1694
        %v1700 = vmul.f32 1.0, %v1699
        %v1701 = vrcp.pop %v1684
        %v1702 = vmul.f32 %v1684, %v1701
        %v1703 = vsub.f32 1.0, %v1702
        %v1704 = vmul.f32 %v1701, %v1703
        %v1705 = vadd.f32 %v1701, %v1704
        %vm1706 = vweird.f32 %v1684
        %vm1707 = vweird.f32 %v1701
        %vm1708 = vmor %vm1706, %vm1707
        %v1709 = vsel %vm1708, %v1701, %v1705
        %v1710 = vand.u32 2147483647, %v1684
        %vm1711 = vcmp.eq.f32.partialorder %v1710, 8.507059e+37
        %v1712 = vand.u32 %v1684, 2147483648
        %v1713 = vor.u32 1.1754944e-38, %v1712
        %v1714 = vsel %vm1711, %v1713, %v1709
        %v1715 = vmul.f32 1.0, %v1714
        %v1716 = vrcp.pop %v1685
        %v1717 = vmul.f32 %v1685, %v1716
        %v1718 = vsub.f32 1.0, %v1717
        %v1719 = vmul.f32 %v1716, %v1718
        %v1720 = vadd.f32 %v1716, %v1719
        %vm1721 = vweird.f32 %v1685
        %vm1722 = vweird.f32 %v1716
        %vm1723 = vmor %vm1721, %vm1722
        %v1724 = vsel %vm1723, %v1716, %v1720
        %v1725 = vand.u32 2147483647, %v1685
        %vm1726 = vcmp.eq.f32.partialorder %v1725, 8.507059e+37
        %v1727 = vand.u32 %v1685, 2147483648
        %v1728 = vor.u32 1.1754944e-38, %v1727
        %v1729 = vsel %vm1726, %v1728, %v1724
        %v1730 = vmul.f32 1.0, %v1729
        %v1731 = vtanh.pop %v1673
        %v1732 = vmul.f32 %v1715, %v1509
        %v1733 = vmul.f32 %v1700, %v1731
        %v1734 = vadd.f32 %v1732, %v1733
        %v1735 = vtanh.pop %v1734
        %v1736 = vmul.f32 %v1730, %v1735
        %s1737 = scalar_lea.vmem %s299, %s1516 [#allocation11]
        %1738 = vst [vmem:[%s1737] sm:$0xff] %v1736
        %s1739 = smul.u32 %s839, 4
        %s1740 = sadd.s32 %s837, %s1739
        %s1741 = smul.u32 %s1740, 8
        %s1742 = sshra.s32 %s1741, 3
        %s1743 = sand.u32 %s1741, 7
        %s1744 = smul.u32 %s1742, 4
        %s1745 = smul.addr %s1744, 8
        %s1746 = scalar_lea.vmem [#allocation4], %s1745
        %v1747 = vld [vmem:[%s1746] sm:$0xff]
        %v1748 = vld [vmem:[%s1746 + $0x8] sm:$0xff]
        %v1749 = vld [vmem:[%s1746 + $0x10] sm:$0xff]
        %v1750 = vld [vmem:[%s1746 + $0x18] sm:$0xff]
        %v1751 = vld [vmem:[#allocation8] sm:$0xff]
        %v1752 = vld [vmem:[#allocation8 + $0x8] sm:$0xff]
        %v1753 = vld [vmem:[#allocation8 + $0x10] sm:$0xff]
        %v1754 = vld [vmem:[#allocation8 + $0x18] sm:$0xff]
        %v1755 = vld [vmem:[#allocation8 + $0x20] sm:$0xff]
        %v1756 = vld [vmem:[#allocation8 + $0x28] sm:$0xff]
        %v1757 = vld [vmem:[#allocation8 + $0x30] sm:$0xff]
        %v1758 = vld [vmem:[#allocation8 + $0x38] sm:$0xff]
        %v1759 = vld [vmem:[#allocation8 + $0x40] sm:$0xff]
        %v1760 = vld [vmem:[#allocation8 + $0x48] sm:$0xff]
        %v1761 = vld [vmem:[#allocation8 + $0x50] sm:$0xff]
        %v1762 = vld [vmem:[#allocation8 + $0x58] sm:$0xff]
        %v1763 = vld [vmem:[#allocation8 + $0x60] sm:$0xff]
        %v1764 = vld [vmem:[#allocation8 + $0x68] sm:$0xff]
        %v1765 = vld [vmem:[#allocation8 + $0x70] sm:$0xff]
        %v1766 = vld [vmem:[#allocation8 + $0x78] sm:$0xff]
        %v1767 = vld [vmem:[#allocation8 + $0x80] sm:$0xff]
        %v1768 = vld [vmem:[#allocation8 + $0x88] sm:$0xff]
        %v1769 = vld [vmem:[#allocation8 + $0x90] sm:$0xff]
        %v1770 = vld [vmem:[#allocation8 + $0x98] sm:$0xff]
        %v1771 = vld [vmem:[#allocation8 + $0xa0] sm:$0xff]
        %v1772 = vld [vmem:[#allocation8 + $0xa8] sm:$0xff]
        %v1773 = vld [vmem:[#allocation8 + $0xb0] sm:$0xff]
        %v1774 = vld [vmem:[#allocation8 + $0xb8] sm:$0xff]
        %v1775 = vld [vmem:[#allocation8 + $0xc0] sm:$0xff]
        %v1776 = vld [vmem:[#allocation8 + $0xc8] sm:$0xff]
        %v1777 = vld [vmem:[#allocation8 + $0xd0] sm:$0xff]
        %v1778 = vld [vmem:[#allocation8 + $0xd8] sm:$0xff]
        %v1779 = vld [vmem:[#allocation8 + $0xe0] sm:$0xff]
        %v1780 = vld [vmem:[#allocation8 + $0xe8] sm:$0xff]
        %v1781 = vld [vmem:[#allocation8 + $0xf0] sm:$0xff]
        %v1782 = vld [vmem:[#allocation8 + $0xf8] sm:$0xff]
        %v1783 = vld [vmem:[#allocation8 + $0x100] sm:$0xff]
        %v1784 = vld [vmem:[#allocation8 + $0x108] sm:$0xff]
        %v1785 = vld [vmem:[#allocation8 + $0x110] sm:$0xff]
        %v1786 = vld [vmem:[#allocation8 + $0x118] sm:$0xff]
        %v1787 = vld [vmem:[#allocation8 + $0x120] sm:$0xff]
        %v1788 = vld [vmem:[#allocation8 + $0x128] sm:$0xff]
        %v1789 = vld [vmem:[#allocation8 + $0x130] sm:$0xff]
        %v1790 = vld [vmem:[#allocation8 + $0x138] sm:$0xff]
        %v1791 = vld [vmem:[#allocation8 + $0x140] sm:$0xff]
        %v1792 = vld [vmem:[#allocation8 + $0x148] sm:$0xff]
        %v1793 = vld [vmem:[#allocation8 + $0x150] sm:$0xff]
        %v1794 = vld [vmem:[#allocation8 + $0x158] sm:$0xff]
        %v1795 = vld [vmem:[#allocation8 + $0x160] sm:$0xff]
        %v1796 = vld [vmem:[#allocation8 + $0x168] sm:$0xff]
        %v1797 = vld [vmem:[#allocation8 + $0x170] sm:$0xff]
        %v1798 = vld [vmem:[#allocation8 + $0x178] sm:$0xff]
        %v1799 = vld [vmem:[#allocation8 + $0x180] sm:$0xff]
        %v1800 = vld [vmem:[#allocation8 + $0x188] sm:$0xff]
        %v1801 = vld [vmem:[#allocation8 + $0x190] sm:$0xff]
        %v1802 = vld [vmem:[#allocation8 + $0x198] sm:$0xff]
        %v1803 = vld [vmem:[#allocation8 + $0x1a0] sm:$0xff]
        %v1804 = vld [vmem:[#allocation8 + $0x1a8] sm:$0xff]
        %v1805 = vld [vmem:[#allocation8 + $0x1b0] sm:$0xff]
        %v1806 = vld [vmem:[#allocation8 + $0x1b8] sm:$0xff]
        %v1807 = vld [vmem:[#allocation8 + $0x1c0] sm:$0xff]
        %v1808 = vld [vmem:[#allocation8 + $0x1c8] sm:$0xff]
        %v1809 = vld [vmem:[#allocation8 + $0x1d0] sm:$0xff]
        %v1810 = vld [vmem:[#allocation8 + $0x1d8] sm:$0xff]
        %v1811 = vld [vmem:[#allocation8 + $0x1e0] sm:$0xff]
        %v1812 = vld [vmem:[#allocation8 + $0x1e8] sm:$0xff]
        %v1813 = vld [vmem:[#allocation8 + $0x1f0] sm:$0xff]
        %v1814 = vld [vmem:[#allocation8 + $0x1f8] sm:$0xff]
        %1815 = vmatpush.msra.mxu0 %v1811
        %1816 = vmatpush.msra.mxu0 %v1807
        %1817 = vmatpush.msra.mxu0 %v1803
        %1818 = vmatpush.msra.mxu0 %v1799
        %1819 = vmatpush.msra.mxu0 %v1795
        %1820 = vmatpush.msra.mxu0 %v1791
        %1821 = vmatpush.msra.mxu0 %v1787
        %1822 = vmatpush.msra.mxu0 %v1783
        %1823 = vmatpush.msra.mxu0 %v1779
        %1824 = vmatpush.msra.mxu0 %v1775
        %1825 = vmatpush.msra.mxu0 %v1771
        %1826 = vmatpush.msra.mxu0 %v1767
        %1827 = vmatpush.msra.mxu0 %v1763
        %1828 = vmatpush.msra.mxu0 %v1759
        %1829 = vmatpush.msra.mxu0 %v1755
        %1830 = vmatpush.msra.mxu0 %v1751
        %1831 = vmatmul.f32.gmra.mxu0 %v1736
        %v1832 = vpop.f32.mrf.mxu0
        %v1833 = vadd.f32 0.0, %v1832
        %1834 = vdwg.mxu0
        %1835 = vmatpush.msra.mxu0 %v1812
        %1836 = vmatpush.msra.mxu0 %v1808
        %1837 = vmatpush.msra.mxu0 %v1804
        %1838 = vmatpush.msra.mxu0 %v1800
        %1839 = vmatpush.msra.mxu0 %v1796
        %1840 = vmatpush.msra.mxu0 %v1792
        %1841 = vmatpush.msra.mxu0 %v1788
        %1842 = vmatpush.msra.mxu0 %v1784
        %1843 = vmatpush.msra.mxu0 %v1780
        %1844 = vmatpush.msra.mxu0 %v1776
        %1845 = vmatpush.msra.mxu0 %v1772
        %1846 = vmatpush.msra.mxu0 %v1768
        %1847 = vmatpush.msra.mxu0 %v1764
        %1848 = vmatpush.msra.mxu0 %v1760
        %1849 = vmatpush.msra.mxu0 %v1756
        %1850 = vmatpush.msra.mxu0 %v1752
        %1851 = vmatmul.f32.gmra.mxu0 %v1736
        %v1852 = vpop.f32.mrf.mxu0
        %v1853 = vadd.f32 0.0, %v1852
        %1854 = vdwg.mxu0
        %1855 = vmatpush.msra.mxu0 %v1813
        %1856 = vmatpush.msra.mxu0 %v1809
        %1857 = vmatpush.msra.mxu0 %v1805
        %1858 = vmatpush.msra.mxu0 %v1801
        %1859 = vmatpush.msra.mxu0 %v1797
        %1860 = vmatpush.msra.mxu0 %v1793
        %1861 = vmatpush.msra.mxu0 %v1789
        %1862 = vmatpush.msra.mxu0 %v1785
        %1863 = vmatpush.msra.mxu0 %v1781
        %1864 = vmatpush.msra.mxu0 %v1777
        %1865 = vmatpush.msra.mxu0 %v1773
        %1866 = vmatpush.msra.mxu0 %v1769
        %1867 = vmatpush.msra.mxu0 %v1765
        %1868 = vmatpush.msra.mxu0 %v1761
        %1869 = vmatpush.msra.mxu0 %v1757
        %1870 = vmatpush.msra.mxu0 %v1753
        %1871 = vmatmul.f32.gmra.mxu0 %v1736
        %v1872 = vpop.f32.mrf.mxu0
        %v1873 = vadd.f32 0.0, %v1872
        %1874 = vdwg.mxu0
        %1875 = vmatpush.msra.mxu0 %v1814
        %1876 = vmatpush.msra.mxu0 %v1810
        %1877 = vmatpush.msra.mxu0 %v1806
        %1878 = vmatpush.msra.mxu0 %v1802
        %1879 = vmatpush.msra.mxu0 %v1798
        %1880 = vmatpush.msra.mxu0 %v1794
        %1881 = vmatpush.msra.mxu0 %v1790
        %1882 = vmatpush.msra.mxu0 %v1786
        %1883 = vmatpush.msra.mxu0 %v1782
        %1884 = vmatpush.msra.mxu0 %v1778
        %1885 = vmatpush.msra.mxu0 %v1774
        %1886 = vmatpush.msra.mxu0 %v1770
        %1887 = vmatpush.msra.mxu0 %v1766
        %1888 = vmatpush.msra.mxu0 %v1762
        %1889 = vmatpush.msra.mxu0 %v1758
        %1890 = vmatpush.msra.mxu0 %v1754
        %1891 = vmatmul.f32.gmra.mxu0 %v1736
        %v1892 = vpop.f32.mrf.mxu0
        %v1893 = vadd.f32 0.0, %v1892
        %1894 = vdwg.mxu0
        %v1895 = vadd.f32 %v1747, %v1833
        %v1896 = vadd.f32 %v1748, %v1853
        %v1897 = vadd.f32 %v1749, %v1873
        %v1898 = vadd.f32 %v1750, %v1893
        %v1899 = vxor.u32 %v1895, 2147483648
        %v1900 = vxor.u32 %v1896, 2147483648
        %v1901 = vxor.u32 %v1897, 2147483648
        %v1902 = vmul.f32 %v1899, 1.442695
        %v1903 = vpow.pop %v1902
        %v1904 = vmul.f32 %v1900, 1.442695
        %v1905 = vpow.pop %v1904
        %v1906 = vmul.f32 %v1901, 1.442695
        %v1907 = vpow.pop %v1906
        %v1908 = vadd.f32 %v1903, 1.0
        %v1909 = vadd.f32 %v1905, 1.0
        %v1910 = vadd.f32 %v1907, 1.0
        %v1911 = vrcp.pop %v1908
        %v1912 = vmul.f32 %v1908, %v1911
        %v1913 = vsub.f32 1.0, %v1912
        %v1914 = vmul.f32 %v1911, %v1913
        %v1915 = vadd.f32 %v1911, %v1914
        %vm1916 = vweird.f32 %v1908
        %vm1917 = vweird.f32 %v1911
        %vm1918 = vmor %vm1916, %vm1917
        %v1919 = vsel %vm1918, %v1911, %v1915
        %v1920 = vand.u32 2147483647, %v1908
        %vm1921 = vcmp.eq.f32.partialorder %v1920, 8.507059e+37
        %v1922 = vand.u32 %v1908, 2147483648
        %v1923 = vor.u32 1.1754944e-38, %v1922
        %v1924 = vsel %vm1921, %v1923, %v1919
        %v1925 = vmul.f32 1.0, %v1924
        %v1926 = vrcp.pop %v1909
        %v1927 = vmul.f32 %v1909, %v1926
        %v1928 = vsub.f32 1.0, %v1927
        %v1929 = vmul.f32 %v1926, %v1928
        %v1930 = vadd.f32 %v1926, %v1929
        %vm1931 = vweird.f32 %v1909
        %vm1932 = vweird.f32 %v1926
        %vm1933 = vmor %vm1931, %vm1932
        %v1934 = vsel %vm1933, %v1926, %v1930
        %v1935 = vand.u32 2147483647, %v1909
        %vm1936 = vcmp.eq.f32.partialorder %v1935, 8.507059e+37
        %v1937 = vand.u32 %v1909, 2147483648
        %v1938 = vor.u32 1.1754944e-38, %v1937
        %v1939 = vsel %vm1936, %v1938, %v1934
        %v1940 = vmul.f32 1.0, %v1939
        %v1941 = vrcp.pop %v1910
        %v1942 = vmul.f32 %v1910, %v1941
        %v1943 = vsub.f32 1.0, %v1942
        %v1944 = vmul.f32 %v1941, %v1943
        %v1945 = vadd.f32 %v1941, %v1944
        %vm1946 = vweird.f32 %v1910
        %vm1947 = vweird.f32 %v1941
        %vm1948 = vmor %vm1946, %vm1947
        %v1949 = vsel %vm1948, %v1941, %v1945
        %v1950 = vand.u32 2147483647, %v1910
        %vm1951 = vcmp.eq.f32.partialorder %v1950, 8.507059e+37
        %v1952 = vand.u32 %v1910, 2147483648
        %v1953 = vor.u32 1.1754944e-38, %v1952
        %v1954 = vsel %vm1951, %v1953, %v1949
        %v1955 = vmul.f32 1.0, %v1954
        %v1956 = vtanh.pop %v1898
        %v1957 = vmul.f32 %v1940, %v1734
        %v1958 = vmul.f32 %v1925, %v1956
        %v1959 = vadd.f32 %v1957, %v1958
        %v1960 = vtanh.pop %v1959
        %v1961 = vmul.f32 %v1955, %v1960
        %s1962 = scalar_lea.vmem %s299, %s1741 [#allocation11]
        %1963 = vst [vmem:[%s1962] sm:$0xff] %v1961
        %s1964 = smul.u32 %s839, 5
        %s1965 = sadd.s32 %s837, %s1964
        %s1966 = smul.u32 %s1965, 8
        %s1967 = sshra.s32 %s1966, 3
        %s1968 = sand.u32 %s1966, 7
        %s1969 = smul.u32 %s1967, 4
        %s1970 = smul.addr %s1969, 8
        %s1971 = scalar_lea.vmem [#allocation4], %s1970
        %v1972 = vld [vmem:[%s1971] sm:$0xff]
        %v1973 = vld [vmem:[%s1971 + $0x8] sm:$0xff]
        %v1974 = vld [vmem:[%s1971 + $0x10] sm:$0xff]
        %v1975 = vld [vmem:[%s1971 + $0x18] sm:$0xff]
        %v1976 = vld [vmem:[#allocation8] sm:$0xff]
        %v1977 = vld [vmem:[#allocation8 + $0x8] sm:$0xff]
        %v1978 = vld [vmem:[#allocation8 + $0x10] sm:$0xff]
        %v1979 = vld [vmem:[#allocation8 + $0x18] sm:$0xff]
        %v1980 = vld [vmem:[#allocation8 + $0x20] sm:$0xff]
        %v1981 = vld [vmem:[#allocation8 + $0x28] sm:$0xff]
        %v1982 = vld [vmem:[#allocation8 + $0x30] sm:$0xff]
        %v1983 = vld [vmem:[#allocation8 + $0x38] sm:$0xff]
        %v1984 = vld [vmem:[#allocation8 + $0x40] sm:$0xff]
        %v1985 = vld [vmem:[#allocation8 + $0x48] sm:$0xff]
        %v1986 = vld [vmem:[#allocation8 + $0x50] sm:$0xff]
        %v1987 = vld [vmem:[#allocation8 + $0x58] sm:$0xff]
        %v1988 = vld [vmem:[#allocation8 + $0x60] sm:$0xff]
        %v1989 = vld [vmem:[#allocation8 + $0x68] sm:$0xff]
        %v1990 = vld [vmem:[#allocation8 + $0x70] sm:$0xff]
        %v1991 = vld [vmem:[#allocation8 + $0x78] sm:$0xff]
        %v1992 = vld [vmem:[#allocation8 + $0x80] sm:$0xff]
        %v1993 = vld [vmem:[#allocation8 + $0x88] sm:$0xff]
        %v1994 = vld [vmem:[#allocation8 + $0x90] sm:$0xff]
        %v1995 = vld [vmem:[#allocation8 + $0x98] sm:$0xff]
        %v1996 = vld [vmem:[#allocation8 + $0xa0] sm:$0xff]
        %v1997 = vld [vmem:[#allocation8 + $0xa8] sm:$0xff]
        %v1998 = vld [vmem:[#allocation8 + $0xb0] sm:$0xff]
        %v1999 = vld [vmem:[#allocation8 + $0xb8] sm:$0xff]
        %v2000 = vld [vmem:[#allocation8 + $0xc0] sm:$0xff]
        %v2001 = vld [vmem:[#allocation8 + $0xc8] sm:$0xff]
        %v2002 = vld [vmem:[#allocation8 + $0xd0] sm:$0xff]
        %v2003 = vld [vmem:[#allocation8 + $0xd8] sm:$0xff]
        %v2004 = vld [vmem:[#allocation8 + $0xe0] sm:$0xff]
        %v2005 = vld [vmem:[#allocation8 + $0xe8] sm:$0xff]
        %v2006 = vld [vmem:[#allocation8 + $0xf0] sm:$0xff]
        %v2007 = vld [vmem:[#allocation8 + $0xf8] sm:$0xff]
        %v2008 = vld [vmem:[#allocation8 + $0x100] sm:$0xff]
        %v2009 = vld [vmem:[#allocation8 + $0x108] sm:$0xff]
        %v2010 = vld [vmem:[#allocation8 + $0x110] sm:$0xff]
        %v2011 = vld [vmem:[#allocation8 + $0x118] sm:$0xff]
        %v2012 = vld [vmem:[#allocation8 + $0x120] sm:$0xff]
        %v2013 = vld [vmem:[#allocation8 + $0x128] sm:$0xff]
        %v2014 = vld [vmem:[#allocation8 + $0x130] sm:$0xff]
        %v2015 = vld [vmem:[#allocation8 + $0x138] sm:$0xff]
        %v2016 = vld [vmem:[#allocation8 + $0x140] sm:$0xff]
        %v2017 = vld [vmem:[#allocation8 + $0x148] sm:$0xff]
        %v2018 = vld [vmem:[#allocation8 + $0x150] sm:$0xff]
        %v2019 = vld [vmem:[#allocation8 + $0x158] sm:$0xff]
        %v2020 = vld [vmem:[#allocation8 + $0x160] sm:$0xff]
        %v2021 = vld [vmem:[#allocation8 + $0x168] sm:$0xff]
        %v2022 = vld [vmem:[#allocation8 + $0x170] sm:$0xff]
        %v2023 = vld [vmem:[#allocation8 + $0x178] sm:$0xff]
        %v2024 = vld [vmem:[#allocation8 + $0x180] sm:$0xff]
        %v2025 = vld [vmem:[#allocation8 + $0x188] sm:$0xff]
        %v2026 = vld [vmem:[#allocation8 + $0x190] sm:$0xff]
        %v2027 = vld [vmem:[#allocation8 + $0x198] sm:$0xff]
        %v2028 = vld [vmem:[#allocation8 + $0x1a0] sm:$0xff]
        %v2029 = vld [vmem:[#allocation8 + $0x1a8] sm:$0xff]
        %v2030 = vld [vmem:[#allocation8 + $0x1b0] sm:$0xff]
        %v2031 = vld [vmem:[#allocation8 + $0x1b8] sm:$0xff]
        %v2032 = vld [vmem:[#allocation8 + $0x1c0] sm:$0xff]
        %v2033 = vld [vmem:[#allocation8 + $0x1c8] sm:$0xff]
        %v2034 = vld [vmem:[#allocation8 + $0x1d0] sm:$0xff]
        %v2035 = vld [vmem:[#allocation8 + $0x1d8] sm:$0xff]
        %v2036 = vld [vmem:[#allocation8 + $0x1e0] sm:$0xff]
        %v2037 = vld [vmem:[#allocation8 + $0x1e8] sm:$0xff]
        %v2038 = vld [vmem:[#allocation8 + $0x1f0] sm:$0xff]
        %v2039 = vld [vmem:[#allocation8 + $0x1f8] sm:$0xff]
        %2040 = vmatpush.msra.mxu0 %v2036
        %2041 = vmatpush.msra.mxu0 %v2032
        %2042 = vmatpush.msra.mxu0 %v2028
        %2043 = vmatpush.msra.mxu0 %v2024
        %2044 = vmatpush.msra.mxu0 %v2020
        %2045 = vmatpush.msra.mxu0 %v2016
        %2046 = vmatpush.msra.mxu0 %v2012
        %2047 = vmatpush.msra.mxu0 %v2008
        %2048 = vmatpush.msra.mxu0 %v2004
        %2049 = vmatpush.msra.mxu0 %v2000
        %2050 = vmatpush.msra.mxu0 %v1996
        %2051 = vmatpush.msra.mxu0 %v1992
        %2052 = vmatpush.msra.mxu0 %v1988
        %2053 = vmatpush.msra.mxu0 %v1984
        %2054 = vmatpush.msra.mxu0 %v1980
        %2055 = vmatpush.msra.mxu0 %v1976
        %2056 = vmatmul.f32.gmra.mxu0 %v1961
        %v2057 = vpop.f32.mrf.mxu0
        %v2058 = vadd.f32 0.0, %v2057
        %2059 = vdwg.mxu0
        %2060 = vmatpush.msra.mxu0 %v2037
        %2061 = vmatpush.msra.mxu0 %v2033
        %2062 = vmatpush.msra.mxu0 %v2029
        %2063 = vmatpush.msra.mxu0 %v2025
        %2064 = vmatpush.msra.mxu0 %v2021
        %2065 = vmatpush.msra.mxu0 %v2017
        %2066 = vmatpush.msra.mxu0 %v2013
        %2067 = vmatpush.msra.mxu0 %v2009
        %2068 = vmatpush.msra.mxu0 %v2005
        %2069 = vmatpush.msra.mxu0 %v2001
        %2070 = vmatpush.msra.mxu0 %v1997
        %2071 = vmatpush.msra.mxu0 %v1993
        %2072 = vmatpush.msra.mxu0 %v1989
        %2073 = vmatpush.msra.mxu0 %v1985
        %2074 = vmatpush.msra.mxu0 %v1981
        %2075 = vmatpush.msra.mxu0 %v1977
        %2076 = vmatmul.f32.gmra.mxu0 %v1961
        %v2077 = vpop.f32.mrf.mxu0
        %v2078 = vadd.f32 0.0, %v2077
        %2079 = vdwg.mxu0
        %2080 = vmatpush.msra.mxu0 %v2038
        %2081 = vmatpush.msra.mxu0 %v2034
        %2082 = vmatpush.msra.mxu0 %v2030
        %2083 = vmatpush.msra.mxu0 %v2026
        %2084 = vmatpush.msra.mxu0 %v2022
        %2085 = vmatpush.msra.mxu0 %v2018
        %2086 = vmatpush.msra.mxu0 %v2014
        %2087 = vmatpush.msra.mxu0 %v2010
        %2088 = vmatpush.msra.mxu0 %v2006
        %2089 = vmatpush.msra.mxu0 %v2002
        %2090 = vmatpush.msra.mxu0 %v1998
        %2091 = vmatpush.msra.mxu0 %v1994
        %2092 = vmatpush.msra.mxu0 %v1990
        %2093 = vmatpush.msra.mxu0 %v1986
        %2094 = vmatpush.msra.mxu0 %v1982
        %2095 = vmatpush.msra.mxu0 %v1978
        %2096 = vmatmul.f32.gmra.mxu0 %v1961
        %v2097 = vpop.f32.mrf.mxu0
        %v2098 = vadd.f32 0.0, %v2097
        %2099 = vdwg.mxu0
        %2100 = vmatpush.msra.mxu0 %v2039
        %2101 = vmatpush.msra.mxu0 %v2035
        %2102 = vmatpush.msra.mxu0 %v2031
        %2103 = vmatpush.msra.mxu0 %v2027
        %2104 = vmatpush.msra.mxu0 %v2023
        %2105 = vmatpush.msra.mxu0 %v2019
        %2106 = vmatpush.msra.mxu0 %v2015
        %2107 = vmatpush.msra.mxu0 %v2011
        %2108 = vmatpush.msra.mxu0 %v2007
        %2109 = vmatpush.msra.mxu0 %v2003
        %2110 = vmatpush.msra.mxu0 %v1999
        %2111 = vmatpush.msra.mxu0 %v1995
        %2112 = vmatpush.msra.mxu0 %v1991
        %2113 = vmatpush.msra.mxu0 %v1987
        %2114 = vmatpush.msra.mxu0 %v1983
        %2115 = vmatpush.msra.mxu0 %v1979
        %2116 = vmatmul.f32.gmra.mxu0 %v1961
        %v2117 = vpop.f32.mrf.mxu0
        %v2118 = vadd.f32 0.0, %v2117
        %2119 = vdwg.mxu0
        %v2120 = vadd.f32 %v1972, %v2058
        %v2121 = vadd.f32 %v1973, %v2078
        %v2122 = vadd.f32 %v1974, %v2098
        %v2123 = vadd.f32 %v1975, %v2118
        %v2124 = vxor.u32 %v2120, 2147483648
        %v2125 = vxor.u32 %v2121, 2147483648
        %v2126 = vxor.u32 %v2122, 2147483648
        %v2127 = vmul.f32 %v2124, 1.442695
        %v2128 = vpow.pop %v2127
        %v2129 = vmul.f32 %v2125, 1.442695
        %v2130 = vpow.pop %v2129
        %v2131 = vmul.f32 %v2126, 1.442695
        %v2132 = vpow.pop %v2131
        %v2133 = vadd.f32 %v2128, 1.0
        %v2134 = vadd.f32 %v2130, 1.0
        %v2135 = vadd.f32 %v2132, 1.0
        %v2136 = vrcp.pop %v2133
        %v2137 = vmul.f32 %v2133, %v2136
        %v2138 = vsub.f32 1.0, %v2137
        %v2139 = vmul.f32 %v2136, %v2138
        %v2140 = vadd.f32 %v2136, %v2139
        %vm2141 = vweird.f32 %v2133
        %vm2142 = vweird.f32 %v2136
        %vm2143 = vmor %vm2141, %vm2142
        %v2144 = vsel %vm2143, %v2136, %v2140
        %v2145 = vand.u32 2147483647, %v2133
        %vm2146 = vcmp.eq.f32.partialorder %v2145, 8.507059e+37
        %v2147 = vand.u32 %v2133, 2147483648
        %v2148 = vor.u32 1.1754944e-38, %v2147
        %v2149 = vsel %vm2146, %v2148, %v2144
        %v2150 = vmul.f32 1.0, %v2149
        %v2151 = vrcp.pop %v2134
        %v2152 = vmul.f32 %v2134, %v2151
        %v2153 = vsub.f32 1.0, %v2152
        %v2154 = vmul.f32 %v2151, %v2153
        %v2155 = vadd.f32 %v2151, %v2154
        %vm2156 = vweird.f32 %v2134
        %vm2157 = vweird.f32 %v2151
        %vm2158 = vmor %vm2156, %vm2157
        %v2159 = vsel %vm2158, %v2151, %v2155
        %v2160 = vand.u32 2147483647, %v2134
        %vm2161 = vcmp.eq.f32.partialorder %v2160, 8.507059e+37
        %v2162 = vand.u32 %v2134, 2147483648
        %v2163 = vor.u32 1.1754944e-38, %v2162
        %v2164 = vsel %vm2161, %v2163, %v2159
        %v2165 = vmul.f32 1.0, %v2164
        %v2166 = vrcp.pop %v2135
        %v2167 = vmul.f32 %v2135, %v2166
        %v2168 = vsub.f32 1.0, %v2167
        %v2169 = vmul.f32 %v2166, %v2168
        %v2170 = vadd.f32 %v2166, %v2169
        %vm2171 = vweird.f32 %v2135
        %vm2172 = vweird.f32 %v2166
        %vm2173 = vmor %vm2171, %vm2172
        %v2174 = vsel %vm2173, %v2166, %v2170
        %v2175 = vand.u32 2147483647, %v2135
        %vm2176 = vcmp.eq.f32.partialorder %v2175, 8.507059e+37
        %v2177 = vand.u32 %v2135, 2147483648
        %v2178 = vor.u32 1.1754944e-38, %v2177
        %v2179 = vsel %vm2176, %v2178, %v2174
        %v2180 = vmul.f32 1.0, %v2179
        %v2181 = vtanh.pop %v2123
        %v2182 = vmul.f32 %v2165, %v1959
        %v2183 = vmul.f32 %v2150, %v2181
        %v2184 = vadd.f32 %v2182, %v2183
        %v2185 = vtanh.pop %v2184
        %v2186 = vmul.f32 %v2180, %v2185
        %s2187 = scalar_lea.vmem %s299, %s1966 [#allocation11]
        %2188 = vst [vmem:[%s2187] sm:$0xff] %v2186
        %s2189 = smul.u32 %s839, 6
        %s2190 = sadd.s32 %s837, %s2189
        %s2191 = smul.u32 %s2190, 8
        %s2192 = sshra.s32 %s2191, 3
        %s2193 = sand.u32 %s2191, 7
        %s2194 = smul.u32 %s2192, 4
        %s2195 = smul.addr %s2194, 8
        %s2196 = scalar_lea.vmem [#allocation4], %s2195
        %v2197 = vld [vmem:[%s2196] sm:$0xff]
        %v2198 = vld [vmem:[%s2196 + $0x8] sm:$0xff]
        %v2199 = vld [vmem:[%s2196 + $0x10] sm:$0xff]
        %v2200 = vld [vmem:[%s2196 + $0x18] sm:$0xff]
        %v2201 = vld [vmem:[#allocation8] sm:$0xff]
        %v2202 = vld [vmem:[#allocation8 + $0x8] sm:$0xff]
        %v2203 = vld [vmem:[#allocation8 + $0x10] sm:$0xff]
        %v2204 = vld [vmem:[#allocation8 + $0x18] sm:$0xff]
        %v2205 = vld [vmem:[#allocation8 + $0x20] sm:$0xff]
        %v2206 = vld [vmem:[#allocation8 + $0x28] sm:$0xff]
        %v2207 = vld [vmem:[#allocation8 + $0x30] sm:$0xff]
        %v2208 = vld [vmem:[#allocation8 + $0x38] sm:$0xff]
        %v2209 = vld [vmem:[#allocation8 + $0x40] sm:$0xff]
        %v2210 = vld [vmem:[#allocation8 + $0x48] sm:$0xff]
        %v2211 = vld [vmem:[#allocation8 + $0x50] sm:$0xff]
        %v2212 = vld [vmem:[#allocation8 + $0x58] sm:$0xff]
        %v2213 = vld [vmem:[#allocation8 + $0x60] sm:$0xff]
        %v2214 = vld [vmem:[#allocation8 + $0x68] sm:$0xff]
        %v2215 = vld [vmem:[#allocation8 + $0x70] sm:$0xff]
        %v2216 = vld [vmem:[#allocation8 + $0x78] sm:$0xff]
        %v2217 = vld [vmem:[#allocation8 + $0x80] sm:$0xff]
        %v2218 = vld [vmem:[#allocation8 + $0x88] sm:$0xff]
        %v2219 = vld [vmem:[#allocation8 + $0x90] sm:$0xff]
        %v2220 = vld [vmem:[#allocation8 + $0x98] sm:$0xff]
        %v2221 = vld [vmem:[#allocation8 + $0xa0] sm:$0xff]
        %v2222 = vld [vmem:[#allocation8 + $0xa8] sm:$0xff]
        %v2223 = vld [vmem:[#allocation8 + $0xb0] sm:$0xff]
        %v2224 = vld [vmem:[#allocation8 + $0xb8] sm:$0xff]
        %v2225 = vld [vmem:[#allocation8 + $0xc0] sm:$0xff]
        %v2226 = vld [vmem:[#allocation8 + $0xc8] sm:$0xff]
        %v2227 = vld [vmem:[#allocation8 + $0xd0] sm:$0xff]
        %v2228 = vld [vmem:[#allocation8 + $0xd8] sm:$0xff]
        %v2229 = vld [vmem:[#allocation8 + $0xe0] sm:$0xff]
        %v2230 = vld [vmem:[#allocation8 + $0xe8] sm:$0xff]
        %v2231 = vld [vmem:[#allocation8 + $0xf0] sm:$0xff]
        %v2232 = vld [vmem:[#allocation8 + $0xf8] sm:$0xff]
        %v2233 = vld [vmem:[#allocation8 + $0x100] sm:$0xff]
        %v2234 = vld [vmem:[#allocation8 + $0x108] sm:$0xff]
        %v2235 = vld [vmem:[#allocation8 + $0x110] sm:$0xff]
        %v2236 = vld [vmem:[#allocation8 + $0x118] sm:$0xff]
        %v2237 = vld [vmem:[#allocation8 + $0x120] sm:$0xff]
        %v2238 = vld [vmem:[#allocation8 + $0x128] sm:$0xff]
        %v2239 = vld [vmem:[#allocation8 + $0x130] sm:$0xff]
        %v2240 = vld [vmem:[#allocation8 + $0x138] sm:$0xff]
        %v2241 = vld [vmem:[#allocation8 + $0x140] sm:$0xff]
        %v2242 = vld [vmem:[#allocation8 + $0x148] sm:$0xff]
        %v2243 = vld [vmem:[#allocation8 + $0x150] sm:$0xff]
        %v2244 = vld [vmem:[#allocation8 + $0x158] sm:$0xff]
        %v2245 = vld [vmem:[#allocation8 + $0x160] sm:$0xff]
        %v2246 = vld [vmem:[#allocation8 + $0x168] sm:$0xff]
        %v2247 = vld [vmem:[#allocation8 + $0x170] sm:$0xff]
        %v2248 = vld [vmem:[#allocation8 + $0x178] sm:$0xff]
        %v2249 = vld [vmem:[#allocation8 + $0x180] sm:$0xff]
        %v2250 = vld [vmem:[#allocation8 + $0x188] sm:$0xff]
        %v2251 = vld [vmem:[#allocation8 + $0x190] sm:$0xff]
        %v2252 = vld [vmem:[#allocation8 + $0x198] sm:$0xff]
        %v2253 = vld [vmem:[#allocation8 + $0x1a0] sm:$0xff]
        %v2254 = vld [vmem:[#allocation8 + $0x1a8] sm:$0xff]
        %v2255 = vld [vmem:[#allocation8 + $0x1b0] sm:$0xff]
        %v2256 = vld [vmem:[#allocation8 + $0x1b8] sm:$0xff]
        %v2257 = vld [vmem:[#allocation8 + $0x1c0] sm:$0xff]
        %v2258 = vld [vmem:[#allocation8 + $0x1c8] sm:$0xff]
        %v2259 = vld [vmem:[#allocation8 + $0x1d0] sm:$0xff]
        %v2260 = vld [vmem:[#allocation8 + $0x1d8] sm:$0xff]
        %v2261 = vld [vmem:[#allocation8 + $0x1e0] sm:$0xff]
        %v2262 = vld [vmem:[#allocation8 + $0x1e8] sm:$0xff]
        %v2263 = vld [vmem:[#allocation8 + $0x1f0] sm:$0xff]
        %v2264 = vld [vmem:[#allocation8 + $0x1f8] sm:$0xff]
        %2265 = vmatpush.msra.mxu0 %v2261
        %2266 = vmatpush.msra.mxu0 %v2257
        %2267 = vmatpush.msra.mxu0 %v2253
        %2268 = vmatpush.msra.mxu0 %v2249
        %2269 = vmatpush.msra.mxu0 %v2245
        %2270 = vmatpush.msra.mxu0 %v2241
        %2271 = vmatpush.msra.mxu0 %v2237
        %2272 = vmatpush.msra.mxu0 %v2233
        %2273 = vmatpush.msra.mxu0 %v2229
        %2274 = vmatpush.msra.mxu0 %v2225
        %2275 = vmatpush.msra.mxu0 %v2221
        %2276 = vmatpush.msra.mxu0 %v2217
        %2277 = vmatpush.msra.mxu0 %v2213
        %2278 = vmatpush.msra.mxu0 %v2209
        %2279 = vmatpush.msra.mxu0 %v2205
        %2280 = vmatpush.msra.mxu0 %v2201
        %2281 = vmatmul.f32.gmra.mxu0 %v2186
        %v2282 = vpop.f32.mrf.mxu0
        %v2283 = vadd.f32 0.0, %v2282
        %2284 = vdwg.mxu0
        %2285 = vmatpush.msra.mxu0 %v2262
        %2286 = vmatpush.msra.mxu0 %v2258
        %2287 = vmatpush.msra.mxu0 %v2254
        %2288 = vmatpush.msra.mxu0 %v2250
        %2289 = vmatpush.msra.mxu0 %v2246
        %2290 = vmatpush.msra.mxu0 %v2242
        %2291 = vmatpush.msra.mxu0 %v2238
        %2292 = vmatpush.msra.mxu0 %v2234
        %2293 = vmatpush.msra.mxu0 %v2230
        %2294 = vmatpush.msra.mxu0 %v2226
        %2295 = vmatpush.msra.mxu0 %v2222
        %2296 = vmatpush.msra.mxu0 %v2218
        %2297 = vmatpush.msra.mxu0 %v2214
        %2298 = vmatpush.msra.mxu0 %v2210
        %2299 = vmatpush.msra.mxu0 %v2206
        %2300 = vmatpush.msra.mxu0 %v2202
        %2301 = vmatmul.f32.gmra.mxu0 %v2186
        %v2302 = vpop.f32.mrf.mxu0
        %v2303 = vadd.f32 0.0, %v2302
        %2304 = vdwg.mxu0
        %2305 = vmatpush.msra.mxu0 %v2263
        %2306 = vmatpush.msra.mxu0 %v2259
        %2307 = vmatpush.msra.mxu0 %v2255
        %2308 = vmatpush.msra.mxu0 %v2251
        %2309 = vmatpush.msra.mxu0 %v2247
        %2310 = vmatpush.msra.mxu0 %v2243
        %2311 = vmatpush.msra.mxu0 %v2239
        %2312 = vmatpush.msra.mxu0 %v2235
        %2313 = vmatpush.msra.mxu0 %v2231
        %2314 = vmatpush.msra.mxu0 %v2227
        %2315 = vmatpush.msra.mxu0 %v2223
        %2316 = vmatpush.msra.mxu0 %v2219
        %2317 = vmatpush.msra.mxu0 %v2215
        %2318 = vmatpush.msra.mxu0 %v2211
        %2319 = vmatpush.msra.mxu0 %v2207
        %2320 = vmatpush.msra.mxu0 %v2203
        %2321 = vmatmul.f32.gmra.mxu0 %v2186
        %v2322 = vpop.f32.mrf.mxu0
        %v2323 = vadd.f32 0.0, %v2322
        %2324 = vdwg.mxu0
        %2325 = vmatpush.msra.mxu0 %v2264
        %2326 = vmatpush.msra.mxu0 %v2260
        %2327 = vmatpush.msra.mxu0 %v2256
        %2328 = vmatpush.msra.mxu0 %v2252
        %2329 = vmatpush.msra.mxu0 %v2248
        %2330 = vmatpush.msra.mxu0 %v2244
        %2331 = vmatpush.msra.mxu0 %v2240
        %2332 = vmatpush.msra.mxu0 %v2236
        %2333 = vmatpush.msra.mxu0 %v2232
        %2334 = vmatpush.msra.mxu0 %v2228
        %2335 = vmatpush.msra.mxu0 %v2224
        %2336 = vmatpush.msra.mxu0 %v2220
        %2337 = vmatpush.msra.mxu0 %v2216
        %2338 = vmatpush.msra.mxu0 %v2212
        %2339 = vmatpush.msra.mxu0 %v2208
        %2340 = vmatpush.msra.mxu0 %v2204
        %2341 = vmatmul.f32.gmra.mxu0 %v2186
        %v2342 = vpop.f32.mrf.mxu0
        %v2343 = vadd.f32 0.0, %v2342
        %2344 = vdwg.mxu0
        %v2345 = vadd.f32 %v2197, %v2283
        %v2346 = vadd.f32 %v2198, %v2303
        %v2347 = vadd.f32 %v2199, %v2323
        %v2348 = vadd.f32 %v2200, %v2343
        %v2349 = vxor.u32 %v2345, 2147483648
        %v2350 = vxor.u32 %v2346, 2147483648
        %v2351 = vxor.u32 %v2347, 2147483648
        %v2352 = vmul.f32 %v2349, 1.442695
        %v2353 = vpow.pop %v2352
        %v2354 = vmul.f32 %v2350, 1.442695
        %v2355 = vpow.pop %v2354
        %v2356 = vmul.f32 %v2351, 1.442695
        %v2357 = vpow.pop %v2356
        %v2358 = vadd.f32 %v2353, 1.0
        %v2359 = vadd.f32 %v2355, 1.0
        %v2360 = vadd.f32 %v2357, 1.0
        %v2361 = vrcp.pop %v2358
        %v2362 = vmul.f32 %v2358, %v2361
        %v2363 = vsub.f32 1.0, %v2362
        %v2364 = vmul.f32 %v2361, %v2363
        %v2365 = vadd.f32 %v2361, %v2364
        %vm2366 = vweird.f32 %v2358
        %vm2367 = vweird.f32 %v2361
        %vm2368 = vmor %vm2366, %vm2367
        %v2369 = vsel %vm2368, %v2361, %v2365
        %v2370 = vand.u32 2147483647, %v2358
        %vm2371 = vcmp.eq.f32.partialorder %v2370, 8.507059e+37
        %v2372 = vand.u32 %v2358, 2147483648
        %v2373 = vor.u32 1.1754944e-38, %v2372
        %v2374 = vsel %vm2371, %v2373, %v2369
        %v2375 = vmul.f32 1.0, %v2374
        %v2376 = vrcp.pop %v2359
        %v2377 = vmul.f32 %v2359, %v2376
        %v2378 = vsub.f32 1.0, %v2377
        %v2379 = vmul.f32 %v2376, %v2378
        %v2380 = vadd.f32 %v2376, %v2379
        %vm2381 = vweird.f32 %v2359
        %vm2382 = vweird.f32 %v2376
        %vm2383 = vmor %vm2381, %vm2382
        %v2384 = vsel %vm2383, %v2376, %v2380
        %v2385 = vand.u32 2147483647, %v2359
        %vm2386 = vcmp.eq.f32.partialorder %v2385, 8.507059e+37
        %v2387 = vand.u32 %v2359, 2147483648
        %v2388 = vor.u32 1.1754944e-38, %v2387
        %v2389 = vsel %vm2386, %v2388, %v2384
        %v2390 = vmul.f32 1.0, %v2389
        %v2391 = vrcp.pop %v2360
        %v2392 = vmul.f32 %v2360, %v2391
        %v2393 = vsub.f32 1.0, %v2392
        %v2394 = vmul.f32 %v2391, %v2393
        %v2395 = vadd.f32 %v2391, %v2394
        %vm2396 = vweird.f32 %v2360
        %vm2397 = vweird.f32 %v2391
        %vm2398 = vmor %vm2396, %vm2397
        %v2399 = vsel %vm2398, %v2391, %v2395
        %v2400 = vand.u32 2147483647, %v2360
        %vm2401 = vcmp.eq.f32.partialorder %v2400, 8.507059e+37
        %v2402 = vand.u32 %v2360, 2147483648
        %v2403 = vor.u32 1.1754944e-38, %v2402
        %v2404 = vsel %vm2401, %v2403, %v2399
        %v2405 = vmul.f32 1.0, %v2404
        %v2406 = vtanh.pop %v2348
        %v2407 = vmul.f32 %v2390, %v2184
        %v2408 = vmul.f32 %v2375, %v2406
        %v2409 = vadd.f32 %v2407, %v2408
        %v2410 = vtanh.pop %v2409
        %v2411 = vmul.f32 %v2405, %v2410
        %s2412 = scalar_lea.vmem %s299, %s2191 [#allocation11]
        %2413 = vst [vmem:[%s2412] sm:$0xff] %v2411
        %s2414 = smul.u32 %s839, 7
        %s2415 = sadd.s32 %s837, %s2414
        %s2416 = smul.u32 %s2415, 8
        %s2417 = sshra.s32 %s2416, 3
        %s2418 = sand.u32 %s2416, 7
        %s2419 = smul.u32 %s2417, 4
        %s2420 = smul.addr %s2419, 8
        %s2421 = scalar_lea.vmem [#allocation4], %s2420
        %v2422 = vld [vmem:[%s2421] sm:$0xff]
        %v2423 = vld [vmem:[%s2421 + $0x8] sm:$0xff]
        %v2424 = vld [vmem:[%s2421 + $0x10] sm:$0xff]
        %v2425 = vld [vmem:[%s2421 + $0x18] sm:$0xff]
        %v2426 = vld [vmem:[#allocation8] sm:$0xff]
        %v2427 = vld [vmem:[#allocation8 + $0x8] sm:$0xff]
        %v2428 = vld [vmem:[#allocation8 + $0x10] sm:$0xff]
        %v2429 = vld [vmem:[#allocation8 + $0x18] sm:$0xff]
        %v2430 = vld [vmem:[#allocation8 + $0x20] sm:$0xff]
        %v2431 = vld [vmem:[#allocation8 + $0x28] sm:$0xff]
        %v2432 = vld [vmem:[#allocation8 + $0x30] sm:$0xff]
        %v2433 = vld [vmem:[#allocation8 + $0x38] sm:$0xff]
        %v2434 = vld [vmem:[#allocation8 + $0x40] sm:$0xff]
        %v2435 = vld [vmem:[#allocation8 + $0x48] sm:$0xff]
        %v2436 = vld [vmem:[#allocation8 + $0x50] sm:$0xff]
        %v2437 = vld [vmem:[#allocation8 + $0x58] sm:$0xff]
        %v2438 = vld [vmem:[#allocation8 + $0x60] sm:$0xff]
        %v2439 = vld [vmem:[#allocation8 + $0x68] sm:$0xff]
        %v2440 = vld [vmem:[#allocation8 + $0x70] sm:$0xff]
        %v2441 = vld [vmem:[#allocation8 + $0x78] sm:$0xff]
        %v2442 = vld [vmem:[#allocation8 + $0x80] sm:$0xff]
        %v2443 = vld [vmem:[#allocation8 + $0x88] sm:$0xff]
        %v2444 = vld [vmem:[#allocation8 + $0x90] sm:$0xff]
        %v2445 = vld [vmem:[#allocation8 + $0x98] sm:$0xff]
        %v2446 = vld [vmem:[#allocation8 + $0xa0] sm:$0xff]
        %v2447 = vld [vmem:[#allocation8 + $0xa8] sm:$0xff]
        %v2448 = vld [vmem:[#allocation8 + $0xb0] sm:$0xff]
        %v2449 = vld [vmem:[#allocation8 + $0xb8] sm:$0xff]
        %v2450 = vld [vmem:[#allocation8 + $0xc0] sm:$0xff]
        %v2451 = vld [vmem:[#allocation8 + $0xc8] sm:$0xff]
        %v2452 = vld [vmem:[#allocation8 + $0xd0] sm:$0xff]
        %v2453 = vld [vmem:[#allocation8 + $0xd8] sm:$0xff]
        %v2454 = vld [vmem:[#allocation8 + $0xe0] sm:$0xff]
        %v2455 = vld [vmem:[#allocation8 + $0xe8] sm:$0xff]
        %v2456 = vld [vmem:[#allocation8 + $0xf0] sm:$0xff]
        %v2457 = vld [vmem:[#allocation8 + $0xf8] sm:$0xff]
        %v2458 = vld [vmem:[#allocation8 + $0x100] sm:$0xff]
        %v2459 = vld [vmem:[#allocation8 + $0x108] sm:$0xff]
        %v2460 = vld [vmem:[#allocation8 + $0x110] sm:$0xff]
        %v2461 = vld [vmem:[#allocation8 + $0x118] sm:$0xff]
        %v2462 = vld [vmem:[#allocation8 + $0x120] sm:$0xff]
        %v2463 = vld [vmem:[#allocation8 + $0x128] sm:$0xff]
        %v2464 = vld [vmem:[#allocation8 + $0x130] sm:$0xff]
        %v2465 = vld [vmem:[#allocation8 + $0x138] sm:$0xff]
        %v2466 = vld [vmem:[#allocation8 + $0x140] sm:$0xff]
        %v2467 = vld [vmem:[#allocation8 + $0x148] sm:$0xff]
        %v2468 = vld [vmem:[#allocation8 + $0x150] sm:$0xff]
        %v2469 = vld [vmem:[#allocation8 + $0x158] sm:$0xff]
        %v2470 = vld [vmem:[#allocation8 + $0x160] sm:$0xff]
        %v2471 = vld [vmem:[#allocation8 + $0x168] sm:$0xff]
        %v2472 = vld [vmem:[#allocation8 + $0x170] sm:$0xff]
        %v2473 = vld [vmem:[#allocation8 + $0x178] sm:$0xff]
        %v2474 = vld [vmem:[#allocation8 + $0x180] sm:$0xff]
        %v2475 = vld [vmem:[#allocation8 + $0x188] sm:$0xff]
        %v2476 = vld [vmem:[#allocation8 + $0x190] sm:$0xff]
        %v2477 = vld [vmem:[#allocation8 + $0x198] sm:$0xff]
        %v2478 = vld [vmem:[#allocation8 + $0x1a0] sm:$0xff]
        %v2479 = vld [vmem:[#allocation8 + $0x1a8] sm:$0xff]
        %v2480 = vld [vmem:[#allocation8 + $0x1b0] sm:$0xff]
        %v2481 = vld [vmem:[#allocation8 + $0x1b8] sm:$0xff]
        %v2482 = vld [vmem:[#allocation8 + $0x1c0] sm:$0xff]
        %v2483 = vld [vmem:[#allocation8 + $0x1c8] sm:$0xff]
        %v2484 = vld [vmem:[#allocation8 + $0x1d0] sm:$0xff]
        %v2485 = vld [vmem:[#allocation8 + $0x1d8] sm:$0xff]
        %v2486 = vld [vmem:[#allocation8 + $0x1e0] sm:$0xff]
        %v2487 = vld [vmem:[#allocation8 + $0x1e8] sm:$0xff]
        %v2488 = vld [vmem:[#allocation8 + $0x1f0] sm:$0xff]
        %v2489 = vld [vmem:[#allocation8 + $0x1f8] sm:$0xff]
        %2490 = vmatpush.msra.mxu0 %v2486
        %2491 = vmatpush.msra.mxu0 %v2482
        %2492 = vmatpush.msra.mxu0 %v2478
        %2493 = vmatpush.msra.mxu0 %v2474
        %2494 = vmatpush.msra.mxu0 %v2470
        %2495 = vmatpush.msra.mxu0 %v2466
        %2496 = vmatpush.msra.mxu0 %v2462
        %2497 = vmatpush.msra.mxu0 %v2458
        %2498 = vmatpush.msra.mxu0 %v2454
        %2499 = vmatpush.msra.mxu0 %v2450
        %2500 = vmatpush.msra.mxu0 %v2446
        %2501 = vmatpush.msra.mxu0 %v2442
        %2502 = vmatpush.msra.mxu0 %v2438
        %2503 = vmatpush.msra.mxu0 %v2434
        %2504 = vmatpush.msra.mxu0 %v2430
        %2505 = vmatpush.msra.mxu0 %v2426
        %2506 = vmatmul.f32.gmra.mxu0 %v2411
        %v2507 = vpop.f32.mrf.mxu0
        %v2508 = vadd.f32 0.0, %v2507
        %2509 = vdwg.mxu0
        %2510 = vmatpush.msra.mxu0 %v2487
        %2511 = vmatpush.msra.mxu0 %v2483
        %2512 = vmatpush.msra.mxu0 %v2479
        %2513 = vmatpush.msra.mxu0 %v2475
        %2514 = vmatpush.msra.mxu0 %v2471
        %2515 = vmatpush.msra.mxu0 %v2467
        %2516 = vmatpush.msra.mxu0 %v2463
        %2517 = vmatpush.msra.mxu0 %v2459
        %2518 = vmatpush.msra.mxu0 %v2455
        %2519 = vmatpush.msra.mxu0 %v2451
        %2520 = vmatpush.msra.mxu0 %v2447
        %2521 = vmatpush.msra.mxu0 %v2443
        %2522 = vmatpush.msra.mxu0 %v2439
        %2523 = vmatpush.msra.mxu0 %v2435
        %2524 = vmatpush.msra.mxu0 %v2431
        %2525 = vmatpush.msra.mxu0 %v2427
        %2526 = vmatmul.f32.gmra.mxu0 %v2411
        %v2527 = vpop.f32.mrf.mxu0
        %v2528 = vadd.f32 0.0, %v2527
        %2529 = vdwg.mxu0
        %2530 = vmatpush.msra.mxu0 %v2488
        %2531 = vmatpush.msra.mxu0 %v2484
        %2532 = vmatpush.msra.mxu0 %v2480
        %2533 = vmatpush.msra.mxu0 %v2476
        %2534 = vmatpush.msra.mxu0 %v2472
        %2535 = vmatpush.msra.mxu0 %v2468
        %2536 = vmatpush.msra.mxu0 %v2464
        %2537 = vmatpush.msra.mxu0 %v2460
        %2538 = vmatpush.msra.mxu0 %v2456
        %2539 = vmatpush.msra.mxu0 %v2452
        %2540 = vmatpush.msra.mxu0 %v2448
        %2541 = vmatpush.msra.mxu0 %v2444
        %2542 = vmatpush.msra.mxu0 %v2440
        %2543 = vmatpush.msra.mxu0 %v2436
        %2544 = vmatpush.msra.mxu0 %v2432
        %2545 = vmatpush.msra.mxu0 %v2428
        %2546 = vmatmul.f32.gmra.mxu0 %v2411
        %v2547 = vpop.f32.mrf.mxu0
        %v2548 = vadd.f32 0.0, %v2547
        %2549 = vdwg.mxu0
        %2550 = vmatpush.msra.mxu0 %v2489
        %2551 = vmatpush.msra.mxu0 %v2485
        %2552 = vmatpush.msra.mxu0 %v2481
        %2553 = vmatpush.msra.mxu0 %v2477
        %2554 = vmatpush.msra.mxu0 %v2473
        %2555 = vmatpush.msra.mxu0 %v2469
        %2556 = vmatpush.msra.mxu0 %v2465
        %2557 = vmatpush.msra.mxu0 %v2461
        %2558 = vmatpush.msra.mxu0 %v2457
        %2559 = vmatpush.msra.mxu0 %v2453
        %2560 = vmatpush.msra.mxu0 %v2449
        %2561 = vmatpush.msra.mxu0 %v2445
        %2562 = vmatpush.msra.mxu0 %v2441
        %2563 = vmatpush.msra.mxu0 %v2437
        %2564 = vmatpush.msra.mxu0 %v2433
        %2565 = vmatpush.msra.mxu0 %v2429
        %2566 = vmatmul.f32.gmra.mxu0 %v2411
        %v2567 = vpop.f32.mrf.mxu0
        %v2568 = vadd.f32 0.0, %v2567
        %2569 = vdwg.mxu0
        %v2570 = vadd.f32 %v2422, %v2508
        %v2571 = vadd.f32 %v2423, %v2528
        %v2572 = vadd.f32 %v2424, %v2548
        %v2573 = vadd.f32 %v2425, %v2568
        %v2574 = vxor.u32 %v2570, 2147483648
        %v2575 = vxor.u32 %v2571, 2147483648
        %v2576 = vxor.u32 %v2572, 2147483648
        %v2577 = vmul.f32 %v2574, 1.442695
        %v2578 = vpow.pop %v2577
        %v2579 = vmul.f32 %v2575, 1.442695
        %v2580 = vpow.pop %v2579
        %v2581 = vmul.f32 %v2576, 1.442695
        %v2582 = vpow.pop %v2581
        %v2583 = vadd.f32 %v2578, 1.0
        %v2584 = vadd.f32 %v2580, 1.0
        %v2585 = vadd.f32 %v2582, 1.0
        %v2586 = vrcp.pop %v2583
        %v2587 = vmul.f32 %v2583, %v2586
        %v2588 = vsub.f32 1.0, %v2587
        %v2589 = vmul.f32 %v2586, %v2588
        %v2590 = vadd.f32 %v2586, %v2589
        %vm2591 = vweird.f32 %v2583
        %vm2592 = vweird.f32 %v2586
        %vm2593 = vmor %vm2591, %vm2592
        %v2594 = vsel %vm2593, %v2586, %v2590
        %v2595 = vand.u32 2147483647, %v2583
        %vm2596 = vcmp.eq.f32.partialorder %v2595, 8.507059e+37
        %v2597 = vand.u32 %v2583, 2147483648
        %v2598 = vor.u32 1.1754944e-38, %v2597
        %v2599 = vsel %vm2596, %v2598, %v2594
        %v2600 = vmul.f32 1.0, %v2599
        %v2601 = vrcp.pop %v2584
        %v2602 = vmul.f32 %v2584, %v2601
        %v2603 = vsub.f32 1.0, %v2602
        %v2604 = vmul.f32 %v2601, %v2603
        %v2605 = vadd.f32 %v2601, %v2604
        %vm2606 = vweird.f32 %v2584
        %vm2607 = vweird.f32 %v2601
        %vm2608 = vmor %vm2606, %vm2607
        %v2609 = vsel %vm2608, %v2601, %v2605
        %v2610 = vand.u32 2147483647, %v2584
        %vm2611 = vcmp.eq.f32.partialorder %v2610, 8.507059e+37
        %v2612 = vand.u32 %v2584, 2147483648
        %v2613 = vor.u32 1.1754944e-38, %v2612
        %v2614 = vsel %vm2611, %v2613, %v2609
        %v2615 = vmul.f32 1.0, %v2614
        %v2616 = vrcp.pop %v2585
        %v2617 = vmul.f32 %v2585, %v2616
        %v2618 = vsub.f32 1.0, %v2617
        %v2619 = vmul.f32 %v2616, %v2618
        %v2620 = vadd.f32 %v2616, %v2619
        %vm2621 = vweird.f32 %v2585
        %vm2622 = vweird.f32 %v2616
        %vm2623 = vmor %vm2621, %vm2622
        %v2624 = vsel %vm2623, %v2616, %v2620
        %v2625 = vand.u32 2147483647, %v2585
        %vm2626 = vcmp.eq.f32.partialorder %v2625, 8.507059e+37
        %v2627 = vand.u32 %v2585, 2147483648
        %v2628 = vor.u32 1.1754944e-38, %v2627
        %v2629 = vsel %vm2626, %v2628, %v2624
        %v2630 = vmul.f32 1.0, %v2629
        %v2631 = vtanh.pop %v2573
        %v2632 = vmul.f32 %v2615, %v2409
        %v2633 = vmul.f32 %v2600, %v2631
        %v2634 = vadd.f32 %v2632, %v2633
        %v2635 = vtanh.pop %v2634
        %v2636 = vmul.f32 %v2630, %v2635
        %s2637 = scalar_lea.vmem %s299, %s2416 [#allocation11]
        %2638 = vst [vmem:[%s2637] sm:$0xff] %v2636
        %2639 = vst [vmem:[#allocation2] sm:$0xff] %v2636
        %2640 = vst [vmem:[#allocation3] sm:$0xff] %v2634
        %s2641 = sand.u32 %s158, 1
        %s2642 = scalar_lea.sflag [#allocation7], %s2641
        %s2643 = sand.u32 %s158, 1
        %s2644 = smul.addr %s2643, 64
        %s2645 = scalar_lea.vmem [#allocation11], %s2644
        // Predicated region
        $region53: #{lstm_block_forward.3} parent=35 // pred_check
          %p2646 = pneg %p168
        $region54: #{lstm_block_forward.3} parent=35 // pred_check_branch
          %2648 = sbr.rel (%p2646) target = $region56
        $region55: #{lstm_block_forward.3} parent=35 // pred_region
          %s2649 = smul.u32 %s24, 2
          %s2650 = ssub.s32 1, %s2649
          %s2651 = smul.u32 %s2650, %s25
          %s2652 = smul.u32 8, %s2651
          %2654 = vsyncadd %s2642, 0
          %s2655 = smul.addr %s2652, 2
          %s2656 = sadd.s32 %s24, %s2655
          %s2657 = smul.addr %s2656, 8
          %s2658 = scalar_lea.hbm %s4, %s2657
          %s2659 = sshll.u32 %s2645, 4
          %s2660 = int_to_ptr.vmem [resolvable:$true] %s2659
          %s2661 = sshll.u32 %s2658, 4
          %s2662 = int_to_ptr.hbm [resolvable:$true] %s2661
          %2667 = dma.vmem_to_hbm [thread:$0]  %s2660, 1024, %s2662, %s2642, 128, 256, 8
        $region56: #{lstm_block_forward.3} parent=35 // pred_fallthru
          _
      $region36: #{lstm_block_forward.3} parent=5 // pred_fallthru
        _
      %p2668 = scmp.le.s32.totalorder 2, %s15
      // Predicated region
      $region57: #{lstm_block_forward.3} parent=5 // pred_check
        %p2669 = pneg %p2668
      $region58: #{lstm_block_forward.3} parent=5 // pred_check_branch
        %2671 = sbr.rel (%p2669) target = $region60
      $region59: #{lstm_block_forward.3} parent=5 // pred_region
        %s2672 = ssub.s32 %s15, 2
        // Predicated region
        $region61: #{lstm_block_forward.3} parent=59 // pred_check
          %p2673 = pneg %p174
        $region62: #{lstm_block_forward.3} parent=59 // pred_check_branch
          %2675 = sbr.rel (%p2673) target = $region64
        $region63: #{lstm_block_forward.3} parent=59 // pred_region
          %s2676 = sand.u32 %s159, 1
          %s2677 = scalar_lea.sflag [#allocation7], %s2676
          %s2678 = sand.u32 %s159, 1
          %s2679 = smul.addr %s2678, 64
          %s2680 = scalar_lea.vmem [#allocation11], %s2679
          %2682 = dma.done %s2677, 1024
        $region64: #{lstm_block_forward.3} parent=59 // pred_fallthru
          _
      $region60: #{lstm_block_forward.3} parent=5 // pred_fallthru
        _
    $region6: #{lstm_block_forward.3} parent=1 // loop_footer
      %s19 = sadd.s32 1, %s15
    $region7: #{lstm_block_forward.3} parent=1 // loop_footer_branch
      %14 = sbr.rel target = $region3
    $region8: #{lstm_block_forward.3} parent=1 // loop_exit
      _
    %2683 = vsyncpa [#allocation6], 1
    %s2684 = scalar_lea.sflag [#allocation6], 1
    %2685 = vsyncpa %s2684, 1
    %2686 = vsyncpa [#allocation9], 1
    %2687 = vsyncpa [#allocation7], 1
    %s2688 = scalar_lea.sflag [#allocation7], 1
    %2689 = vsyncpa %s2688, 1

</llo_original>
